<compile_context>
chip_gen: v6e
topology: v6e:2x2x1
jax: 0.10.0
libtpu: 0.0.40
codegen_flags: <defaults>
</compile_context>

<pallas_src>
import functools

import jax
import jax.numpy as jnp
from jax.experimental import pallas as pl
from jax.experimental.pallas import tpu as pltpu

EPS = 1e-5
LANE = 128


def _round_up(v, m):
    return (v + m - 1) // m * m


def _pick_row_block(h, target):
    hb = min(h, max(int(target), 1))
    while h % hb:
        hb -= 1
    return hb


def _compiler_params():
    # Batch-block grid axis is independent -> "parallel" (v7x megacore sharding).
    # 56 MiB leaves headroom under v7x's 64 MiB physical VMEM; the per-step
    # working set (2x in + 2x out blocks + pad scratch + resident weights) is
    # ~1-2 MiB at CIFAR-scale blocks, so v5e/v6e are not constrained either.
    return pltpu.CompilerParams(
        dimension_semantics=("parallel",),
        vmem_limit_bytes=56 * 1024 * 1024,
    )


# ---------------------------------------------------------------------------
# In-kernel building blocks
# ---------------------------------------------------------------------------
def _bn_apply_relu_to_pad(src_ref, mv_ref, pad_ref):
    """bn-apply + ReLU into the interior of the padded VMEM tile.

    Only the 1-wide halo ring is zeroed (per grid step, so there is no
    cross-iteration state and it stays correct under megacore 'parallel').
    """
    nb, h, w, cpi = src_ref.shape
    mean = mv_ref[0:1, :].reshape(1, 1, 1, cpi)
    scale = mv_ref[1:2, :].reshape(1, 1, 1, cpi)
    act = jnp.maximum((src_ref[...] - mean) * scale, 0.0).astype(pad_ref.dtype)
    zrow = jnp.zeros((nb, 1, w + 2, cpi), pad_ref.dtype)
    zcol = jnp.zeros((nb, h + 2, 1, cpi), pad_ref.dtype)
    pad_ref[:, 0:1, :, :] = zrow
    pad_ref[:, h + 1:h + 2, :, :] = zrow
    pad_ref[:, :, 0:1, :] = zcol
    pad_ref[:, :, w + 1:w + 2, :] = zcol
    pad_ref[:, 1:h + 1, 1:w + 1, :] = act


def _conv3x3_chunk(pad_ref, w_ref, r0, nb, hb, w, cpi):
    """One (nb*hb*w, Cpo) output-row chunk of the 3x3 stride-1 conv as a single
    big-K MXU matmul: the 9 taps are concatenated along the lane axis into a
    VMEM-only im2col slab (K = 9*Cpi), accumulated in f32."""
    taps = []
    for k in range(9):
        dh, dw = divmod(k, 3)
        taps.append(pad_ref[:, pl.ds(r0 + dh, hb), dw:dw + w, :])
    slab = jnp.concatenate(taps, axis=-1).reshape(nb * hb * w, 9 * cpi)
    return jnp.dot(slab, w_ref[...], preferred_element_type=jnp.float32)


# ---------------------------------------------------------------------------
# Pallas kernels
# ---------------------------------------------------------------------------
def _bnrelu_conv_stats_kernel(x_ref, mv_ref, w_ref, y_ref, st_ref, pad_ref, *, hb):
    # Fused: bn1-apply + ReLU + conv1 (stride 1) + per-block bn2 partial stats.
    nb, h, w, cpi = x_ref.shape
    cpo = y_ref.shape[-1]
    _bn_apply_relu_to_pad(x_ref, mv_ref, pad_ref)

    def chunk(ci, carry):
        s, ss = carry
        r0 = pl.multiple_of(ci * hb, hb)
        res = _conv3x3_chunk(pad_ref, w_ref, r0, nb, hb, w, cpi)  # (nb*hb*w, cpo) f32
        y_ref[:, pl.ds(r0, hb), :, :] = res.reshape(nb, hb, w, cpo).astype(y_ref.dtype)
        s = s + jnp.sum(res, axis=0, keepdims=True)
        ss = ss + jnp.sum(res * res, axis=0, keepdims=True)
        return s, ss

    zero = jnp.zeros((1, cpo), jnp.float32)
    s, ss = jax.lax.fori_loop(0, h // hb, chunk, (zero, zero), unroll=True)
    # Single lane-dense store of both partial-stat rows.
    st_ref[...] = jnp.concatenate([s, ss], axis=0)[None]


def _bnrelu_conv_add_kernel(y_ref, mv_ref, w_ref, id_ref, o_ref, pad_ref, *, hb):
    # Fused: bn2-apply + ReLU + conv2 (stride 1) + residual add.
    nb, h, w, cpi = y_ref.shape
    cpo = o_ref.shape[-1]
    _bn_apply_relu_to_pad(y_ref, mv_ref, pad_ref)

    def chunk(ci, carry):
        r0 = pl.multiple_of(ci * hb, hb)
        res = _conv3x3_chunk(pad_ref, w_ref, r0, nb, hb, w, cpi)
        o_ref[:, pl.ds(r0, hb), :, :] = (
            res.reshape(nb, hb, w, cpo) + id_ref[:, pl.ds(r0, hb), :, :]
        ).astype(o_ref.dtype)
        return carry

    jax.lax.fori_loop(0, h // hb, chunk, 0, unroll=True)


# ---------------------------------------------------------------------------
# pallas_call wrappers (tiled over batch blocks)
# ---------------------------------------------------------------------------
def _bnrelu_conv_stats(x4, mv1, w9, nb, hb):
    n, h, w, cpi = x4.shape
    kdim, cpo = w9.shape
    g = n // nb
    kernel = functools.partial(_bnrelu_conv_stats_kernel, hb=hb)
    return pl.pallas_call(
        kernel,
        out_shape=(jax.ShapeDtypeStruct((n, h, w, cpo), jnp.float32),
                   jax.ShapeDtypeStruct((g, 2, cpo), jnp.float32)),
        grid=(g,),
        in_specs=[pl.BlockSpec((nb, h, w, cpi), lambda i: (i, 0, 0, 0)),
                  pl.BlockSpec((2, cpi), lambda i: (0, 0)),        # resident
                  pl.BlockSpec((kdim, cpo), lambda i: (0, 0))],    # resident
        out_specs=(pl.BlockSpec((nb, h, w, cpo), lambda i: (i, 0, 0, 0)),
                   pl.BlockSpec((1, 2, cpo), lambda i: (i, 0, 0))),
        scratch_shapes=[pltpu.VMEM((nb, h + 2, w + 2, cpi), w9.dtype)],
        compiler_params=_compiler_params(),
    )(x4, mv1, w9)


def _bnrelu_conv_add(y1, mv2, w9, ident, nb, hb):
    n, h, w, cpi = y1.shape
    kdim, cpo = w9.shape
    g = n // nb
    kernel = functools.partial(_bnrelu_conv_add_kernel, hb=hb)
    return pl.pallas_call(
        kernel,
        out_shape=jax.ShapeDtypeStruct((n, h, w, cpo), jnp.float32),
        grid=(g,),
        in_specs=[pl.BlockSpec((nb, h, w, cpi), lambda i: (i, 0, 0, 0)),
                  pl.BlockSpec((2, cpi), lambda i: (0, 0)),
                  pl.BlockSpec((kdim, cpo), lambda i: (0, 0)),
                  pl.BlockSpec((nb, h, w, cpo), lambda i: (i, 0, 0, 0))],
        out_specs=pl.BlockSpec((nb, h, w, cpo), lambda i: (i, 0, 0, 0)),
        scratch_shapes=[pltpu.VMEM((nb, h + 2, w + 2, cpi), w9.dtype)],
        compiler_params=_compiler_params(),
    )(y1, mv2, w9, ident)


# ---------------------------------------------------------------------------
# Plain-JAX glue (weight repack, BN stats finalize, layout)
# ---------------------------------------------------------------------------
def _prep_weight(w_oihw, cpi, cpo, dtype):
    co, ci, kh, kw = w_oihw.shape
    # (O,I,3,3) -> (9*Cpi, Cpo), tap-major (dh, dw) to match the im2col slab.
    w9 = jnp.transpose(w_oihw.astype(jnp.float32), (2, 3, 1, 0)).reshape(kh * kw, ci, co)
    w9 = jnp.pad(w9, ((0, 0), (0, cpi - ci), (0, cpo - co)))
    return w9.reshape(kh * kw * cpi, cpo).astype(dtype)


def _bn_mean_scale(x4):
    # Two-pass per-channel batch stats in f32 (avoids E[x^2]-E[x]^2 cancellation).
    mean = jnp.mean(x4, axis=(0, 1, 2))
    var = jnp.mean(jnp.square(x4 - mean), axis=(0, 1, 2))
    return jnp.stack([mean, jax.lax.rsqrt(var + EPS)], axis=0).astype(jnp.float32)


def _finalize_stats(partials, count):
    # Reduce per-block (sum, sumsq) partials from the conv1 kernel; f32 throughout
    # even on the bf16 matmul path (the conv accumulator is f32).
    s = jnp.sum(partials, axis=0)
    mean = s[0] / count
    var = jnp.maximum(s[1] / count - mean * mean, 0.0)   # biased variance
    return jnp.stack([mean, jax.lax.rsqrt(var + EPS)], axis=0)


@functools.partial(jax.jit,
                   static_argnames=("stride", "batch_block", "row_block", "matmul_dtype"))
def res_basic_block_preact(x_nchw, w1_oihw, w2_oihw, stride=1, batch_block=1,
                           row_block=8, matmul_dtype=jnp.bfloat16):
    n, c, h, w = x_nchw.shape
    cout = w1_oihw.shape[0]
    assert cout == c, "residual add requires in_ == out_ when downsample is None"
    assert n % batch_block == 0, "batch_block must divide the batch size"
    assert h % stride == 0 and w % stride == 0, "stride must divide H and W"
    nb = batch_block
    cp = _round_up(c, LANE)

    # NCHW -> NHWC, channels zero-padded to a lane-dense multiple of 128.
    x4 = jnp.transpose(x_nchw, (0, 2, 3, 1)).astype(jnp.float32)
    x4 = jnp.pad(x4, ((0, 0), (0, 0), (0, 0), (0, cp - c)))
    w9_1 = _prep_weight(w1_oihw, cp, cp, matmul_dtype)
    w9_2 = _prep_weight(w2_oihw, cp, cp, matmul_dtype)

    # bn1 batch stats: plain-XLA per-channel reduction, fused with the layout/pad
    # producer above (replaces the dedicated stats pallas_call of v1).
    mv1 = _bn_mean_scale(x4)

    # Kernel A: bn1-apply + ReLU + conv1 (+ per-block bn2 partial stats).
    hb1 = _pick_row_block(h, row_block)
    y1, st2 = _bnrelu_conv_stats(x4, mv1, w9_1, nb, hb1)

    if stride == 1:
        mv2 = _finalize_stats(st2, n * h * w)
        ident = x4
    else:
        # conv1 at stride s == stride-1 conv subsampled at [::s, ::s]; the
        # identity branch is the grouped "ones" 1x1 stride-s conv == same subsample.
        y1 = y1[:, ::stride, ::stride, :]
        ident = x4[:, ::stride, ::stride, :]
        mv2 = _bn_mean_scale(y1)          # fuses with the strided-slice producer
    h2 = y1.shape[1]

    # Kernel B: bn2-apply + ReLU + conv2 + residual add.
    hb2 = _pick_row_block(h2, row_block)
    out4 = _bnrelu_conv_add(y1, mv2, w9_2, ident, nb, hb2)

    # TODO(synk): in a full network keep the padded-NHWC boundary between blocks;
    # this un-pad + NHWC->NCHW transpose only restores the PyTorch interface.
    return jnp.transpose(out4[..., :c], (0, 3, 1, 2))


# ---------------------------------------------------------------------------
# Pure-JAX reference (for correctness check)
# ---------------------------------------------------------------------------
def _ref_block(x, w1, w2, stride=1):
    def bn_relu(z):
        mean = z.mean(axis=(0, 2, 3), keepdims=True)
        var = jnp.square(z - mean).mean(axis=(0, 2, 3), keepdims=True)
        return jnp.maximum((z - mean) * jax.lax.rsqrt(var + EPS), 0.0)

    dn = ("NCHW", "OIHW", "NCHW")
    out = bn_relu(x)
    out = jax.lax.conv_general_dilated(out, w1, (stride, stride),
                                       ((1, 1), (1, 1)), dimension_numbers=dn)
    out = bn_relu(out)
    out = jax.lax.conv_general_dilated(out, w2, (1, 1),
                                       ((1, 1), (1, 1)), dimension_numbers=dn)
    ident = x if stride == 1 else x[:, :, ::stride, ::stride]
    return out + ident


if __name__ == "__main__":
    # Small shapes consistent with the module: N=2, in_=out_=4, H=W=16.
    N, C, H, W = 2, 4, 16, 16
    key = jax.random.PRNGKey(0)
    kx, k1, k2 = jax.random.split(key, 3)

    x = jax.random.normal(kx, (N, C, H, W), dtype=jnp.float32)
    fan_in = C * 3 * 3
    w1 = jax.random.normal(k1, (C, C, 3, 3), dtype=jnp.float32) * (2.0 / fan_in) ** 0.5
    w2 = jax.random.normal(k2, (C, C, 3, 3), dtype=jnp.float32) * (2.0 / fan_in) ** 0.5

    ref1 = _ref_block(x, w1, w2, stride=1)
    ref2 = _ref_block(x, w1, w2, stride=2)

    # Exactness check of the algorithm with f32 matmul operands.
    out_f32 = jax.block_until_ready(
        res_basic_block_preact(x, w1, w2, stride=1, matmul_dtype=jnp.float32))
    assert out_f32.shape == (N, C, H, W)
    assert jnp.allclose(out_f32, ref1, atol=5e-4, rtol=5e-4), "mismatch (f32, stride=1)"

    # Default perf path: bf16 MXU operands, f32 accumulation / statistics.
    out1 = jax.block_until_ready(res_basic_block_preact(x, w1, w2, stride=1))
    assert jnp.allclose(out1, ref1, atol=1e-1, rtol=1e-1), "mismatch (bf16, stride=1)"
    assert float(jnp.mean(jnp.abs(out1 - ref1))) < 1e-2

    out2 = jax.block_until_ready(res_basic_block_preact(x, w1, w2, stride=2))
    assert out2.shape == ref2.shape
    assert jnp.allclose(out2, ref2, atol=1e-1, rtol=1e-1), "mismatch (bf16, stride=2)"

    print("KERNEL_OK")
</pallas_src>

<mosaic_0001>
module attributes {stable_mosaic.version = 11 : i64} {
  func.func @_bnrelu_conv_stats_kernel(%arg0: i32, %arg1: memref<1x16x16x128xf32, #tpu.memory_space<vmem>>, %arg2: memref<2x128xf32, #tpu.memory_space<vmem>>, %arg3: memref<1152x128xf32, #tpu.memory_space<vmem>>, %arg4: memref<1x16x16x128xf32, #tpu.memory_space<vmem>>, %arg5: memref<1x2x128xf32, #tpu.memory_space<vmem>>, %arg6: memref<1x18x18x128xf32, #tpu.memory_space<vmem>>) attributes {dimension_semantics = [#tpu.dimension_semantics<parallel>], iteration_bounds = array<i64: 2>, scalar_prefetch = 0 : i64, scratch_operands = 1 : i64, tpu.core_type = #tpu.core_type<tc>, window_params = [{transform_indices = @transform_0, window_bounds = array<i64: 1, 16, 16, 128>}, {pipeline_mode = #tpu.pipeline_mode<synchronous>, transform_indices = @transform_1, window_bounds = array<i64: 2, 128>}, {pipeline_mode = #tpu.pipeline_mode<synchronous>, transform_indices = @transform_2, window_bounds = array<i64: 1152, 128>}, {transform_indices = @transform_3, window_bounds = array<i64: 1, 16, 16, 128>}, {transform_indices = @transform_4, window_bounds = array<i64: 1, 2, 128>}]} {
    %c0 = arith.constant 0 : index
    %c0_0 = arith.constant 0 : index
    %0 = vector.load %arg2[%c0, %c0_0] : memref<2x128xf32, #tpu.memory_space<vmem>>, vector<1x128xf32>
    %1 = vector.shape_cast %0 : vector<1x128xf32> to vector<1x1x1x128xf32>
    %c1 = arith.constant 1 : index
    %c0_1 = arith.constant 0 : index
    %2 = vector.load %arg2[%c1, %c0_1] : memref<2x128xf32, #tpu.memory_space<vmem>>, vector<1x128xf32>
    %3 = vector.shape_cast %2 : vector<1x128xf32> to vector<1x1x1x128xf32>
    %c0_2 = arith.constant 0 : index
    %c0_3 = arith.constant 0 : index
    %c0_4 = arith.constant 0 : index
    %c0_5 = arith.constant 0 : index
    %4 = vector.load %arg1[%c0_2, %c0_3, %c0_4, %c0_5] : memref<1x16x16x128xf32, #tpu.memory_space<vmem>>, vector<1x16x16x128xf32>
    %5 = vector.broadcast %1 : vector<1x1x1x128xf32> to vector<1x16x16x128xf32>
    %6 = arith.subf %4, %5 : vector<1x16x16x128xf32>
    %7 = vector.broadcast %3 : vector<1x1x1x128xf32> to vector<1x16x16x128xf32>
    %8 = arith.mulf %6, %7 : vector<1x16x16x128xf32>
    %cst = arith.constant 0.000000e+00 : f32
    %9 = vector.broadcast %cst : f32 to vector<1x16x16x128xf32>
    %10 = arith.maximumf %8, %9 : vector<1x16x16x128xf32>
    %cst_6 = arith.constant 0.000000e+00 : f32
    %11 = vector.broadcast %cst_6 : f32 to vector<1x1x18x128xf32>
    %cst_7 = arith.constant 0.000000e+00 : f32
    %12 = vector.broadcast %cst_7 : f32 to vector<1x18x1x128xf32>
    %c0_8 = arith.constant 0 : index
    %c0_9 = arith.constant 0 : index
    %c0_10 = arith.constant 0 : index
    %c0_11 = arith.constant 0 : index
    %13 = vector.load %arg6[%c0_8, %c0_9, %c0_10, %c0_11] : memref<1x18x18x128xf32, #tpu.memory_space<vmem>>, vector<1x1x18x128xf32>
    tpu.vector_store %arg6[%c0_8, %c0_9, %c0_10, %c0_11], %11 {strides = array<i32>} : memref<1x18x18x128xf32, #tpu.memory_space<vmem>>, vector<1x1x18x128xf32>,
    %c0_12 = arith.constant 0 : index
    %c17 = arith.constant 17 : index
    %c0_13 = arith.constant 0 : index
    %c0_14 = arith.constant 0 : index
    %14 = vector.load %arg6[%c0_12, %c17, %c0_13, %c0_14] : memref<1x18x18x128xf32, #tpu.memory_space<vmem>>, vector<1x1x18x128xf32>
    tpu.vector_store %arg6[%c0_12, %c17, %c0_13, %c0_14], %11 {strides = array<i32>} : memref<1x18x18x128xf32, #tpu.memory_space<vmem>>, vector<1x1x18x128xf32>,
    %c0_15 = arith.constant 0 : index
    %c0_16 = arith.constant 0 : index
    %c0_17 = arith.constant 0 : index
    %c0_18 = arith.constant 0 : index
    %15 = vector.load %arg6[%c0_15, %c0_16, %c0_17, %c0_18] : memref<1x18x18x128xf32, #tpu.memory_space<vmem>>, vector<1x18x1x128xf32>
    tpu.vector_store %arg6[%c0_15, %c0_16, %c0_17, %c0_18], %12 {strides = array<i32>} : memref<1x18x18x128xf32, #tpu.memory_space<vmem>>, vector<1x18x1x128xf32>,
    %c0_19 = arith.constant 0 : index
    %c0_20 = arith.constant 0 : index
    %c17_21 = arith.constant 17 : index
    %c0_22 = arith.constant 0 : index
    %16 = vector.load %arg6[%c0_19, %c0_20, %c17_21, %c0_22] : memref<1x18x18x128xf32, #tpu.memory_space<vmem>>, vector<1x18x1x128xf32>
    tpu.vector_store %arg6[%c0_19, %c0_20, %c17_21, %c0_22], %12 {strides = array<i32>} : memref<1x18x18x128xf32, #tpu.memory_space<vmem>>, vector<1x18x1x128xf32>,
    %c0_23 = arith.constant 0 : index
    %c1_24 = arith.constant 1 : index
    %c1_25 = arith.constant 1 : index
    %c0_26 = arith.constant 0 : index
    %17 = vector.load %arg6[%c0_23, %c1_24, %c1_25, %c0_26] : memref<1x18x18x128xf32, #tpu.memory_space<vmem>>, vector<1x16x16x128xf32>
    tpu.vector_store %arg6[%c0_23, %c1_24, %c1_25, %c0_26], %10 {strides = array<i32>} : memref<1x18x18x128xf32, #tpu.memory_space<vmem>>, vector<1x16x16x128xf32>,
    %cst_27 = arith.constant 0.000000e+00 : f32
    %18 = vector.broadcast %cst_27 : f32 to vector<1x128xf32>
    %c0_i32 = arith.constant 0 : i32
    %c8_i32 = arith.constant 8 : i32
    %19 = arith.muli %c0_i32, %c8_i32 : i32
    %20 = tpu.assume_multiple %19, 8 : i32
    %c0_i32_28 = arith.constant 0 : i32
    %21 = arith.addi %20, %c0_i32_28 : i32
    %c0_29 = arith.constant 0 : index
    %22 = arith.index_cast %21 : i32 to index
    %c0_30 = arith.constant 0 : index
    %c0_31 = arith.constant 0 : index
    %23 = vector.load %arg6[%c0_29, %22, %c0_30, %c0_31] : memref<1x18x18x128xf32, #tpu.memory_space<vmem>>, vector<1x8x16x128xf32>
    %c0_i32_32 = arith.constant 0 : i32
    %24 = arith.addi %20, %c0_i32_32 : i32
    %c0_33 = arith.constant 0 : index
    %25 = arith.index_cast %24 : i32 to index
    %c1_34 = arith.constant 1 : index
    %c0_35 = arith.constant 0 : index
    %26 = vector.load %arg6[%c0_33, %25, %c1_34, %c0_35] : memref<1x18x18x128xf32, #tpu.memory_space<vmem>>, vector<1x8x16x128xf32>
    %c0_i32_36 = arith.constant 0 : i32
    %27 = arith.addi %20, %c0_i32_36 : i32
    %c0_37 = arith.constant 0 : index
    %28 = arith.index_cast %27 : i32 to index
    %c2 = arith.constant 2 : index
    %c0_38 = arith.constant 0 : index
    %29 = vector.load %arg6[%c0_37, %28, %c2, %c0_38] : memref<1x18x18x128xf32, #tpu.memory_space<vmem>>, vector<1x8x16x128xf32>
    %c1_i32 = arith.constant 1 : i32
    %30 = arith.addi %20, %c1_i32 : i32
    %c0_39 = arith.constant 0 : index
    %31 = arith.index_cast %30 : i32 to index
    %c0_40 = arith.constant 0 : index
    %c0_41 = arith.constant 0 : index
    %32 = vector.load %arg6[%c0_39, %31, %c0_40, %c0_41] : memref<1x18x18x128xf32, #tpu.memory_space<vmem>>, vector<1x8x16x128xf32>
    %c1_i32_42 = arith.constant 1 : i32
    %33 = arith.addi %20, %c1_i32_42 : i32
    %c0_43 = arith.constant 0 : index
    %34 = arith.index_cast %33 : i32 to index
    %c1_44 = arith.constant 1 : index
    %c0_45 = arith.constant 0 : index
    %35 = vector.load %arg6[%c0_43, %34, %c1_44, %c0_45] : memref<1x18x18x128xf32, #tpu.memory_space<vmem>>, vector<1x8x16x128xf32>
    %c1_i32_46 = arith.constant 1 : i32
    %36 = arith.addi %20, %c1_i32_46 : i32
    %c0_47 = arith.constant 0 : index
    %37 = arith.index_cast %36 : i32 to index
    %c2_48 = arith.constant 2 : index
    %c0_49 = arith.constant 0 : index
    %38 = vector.load %arg6[%c0_47, %37, %c2_48, %c0_49] : memref<1x18x18x128xf32, #tpu.memory_space<vmem>>, vector<1x8x16x128xf32>
    %c2_i32 = arith.constant 2 : i32
    %39 = arith.addi %20, %c2_i32 : i32
    %c0_50 = arith.constant 0 : index
    %40 = arith.index_cast %39 : i32 to index
    %c0_51 = arith.constant 0 : index
    %c0_52 = arith.constant 0 : index
    %41 = vector.load %arg6[%c0_50, %40, %c0_51, %c0_52] : memref<1x18x18x128xf32, #tpu.memory_space<vmem>>, vector<1x8x16x128xf32>
    %c2_i32_53 = arith.constant 2 : i32
    %42 = arith.addi %20, %c2_i32_53 : i32
    %c0_54 = arith.constant 0 : index
    %43 = arith.index_cast %42 : i32 to index
    %c1_55 = arith.constant 1 : index
    %c0_56 = arith.constant 0 : index
    %44 = vector.load %arg6[%c0_54, %43, %c1_55, %c0_56] : memref<1x18x18x128xf32, #tpu.memory_space<vmem>>, vector<1x8x16x128xf32>
    %c2_i32_57 = arith.constant 2 : i32
    %45 = arith.addi %20, %c2_i32_57 : i32
    %c0_58 = arith.constant 0 : index
    %46 = arith.index_cast %45 : i32 to index
    %c2_59 = arith.constant 2 : index
    %c0_60 = arith.constant 0 : index
    %47 = vector.load %arg6[%c0_58, %46, %c2_59, %c0_60] : memref<1x18x18x128xf32, #tpu.memory_space<vmem>>, vector<1x8x16x128xf32>
    %48 = tpu.concatenate %23, %26, %29, %32, %35, %38, %41, %44, %47 in 3 : vector<1x8x16x128xf32>, vector<1x8x16x128xf32>, vector<1x8x16x128xf32>, vector<1x8x16x128xf32>, vector<1x8x16x128xf32>, vector<1x8x16x128xf32>, vector<1x8x16x128xf32>, vector<1x8x16x128xf32>, vector<1x8x16x128xf32> -> vector<1x8x16x1152xf32>
    %49 = vector.shape_cast %48 : vector<1x8x16x1152xf32> to vector<128x1152xf32>
    %c0_61 = arith.constant 0 : index
    %c0_62 = arith.constant 0 : index
    %50 = vector.load %arg3[%c0_61, %c0_62] : memref<1152x128xf32, #tpu.memory_space<vmem>>, vector<1152x128xf32>
    %cst_63 = arith.constant dense<0.000000e+00> : vector<128x128xf32>
    %51 = tpu.matmul %49, %50, %cst_63 {dimension_numbers = #tpu.dot_dimension_numbers<[1], [0], [0], [1], [0, 0, 1, 1], [], []>} : vector<128x1152xf32>, vector<1152x128xf32>, vector<128x128xf32> -> vector<128x128xf32>
    %52 = vector.shape_cast %51 : vector<128x128xf32> to vector<1x8x16x128xf32>
    %c0_64 = arith.constant 0 : index
    %53 = arith.index_cast %20 : i32 to index
    %c0_65 = arith.constant 0 : index
    %c0_66 = arith.constant 0 : index
    %54 = vector.load %arg4[%c0_64, %53, %c0_65, %c0_66] : memref<1x16x16x128xf32, #tpu.memory_space<vmem>>, vector<1x8x16x128xf32>
    tpu.vector_store %arg4[%c0_64, %53, %c0_65, %c0_66], %52 {strides = array<i32>} : memref<1x16x16x128xf32, #tpu.memory_space<vmem>>, vector<1x8x16x128xf32>,
    %cst_67 = arith.constant dense<0.000000e+00> : vector<128xf32>
    %55 = vector.multi_reduction <add>, %51, %cst_67 [0] : vector<128x128xf32> to vector<128xf32>
    %56 = vector.shape_cast %55 : vector<128xf32> to vector<1x128xf32>
    %57 = arith.addf %18, %56 : vector<1x128xf32>
    %58 = arith.mulf %51, %51 : vector<128x128xf32>
    %cst_68 = arith.constant dense<0.000000e+00> : vector<128xf32>
    %59 = vector.multi_reduction <add>, %58, %cst_68 [0] : vector<128x128xf32> to vector<128xf32>
    %60 = vector.shape_cast %59 : vector<128xf32> to vector<1x128xf32>
    %61 = arith.addf %18, %60 : vector<1x128xf32>
    %c1_i32_69 = arith.constant 1 : i32
    %c8_i32_70 = arith.constant 8 : i32
    %62 = arith.muli %c1_i32_69, %c8_i32_70 : i32
    %63 = tpu.assume_multiple %62, 8 : i32
    %c0_i32_71 = arith.constant 0 : i32
    %64 = arith.addi %63, %c0_i32_71 : i32
    %c0_72 = arith.constant 0 : index
    %65 = arith.index_cast %64 : i32 to index
    %c0_73 = arith.constant 0 : index
    %c0_74 = arith.constant 0 : index
    %66 = vector.load %arg6[%c0_72, %65, %c0_73, %c0_74] : memref<1x18x18x128xf32, #tpu.memory_space<vmem>>, vector<1x8x16x128xf32>
    %c0_i32_75 = arith.constant 0 : i32
    %67 = arith.addi %63, %c0_i32_75 : i32
    %c0_76 = arith.constant 0 : index
    %68 = arith.index_cast %67 : i32 to index
    %c1_77 = arith.constant 1 : index
    %c0_78 = arith.constant 0 : index
    %69 = vector.load %arg6[%c0_76, %68, %c1_77, %c0_78] : memref<1x18x18x128xf32, #tpu.memory_space<vmem>>, vector<1x8x16x128xf32>
    %c0_i32_79 = arith.constant 0 : i32
    %70 = arith.addi %63, %c0_i32_79 : i32
    %c0_80 = arith.constant 0 : index
    %71 = arith.index_cast %70 : i32 to index
    %c2_81 = arith.constant 2 : index
    %c0_82 = arith.constant 0 : index
    %72 = vector.load %arg6[%c0_80, %71, %c2_81, %c0_82] : memref<1x18x18x128xf32, #tpu.memory_space<vmem>>, vector<1x8x16x128xf32>
    %c1_i32_83 = arith.constant 1 : i32
    %73 = arith.addi %63, %c1_i32_83 : i32
    %c0_84 = arith.constant 0 : index
    %74 = arith.index_cast %73 : i32 to index
    %c0_85 = arith.constant 0 : index
    %c0_86 = arith.constant 0 : index
    %75 = vector.load %arg6[%c0_84, %74, %c0_85, %c0_86] : memref<1x18x18x128xf32, #tpu.memory_space<vmem>>, vector<1x8x16x128xf32>
    %c1_i32_87 = arith.constant 1 : i32
    %76 = arith.addi %63, %c1_i32_87 : i32
    %c0_88 = arith.constant 0 : index
    %77 = arith.index_cast %76 : i32 to index
    %c1_89 = arith.constant 1 : index
    %c0_90 = arith.constant 0 : index
    %78 = vector.load %arg6[%c0_88, %77, %c1_89, %c0_90] : memref<1x18x18x128xf32, #tpu.memory_space<vmem>>, vector<1x8x16x128xf32>
    %c1_i32_91 = arith.constant 1 : i32
    %79 = arith.addi %63, %c1_i32_91 : i32
    %c0_92 = arith.constant 0 : index
    %80 = arith.index_cast %79 : i32 to index
    %c2_93 = arith.constant 2 : index
    %c0_94 = arith.constant 0 : index
    %81 = vector.load %arg6[%c0_92, %80, %c2_93, %c0_94] : memref<1x18x18x128xf32, #tpu.memory_space<vmem>>, vector<1x8x16x128xf32>
    %c2_i32_95 = arith.constant 2 : i32
    %82 = arith.addi %63, %c2_i32_95 : i32
    %c0_96 = arith.constant 0 : index
    %83 = arith.index_cast %82 : i32 to index
    %c0_97 = arith.constant 0 : index
    %c0_98 = arith.constant 0 : index
    %84 = vector.load %arg6[%c0_96, %83, %c0_97, %c0_98] : memref<1x18x18x128xf32, #tpu.memory_space<vmem>>, vector<1x8x16x128xf32>
    %c2_i32_99 = arith.constant 2 : i32
    %85 = arith.addi %63, %c2_i32_99 : i32
    %c0_100 = arith.constant 0 : index
    %86 = arith.index_cast %85 : i32 to index
    %c1_101 = arith.constant 1 : index
    %c0_102 = arith.constant 0 : index
    %87 = vector.load %arg6[%c0_100, %86, %c1_101, %c0_102] : memref<1x18x18x128xf32, #tpu.memory_space<vmem>>, vector<1x8x16x128xf32>
    %c2_i32_103 = arith.constant 2 : i32
    %88 = arith.addi %63, %c2_i32_103 : i32
    %c0_104 = arith.constant 0 : index
    %89 = arith.index_cast %88 : i32 to index
    %c2_105 = arith.constant 2 : index
    %c0_106 = arith.constant 0 : index
    %90 = vector.load %arg6[%c0_104, %89, %c2_105, %c0_106] : memref<1x18x18x128xf32, #tpu.memory_space<vmem>>, vector<1x8x16x128xf32>
    %91 = tpu.concatenate %66, %69, %72, %75, %78, %81, %84, %87, %90 in 3 : vector<1x8x16x128xf32>, vector<1x8x16x128xf32>, vector<1x8x16x128xf32>, vector<1x8x16x128xf32>, vector<1x8x16x128xf32>, vector<1x8x16x128xf32>, vector<1x8x16x128xf32>, vector<1x8x16x128xf32>, vector<1x8x16x128xf32> -> vector<1x8x16x1152xf32>
    %92 = vector.shape_cast %91 : vector<1x8x16x1152xf32> to vector<128x1152xf32>
    %c0_107 = arith.constant 0 : index
    %c0_108 = arith.constant 0 : index
    %93 = vector.load %arg3[%c0_107, %c0_108] : memref<1152x128xf32, #tpu.memory_space<vmem>>, vector<1152x128xf32>
    %cst_109 = arith.constant dense<0.000000e+00> : vector<128x128xf32>
    %94 = tpu.matmul %92, %93, %cst_109 {dimension_numbers = #tpu.dot_dimension_numbers<[1], [0], [0], [1], [0, 0, 1, 1], [], []>} : vector<128x1152xf32>, vector<1152x128xf32>, vector<128x128xf32> -> vector<128x128xf32>
    %95 = vector.shape_cast %94 : vector<128x128xf32> to vector<1x8x16x128xf32>
    %c0_110 = arith.constant 0 : index
    %96 = arith.index_cast %63 : i32 to index
    %c0_111 = arith.constant 0 : index
    %c0_112 = arith.constant 0 : index
    %97 = vector.load %arg4[%c0_110, %96, %c0_111, %c0_112] : memref<1x16x16x128xf32, #tpu.memory_space<vmem>>, vector<1x8x16x128xf32>
    tpu.vector_store %arg4[%c0_110, %96, %c0_111, %c0_112], %95 {strides = array<i32>} : memref<1x16x16x128xf32, #tpu.memory_space<vmem>>, vector<1x8x16x128xf32>,
    %cst_113 = arith.constant dense<0.000000e+00> : vector<128xf32>
    %98 = vector.multi_reduction <add>, %94, %cst_113 [0] : vector<128x128xf32> to vector<128xf32>
    %99 = vector.shape_cast %98 : vector<128xf32> to vector<1x128xf32>
    %100 = arith.addf %57, %99 : vector<1x128xf32>
    %101 = arith.mulf %94, %94 : vector<128x128xf32>
    %cst_114 = arith.constant dense<0.000000e+00> : vector<128xf32>
    %102 = vector.multi_reduction <add>, %101, %cst_114 [0] : vector<128x128xf32> to vector<128xf32>
    %103 = vector.shape_cast %102 : vector<128xf32> to vector<1x128xf32>
    %104 = arith.addf %61, %103 : vector<1x128xf32>
    %c2_i32_115 = arith.constant 2 : i32
    %105 = tpu.concatenate %100, %104 in 0 : vector<1x128xf32>, vector<1x128xf32> -> vector<2x128xf32>
    %106 = vector.shape_cast %105 : vector<2x128xf32> to vector<1x2x128xf32>
    %c0_116 = arith.constant 0 : index
    %c0_117 = arith.constant 0 : index
    %c0_118 = arith.constant 0 : index
    %107 = vector.load %arg5[%c0_116, %c0_117, %c0_118] : memref<1x2x128xf32, #tpu.memory_space<vmem>>, vector<1x2x128xf32>
    tpu.vector_store %arg5[%c0_116, %c0_117, %c0_118], %106 {strides = array<i32>} : memref<1x2x128xf32, #tpu.memory_space<vmem>>, vector<1x2x128xf32>,
    return
  }
  func.func @transform_0(%arg0: i32) -> (i32, i32, i32, i32) {
    %c0_i32 = arith.constant 0 : i32
    %c0_i32_0 = arith.constant 0 : i32
    %c0_i32_1 = arith.constant 0 : i32
    %c0_i32_2 = arith.constant 0 : i32
    return %arg0, %c0_i32, %c0_i32_0, %c0_i32_1 : i32, i32, i32, i32
  }
  func.func @transform_1(%arg0: i32) -> (i32, i32) {
    %c0_i32 = arith.constant 0 : i32
    %c0_i32_0 = arith.constant 0 : i32
    %c0_i32_1 = arith.constant 0 : i32
    return %c0_i32, %c0_i32_0 : i32, i32
  }
  func.func @transform_2(%arg0: i32) -> (i32, i32) {
    %c0_i32 = arith.constant 0 : i32
    %c0_i32_0 = arith.constant 0 : i32
    %c0_i32_1 = arith.constant 0 : i32
    return %c0_i32, %c0_i32_0 : i32, i32
  }
  func.func @transform_3(%arg0: i32) -> (i32, i32, i32, i32) {
    %c0_i32 = arith.constant 0 : i32
    %c0_i32_0 = arith.constant 0 : i32
    %c0_i32_1 = arith.constant 0 : i32
    %c0_i32_2 = arith.constant 0 : i32
    return %arg0, %c0_i32, %c0_i32_0, %c0_i32_1 : i32, i32, i32, i32
  }
  func.func @transform_4(%arg0: i32) -> (i32, i32, i32) {
    %c0_i32 = arith.constant 0 : i32
    %c0_i32_0 = arith.constant 0 : i32
    %c0_i32_1 = arith.constant 0 : i32
    return %arg0, %c0_i32, %c0_i32_0 : i32, i32, i32
  }
}

module attributes {stable_mosaic.version = 11 : i64} {
  func.func @_bnrelu_conv_add_kernel(%arg0: i32, %arg1: memref<1x16x16x128xf32, #tpu.memory_space<vmem>>, %arg2: memref<2x128xf32, #tpu.memory_space<vmem>>, %arg3: memref<1152x128xf32, #tpu.memory_space<vmem>>, %arg4: memref<1x16x16x128xf32, #tpu.memory_space<vmem>>, %arg5: memref<1x16x16x128xf32, #tpu.memory_space<vmem>>, %arg6: memref<1x18x18x128xf32, #tpu.memory_space<vmem>>) attributes {dimension_semantics = [#tpu.dimension_semantics<parallel>], iteration_bounds = array<i64: 2>, scalar_prefetch = 0 : i64, scratch_operands = 1 : i64, tpu.core_type = #tpu.core_type<tc>, window_params = [{transform_indices = @transform_0, window_bounds = array<i64: 1, 16, 16, 128>}, {pipeline_mode = #tpu.pipeline_mode<synchronous>, transform_indices = @transform_1, window_bounds = array<i64: 2, 128>}, {pipeline_mode = #tpu.pipeline_mode<synchronous>, transform_indices = @transform_2, window_bounds = array<i64: 1152, 128>}, {transform_indices = @transform_3, window_bounds = array<i64: 1, 16, 16, 128>}, {transform_indices = @transform_4, window_bounds = array<i64: 1, 16, 16, 128>}]} {
    %c0 = arith.constant 0 : index
    %c0_0 = arith.constant 0 : index
    %0 = vector.load %arg2[%c0, %c0_0] : memref<2x128xf32, #tpu.memory_space<vmem>>, vector<1x128xf32>
    %1 = vector.shape_cast %0 : vector<1x128xf32> to vector<1x1x1x128xf32>
    %c1 = arith.constant 1 : index
    %c0_1 = arith.constant 0 : index
    %2 = vector.load %arg2[%c1, %c0_1] : memref<2x128xf32, #tpu.memory_space<vmem>>, vector<1x128xf32>
    %3 = vector.shape_cast %2 : vector<1x128xf32> to vector<1x1x1x128xf32>
    %c0_2 = arith.constant 0 : index
    %c0_3 = arith.constant 0 : index
    %c0_4 = arith.constant 0 : index
    %c0_5 = arith.constant 0 : index
    %4 = vector.load %arg1[%c0_2, %c0_3, %c0_4, %c0_5] : memref<1x16x16x128xf32, #tpu.memory_space<vmem>>, vector<1x16x16x128xf32>
    %5 = vector.broadcast %1 : vector<1x1x1x128xf32> to vector<1x16x16x128xf32>
    %6 = arith.subf %4, %5 : vector<1x16x16x128xf32>
    %7 = vector.broadcast %3 : vector<1x1x1x128xf32> to vector<1x16x16x128xf32>
    %8 = arith.mulf %6, %7 : vector<1x16x16x128xf32>
    %cst = arith.constant 0.000000e+00 : f32
    %9 = vector.broadcast %cst : f32 to vector<1x16x16x128xf32>
    %10 = arith.maximumf %8, %9 : vector<1x16x16x128xf32>
    %cst_6 = arith.constant 0.000000e+00 : f32
    %11 = vector.broadcast %cst_6 : f32 to vector<1x1x18x128xf32>
    %cst_7 = arith.constant 0.000000e+00 : f32
    %12 = vector.broadcast %cst_7 : f32 to vector<1x18x1x128xf32>
    %c0_8 = arith.constant 0 : index
    %c0_9 = arith.constant 0 : index
    %c0_10 = arith.constant 0 : index
    %c0_11 = arith.constant 0 : index
    %13 = vector.load %arg6[%c0_8, %c0_9, %c0_10, %c0_11] : memref<1x18x18x128xf32, #tpu.memory_space<vmem>>, vector<1x1x18x128xf32>
    tpu.vector_store %arg6[%c0_8, %c0_9, %c0_10, %c0_11], %11 {strides = array<i32>} : memref<1x18x18x128xf32, #tpu.memory_space<vmem>>, vector<1x1x18x128xf32>,
    %c0_12 = arith.constant 0 : index
    %c17 = arith.constant 17 : index
    %c0_13 = arith.constant 0 : index
    %c0_14 = arith.constant 0 : index
    %14 = vector.load %arg6[%c0_12, %c17, %c0_13, %c0_14] : memref<1x18x18x128xf32, #tpu.memory_space<vmem>>, vector<1x1x18x128xf32>
    tpu.vector_store %arg6[%c0_12, %c17, %c0_13, %c0_14], %11 {strides = array<i32>} : memref<1x18x18x128xf32, #tpu.memory_space<vmem>>, vector<1x1x18x128xf32>,
    %c0_15 = arith.constant 0 : index
    %c0_16 = arith.constant 0 : index
    %c0_17 = arith.constant 0 : index
    %c0_18 = arith.constant 0 : index
    %15 = vector.load %arg6[%c0_15, %c0_16, %c0_17, %c0_18] : memref<1x18x18x128xf32, #tpu.memory_space<vmem>>, vector<1x18x1x128xf32>
    tpu.vector_store %arg6[%c0_15, %c0_16, %c0_17, %c0_18], %12 {strides = array<i32>} : memref<1x18x18x128xf32, #tpu.memory_space<vmem>>, vector<1x18x1x128xf32>,
    %c0_19 = arith.constant 0 : index
    %c0_20 = arith.constant 0 : index
    %c17_21 = arith.constant 17 : index
    %c0_22 = arith.constant 0 : index
    %16 = vector.load %arg6[%c0_19, %c0_20, %c17_21, %c0_22] : memref<1x18x18x128xf32, #tpu.memory_space<vmem>>, vector<1x18x1x128xf32>
    tpu.vector_store %arg6[%c0_19, %c0_20, %c17_21, %c0_22], %12 {strides = array<i32>} : memref<1x18x18x128xf32, #tpu.memory_space<vmem>>, vector<1x18x1x128xf32>,
    %c0_23 = arith.constant 0 : index
    %c1_24 = arith.constant 1 : index
    %c1_25 = arith.constant 1 : index
    %c0_26 = arith.constant 0 : index
    %17 = vector.load %arg6[%c0_23, %c1_24, %c1_25, %c0_26] : memref<1x18x18x128xf32, #tpu.memory_space<vmem>>, vector<1x16x16x128xf32>
    tpu.vector_store %arg6[%c0_23, %c1_24, %c1_25, %c0_26], %10 {strides = array<i32>} : memref<1x18x18x128xf32, #tpu.memory_space<vmem>>, vector<1x16x16x128xf32>,
    %c0_i32 = arith.constant 0 : i32
    %c8_i32 = arith.constant 8 : i32
    %18 = arith.muli %c0_i32, %c8_i32 : i32
    %19 = tpu.assume_multiple %18, 8 : i32
    %c0_i32_27 = arith.constant 0 : i32
    %20 = arith.addi %19, %c0_i32_27 : i32
    %c0_28 = arith.constant 0 : index
    %21 = arith.index_cast %20 : i32 to index
    %c0_29 = arith.constant 0 : index
    %c0_30 = arith.constant 0 : index
    %22 = vector.load %arg6[%c0_28, %21, %c0_29, %c0_30] : memref<1x18x18x128xf32, #tpu.memory_space<vmem>>, vector<1x8x16x128xf32>
    %c0_i32_31 = arith.constant 0 : i32
    %23 = arith.addi %19, %c0_i32_31 : i32
    %c0_32 = arith.constant 0 : index
    %24 = arith.index_cast %23 : i32 to index
    %c1_33 = arith.constant 1 : index
    %c0_34 = arith.constant 0 : index
    %25 = vector.load %arg6[%c0_32, %24, %c1_33, %c0_34] : memref<1x18x18x128xf32, #tpu.memory_space<vmem>>, vector<1x8x16x128xf32>
    %c0_i32_35 = arith.constant 0 : i32
    %26 = arith.addi %19, %c0_i32_35 : i32
    %c0_36 = arith.constant 0 : index
    %27 = arith.index_cast %26 : i32 to index
    %c2 = arith.constant 2 : index
    %c0_37 = arith.constant 0 : index
    %28 = vector.load %arg6[%c0_36, %27, %c2, %c0_37] : memref<1x18x18x128xf32, #tpu.memory_space<vmem>>, vector<1x8x16x128xf32>
    %c1_i32 = arith.constant 1 : i32
    %29 = arith.addi %19, %c1_i32 : i32
    %c0_38 = arith.constant 0 : index
    %30 = arith.index_cast %29 : i32 to index
    %c0_39 = arith.constant 0 : index
    %c0_40 = arith.constant 0 : index
    %31 = vector.load %arg6[%c0_38, %30, %c0_39, %c0_40] : memref<1x18x18x128xf32, #tpu.memory_space<vmem>>, vector<1x8x16x128xf32>
    %c1_i32_41 = arith.constant 1 : i32
    %32 = arith.addi %19, %c1_i32_41 : i32
    %c0_42 = arith.constant 0 : index
    %33 = arith.index_cast %32 : i32 to index
    %c1_43 = arith.constant 1 : index
    %c0_44 = arith.constant 0 : index
    %34 = vector.load %arg6[%c0_42, %33, %c1_43, %c0_44] : memref<1x18x18x128xf32, #tpu.memory_space<vmem>>, vector<1x8x16x128xf32>
    %c1_i32_45 = arith.constant 1 : i32
    %35 = arith.addi %19, %c1_i32_45 : i32
    %c0_46 = arith.constant 0 : index
    %36 = arith.index_cast %35 : i32 to index
    %c2_47 = arith.constant 2 : index
    %c0_48 = arith.constant 0 : index
    %37 = vector.load %arg6[%c0_46, %36, %c2_47, %c0_48] : memref<1x18x18x128xf32, #tpu.memory_space<vmem>>, vector<1x8x16x128xf32>
    %c2_i32 = arith.constant 2 : i32
    %38 = arith.addi %19, %c2_i32 : i32
    %c0_49 = arith.constant 0 : index
    %39 = arith.index_cast %38 : i32 to index
    %c0_50 = arith.constant 0 : index
    %c0_51 = arith.constant 0 : index
    %40 = vector.load %arg6[%c0_49, %39, %c0_50, %c0_51] : memref<1x18x18x128xf32, #tpu.memory_space<vmem>>, vector<1x8x16x128xf32>
    %c2_i32_52 = arith.constant 2 : i32
    %41 = arith.addi %19, %c2_i32_52 : i32
    %c0_53 = arith.constant 0 : index
    %42 = arith.index_cast %41 : i32 to index
    %c1_54 = arith.constant 1 : index
    %c0_55 = arith.constant 0 : index
    %43 = vector.load %arg6[%c0_53, %42, %c1_54, %c0_55] : memref<1x18x18x128xf32, #tpu.memory_space<vmem>>, vector<1x8x16x128xf32>
    %c2_i32_56 = arith.constant 2 : i32
    %44 = arith.addi %19, %c2_i32_56 : i32
    %c0_57 = arith.constant 0 : index
    %45 = arith.index_cast %44 : i32 to index
    %c2_58 = arith.constant 2 : index
    %c0_59 = arith.constant 0 : index
    %46 = vector.load %arg6[%c0_57, %45, %c2_58, %c0_59] : memref<1x18x18x128xf32, #tpu.memory_space<vmem>>, vector<1x8x16x128xf32>
    %47 = tpu.concatenate %22, %25, %28, %31, %34, %37, %40, %43, %46 in 3 : vector<1x8x16x128xf32>, vector<1x8x16x128xf32>, vector<1x8x16x128xf32>, vector<1x8x16x128xf32>, vector<1x8x16x128xf32>, vector<1x8x16x128xf32>, vector<1x8x16x128xf32>, vector<1x8x16x128xf32>, vector<1x8x16x128xf32> -> vector<1x8x16x1152xf32>
    %48 = vector.shape_cast %47 : vector<1x8x16x1152xf32> to vector<128x1152xf32>
    %c0_60 = arith.constant 0 : index
    %c0_61 = arith.constant 0 : index
    %49 = vector.load %arg3[%c0_60, %c0_61] : memref<1152x128xf32, #tpu.memory_space<vmem>>, vector<1152x128xf32>
    %cst_62 = arith.constant dense<0.000000e+00> : vector<128x128xf32>
    %50 = tpu.matmul %48, %49, %cst_62 {dimension_numbers = #tpu.dot_dimension_numbers<[1], [0], [0], [1], [0, 0, 1, 1], [], []>} : vector<128x1152xf32>, vector<1152x128xf32>, vector<128x128xf32> -> vector<128x128xf32>
    %51 = vector.shape_cast %50 : vector<128x128xf32> to vector<1x8x16x128xf32>
    %c0_63 = arith.constant 0 : index
    %52 = arith.index_cast %19 : i32 to index
    %c0_64 = arith.constant 0 : index
    %c0_65 = arith.constant 0 : index
    %53 = vector.load %arg4[%c0_63, %52, %c0_64, %c0_65] : memref<1x16x16x128xf32, #tpu.memory_space<vmem>>, vector<1x8x16x128xf32>
    %54 = arith.addf %51, %53 : vector<1x8x16x128xf32>
    %c0_66 = arith.constant 0 : index
    %55 = arith.index_cast %19 : i32 to index
    %c0_67 = arith.constant 0 : index
    %c0_68 = arith.constant 0 : index
    %56 = vector.load %arg5[%c0_66, %55, %c0_67, %c0_68] : memref<1x16x16x128xf32, #tpu.memory_space<vmem>>, vector<1x8x16x128xf32>
    tpu.vector_store %arg5[%c0_66, %55, %c0_67, %c0_68], %54 {strides = array<i32>} : memref<1x16x16x128xf32, #tpu.memory_space<vmem>>, vector<1x8x16x128xf32>,
    %c1_i32_69 = arith.constant 1 : i32
    %c8_i32_70 = arith.constant 8 : i32
    %57 = arith.muli %c1_i32_69, %c8_i32_70 : i32
    %58 = tpu.assume_multiple %57, 8 : i32
    %c0_i32_71 = arith.constant 0 : i32
    %59 = arith.addi %58, %c0_i32_71 : i32
    %c0_72 = arith.constant 0 : index
    %60 = arith.index_cast %59 : i32 to index
    %c0_73 = arith.constant 0 : index
    %c0_74 = arith.constant 0 : index
    %61 = vector.load %arg6[%c0_72, %60, %c0_73, %c0_74] : memref<1x18x18x128xf32, #tpu.memory_space<vmem>>, vector<1x8x16x128xf32>
    %c0_i32_75 = arith.constant 0 : i32
    %62 = arith.addi %58, %c0_i32_75 : i32
    %c0_76 = arith.constant 0 : index
    %63 = arith.index_cast %62 : i32 to index
    %c1_77 = arith.constant 1 : index
    %c0_78 = arith.constant 0 : index
    %64 = vector.load %arg6[%c0_76, %63, %c1_77, %c0_78] : memref<1x18x18x128xf32, #tpu.memory_space<vmem>>, vector<1x8x16x128xf32>
    %c0_i32_79 = arith.constant 0 : i32
    %65 = arith.addi %58, %c0_i32_79 : i32
    %c0_80 = arith.constant 0 : index
    %66 = arith.index_cast %65 : i32 to index
    %c2_81 = arith.constant 2 : index
    %c0_82 = arith.constant 0 : index
    %67 = vector.load %arg6[%c0_80, %66, %c2_81, %c0_82] : memref<1x18x18x128xf32, #tpu.memory_space<vmem>>, vector<1x8x16x128xf32>
    %c1_i32_83 = arith.constant 1 : i32
    %68 = arith.addi %58, %c1_i32_83 : i32
    %c0_84 = arith.constant 0 : index
    %69 = arith.index_cast %68 : i32 to index
    %c0_85 = arith.constant 0 : index
    %c0_86 = arith.constant 0 : index
    %70 = vector.load %arg6[%c0_84, %69, %c0_85, %c0_86] : memref<1x18x18x128xf32, #tpu.memory_space<vmem>>, vector<1x8x16x128xf32>
    %c1_i32_87 = arith.constant 1 : i32
    %71 = arith.addi %58, %c1_i32_87 : i32
    %c0_88 = arith.constant 0 : index
    %72 = arith.index_cast %71 : i32 to index
    %c1_89 = arith.constant 1 : index
    %c0_90 = arith.constant 0 : index
    %73 = vector.load %arg6[%c0_88, %72, %c1_89, %c0_90] : memref<1x18x18x128xf32, #tpu.memory_space<vmem>>, vector<1x8x16x128xf32>
    %c1_i32_91 = arith.constant 1 : i32
    %74 = arith.addi %58, %c1_i32_91 : i32
    %c0_92 = arith.constant 0 : index
    %75 = arith.index_cast %74 : i32 to index
    %c2_93 = arith.constant 2 : index
    %c0_94 = arith.constant 0 : index
    %76 = vector.load %arg6[%c0_92, %75, %c2_93, %c0_94] : memref<1x18x18x128xf32, #tpu.memory_space<vmem>>, vector<1x8x16x128xf32>
    %c2_i32_95 = arith.constant 2 : i32
    %77 = arith.addi %58, %c2_i32_95 : i32
    %c0_96 = arith.constant 0 : index
    %78 = arith.index_cast %77 : i32 to index
    %c0_97 = arith.constant 0 : index
    %c0_98 = arith.constant 0 : index
    %79 = vector.load %arg6[%c0_96, %78, %c0_97, %c0_98] : memref<1x18x18x128xf32, #tpu.memory_space<vmem>>, vector<1x8x16x128xf32>
    %c2_i32_99 = arith.constant 2 : i32
    %80 = arith.addi %58, %c2_i32_99 : i32
    %c0_100 = arith.constant 0 : index
    %81 = arith.index_cast %80 : i32 to index
    %c1_101 = arith.constant 1 : index
    %c0_102 = arith.constant 0 : index
    %82 = vector.load %arg6[%c0_100, %81, %c1_101, %c0_102] : memref<1x18x18x128xf32, #tpu.memory_space<vmem>>, vector<1x8x16x128xf32>
    %c2_i32_103 = arith.constant 2 : i32
    %83 = arith.addi %58, %c2_i32_103 : i32
    %c0_104 = arith.constant 0 : index
    %84 = arith.index_cast %83 : i32 to index
    %c2_105 = arith.constant 2 : index
    %c0_106 = arith.constant 0 : index
    %85 = vector.load %arg6[%c0_104, %84, %c2_105, %c0_106] : memref<1x18x18x128xf32, #tpu.memory_space<vmem>>, vector<1x8x16x128xf32>
    %86 = tpu.concatenate %61, %64, %67, %70, %73, %76, %79, %82, %85 in 3 : vector<1x8x16x128xf32>, vector<1x8x16x128xf32>, vector<1x8x16x128xf32>, vector<1x8x16x128xf32>, vector<1x8x16x128xf32>, vector<1x8x16x128xf32>, vector<1x8x16x128xf32>, vector<1x8x16x128xf32>, vector<1x8x16x128xf32> -> vector<1x8x16x1152xf32>
    %87 = vector.shape_cast %86 : vector<1x8x16x1152xf32> to vector<128x1152xf32>
    %c0_107 = arith.constant 0 : index
    %c0_108 = arith.constant 0 : index
    %88 = vector.load %arg3[%c0_107, %c0_108] : memref<1152x128xf32, #tpu.memory_space<vmem>>, vector<1152x128xf32>
    %cst_109 = arith.constant dense<0.000000e+00> : vector<128x128xf32>
    %89 = tpu.matmul %87, %88, %cst_109 {dimension_numbers = #tpu.dot_dimension_numbers<[1], [0], [0], [1], [0, 0, 1, 1], [], []>} : vector<128x1152xf32>, vector<1152x128xf32>, vector<128x128xf32> -> vector<128x128xf32>
    %90 = vector.shape_cast %89 : vector<128x128xf32> to vector<1x8x16x128xf32>
    %c0_110 = arith.constant 0 : index
    %91 = arith.index_cast %58 : i32 to index
    %c0_111 = arith.constant 0 : index
    %c0_112 = arith.constant 0 : index
    %92 = vector.load %arg4[%c0_110, %91, %c0_111, %c0_112] : memref<1x16x16x128xf32, #tpu.memory_space<vmem>>, vector<1x8x16x128xf32>
    %93 = arith.addf %90, %92 : vector<1x8x16x128xf32>
    %c0_113 = arith.constant 0 : index
    %94 = arith.index_cast %58 : i32 to index
    %c0_114 = arith.constant 0 : index
    %c0_115 = arith.constant 0 : index
    %95 = vector.load %arg5[%c0_113, %94, %c0_114, %c0_115] : memref<1x16x16x128xf32, #tpu.memory_space<vmem>>, vector<1x8x16x128xf32>
    tpu.vector_store %arg5[%c0_113, %94, %c0_114, %c0_115], %93 {strides = array<i32>} : memref<1x16x16x128xf32, #tpu.memory_space<vmem>>, vector<1x8x16x128xf32>,
    %c2_i32_116 = arith.constant 2 : i32
    return
  }
  func.func @transform_0(%arg0: i32) -> (i32, i32, i32, i32) {
    %c0_i32 = arith.constant 0 : i32
    %c0_i32_0 = arith.constant 0 : i32
    %c0_i32_1 = arith.constant 0 : i32
    %c0_i32_2 = arith.constant 0 : i32
    return %arg0, %c0_i32, %c0_i32_0, %c0_i32_1 : i32, i32, i32, i32
  }
  func.func @transform_1(%arg0: i32) -> (i32, i32) {
    %c0_i32 = arith.constant 0 : i32
    %c0_i32_0 = arith.constant 0 : i32
    %c0_i32_1 = arith.constant 0 : i32
    return %c0_i32, %c0_i32_0 : i32, i32
  }
  func.func @transform_2(%arg0: i32) -> (i32, i32) {
    %c0_i32 = arith.constant 0 : i32
    %c0_i32_0 = arith.constant 0 : i32
    %c0_i32_1 = arith.constant 0 : i32
    return %c0_i32, %c0_i32_0 : i32, i32
  }
  func.func @transform_3(%arg0: i32) -> (i32, i32, i32, i32) {
    %c0_i32 = arith.constant 0 : i32
    %c0_i32_0 = arith.constant 0 : i32
    %c0_i32_1 = arith.constant 0 : i32
    %c0_i32_2 = arith.constant 0 : i32
    return %arg0, %c0_i32, %c0_i32_0, %c0_i32_1 : i32, i32, i32, i32
  }
  func.func @transform_4(%arg0: i32) -> (i32, i32, i32, i32) {
    %c0_i32 = arith.constant 0 : i32
    %c0_i32_0 = arith.constant 0 : i32
    %c0_i32_1 = arith.constant 0 : i32
    %c0_i32_2 = arith.constant 0 : i32
    return %arg0, %c0_i32, %c0_i32_0, %c0_i32_1 : i32, i32, i32, i32
  }
}

</mosaic_0001>

<llo_original>
// kernel: res_basic_block_preact.2
$region0: #{res_basic_block_preact.2}
  #allocation0 [shape = 'u32[]', space=smem, size = 0x4, offset = 0x4, fixed_abs, tag = 'smem constant byte address 0x4 - core index']
  #allocation1 [shape = 'u32[144,128]{1,0:T(1,128)}', space=vmem, size = 0x12000, scoped, tag = 'internal scratch']
  #allocation2 [shape = 'f32[1,18,18,128]{3,2,1,0:T(8,128)}', space=vmem, size = 0x36000, scoped, tag = 'scratch operand']
  %s0 = inlined_call_operand.vmem [shape: f32[2,16,16,128], index: 0, kind: input, shape index: {}]
  %s1 = inlined_call_operand.vmem [shape: f32[2,128], index: 1, kind: input, shape index: {}]
  %s2 = inlined_call_operand.vmem [shape: f32[1152,128], index: 2, kind: input, shape index: {}]
  %s3 = inlined_call_operand.vmem [shape: f32[2,16,16,128], index: 3, kind: output, shape index: {0}]
  %s4 = inlined_call_operand.vmem [shape: f32[2,2,128], index: 4, kind: output, shape index: {1}]
  %5 = xla_tuple %s3, %s4
  %s6 = sld [smem:[#allocation0]]
  $region53: #{res_basic_block_preact.2} parent=0
    _
  %s8 = ssub.s32 1, %s6
  %s9 = scalar_select 0, %s8, %s6
  loop: start=0, step=1, limit=4
  $region2: #{res_basic_block_preact.2} parent=0 // loop_pre_header
    _
  $region3: #{res_basic_block_preact.2} parent=0 // loop_header
    %s11 = sphi 0, %s15
    %p12 = scmp.ge.s32.totalorder %s11, 4
    %s21 = sphi 0, %s23
    %s24 = sphi 0, %s21
    %s25 = sphi 0, %s24
    %s41 = sphi 0, %s25
    %s45 = sphi 0, %s45
    %s47 = sphi 0, %s45
    %s48 = sphi 0, %s47
    %s62 = sphi 0, %s48
    %s66 = sphi 0, %s66
    %s68 = sphi 0, %s66
    %s69 = sphi 0, %s68
    %s83 = sphi 0, %s69
    %s89 = sphi 0, %s91
    %s92 = sphi 0, %s89
    %s93 = sphi 0, %s92
    %s109 = sphi 0, %s93
    %s115 = sphi 0, %s117
    %s118 = sphi 0, %s115
    %s119 = sphi 0, %s118
    %s135 = sphi 0, %s119
  $region4: #{res_basic_block_preact.2} parent=0 // loop_header_branch
    %14 = sbr.rel (%p12) target = $region8
  $region5: #{res_basic_block_preact.2} parent=0 // loop_body
    %s16 = ssub.s32 %s11, 1
    %s17 = ssub.s32 %s11, 2
    %s18 = sadd.s32 %s11, 1
    %s19 = ssub.s32 %s11, %s18
    %p20 = scmp.eq.s32.totalorder %s19, 0
    %s22 = sadd.s32 %s21, 1
    %s23 = scalar_select %p20, %s21, %s22
    %p26 = pneg %p20
    %p27 = scmp.eq.s32.totalorder %s11, 1
    %p28 = por %p26, %p27
    %p29 = scmp.ne.s32.totalorder %s21, %s24
    %p30 = scmp.eq.s32.totalorder %s11, 0
    %p31 = por %p29, %p30
    %p32 = scmp.ne.s32.totalorder %s21, %s24
    %p33 = scmp.eq.s32.totalorder %s16, 1
    %p34 = por %p32, %p33
    %p35 = scmp.ne.s32.totalorder %s24, %s25
    %p36 = scmp.eq.s32.totalorder %s16, 0
    %p37 = por %p35, %p36
    %p38 = scmp.ne.s32.totalorder %s24, %s25
    %p39 = scmp.eq.s32.totalorder %s17, 1
    %p40 = por %p38, %p39
    %p42 = scmp.ne.s32.totalorder %s25, %s41
    %p43 = scmp.eq.s32.totalorder %s17, 0
    %p44 = por %p42, %p43
    %s46 = sadd.s32 %s45, 1
    %p49 = scmp.eq.s32.totalorder %s11, 1
    %p50 = scmp.ne.s32.totalorder %s45, %s47
    %p51 = scmp.eq.s32.totalorder %s11, 0
    %p52 = por %p50, %p51
    %p53 = scmp.ne.s32.totalorder %s45, %s47
    %p54 = scmp.eq.s32.totalorder %s16, 1
    %p55 = por %p53, %p54
    %p56 = scmp.ne.s32.totalorder %s47, %s48
    %p57 = scmp.eq.s32.totalorder %s16, 0
    %p58 = por %p56, %p57
    %p59 = scmp.ne.s32.totalorder %s47, %s48
    %p60 = scmp.eq.s32.totalorder %s17, 1
    %p61 = por %p59, %p60
    %p63 = scmp.ne.s32.totalorder %s48, %s62
    %p64 = scmp.eq.s32.totalorder %s17, 0
    %p65 = por %p63, %p64
    %s67 = sadd.s32 %s66, 1
    %p70 = scmp.eq.s32.totalorder %s11, 1
    %p71 = scmp.ne.s32.totalorder %s66, %s68
    %p72 = scmp.eq.s32.totalorder %s11, 0
    %p73 = por %p71, %p72
    %p74 = scmp.ne.s32.totalorder %s66, %s68
    %p75 = scmp.eq.s32.totalorder %s16, 1
    %p76 = por %p74, %p75
    %p77 = scmp.ne.s32.totalorder %s68, %s69
    %p78 = scmp.eq.s32.totalorder %s16, 0
    %p79 = por %p77, %p78
    %p80 = scmp.ne.s32.totalorder %s68, %s69
    %p81 = scmp.eq.s32.totalorder %s17, 1
    %p82 = por %p80, %p81
    %p84 = scmp.ne.s32.totalorder %s69, %s83
    %p85 = scmp.eq.s32.totalorder %s17, 0
    %p86 = por %p84, %p85
    %s87 = ssub.s32 %s11, %s18
    %p88 = scmp.eq.s32.totalorder %s87, 0
    %s90 = sadd.s32 %s89, 1
    %s91 = scalar_select %p88, %s89, %s90
    %p94 = pneg %p88
    %p95 = scmp.eq.s32.totalorder %s11, 1
    %p96 = por %p94, %p95
    %p97 = scmp.ne.s32.totalorder %s89, %s92
    %p98 = scmp.eq.s32.totalorder %s11, 0
    %p99 = por %p97, %p98
    %p100 = scmp.ne.s32.totalorder %s89, %s92
    %p101 = scmp.eq.s32.totalorder %s16, 1
    %p102 = por %p100, %p101
    %p103 = scmp.ne.s32.totalorder %s92, %s93
    %p104 = scmp.eq.s32.totalorder %s16, 0
    %p105 = por %p103, %p104
    %p106 = scmp.ne.s32.totalorder %s92, %s93
    %p107 = scmp.eq.s32.totalorder %s17, 1
    %p108 = por %p106, %p107
    %p110 = scmp.ne.s32.totalorder %s93, %s109
    %p111 = scmp.eq.s32.totalorder %s17, 0
    %p112 = por %p110, %p111
    %s113 = ssub.s32 %s11, %s18
    %p114 = scmp.eq.s32.totalorder %s113, 0
    %s116 = sadd.s32 %s115, 1
    %s117 = scalar_select %p114, %s115, %s116
    %p120 = pneg %p114
    %p121 = scmp.eq.s32.totalorder %s11, 1
    %p122 = por %p120, %p121
    %p123 = scmp.ne.s32.totalorder %s115, %s118
    %p124 = scmp.eq.s32.totalorder %s11, 0
    %p125 = por %p123, %p124
    %p126 = scmp.ne.s32.totalorder %s115, %s118
    %p127 = scmp.eq.s32.totalorder %s16, 1
    %p128 = por %p126, %p127
    %p129 = scmp.ne.s32.totalorder %s118, %s119
    %p130 = scmp.eq.s32.totalorder %s16, 0
    %p131 = por %p129, %p130
    %p132 = scmp.ne.s32.totalorder %s118, %s119
    %p133 = scmp.eq.s32.totalorder %s17, 1
    %p134 = por %p132, %p133
    %p136 = scmp.ne.s32.totalorder %s119, %s135
    %p137 = scmp.eq.s32.totalorder %s17, 0
    %p138 = por %p136, %p137
    %p139 = scmp.le.s32.totalorder 1, %s11
    %p140 = scmp.lt.s32.totalorder %s11, 3
    %p141 = pnand %p139, %p140
    %p142 = pneg %p141
    // Predicated region
    $region9: #{res_basic_block_preact.2} parent=5 // pred_check
      _
    $region10: #{res_basic_block_preact.2} parent=5 // pred_check_branch
      %144 = sbr.rel (%p141) target = $region12
    $region11: #{res_basic_block_preact.2} parent=5 // pred_region
      %s145 = ssub.s32 %s11, 1
      // Predicated region
      $region13: #{res_basic_block_preact.2} parent=11 // pred_check
        %p146 = pneg %p58
      $region14: #{res_basic_block_preact.2} parent=11 // pred_check_branch
        %148 = sbr.rel (%p146) target = $region16
      $region15: #{res_basic_block_preact.2} parent=11 // pred_region
        _
      $region16: #{res_basic_block_preact.2} parent=11 // pred_fallthru
        _
      // Predicated region
      $region17: #{res_basic_block_preact.2} parent=11 // pred_check
        %p149 = pneg %p79
      $region18: #{res_basic_block_preact.2} parent=11 // pred_check_branch
        %151 = sbr.rel (%p149) target = $region20
      $region19: #{res_basic_block_preact.2} parent=11 // pred_region
        _
      $region20: #{res_basic_block_preact.2} parent=11 // pred_fallthru
        _
    $region12: #{res_basic_block_preact.2} parent=5 // pred_fallthru
      _
    %p152 = scmp.lt.s32.totalorder %s11, 2
    // Predicated region
    $region21: #{res_basic_block_preact.2} parent=5 // pred_check
      %p153 = pneg %p152
    $region22: #{res_basic_block_preact.2} parent=5 // pred_check_branch
      %155 = sbr.rel (%p153) target = $region24
    $region23: #{res_basic_block_preact.2} parent=5 // pred_region
      // Predicated region
      $region25: #{res_basic_block_preact.2} parent=23 // pred_check
        %p156 = pneg %p31
      $region26: #{res_basic_block_preact.2} parent=23 // pred_check_branch
        %158 = sbr.rel (%p156) target = $region28
      $region27: #{res_basic_block_preact.2} parent=23 // pred_region
        %p159 = scmp.lt.s32.totalorder %s11, 1
        %s160 = scalar_select %p159, %s11, 1
        %s161 = smul.addr %s160, 32
        %s162 = smul.addr %s161, 8
        %s163 = scalar_lea.vmem %s0, %s162
      $region28: #{res_basic_block_preact.2} parent=23 // pred_fallthru
        _
    $region24: #{res_basic_block_preact.2} parent=5 // pred_fallthru
      _
    %p164 = scmp.le.s32.totalorder 1, %s11
    %p165 = scmp.lt.s32.totalorder %s11, 3
    %p166 = pnand %p164, %p165
    %p167 = pneg %p166
    // Predicated region
    $region29: #{res_basic_block_preact.2} parent=5 // pred_check
      _
    $region30: #{res_basic_block_preact.2} parent=5 // pred_check_branch
      %169 = sbr.rel (%p166) target = $region32
    $region31: #{res_basic_block_preact.2} parent=5 // pred_region
      %s170 = ssub.s32 %s11, 1
      %p171 = scmp.lt.s32.totalorder %s16, 1
      %s172 = scalar_select %p171, %s16, 1
      %s173 = smul.addr %s172, 32
      %s174 = smul.addr %s173, 8
      %s175 = scalar_lea.vmem %s0, %s174
      %p176 = pneg %p37
      %p177 = pneg %p34
      %p178 = pneg %p58
      %p179 = pneg %p55
      %p180 = pneg %p79
      %p181 = pneg %p76
      %p182 = pneg %p105
      %p183 = pneg %p102
      %p184 = scmp.lt.s32.totalorder %s16, 1
      %s185 = scalar_select %p184, %s16, 1
      %s186 = smul.addr %s185, 32
      %s187 = smul.addr %s186, 8
      %s188 = scalar_lea.vmem %s3, %s187
      %p189 = pneg %p131
      %p190 = pneg %p128
      %p191 = scmp.lt.s32.totalorder %s16, 1
      %s192 = scalar_select %p191, %s16, 1
      %s193 = smul.addr %s192, 2
      %s194 = scalar_lea.vmem %s4, %s193
      %p195 = scmp.lt.s32.totalorder %s16, 1
      %s196 = scalar_select %p195, %s16, 1
      %s197 = smul.addr %s196, 32
      %s198 = smul.addr %s197, 8
      %s199 = scalar_lea.vmem %s0, %s198
      %p200 = scmp.lt.s32.totalorder %s16, 1
      %s201 = scalar_select %p200, %s16, 1
      %s202 = smul.addr %s201, 32
      %s203 = smul.addr %s202, 8
      %s204 = scalar_lea.vmem %s3, %s203
      %p205 = scmp.lt.s32.totalorder %s16, 1
      %s206 = scalar_select %p205, %s16, 1
      %s207 = smul.addr %s206, 2
      %s208 = scalar_lea.vmem %s4, %s207
      %v209 = vld [vmem:[%s1] sm:$0x1]
      %v210 = vld [vmem:[%s1 + $0x1] sm:$0x1]
      %v211 = vld [vmem:[%s199] sm:$0xff]
      %v212 = vld [vmem:[%s199 + $0x8] sm:$0xff]
      %v213 = vld [vmem:[%s199 + $0x10] sm:$0xff]
      %v214 = vld [vmem:[%s199 + $0x18] sm:$0xff]
      %v215 = vld [vmem:[%s199 + $0x20] sm:$0xff]
      %v216 = vld [vmem:[%s199 + $0x28] sm:$0xff]
      %v217 = vld [vmem:[%s199 + $0x30] sm:$0xff]
      %v218 = vld [vmem:[%s199 + $0x38] sm:$0xff]
      %v219 = vld [vmem:[%s199 + $0x40] sm:$0xff]
      %v220 = vld [vmem:[%s199 + $0x48] sm:$0xff]
      %v221 = vld [vmem:[%s199 + $0x50] sm:$0xff]
      %v222 = vld [vmem:[%s199 + $0x58] sm:$0xff]
      %v223 = vld [vmem:[%s199 + $0x60] sm:$0xff]
      %v224 = vld [vmem:[%s199 + $0x68] sm:$0xff]
      %v225 = vld [vmem:[%s199 + $0x70] sm:$0xff]
      %v226 = vld [vmem:[%s199 + $0x78] sm:$0xff]
      %v227 = vld [vmem:[%s199 + $0x80] sm:$0xff]
      %v228 = vld [vmem:[%s199 + $0x88] sm:$0xff]
      %v229 = vld [vmem:[%s199 + $0x90] sm:$0xff]
      %v230 = vld [vmem:[%s199 + $0x98] sm:$0xff]
      %v231 = vld [vmem:[%s199 + $0xa0] sm:$0xff]
      %v232 = vld [vmem:[%s199 + $0xa8] sm:$0xff]
      %v233 = vld [vmem:[%s199 + $0xb0] sm:$0xff]
      %v234 = vld [vmem:[%s199 + $0xb8] sm:$0xff]
      %v235 = vld [vmem:[%s199 + $0xc0] sm:$0xff]
      %v236 = vld [vmem:[%s199 + $0xc8] sm:$0xff]
      %v237 = vld [vmem:[%s199 + $0xd0] sm:$0xff]
      %v238 = vld [vmem:[%s199 + $0xd8] sm:$0xff]
      %v239 = vld [vmem:[%s199 + $0xe0] sm:$0xff]
      %v240 = vld [vmem:[%s199 + $0xe8] sm:$0xff]
      %v241 = vld [vmem:[%s199 + $0xf0] sm:$0xff]
      %v242 = vld [vmem:[%s199 + $0xf8] sm:$0xff]
      %v243 = vlaneseq
      %v244 = vshrl.u32 %v243, 7
      %v245 = vsub.s32 0, %v244
      %v246 = vrot.slane %v209, %v245
      %v247 = vsub.f32 %v211, %v246
      %v248 = vsub.f32 %v212, %v246
      %v249 = vsub.f32 %v213, %v246
      %v250 = vsub.f32 %v214, %v246
      %v251 = vsub.f32 %v215, %v246
      %v252 = vsub.f32 %v216, %v246
      %v253 = vsub.f32 %v217, %v246
      %v254 = vsub.f32 %v218, %v246
      %v255 = vsub.f32 %v219, %v246
      %v256 = vsub.f32 %v220, %v246
      %v257 = vsub.f32 %v221, %v246
      %v258 = vsub.f32 %v222, %v246
      %v259 = vsub.f32 %v223, %v246
      %v260 = vsub.f32 %v224, %v246
      %v261 = vsub.f32 %v225, %v246
      %v262 = vsub.f32 %v226, %v246
      %v263 = vsub.f32 %v227, %v246
      %v264 = vsub.f32 %v228, %v246
      %v265 = vsub.f32 %v229, %v246
      %v266 = vsub.f32 %v230, %v246
      %v267 = vsub.f32 %v231, %v246
      %v268 = vsub.f32 %v232, %v246
      %v269 = vsub.f32 %v233, %v246
      %v270 = vsub.f32 %v234, %v246
      %v271 = vsub.f32 %v235, %v246
      %v272 = vsub.f32 %v236, %v246
      %v273 = vsub.f32 %v237, %v246
      %v274 = vsub.f32 %v238, %v246
      %v275 = vsub.f32 %v239, %v246
      %v276 = vsub.f32 %v240, %v246
      %v277 = vsub.f32 %v241, %v246
      %v278 = vsub.f32 %v242, %v246
      %v279 = vlaneseq
      %v280 = vshrl.u32 %v279, 7
      %v281 = vsub.s32 0, %v280
      %v282 = vrot.slane %v210, %v281
      %v283 = vmul.f32 %v247, %v282
      %v284 = vmul.f32 %v248, %v282
      %v285 = vmul.f32 %v249, %v282
      %v286 = vmul.f32 %v250, %v282
      %v287 = vmul.f32 %v251, %v282
      %v288 = vmul.f32 %v252, %v282
      %v289 = vmul.f32 %v253, %v282
      %v290 = vmul.f32 %v254, %v282
      %v291 = vmul.f32 %v255, %v282
      %v292 = vmul.f32 %v256, %v282
      %v293 = vmul.f32 %v257, %v282
      %v294 = vmul.f32 %v258, %v282
      %v295 = vmul.f32 %v259, %v282
      %v296 = vmul.f32 %v260, %v282
      %v297 = vmul.f32 %v261, %v282
      %v298 = vmul.f32 %v262, %v282
      %v299 = vmul.f32 %v263, %v282
      %v300 = vmul.f32 %v264, %v282
      %v301 = vmul.f32 %v265, %v282
      %v302 = vmul.f32 %v266, %v282
      %v303 = vmul.f32 %v267, %v282
      %v304 = vmul.f32 %v268, %v282
      %v305 = vmul.f32 %v269, %v282
      %v306 = vmul.f32 %v270, %v282
      %v307 = vmul.f32 %v271, %v282
      %v308 = vmul.f32 %v272, %v282
      %v309 = vmul.f32 %v273, %v282
      %v310 = vmul.f32 %v274, %v282
      %v311 = vmul.f32 %v275, %v282
      %v312 = vmul.f32 %v276, %v282
      %v313 = vmul.f32 %v277, %v282
      %v314 = vmul.f32 %v278, %v282
      %v315 = vmax.f32 %v283, 0.0
      %v316 = vmax.f32 %v284, 0.0
      %v317 = vmax.f32 %v285, 0.0
      %v318 = vmax.f32 %v286, 0.0
      %v319 = vmax.f32 %v287, 0.0
      %v320 = vmax.f32 %v288, 0.0
      %v321 = vmax.f32 %v289, 0.0
      %v322 = vmax.f32 %v290, 0.0
      %v323 = vmax.f32 %v291, 0.0
      %v324 = vmax.f32 %v292, 0.0
      %v325 = vmax.f32 %v293, 0.0
      %v326 = vmax.f32 %v294, 0.0
      %v327 = vmax.f32 %v295, 0.0
      %v328 = vmax.f32 %v296, 0.0
      %v329 = vmax.f32 %v297, 0.0
      %v330 = vmax.f32 %v298, 0.0
      %v331 = vmax.f32 %v299, 0.0
      %v332 = vmax.f32 %v300, 0.0
      %v333 = vmax.f32 %v301, 0.0
      %v334 = vmax.f32 %v302, 0.0
      %v335 = vmax.f32 %v303, 0.0
      %v336 = vmax.f32 %v304, 0.0
      %v337 = vmax.f32 %v305, 0.0
      %v338 = vmax.f32 %v306, 0.0
      %v339 = vmax.f32 %v307, 0.0
      %v340 = vmax.f32 %v308, 0.0
      %v341 = vmax.f32 %v309, 0.0
      %v342 = vmax.f32 %v310, 0.0
      %v343 = vmax.f32 %v311, 0.0
      %v344 = vmax.f32 %v312, 0.0
      %v345 = vmax.f32 %v313, 0.0
      %v346 = vmax.f32 %v314, 0.0
      %347 = vst [vmem:[#allocation2] sm:$0xff] 0.0
      %348 = vst [vmem:[#allocation2 + $0x8] sm:$0xff] 0.0
      %349 = vst [vmem:[#allocation2 + $0x10] sm:$0x3] 0.0
      %s350 = scalar_lea.vmem [#allocation2], 408
      %351 = vst [vmem:[%s350] sm:$0xff] 0.0
      %352 = vst [vmem:[%s350 + $0x8] sm:$0xff] 0.0
      %353 = vst [vmem:[%s350 + $0x10] sm:$0x3] 0.0
      %354 = vst [vmem:[#allocation2] sm:$0x1] 0.0
      %355 = vst [vmem:[#allocation2 + $0x18] sm:$0x1] 0.0
      %356 = vst [vmem:[#allocation2 + $0x30] sm:$0x1] 0.0
      %357 = vst [vmem:[#allocation2 + $0x48] sm:$0x1] 0.0
      %358 = vst [vmem:[#allocation2 + $0x60] sm:$0x1] 0.0
      %359 = vst [vmem:[#allocation2 + $0x78] sm:$0x1] 0.0
      %360 = vst [vmem:[#allocation2 + $0x90] sm:$0x1] 0.0
      %361 = vst [vmem:[#allocation2 + $0xa8] sm:$0x1] 0.0
      %362 = vst [vmem:[#allocation2 + $0xc0] sm:$0x1] 0.0
      %363 = vst [vmem:[#allocation2 + $0xd8] sm:$0x1] 0.0
      %364 = vst [vmem:[#allocation2 + $0xf0] sm:$0x1] 0.0
      %365 = vst [vmem:[#allocation2 + $0x108] sm:$0x1] 0.0
      %366 = vst [vmem:[#allocation2 + $0x120] sm:$0x1] 0.0
      %367 = vst [vmem:[#allocation2 + $0x138] sm:$0x1] 0.0
      %368 = vst [vmem:[#allocation2 + $0x150] sm:$0x1] 0.0
      %369 = vst [vmem:[#allocation2 + $0x168] sm:$0x1] 0.0
      %370 = vst [vmem:[#allocation2 + $0x180] sm:$0x1] 0.0
      %371 = vst [vmem:[#allocation2 + $0x198] sm:$0x1] 0.0
      %372 = vst [vmem:[#allocation2 + $0x11] sm:$0x1] 0.0
      %373 = vst [vmem:[#allocation2 + $0x29] sm:$0x1] 0.0
      %374 = vst [vmem:[#allocation2 + $0x41] sm:$0x1] 0.0
      %375 = vst [vmem:[#allocation2 + $0x59] sm:$0x1] 0.0
      %376 = vst [vmem:[#allocation2 + $0x71] sm:$0x1] 0.0
      %377 = vst [vmem:[#allocation2 + $0x89] sm:$0x1] 0.0
      %378 = vst [vmem:[#allocation2 + $0xa1] sm:$0x1] 0.0
      %379 = vst [vmem:[#allocation2 + $0xb9] sm:$0x1] 0.0
      %380 = vst [vmem:[#allocation2 + $0xd1] sm:$0x1] 0.0
      %381 = vst [vmem:[#allocation2 + $0xe9] sm:$0x1] 0.0
      %382 = vst [vmem:[#allocation2 + $0x101] sm:$0x1] 0.0
      %383 = vst [vmem:[#allocation2 + $0x119] sm:$0x1] 0.0
      %384 = vst [vmem:[#allocation2 + $0x131] sm:$0x1] 0.0
      %385 = vst [vmem:[#allocation2 + $0x149] sm:$0x1] 0.0
      %386 = vst [vmem:[#allocation2 + $0x161] sm:$0x1] 0.0
      %387 = vst [vmem:[#allocation2 + $0x179] sm:$0x1] 0.0
      %388 = vst [vmem:[#allocation2 + $0x191] sm:$0x1] 0.0
      %389 = vst [vmem:[#allocation2 + $0x1a9] sm:$0x1] 0.0
      %s390 = scalar_lea.vmem [#allocation2], 24
      %391 = vst [vmem:[%s390 + $0x1] sm:$0xff] %v315
      %392 = vst [vmem:[%s390 + $0x9] sm:$0xff] %v316
      %393 = vst [vmem:[%s390 + $0x19] sm:$0xff] %v317
      %394 = vst [vmem:[%s390 + $0x21] sm:$0xff] %v318
      %395 = vst [vmem:[%s390 + $0x31] sm:$0xff] %v319
      %396 = vst [vmem:[%s390 + $0x39] sm:$0xff] %v320
      %397 = vst [vmem:[%s390 + $0x49] sm:$0xff] %v321
      %398 = vst [vmem:[%s390 + $0x51] sm:$0xff] %v322
      %399 = vst [vmem:[%s390 + $0x61] sm:$0xff] %v323
      %400 = vst [vmem:[%s390 + $0x69] sm:$0xff] %v324
      %401 = vst [vmem:[%s390 + $0x79] sm:$0xff] %v325
      %402 = vst [vmem:[%s390 + $0x81] sm:$0xff] %v326
      %403 = vst [vmem:[%s390 + $0x91] sm:$0xff] %v327
      %404 = vst [vmem:[%s390 + $0x99] sm:$0xff] %v328
      %405 = vst [vmem:[%s390 + $0xa9] sm:$0xff] %v329
      %406 = vst [vmem:[%s390 + $0xb1] sm:$0xff] %v330
      %407 = vst [vmem:[%s390 + $0xc1] sm:$0xff] %v331
      %408 = vst [vmem:[%s390 + $0xc9] sm:$0xff] %v332
      %409 = vst [vmem:[%s390 + $0xd9] sm:$0xff] %v333
      %410 = vst [vmem:[%s390 + $0xe1] sm:$0xff] %v334
      %411 = vst [vmem:[%s390 + $0xf1] sm:$0xff] %v335
      %412 = vst [vmem:[%s390 + $0xf9] sm:$0xff] %v336
      %413 = vst [vmem:[%s390 + $0x109] sm:$0xff] %v337
      %414 = vst [vmem:[%s390 + $0x111] sm:$0xff] %v338
      %415 = vst [vmem:[%s390 + $0x121] sm:$0xff] %v339
      %416 = vst [vmem:[%s390 + $0x129] sm:$0xff] %v340
      %417 = vst [vmem:[%s390 + $0x139] sm:$0xff] %v341
      %418 = vst [vmem:[%s390 + $0x141] sm:$0xff] %v342
      %419 = vst [vmem:[%s390 + $0x151] sm:$0xff] %v343
      %420 = vst [vmem:[%s390 + $0x159] sm:$0xff] %v344
      %421 = vst [vmem:[%s390 + $0x169] sm:$0xff] %v345
      %422 = vst [vmem:[%s390 + $0x171] sm:$0xff] %v346
      %s423 = smul.u32 0, 24
      %s424 = scalar_lea.vmem [#allocation2], %s423
      %v425 = vld [vmem:[%s424] sm:$0xff]
      %v426 = vld [vmem:[%s424 + $0x8] sm:$0xff]
      %v427 = vld [vmem:[%s424 + $0x18] sm:$0xff]
      %v428 = vld [vmem:[%s424 + $0x20] sm:$0xff]
      %v429 = vld [vmem:[%s424 + $0x30] sm:$0xff]
      %v430 = vld [vmem:[%s424 + $0x38] sm:$0xff]
      %v431 = vld [vmem:[%s424 + $0x48] sm:$0xff]
      %v432 = vld [vmem:[%s424 + $0x50] sm:$0xff]
      %v433 = vld [vmem:[%s424 + $0x60] sm:$0xff]
      %v434 = vld [vmem:[%s424 + $0x68] sm:$0xff]
      %v435 = vld [vmem:[%s424 + $0x78] sm:$0xff]
      %v436 = vld [vmem:[%s424 + $0x80] sm:$0xff]
      %v437 = vld [vmem:[%s424 + $0x90] sm:$0xff]
      %v438 = vld [vmem:[%s424 + $0x98] sm:$0xff]
      %v439 = vld [vmem:[%s424 + $0xa8] sm:$0xff]
      %v440 = vld [vmem:[%s424 + $0xb0] sm:$0xff]
      %v441 = vld [vmem:[%s424 + $0x1] sm:$0xff]
      %v442 = vld [vmem:[%s424 + $0x9] sm:$0xff]
      %v443 = vld [vmem:[%s424 + $0x19] sm:$0xff]
      %v444 = vld [vmem:[%s424 + $0x21] sm:$0xff]
      %v445 = vld [vmem:[%s424 + $0x31] sm:$0xff]
      %v446 = vld [vmem:[%s424 + $0x39] sm:$0xff]
      %v447 = vld [vmem:[%s424 + $0x49] sm:$0xff]
      %v448 = vld [vmem:[%s424 + $0x51] sm:$0xff]
      %v449 = vld [vmem:[%s424 + $0x61] sm:$0xff]
      %v450 = vld [vmem:[%s424 + $0x69] sm:$0xff]
      %v451 = vld [vmem:[%s424 + $0x79] sm:$0xff]
      %v452 = vld [vmem:[%s424 + $0x81] sm:$0xff]
      %v453 = vld [vmem:[%s424 + $0x91] sm:$0xff]
      %v454 = vld [vmem:[%s424 + $0x99] sm:$0xff]
      %v455 = vld [vmem:[%s424 + $0xa9] sm:$0xff]
      %v456 = vld [vmem:[%s424 + $0xb1] sm:$0xff]
      %v457 = vld [vmem:[%s424 + $0x2] sm:$0xff]
      %v458 = vld [vmem:[%s424 + $0xa] sm:$0xff]
      %v459 = vld [vmem:[%s424 + $0x1a] sm:$0xff]
      %v460 = vld [vmem:[%s424 + $0x22] sm:$0xff]
      %v461 = vld [vmem:[%s424 + $0x32] sm:$0xff]
      %v462 = vld [vmem:[%s424 + $0x3a] sm:$0xff]
      %v463 = vld [vmem:[%s424 + $0x4a] sm:$0xff]
      %v464 = vld [vmem:[%s424 + $0x52] sm:$0xff]
      %v465 = vld [vmem:[%s424 + $0x62] sm:$0xff]
      %v466 = vld [vmem:[%s424 + $0x6a] sm:$0xff]
      %v467 = vld [vmem:[%s424 + $0x7a] sm:$0xff]
      %v468 = vld [vmem:[%s424 + $0x82] sm:$0xff]
      %v469 = vld [vmem:[%s424 + $0x92] sm:$0xff]
      %v470 = vld [vmem:[%s424 + $0x9a] sm:$0xff]
      %v471 = vld [vmem:[%s424 + $0xaa] sm:$0xff]
      %v472 = vld [vmem:[%s424 + $0xb2] sm:$0xff]
      %s473 = sadd.s32 0, 1
      %s474 = smul.u32 %s473, 24
      %s475 = scalar_lea.vmem [#allocation2], %s474
      %v476 = vld [vmem:[%s475] sm:$0xff]
      %v477 = vld [vmem:[%s475 + $0x8] sm:$0xff]
      %v478 = vld [vmem:[%s475 + $0x18] sm:$0xff]
      %v479 = vld [vmem:[%s475 + $0x20] sm:$0xff]
      %v480 = vld [vmem:[%s475 + $0x30] sm:$0xff]
      %v481 = vld [vmem:[%s475 + $0x38] sm:$0xff]
      %v482 = vld [vmem:[%s475 + $0x48] sm:$0xff]
      %v483 = vld [vmem:[%s475 + $0x50] sm:$0xff]
      %v484 = vld [vmem:[%s475 + $0x60] sm:$0xff]
      %v485 = vld [vmem:[%s475 + $0x68] sm:$0xff]
      %v486 = vld [vmem:[%s475 + $0x78] sm:$0xff]
      %v487 = vld [vmem:[%s475 + $0x80] sm:$0xff]
      %v488 = vld [vmem:[%s475 + $0x90] sm:$0xff]
      %v489 = vld [vmem:[%s475 + $0x98] sm:$0xff]
      %v490 = vld [vmem:[%s475 + $0xa8] sm:$0xff]
      %v491 = vld [vmem:[%s475 + $0xb0] sm:$0xff]
      %v492 = vld [vmem:[%s475 + $0x1] sm:$0xff]
      %v493 = vld [vmem:[%s475 + $0x9] sm:$0xff]
      %v494 = vld [vmem:[%s475 + $0x19] sm:$0xff]
      %v495 = vld [vmem:[%s475 + $0x21] sm:$0xff]
      %v496 = vld [vmem:[%s475 + $0x31] sm:$0xff]
      %v497 = vld [vmem:[%s475 + $0x39] sm:$0xff]
      %v498 = vld [vmem:[%s475 + $0x49] sm:$0xff]
      %v499 = vld [vmem:[%s475 + $0x51] sm:$0xff]
      %v500 = vld [vmem:[%s475 + $0x61] sm:$0xff]
      %v501 = vld [vmem:[%s475 + $0x69] sm:$0xff]
      %v502 = vld [vmem:[%s475 + $0x79] sm:$0xff]
      %v503 = vld [vmem:[%s475 + $0x81] sm:$0xff]
      %v504 = vld [vmem:[%s475 + $0x91] sm:$0xff]
      %v505 = vld [vmem:[%s475 + $0x99] sm:$0xff]
      %v506 = vld [vmem:[%s475 + $0xa9] sm:$0xff]
      %v507 = vld [vmem:[%s475 + $0xb1] sm:$0xff]
      %v508 = vld [vmem:[%s475 + $0x2] sm:$0xff]
      %v509 = vld [vmem:[%s475 + $0xa] sm:$0xff]
      %v510 = vld [vmem:[%s475 + $0x1a] sm:$0xff]
      %v511 = vld [vmem:[%s475 + $0x22] sm:$0xff]
      %v512 = vld [vmem:[%s475 + $0x32] sm:$0xff]
      %v513 = vld [vmem:[%s475 + $0x3a] sm:$0xff]
      %v514 = vld [vmem:[%s475 + $0x4a] sm:$0xff]
      %v515 = vld [vmem:[%s475 + $0x52] sm:$0xff]
      %v516 = vld [vmem:[%s475 + $0x62] sm:$0xff]
      %v517 = vld [vmem:[%s475 + $0x6a] sm:$0xff]
      %v518 = vld [vmem:[%s475 + $0x7a] sm:$0xff]
      %v519 = vld [vmem:[%s475 + $0x82] sm:$0xff]
      %v520 = vld [vmem:[%s475 + $0x92] sm:$0xff]
      %v521 = vld [vmem:[%s475 + $0x9a] sm:$0xff]
      %v522 = vld [vmem:[%s475 + $0xaa] sm:$0xff]
      %v523 = vld [vmem:[%s475 + $0xb2] sm:$0xff]
      %s524 = sadd.s32 0, 2
      %s525 = smul.u32 %s524, 24
      %s526 = scalar_lea.vmem [#allocation2], %s525
      %v527 = vld [vmem:[%s526] sm:$0xff]
      %v528 = vld [vmem:[%s526 + $0x8] sm:$0xff]
      %v529 = vld [vmem:[%s526 + $0x18] sm:$0xff]
      %v530 = vld [vmem:[%s526 + $0x20] sm:$0xff]
      %v531 = vld [vmem:[%s526 + $0x30] sm:$0xff]
      %v532 = vld [vmem:[%s526 + $0x38] sm:$0xff]
      %v533 = vld [vmem:[%s526 + $0x48] sm:$0xff]
      %v534 = vld [vmem:[%s526 + $0x50] sm:$0xff]
      %v535 = vld [vmem:[%s526 + $0x60] sm:$0xff]
      %v536 = vld [vmem:[%s526 + $0x68] sm:$0xff]
      %v537 = vld [vmem:[%s526 + $0x78] sm:$0xff]
      %v538 = vld [vmem:[%s526 + $0x80] sm:$0xff]
      %v539 = vld [vmem:[%s526 + $0x90] sm:$0xff]
      %v540 = vld [vmem:[%s526 + $0x98] sm:$0xff]
      %v541 = vld [vmem:[%s526 + $0xa8] sm:$0xff]
      %v542 = vld [vmem:[%s526 + $0xb0] sm:$0xff]
      %v543 = vld [vmem:[%s526 + $0x1] sm:$0xff]
      %v544 = vld [vmem:[%s526 + $0x9] sm:$0xff]
      %v545 = vld [vmem:[%s526 + $0x19] sm:$0xff]
      %v546 = vld [vmem:[%s526 + $0x21] sm:$0xff]
      %v547 = vld [vmem:[%s526 + $0x31] sm:$0xff]
      %v548 = vld [vmem:[%s526 + $0x39] sm:$0xff]
      %v549 = vld [vmem:[%s526 + $0x49] sm:$0xff]
      %v550 = vld [vmem:[%s526 + $0x51] sm:$0xff]
      %v551 = vld [vmem:[%s526 + $0x61] sm:$0xff]
      %v552 = vld [vmem:[%s526 + $0x69] sm:$0xff]
      %v553 = vld [vmem:[%s526 + $0x79] sm:$0xff]
      %v554 = vld [vmem:[%s526 + $0x81] sm:$0xff]
      %v555 = vld [vmem:[%s526 + $0x91] sm:$0xff]
      %v556 = vld [vmem:[%s526 + $0x99] sm:$0xff]
      %v557 = vld [vmem:[%s526 + $0xa9] sm:$0xff]
      %v558 = vld [vmem:[%s526 + $0xb1] sm:$0xff]
      %v559 = vld [vmem:[%s526 + $0x2] sm:$0xff]
      %v560 = vld [vmem:[%s526 + $0xa] sm:$0xff]
      %v561 = vld [vmem:[%s526 + $0x1a] sm:$0xff]
      %v562 = vld [vmem:[%s526 + $0x22] sm:$0xff]
      %v563 = vld [vmem:[%s526 + $0x32] sm:$0xff]
      %v564 = vld [vmem:[%s526 + $0x3a] sm:$0xff]
      %v565 = vld [vmem:[%s526 + $0x4a] sm:$0xff]
      %v566 = vld [vmem:[%s526 + $0x52] sm:$0xff]
      %v567 = vld [vmem:[%s526 + $0x62] sm:$0xff]
      %v568 = vld [vmem:[%s526 + $0x6a] sm:$0xff]
      %v569 = vld [vmem:[%s526 + $0x7a] sm:$0xff]
      %v570 = vld [vmem:[%s526 + $0x82] sm:$0xff]
      %v571 = vld [vmem:[%s526 + $0x92] sm:$0xff]
      %v572 = vld [vmem:[%s526 + $0x9a] sm:$0xff]
      %v573 = vld [vmem:[%s526 + $0xaa] sm:$0xff]
      %v574 = vld [vmem:[%s526 + $0xb2] sm:$0xff]
      %v575 = vld [vmem:[%s2] sm:$0xff]
      %v576 = vld [vmem:[%s2 + $0x8] sm:$0xff]
      %v577 = vld [vmem:[%s2 + $0x10] sm:$0xff]
      %v578 = vld [vmem:[%s2 + $0x18] sm:$0xff]
      %v579 = vld [vmem:[%s2 + $0x20] sm:$0xff]
      %v580 = vld [vmem:[%s2 + $0x28] sm:$0xff]
      %v581 = vld [vmem:[%s2 + $0x30] sm:$0xff]
      %v582 = vld [vmem:[%s2 + $0x38] sm:$0xff]
      %v583 = vld [vmem:[%s2 + $0x40] sm:$0xff]
      %v584 = vld [vmem:[%s2 + $0x48] sm:$0xff]
      %v585 = vld [vmem:[%s2 + $0x50] sm:$0xff]
      %v586 = vld [vmem:[%s2 + $0x58] sm:$0xff]
      %v587 = vld [vmem:[%s2 + $0x60] sm:$0xff]
      %v588 = vld [vmem:[%s2 + $0x68] sm:$0xff]
      %v589 = vld [vmem:[%s2 + $0x70] sm:$0xff]
      %v590 = vld [vmem:[%s2 + $0x78] sm:$0xff]
      %v591 = vld [vmem:[%s2 + $0x80] sm:$0xff]
      %v592 = vld [vmem:[%s2 + $0x88] sm:$0xff]
      %v593 = vld [vmem:[%s2 + $0x90] sm:$0xff]
      %v594 = vld [vmem:[%s2 + $0x98] sm:$0xff]
      %v595 = vld [vmem:[%s2 + $0xa0] sm:$0xff]
      %v596 = vld [vmem:[%s2 + $0xa8] sm:$0xff]
      %v597 = vld [vmem:[%s2 + $0xb0] sm:$0xff]
      %v598 = vld [vmem:[%s2 + $0xb8] sm:$0xff]
      %v599 = vld [vmem:[%s2 + $0xc0] sm:$0xff]
      %v600 = vld [vmem:[%s2 + $0xc8] sm:$0xff]
      %v601 = vld [vmem:[%s2 + $0xd0] sm:$0xff]
      %v602 = vld [vmem:[%s2 + $0xd8] sm:$0xff]
      %v603 = vld [vmem:[%s2 + $0xe0] sm:$0xff]
      %v604 = vld [vmem:[%s2 + $0xe8] sm:$0xff]
      %v605 = vld [vmem:[%s2 + $0xf0] sm:$0xff]
      %v606 = vld [vmem:[%s2 + $0xf8] sm:$0xff]
      %v607 = vld [vmem:[%s2 + $0x100] sm:$0xff]
      %v608 = vld [vmem:[%s2 + $0x108] sm:$0xff]
      %v609 = vld [vmem:[%s2 + $0x110] sm:$0xff]
      %v610 = vld [vmem:[%s2 + $0x118] sm:$0xff]
      %v611 = vld [vmem:[%s2 + $0x120] sm:$0xff]
      %v612 = vld [vmem:[%s2 + $0x128] sm:$0xff]
      %v613 = vld [vmem:[%s2 + $0x130] sm:$0xff]
      %v614 = vld [vmem:[%s2 + $0x138] sm:$0xff]
      %v615 = vld [vmem:[%s2 + $0x140] sm:$0xff]
      %v616 = vld [vmem:[%s2 + $0x148] sm:$0xff]
      %v617 = vld [vmem:[%s2 + $0x150] sm:$0xff]
      %v618 = vld [vmem:[%s2 + $0x158] sm:$0xff]
      %v619 = vld [vmem:[%s2 + $0x160] sm:$0xff]
      %v620 = vld [vmem:[%s2 + $0x168] sm:$0xff]
      %v621 = vld [vmem:[%s2 + $0x170] sm:$0xff]
      %v622 = vld [vmem:[%s2 + $0x178] sm:$0xff]
      %v623 = vld [vmem:[%s2 + $0x180] sm:$0xff]
      %v624 = vld [vmem:[%s2 + $0x188] sm:$0xff]
      %v625 = vld [vmem:[%s2 + $0x190] sm:$0xff]
      %v626 = vld [vmem:[%s2 + $0x198] sm:$0xff]
      %v627 = vld [vmem:[%s2 + $0x1a0] sm:$0xff]
      %v628 = vld [vmem:[%s2 + $0x1a8] sm:$0xff]
      %v629 = vld [vmem:[%s2 + $0x1b0] sm:$0xff]
      %v630 = vld [vmem:[%s2 + $0x1b8] sm:$0xff]
      %v631 = vld [vmem:[%s2 + $0x1c0] sm:$0xff]
      %v632 = vld [vmem:[%s2 + $0x1c8] sm:$0xff]
      %v633 = vld [vmem:[%s2 + $0x1d0] sm:$0xff]
      %v634 = vld [vmem:[%s2 + $0x1d8] sm:$0xff]
      %v635 = vld [vmem:[%s2 + $0x1e0] sm:$0xff]
      %v636 = vld [vmem:[%s2 + $0x1e8] sm:$0xff]
      %v637 = vld [vmem:[%s2 + $0x1f0] sm:$0xff]
      %v638 = vld [vmem:[%s2 + $0x1f8] sm:$0xff]
      %v639 = vld [vmem:[%s2 + $0x200] sm:$0xff]
      %v640 = vld [vmem:[%s2 + $0x208] sm:$0xff]
      %v641 = vld [vmem:[%s2 + $0x210] sm:$0xff]
      %v642 = vld [vmem:[%s2 + $0x218] sm:$0xff]
      %v643 = vld [vmem:[%s2 + $0x220] sm:$0xff]
      %v644 = vld [vmem:[%s2 + $0x228] sm:$0xff]
      %v645 = vld [vmem:[%s2 + $0x230] sm:$0xff]
      %v646 = vld [vmem:[%s2 + $0x238] sm:$0xff]
      %v647 = vld [vmem:[%s2 + $0x240] sm:$0xff]
      %v648 = vld [vmem:[%s2 + $0x248] sm:$0xff]
      %v649 = vld [vmem:[%s2 + $0x250] sm:$0xff]
      %v650 = vld [vmem:[%s2 + $0x258] sm:$0xff]
      %v651 = vld [vmem:[%s2 + $0x260] sm:$0xff]
      %v652 = vld [vmem:[%s2 + $0x268] sm:$0xff]
      %v653 = vld [vmem:[%s2 + $0x270] sm:$0xff]
      %v654 = vld [vmem:[%s2 + $0x278] sm:$0xff]
      %v655 = vld [vmem:[%s2 + $0x280] sm:$0xff]
      %v656 = vld [vmem:[%s2 + $0x288] sm:$0xff]
      %v657 = vld [vmem:[%s2 + $0x290] sm:$0xff]
      %v658 = vld [vmem:[%s2 + $0x298] sm:$0xff]
      %v659 = vld [vmem:[%s2 + $0x2a0] sm:$0xff]
      %v660 = vld [vmem:[%s2 + $0x2a8] sm:$0xff]
      %v661 = vld [vmem:[%s2 + $0x2b0] sm:$0xff]
      %v662 = vld [vmem:[%s2 + $0x2b8] sm:$0xff]
      %v663 = vld [vmem:[%s2 + $0x2c0] sm:$0xff]
      %v664 = vld [vmem:[%s2 + $0x2c8] sm:$0xff]
      %v665 = vld [vmem:[%s2 + $0x2d0] sm:$0xff]
      %v666 = vld [vmem:[%s2 + $0x2d8] sm:$0xff]
      %v667 = vld [vmem:[%s2 + $0x2e0] sm:$0xff]
      %v668 = vld [vmem:[%s2 + $0x2e8] sm:$0xff]
      %v669 = vld [vmem:[%s2 + $0x2f0] sm:$0xff]
      %v670 = vld [vmem:[%s2 + $0x2f8] sm:$0xff]
      %v671 = vld [vmem:[%s2 + $0x300] sm:$0xff]
      %v672 = vld [vmem:[%s2 + $0x308] sm:$0xff]
      %v673 = vld [vmem:[%s2 + $0x310] sm:$0xff]
      %v674 = vld [vmem:[%s2 + $0x318] sm:$0xff]
      %v675 = vld [vmem:[%s2 + $0x320] sm:$0xff]
      %v676 = vld [vmem:[%s2 + $0x328] sm:$0xff]
      %v677 = vld [vmem:[%s2 + $0x330] sm:$0xff]
      %v678 = vld [vmem:[%s2 + $0x338] sm:$0xff]
      %v679 = vld [vmem:[%s2 + $0x340] sm:$0xff]
      %v680 = vld [vmem:[%s2 + $0x348] sm:$0xff]
      %v681 = vld [vmem:[%s2 + $0x350] sm:$0xff]
      %v682 = vld [vmem:[%s2 + $0x358] sm:$0xff]
      %v683 = vld [vmem:[%s2 + $0x360] sm:$0xff]
      %v684 = vld [vmem:[%s2 + $0x368] sm:$0xff]
      %v685 = vld [vmem:[%s2 + $0x370] sm:$0xff]
      %v686 = vld [vmem:[%s2 + $0x378] sm:$0xff]
      %v687 = vld [vmem:[%s2 + $0x380] sm:$0xff]
      %v688 = vld [vmem:[%s2 + $0x388] sm:$0xff]
      %v689 = vld [vmem:[%s2 + $0x390] sm:$0xff]
      %v690 = vld [vmem:[%s2 + $0x398] sm:$0xff]
      %v691 = vld [vmem:[%s2 + $0x3a0] sm:$0xff]
      %v692 = vld [vmem:[%s2 + $0x3a8] sm:$0xff]
      %v693 = vld [vmem:[%s2 + $0x3b0] sm:$0xff]
      %v694 = vld [vmem:[%s2 + $0x3b8] sm:$0xff]
      %v695 = vld [vmem:[%s2 + $0x3c0] sm:$0xff]
      %v696 = vld [vmem:[%s2 + $0x3c8] sm:$0xff]
      %v697 = vld [vmem:[%s2 + $0x3d0] sm:$0xff]
      %v698 = vld [vmem:[%s2 + $0x3d8] sm:$0xff]
      %v699 = vld [vmem:[%s2 + $0x3e0] sm:$0xff]
      %v700 = vld [vmem:[%s2 + $0x3e8] sm:$0xff]
      %v701 = vld [vmem:[%s2 + $0x3f0] sm:$0xff]
      %v702 = vld [vmem:[%s2 + $0x3f8] sm:$0xff]
      %v703 = vld [vmem:[%s2 + $0x400] sm:$0xff]
      %v704 = vld [vmem:[%s2 + $0x408] sm:$0xff]
      %v705 = vld [vmem:[%s2 + $0x410] sm:$0xff]
      %v706 = vld [vmem:[%s2 + $0x418] sm:$0xff]
      %v707 = vld [vmem:[%s2 + $0x420] sm:$0xff]
      %v708 = vld [vmem:[%s2 + $0x428] sm:$0xff]
      %v709 = vld [vmem:[%s2 + $0x430] sm:$0xff]
      %v710 = vld [vmem:[%s2 + $0x438] sm:$0xff]
      %v711 = vld [vmem:[%s2 + $0x440] sm:$0xff]
      %v712 = vld [vmem:[%s2 + $0x448] sm:$0xff]
      %v713 = vld [vmem:[%s2 + $0x450] sm:$0xff]
      %v714 = vld [vmem:[%s2 + $0x458] sm:$0xff]
      %v715 = vld [vmem:[%s2 + $0x460] sm:$0xff]
      %v716 = vld [vmem:[%s2 + $0x468] sm:$0xff]
      %v717 = vld [vmem:[%s2 + $0x470] sm:$0xff]
      %v718 = vld [vmem:[%s2 + $0x478] sm:$0xff]
      %719 = vmatprep.subr.mxu0 0.0
      %720 = vmatpush1.msra.mxu0 %v590
      %721 = vmatprep.subr.mxu0 0.0
      %722 = vmatpush1.msra.mxu0 %v589
      %723 = vmatprep.subr.mxu0 0.0
      %724 = vmatpush1.msra.mxu0 %v588
      %725 = vmatprep.subr.mxu0 0.0
      %726 = vmatpush1.msra.mxu0 %v587
      %727 = vmatprep.subr.mxu0 0.0
      %728 = vmatpush1.msra.mxu0 %v586
      %729 = vmatprep.subr.mxu0 0.0
      %730 = vmatpush1.msra.mxu0 %v585
      %731 = vmatprep.subr.mxu0 0.0
      %732 = vmatpush1.msra.mxu0 %v584
      %733 = vmatprep.subr.mxu0 0.0
      %734 = vmatpush1.msra.mxu0 %v583
      %735 = vmatprep.subr.mxu0 0.0
      %736 = vmatpush1.msra.mxu0 %v582
      %737 = vmatprep.subr.mxu0 0.0
      %738 = vmatpush1.msra.mxu0 %v581
      %739 = vmatprep.subr.mxu0 0.0
      %740 = vmatpush1.msra.mxu0 %v580
      %741 = vmatprep.subr.mxu0 0.0
      %742 = vmatpush1.msra.mxu0 %v579
      %743 = vmatprep.subr.mxu0 0.0
      %744 = vmatpush1.msra.mxu0 %v578
      %745 = vmatprep.subr.mxu0 0.0
      %746 = vmatpush1.msra.mxu0 %v577
      %747 = vmatprep.subr.mxu0 0.0
      %748 = vmatpush1.msra.mxu0 %v576
      %749 = vmatprep.subr.mxu0 0.0
      %750 = vmatpush1.msra.mxu0 %v575
      %751 = vmatprep.subr.mxu0 0.0
      %752 = vmatpush2.msra.mxu0 %v606
      %753 = vmatprep.subr.mxu0 0.0
      %754 = vmatpush2.msra.mxu0 %v605
      %755 = vmatprep.subr.mxu0 0.0
      %756 = vmatpush2.msra.mxu0 %v604
      %757 = vmatprep.subr.mxu0 0.0
      %758 = vmatpush2.msra.mxu0 %v603
      %759 = vmatprep.subr.mxu0 0.0
      %760 = vmatpush2.msra.mxu0 %v602
      %761 = vmatprep.subr.mxu0 0.0
      %762 = vmatpush2.msra.mxu0 %v601
      %763 = vmatprep.subr.mxu0 0.0
      %764 = vmatpush2.msra.mxu0 %v600
      %765 = vmatprep.subr.mxu0 0.0
      %766 = vmatpush2.msra.mxu0 %v599
      %767 = vmatprep.subr.mxu0 0.0
      %768 = vmatpush2.msra.mxu0 %v598
      %769 = vmatprep.subr.mxu0 0.0
      %770 = vmatpush2.msra.mxu0 %v597
      %771 = vmatprep.subr.mxu0 0.0
      %772 = vmatpush2.msra.mxu0 %v596
      %773 = vmatprep.subr.mxu0 0.0
      %774 = vmatpush2.msra.mxu0 %v595
      %775 = vmatprep.subr.mxu0 0.0
      %776 = vmatpush2.msra.mxu0 %v594
      %777 = vmatprep.subr.mxu0 0.0
      %778 = vmatpush2.msra.mxu0 %v593
      %779 = vmatprep.subr.mxu0 0.0
      %780 = vmatpush2.msra.mxu0 %v592
      %781 = vmatprep.subr.mxu0 0.0
      %782 = vmatpush2.msra.mxu0 %v591
      %783 = vmatprep.mubr.f32.mxu0 %v441
      %784 = vmatmul.mubr.f32.gmra.mxu0 %v425
      %v785 = vpop.f32.mrf.mxu0
      %v786 = vadd.f32 0.0, %v785
      %v787 = vpop.f32.mrf.mxu0
      %788 = vmatprep.mubr.f32.mxu0 %v442
      %789 = vmatmul.mubr.f32.gmra.mxu0 %v426
      %v790 = vpop.f32.mrf.mxu0
      %v791 = vadd.f32 0.0, %v790
      %v792 = vpop.f32.mrf.mxu0
      %793 = vmatprep.mubr.f32.mxu0 %v443
      %794 = vmatmul.mubr.f32.gmra.mxu0 %v427
      %v795 = vpop.f32.mrf.mxu0
      %v796 = vadd.f32 0.0, %v795
      %v797 = vpop.f32.mrf.mxu0
      %798 = vmatprep.mubr.f32.mxu0 %v444
      %799 = vmatmul.mubr.f32.gmra.mxu0 %v428
      %v800 = vpop.f32.mrf.mxu0
      %v801 = vadd.f32 0.0, %v800
      %v802 = vpop.f32.mrf.mxu0
      %803 = vmatprep.mubr.f32.mxu0 %v445
      %804 = vmatmul.mubr.f32.gmra.mxu0 %v429
      %v805 = vpop.f32.mrf.mxu0
      %v806 = vadd.f32 0.0, %v805
      %v807 = vpop.f32.mrf.mxu0
      %808 = vmatprep.mubr.f32.mxu0 %v446
      %809 = vmatmul.mubr.f32.gmra.mxu0 %v430
      %v810 = vpop.f32.mrf.mxu0
      %v811 = vadd.f32 0.0, %v810
      %v812 = vpop.f32.mrf.mxu0
      %813 = vmatprep.mubr.f32.mxu0 %v447
      %814 = vmatmul.mubr.f32.gmra.mxu0 %v431
      %v815 = vpop.f32.mrf.mxu0
      %v816 = vadd.f32 0.0, %v815
      %v817 = vpop.f32.mrf.mxu0
      %818 = vmatprep.mubr.f32.mxu0 %v448
      %819 = vmatmul.mubr.f32.gmra.mxu0 %v432
      %v820 = vpop.f32.mrf.mxu0
      %v821 = vadd.f32 0.0, %v820
      %v822 = vpop.f32.mrf.mxu0
      %823 = vmatprep.mubr.f32.mxu0 %v449
      %824 = vmatmul.mubr.f32.gmra.mxu0 %v433
      %v825 = vpop.f32.mrf.mxu0
      %v826 = vadd.f32 0.0, %v825
      %v827 = vpop.f32.mrf.mxu0
      %828 = vmatprep.mubr.f32.mxu0 %v450
      %829 = vmatmul.mubr.f32.gmra.mxu0 %v434
      %v830 = vpop.f32.mrf.mxu0
      %v831 = vadd.f32 0.0, %v830
      %v832 = vpop.f32.mrf.mxu0
      %833 = vmatprep.mubr.f32.mxu0 %v451
      %834 = vmatmul.mubr.f32.gmra.mxu0 %v435
      %v835 = vpop.f32.mrf.mxu0
      %v836 = vadd.f32 0.0, %v835
      %v837 = vpop.f32.mrf.mxu0
      %838 = vmatprep.mubr.f32.mxu0 %v452
      %839 = vmatmul.mubr.f32.gmra.mxu0 %v436
      %v840 = vpop.f32.mrf.mxu0
      %v841 = vadd.f32 0.0, %v840
      %v842 = vpop.f32.mrf.mxu0
      %843 = vmatprep.mubr.f32.mxu0 %v453
      %844 = vmatmul.mubr.f32.gmra.mxu0 %v437
      %v845 = vpop.f32.mrf.mxu0
      %v846 = vadd.f32 0.0, %v845
      %v847 = vpop.f32.mrf.mxu0
      %848 = vmatprep.mubr.f32.mxu0 %v454
      %849 = vmatmul.mubr.f32.gmra.mxu0 %v438
      %v850 = vpop.f32.mrf.mxu0
      %v851 = vadd.f32 0.0, %v850
      %v852 = vpop.f32.mrf.mxu0
      %853 = vmatprep.mubr.f32.mxu0 %v455
      %854 = vmatmul.mubr.f32.gmra.mxu0 %v439
      %v855 = vpop.f32.mrf.mxu0
      %v856 = vadd.f32 0.0, %v855
      %v857 = vpop.f32.mrf.mxu0
      %858 = vmatprep.mubr.f32.mxu0 %v456
      %859 = vmatmul.mubr.f32.gmra.mxu0 %v440
      %v860 = vpop.f32.mrf.mxu0
      %v861 = vadd.f32 0.0, %v860
      %v862 = vpop.f32.mrf.mxu0
      %863 = vdwg.mxu0
      %864 = vmatprep.subr.mxu0 0.0
      %865 = vmatpush1.msra.mxu0 %v622
      %866 = vmatprep.subr.mxu0 0.0
      %867 = vmatpush1.msra.mxu0 %v621
      %868 = vmatprep.subr.mxu0 0.0
      %869 = vmatpush1.msra.mxu0 %v620
      %870 = vmatprep.subr.mxu0 0.0
      %871 = vmatpush1.msra.mxu0 %v619
      %872 = vmatprep.subr.mxu0 0.0
      %873 = vmatpush1.msra.mxu0 %v618
      %874 = vmatprep.subr.mxu0 0.0
      %875 = vmatpush1.msra.mxu0 %v617
      %876 = vmatprep.subr.mxu0 0.0
      %877 = vmatpush1.msra.mxu0 %v616
      %878 = vmatprep.subr.mxu0 0.0
      %879 = vmatpush1.msra.mxu0 %v615
      %880 = vmatprep.subr.mxu0 0.0
      %881 = vmatpush1.msra.mxu0 %v614
      %882 = vmatprep.subr.mxu0 0.0
      %883 = vmatpush1.msra.mxu0 %v613
      %884 = vmatprep.subr.mxu0 0.0
      %885 = vmatpush1.msra.mxu0 %v612
      %886 = vmatprep.subr.mxu0 0.0
      %887 = vmatpush1.msra.mxu0 %v611
      %888 = vmatprep.subr.mxu0 0.0
      %889 = vmatpush1.msra.mxu0 %v610
      %890 = vmatprep.subr.mxu0 0.0
      %891 = vmatpush1.msra.mxu0 %v609
      %892 = vmatprep.subr.mxu0 0.0
      %893 = vmatpush1.msra.mxu0 %v608
      %894 = vmatprep.subr.mxu0 0.0
      %895 = vmatpush1.msra.mxu0 %v607
      %896 = vmatprep.subr.mxu0 0.0
      %897 = vmatpush2.msra.mxu0 %v638
      %898 = vmatprep.subr.mxu0 0.0
      %899 = vmatpush2.msra.mxu0 %v637
      %900 = vmatprep.subr.mxu0 0.0
      %901 = vmatpush2.msra.mxu0 %v636
      %902 = vmatprep.subr.mxu0 0.0
      %903 = vmatpush2.msra.mxu0 %v635
      %904 = vmatprep.subr.mxu0 0.0
      %905 = vmatpush2.msra.mxu0 %v634
      %906 = vmatprep.subr.mxu0 0.0
      %907 = vmatpush2.msra.mxu0 %v633
      %908 = vmatprep.subr.mxu0 0.0
      %909 = vmatpush2.msra.mxu0 %v632
      %910 = vmatprep.subr.mxu0 0.0
      %911 = vmatpush2.msra.mxu0 %v631
      %912 = vmatprep.subr.mxu0 0.0
      %913 = vmatpush2.msra.mxu0 %v630
      %914 = vmatprep.subr.mxu0 0.0
      %915 = vmatpush2.msra.mxu0 %v629
      %916 = vmatprep.subr.mxu0 0.0
      %917 = vmatpush2.msra.mxu0 %v628
      %918 = vmatprep.subr.mxu0 0.0
      %919 = vmatpush2.msra.mxu0 %v627
      %920 = vmatprep.subr.mxu0 0.0
      %921 = vmatpush2.msra.mxu0 %v626
      %922 = vmatprep.subr.mxu0 0.0
      %923 = vmatpush2.msra.mxu0 %v625
      %924 = vmatprep.subr.mxu0 0.0
      %925 = vmatpush2.msra.mxu0 %v624
      %926 = vmatprep.subr.mxu0 0.0
      %927 = vmatpush2.msra.mxu0 %v623
      %928 = vmatprep.mubr.f32.mxu0 %v476
      %929 = vmatmul.mubr.f32.gmra.mxu0 %v457
      %v930 = vpop.f32.mrf.mxu0
      %v931 = vadd.f32 %v786, %v930
      %v932 = vpop.f32.mrf.mxu0
      %933 = vmatprep.mubr.f32.mxu0 %v477
      %934 = vmatmul.mubr.f32.gmra.mxu0 %v458
      %v935 = vpop.f32.mrf.mxu0
      %v936 = vadd.f32 %v791, %v935
      %v937 = vpop.f32.mrf.mxu0
      %938 = vmatprep.mubr.f32.mxu0 %v478
      %939 = vmatmul.mubr.f32.gmra.mxu0 %v459
      %v940 = vpop.f32.mrf.mxu0
      %v941 = vadd.f32 %v796, %v940
      %v942 = vpop.f32.mrf.mxu0
      %943 = vmatprep.mubr.f32.mxu0 %v479
      %944 = vmatmul.mubr.f32.gmra.mxu0 %v460
      %v945 = vpop.f32.mrf.mxu0
      %v946 = vadd.f32 %v801, %v945
      %v947 = vpop.f32.mrf.mxu0
      %948 = vmatprep.mubr.f32.mxu0 %v480
      %949 = vmatmul.mubr.f32.gmra.mxu0 %v461
      %v950 = vpop.f32.mrf.mxu0
      %v951 = vadd.f32 %v806, %v950
      %v952 = vpop.f32.mrf.mxu0
      %953 = vmatprep.mubr.f32.mxu0 %v481
      %954 = vmatmul.mubr.f32.gmra.mxu0 %v462
      %v955 = vpop.f32.mrf.mxu0
      %v956 = vadd.f32 %v811, %v955
      %v957 = vpop.f32.mrf.mxu0
      %958 = vmatprep.mubr.f32.mxu0 %v482
      %959 = vmatmul.mubr.f32.gmra.mxu0 %v463
      %v960 = vpop.f32.mrf.mxu0
      %v961 = vadd.f32 %v816, %v960
      %v962 = vpop.f32.mrf.mxu0
      %963 = vmatprep.mubr.f32.mxu0 %v483
      %964 = vmatmul.mubr.f32.gmra.mxu0 %v464
      %v965 = vpop.f32.mrf.mxu0
      %v966 = vadd.f32 %v821, %v965
      %v967 = vpop.f32.mrf.mxu0
      %968 = vmatprep.mubr.f32.mxu0 %v484
      %969 = vmatmul.mubr.f32.gmra.mxu0 %v465
      %v970 = vpop.f32.mrf.mxu0
      %v971 = vadd.f32 %v826, %v970
      %v972 = vpop.f32.mrf.mxu0
      %973 = vmatprep.mubr.f32.mxu0 %v485
      %974 = vmatmul.mubr.f32.gmra.mxu0 %v466
      %v975 = vpop.f32.mrf.mxu0
      %v976 = vadd.f32 %v831, %v975
      %v977 = vpop.f32.mrf.mxu0
      %978 = vmatprep.mubr.f32.mxu0 %v486
      %979 = vmatmul.mubr.f32.gmra.mxu0 %v467
      %v980 = vpop.f32.mrf.mxu0
      %v981 = vadd.f32 %v836, %v980
      %v982 = vpop.f32.mrf.mxu0
      %983 = vmatprep.mubr.f32.mxu0 %v487
      %984 = vmatmul.mubr.f32.gmra.mxu0 %v468
      %v985 = vpop.f32.mrf.mxu0
      %v986 = vadd.f32 %v841, %v985
      %v987 = vpop.f32.mrf.mxu0
      %988 = vmatprep.mubr.f32.mxu0 %v488
      %989 = vmatmul.mubr.f32.gmra.mxu0 %v469
      %v990 = vpop.f32.mrf.mxu0
      %v991 = vadd.f32 %v846, %v990
      %v992 = vpop.f32.mrf.mxu0
      %993 = vmatprep.mubr.f32.mxu0 %v489
      %994 = vmatmul.mubr.f32.gmra.mxu0 %v470
      %v995 = vpop.f32.mrf.mxu0
      %v996 = vadd.f32 %v851, %v995
      %v997 = vpop.f32.mrf.mxu0
      %998 = vmatprep.mubr.f32.mxu0 %v490
      %999 = vmatmul.mubr.f32.gmra.mxu0 %v471
      %v1000 = vpop.f32.mrf.mxu0
      %v1001 = vadd.f32 %v856, %v1000
      %v1002 = vpop.f32.mrf.mxu0
      %1003 = vmatprep.mubr.f32.mxu0 %v491
      %1004 = vmatmul.mubr.f32.gmra.mxu0 %v472
      %v1005 = vpop.f32.mrf.mxu0
      %v1006 = vadd.f32 %v861, %v1005
      %v1007 = vpop.f32.mrf.mxu0
      %1008 = vdwg.mxu0
      %1009 = vmatprep.subr.mxu0 0.0
      %1010 = vmatpush1.msra.mxu0 %v654
      %1011 = vmatprep.subr.mxu0 0.0
      %1012 = vmatpush1.msra.mxu0 %v653
      %1013 = vmatprep.subr.mxu0 0.0
      %1014 = vmatpush1.msra.mxu0 %v652
      %1015 = vmatprep.subr.mxu0 0.0
      %1016 = vmatpush1.msra.mxu0 %v651
      %1017 = vmatprep.subr.mxu0 0.0
      %1018 = vmatpush1.msra.mxu0 %v650
      %1019 = vmatprep.subr.mxu0 0.0
      %1020 = vmatpush1.msra.mxu0 %v649
      %1021 = vmatprep.subr.mxu0 0.0
      %1022 = vmatpush1.msra.mxu0 %v648
      %1023 = vmatprep.subr.mxu0 0.0
      %1024 = vmatpush1.msra.mxu0 %v647
      %1025 = vmatprep.subr.mxu0 0.0
      %1026 = vmatpush1.msra.mxu0 %v646
      %1027 = vmatprep.subr.mxu0 0.0
      %1028 = vmatpush1.msra.mxu0 %v645
      %1029 = vmatprep.subr.mxu0 0.0
      %1030 = vmatpush1.msra.mxu0 %v644
      %1031 = vmatprep.subr.mxu0 0.0
      %1032 = vmatpush1.msra.mxu0 %v643
      %1033 = vmatprep.subr.mxu0 0.0
      %1034 = vmatpush1.msra.mxu0 %v642
      %1035 = vmatprep.subr.mxu0 0.0
      %1036 = vmatpush1.msra.mxu0 %v641
      %1037 = vmatprep.subr.mxu0 0.0
      %1038 = vmatpush1.msra.mxu0 %v640
      %1039 = vmatprep.subr.mxu0 0.0
      %1040 = vmatpush1.msra.mxu0 %v639
      %1041 = vmatprep.subr.mxu0 0.0
      %1042 = vmatpush2.msra.mxu0 %v670
      %1043 = vmatprep.subr.mxu0 0.0
      %1044 = vmatpush2.msra.mxu0 %v669
      %1045 = vmatprep.subr.mxu0 0.0
      %1046 = vmatpush2.msra.mxu0 %v668
      %1047 = vmatprep.subr.mxu0 0.0
      %1048 = vmatpush2.msra.mxu0 %v667
      %1049 = vmatprep.subr.mxu0 0.0
      %1050 = vmatpush2.msra.mxu0 %v666
      %1051 = vmatprep.subr.mxu0 0.0
      %1052 = vmatpush2.msra.mxu0 %v665
      %1053 = vmatprep.subr.mxu0 0.0
      %1054 = vmatpush2.msra.mxu0 %v664
      %1055 = vmatprep.subr.mxu0 0.0
      %1056 = vmatpush2.msra.mxu0 %v663
      %1057 = vmatprep.subr.mxu0 0.0
      %1058 = vmatpush2.msra.mxu0 %v662
      %1059 = vmatprep.subr.mxu0 0.0
      %1060 = vmatpush2.msra.mxu0 %v661
      %1061 = vmatprep.subr.mxu0 0.0
      %1062 = vmatpush2.msra.mxu0 %v660
      %1063 = vmatprep.subr.mxu0 0.0
      %1064 = vmatpush2.msra.mxu0 %v659
      %1065 = vmatprep.subr.mxu0 0.0
      %1066 = vmatpush2.msra.mxu0 %v658
      %1067 = vmatprep.subr.mxu0 0.0
      %1068 = vmatpush2.msra.mxu0 %v657
      %1069 = vmatprep.subr.mxu0 0.0
      %1070 = vmatpush2.msra.mxu0 %v656
      %1071 = vmatprep.subr.mxu0 0.0
      %1072 = vmatpush2.msra.mxu0 %v655
      %1073 = vmatprep.mubr.f32.mxu0 %v508
      %1074 = vmatmul.mubr.f32.gmra.mxu0 %v492
      %v1075 = vpop.f32.mrf.mxu0
      %v1076 = vadd.f32 %v931, %v1075
      %v1077 = vpop.f32.mrf.mxu0
      %1078 = vmatprep.mubr.f32.mxu0 %v509
      %1079 = vmatmul.mubr.f32.gmra.mxu0 %v493
      %v1080 = vpop.f32.mrf.mxu0
      %v1081 = vadd.f32 %v936, %v1080
      %v1082 = vpop.f32.mrf.mxu0
      %1083 = vmatprep.mubr.f32.mxu0 %v510
      %1084 = vmatmul.mubr.f32.gmra.mxu0 %v494
      %v1085 = vpop.f32.mrf.mxu0
      %v1086 = vadd.f32 %v941, %v1085
      %v1087 = vpop.f32.mrf.mxu0
      %1088 = vmatprep.mubr.f32.mxu0 %v511
      %1089 = vmatmul.mubr.f32.gmra.mxu0 %v495
      %v1090 = vpop.f32.mrf.mxu0
      %v1091 = vadd.f32 %v946, %v1090
      %v1092 = vpop.f32.mrf.mxu0
      %1093 = vmatprep.mubr.f32.mxu0 %v512
      %1094 = vmatmul.mubr.f32.gmra.mxu0 %v496
      %v1095 = vpop.f32.mrf.mxu0
      %v1096 = vadd.f32 %v951, %v1095
      %v1097 = vpop.f32.mrf.mxu0
      %1098 = vmatprep.mubr.f32.mxu0 %v513
      %1099 = vmatmul.mubr.f32.gmra.mxu0 %v497
      %v1100 = vpop.f32.mrf.mxu0
      %v1101 = vadd.f32 %v956, %v1100
      %v1102 = vpop.f32.mrf.mxu0
      %1103 = vmatprep.mubr.f32.mxu0 %v514
      %1104 = vmatmul.mubr.f32.gmra.mxu0 %v498
      %v1105 = vpop.f32.mrf.mxu0
      %v1106 = vadd.f32 %v961, %v1105
      %v1107 = vpop.f32.mrf.mxu0
      %1108 = vmatprep.mubr.f32.mxu0 %v515
      %1109 = vmatmul.mubr.f32.gmra.mxu0 %v499
      %v1110 = vpop.f32.mrf.mxu0
      %v1111 = vadd.f32 %v966, %v1110
      %v1112 = vpop.f32.mrf.mxu0
      %1113 = vmatprep.mubr.f32.mxu0 %v516
      %1114 = vmatmul.mubr.f32.gmra.mxu0 %v500
      %v1115 = vpop.f32.mrf.mxu0
      %v1116 = vadd.f32 %v971, %v1115
      %v1117 = vpop.f32.mrf.mxu0
      %1118 = vmatprep.mubr.f32.mxu0 %v517
      %1119 = vmatmul.mubr.f32.gmra.mxu0 %v501
      %v1120 = vpop.f32.mrf.mxu0
      %v1121 = vadd.f32 %v976, %v1120
      %v1122 = vpop.f32.mrf.mxu0
      %1123 = vmatprep.mubr.f32.mxu0 %v518
      %1124 = vmatmul.mubr.f32.gmra.mxu0 %v502
      %v1125 = vpop.f32.mrf.mxu0
      %v1126 = vadd.f32 %v981, %v1125
      %v1127 = vpop.f32.mrf.mxu0
      %1128 = vmatprep.mubr.f32.mxu0 %v519
      %1129 = vmatmul.mubr.f32.gmra.mxu0 %v503
      %v1130 = vpop.f32.mrf.mxu0
      %v1131 = vadd.f32 %v986, %v1130
      %v1132 = vpop.f32.mrf.mxu0
      %1133 = vmatprep.mubr.f32.mxu0 %v520
      %1134 = vmatmul.mubr.f32.gmra.mxu0 %v504
      %v1135 = vpop.f32.mrf.mxu0
      %v1136 = vadd.f32 %v991, %v1135
      %v1137 = vpop.f32.mrf.mxu0
      %1138 = vmatprep.mubr.f32.mxu0 %v521
      %1139 = vmatmul.mubr.f32.gmra.mxu0 %v505
      %v1140 = vpop.f32.mrf.mxu0
      %v1141 = vadd.f32 %v996, %v1140
      %v1142 = vpop.f32.mrf.mxu0
      %1143 = vmatprep.mubr.f32.mxu0 %v522
      %1144 = vmatmul.mubr.f32.gmra.mxu0 %v506
      %v1145 = vpop.f32.mrf.mxu0
      %v1146 = vadd.f32 %v1001, %v1145
      %v1147 = vpop.f32.mrf.mxu0
      %1148 = vmatprep.mubr.f32.mxu0 %v523
      %1149 = vmatmul.mubr.f32.gmra.mxu0 %v507
      %v1150 = vpop.f32.mrf.mxu0
      %v1151 = vadd.f32 %v1006, %v1150
      %v1152 = vpop.f32.mrf.mxu0
      %1153 = vdwg.mxu0
      %1154 = vmatprep.subr.mxu0 0.0
      %1155 = vmatpush1.msra.mxu0 %v686
      %1156 = vmatprep.subr.mxu0 0.0
      %1157 = vmatpush1.msra.mxu0 %v685
      %1158 = vmatprep.subr.mxu0 0.0
      %1159 = vmatpush1.msra.mxu0 %v684
      %1160 = vmatprep.subr.mxu0 0.0
      %1161 = vmatpush1.msra.mxu0 %v683
      %1162 = vmatprep.subr.mxu0 0.0
      %1163 = vmatpush1.msra.mxu0 %v682
      %1164 = vmatprep.subr.mxu0 0.0
      %1165 = vmatpush1.msra.mxu0 %v681
      %1166 = vmatprep.subr.mxu0 0.0
      %1167 = vmatpush1.msra.mxu0 %v680
      %1168 = vmatprep.subr.mxu0 0.0
      %1169 = vmatpush1.msra.mxu0 %v679
      %1170 = vmatprep.subr.mxu0 0.0
      %1171 = vmatpush1.msra.mxu0 %v678
      %1172 = vmatprep.subr.mxu0 0.0
      %1173 = vmatpush1.msra.mxu0 %v677
      %1174 = vmatprep.subr.mxu0 0.0
      %1175 = vmatpush1.msra.mxu0 %v676
      %1176 = vmatprep.subr.mxu0 0.0
      %1177 = vmatpush1.msra.mxu0 %v675
      %1178 = vmatprep.subr.mxu0 0.0
      %1179 = vmatpush1.msra.mxu0 %v674
      %1180 = vmatprep.subr.mxu0 0.0
      %1181 = vmatpush1.msra.mxu0 %v673
      %1182 = vmatprep.subr.mxu0 0.0
      %1183 = vmatpush1.msra.mxu0 %v672
      %1184 = vmatprep.subr.mxu0 0.0
      %1185 = vmatpush1.msra.mxu0 %v671
      %1186 = vmatprep.subr.mxu0 0.0
      %1187 = vmatpush2.msra.mxu0 %v702
      %1188 = vmatprep.subr.mxu0 0.0
      %1189 = vmatpush2.msra.mxu0 %v701
      %1190 = vmatprep.subr.mxu0 0.0
      %1191 = vmatpush2.msra.mxu0 %v700
      %1192 = vmatprep.subr.mxu0 0.0
      %1193 = vmatpush2.msra.mxu0 %v699
      %1194 = vmatprep.subr.mxu0 0.0
      %1195 = vmatpush2.msra.mxu0 %v698
      %1196 = vmatprep.subr.mxu0 0.0
      %1197 = vmatpush2.msra.mxu0 %v697
      %1198 = vmatprep.subr.mxu0 0.0
      %1199 = vmatpush2.msra.mxu0 %v696
      %1200 = vmatprep.subr.mxu0 0.0
      %1201 = vmatpush2.msra.mxu0 %v695
      %1202 = vmatprep.subr.mxu0 0.0
      %1203 = vmatpush2.msra.mxu0 %v694
      %1204 = vmatprep.subr.mxu0 0.0
      %1205 = vmatpush2.msra.mxu0 %v693
      %1206 = vmatprep.subr.mxu0 0.0
      %1207 = vmatpush2.msra.mxu0 %v692
      %1208 = vmatprep.subr.mxu0 0.0
      %1209 = vmatpush2.msra.mxu0 %v691
      %1210 = vmatprep.subr.mxu0 0.0
      %1211 = vmatpush2.msra.mxu0 %v690
      %1212 = vmatprep.subr.mxu0 0.0
      %1213 = vmatpush2.msra.mxu0 %v689
      %1214 = vmatprep.subr.mxu0 0.0
      %1215 = vmatpush2.msra.mxu0 %v688
      %1216 = vmatprep.subr.mxu0 0.0
      %1217 = vmatpush2.msra.mxu0 %v687
      %1218 = vmatprep.mubr.f32.mxu0 %v543
      %1219 = vmatmul.mubr.f32.gmra.mxu0 %v527
      %v1220 = vpop.f32.mrf.mxu0
      %v1221 = vadd.f32 %v1076, %v1220
      %v1222 = vpop.f32.mrf.mxu0
      %1223 = vmatprep.mubr.f32.mxu0 %v544
      %1224 = vmatmul.mubr.f32.gmra.mxu0 %v528
      %v1225 = vpop.f32.mrf.mxu0
      %v1226 = vadd.f32 %v1081, %v1225
      %v1227 = vpop.f32.mrf.mxu0
      %1228 = vmatprep.mubr.f32.mxu0 %v545
      %1229 = vmatmul.mubr.f32.gmra.mxu0 %v529
      %v1230 = vpop.f32.mrf.mxu0
      %v1231 = vadd.f32 %v1086, %v1230
      %v1232 = vpop.f32.mrf.mxu0
      %1233 = vmatprep.mubr.f32.mxu0 %v546
      %1234 = vmatmul.mubr.f32.gmra.mxu0 %v530
      %v1235 = vpop.f32.mrf.mxu0
      %v1236 = vadd.f32 %v1091, %v1235
      %v1237 = vpop.f32.mrf.mxu0
      %1238 = vmatprep.mubr.f32.mxu0 %v547
      %1239 = vmatmul.mubr.f32.gmra.mxu0 %v531
      %v1240 = vpop.f32.mrf.mxu0
      %v1241 = vadd.f32 %v1096, %v1240
      %v1242 = vpop.f32.mrf.mxu0
      %1243 = vmatprep.mubr.f32.mxu0 %v548
      %1244 = vmatmul.mubr.f32.gmra.mxu0 %v532
      %v1245 = vpop.f32.mrf.mxu0
      %v1246 = vadd.f32 %v1101, %v1245
      %v1247 = vpop.f32.mrf.mxu0
      %1248 = vmatprep.mubr.f32.mxu0 %v549
      %1249 = vmatmul.mubr.f32.gmra.mxu0 %v533
      %v1250 = vpop.f32.mrf.mxu0
      %v1251 = vadd.f32 %v1106, %v1250
      %v1252 = vpop.f32.mrf.mxu0
      %1253 = vmatprep.mubr.f32.mxu0 %v550
      %1254 = vmatmul.mubr.f32.gmra.mxu0 %v534
      %v1255 = vpop.f32.mrf.mxu0
      %v1256 = vadd.f32 %v1111, %v1255
      %v1257 = vpop.f32.mrf.mxu0
      %1258 = vmatprep.mubr.f32.mxu0 %v551
      %1259 = vmatmul.mubr.f32.gmra.mxu0 %v535
      %v1260 = vpop.f32.mrf.mxu0
      %v1261 = vadd.f32 %v1116, %v1260
      %v1262 = vpop.f32.mrf.mxu0
      %1263 = vmatprep.mubr.f32.mxu0 %v552
      %1264 = vmatmul.mubr.f32.gmra.mxu0 %v536
      %v1265 = vpop.f32.mrf.mxu0
      %v1266 = vadd.f32 %v1121, %v1265
      %v1267 = vpop.f32.mrf.mxu0
      %1268 = vmatprep.mubr.f32.mxu0 %v553
      %1269 = vmatmul.mubr.f32.gmra.mxu0 %v537
      %v1270 = vpop.f32.mrf.mxu0
      %v1271 = vadd.f32 %v1126, %v1270
      %v1272 = vpop.f32.mrf.mxu0
      %1273 = vmatprep.mubr.f32.mxu0 %v554
      %1274 = vmatmul.mubr.f32.gmra.mxu0 %v538
      %v1275 = vpop.f32.mrf.mxu0
      %v1276 = vadd.f32 %v1131, %v1275
      %v1277 = vpop.f32.mrf.mxu0
      %1278 = vmatprep.mubr.f32.mxu0 %v555
      %1279 = vmatmul.mubr.f32.gmra.mxu0 %v539
      %v1280 = vpop.f32.mrf.mxu0
      %v1281 = vadd.f32 %v1136, %v1280
      %v1282 = vpop.f32.mrf.mxu0
      %1283 = vmatprep.mubr.f32.mxu0 %v556
      %1284 = vmatmul.mubr.f32.gmra.mxu0 %v540
      %v1285 = vpop.f32.mrf.mxu0
      %v1286 = vadd.f32 %v1141, %v1285
      %v1287 = vpop.f32.mrf.mxu0
      %1288 = vmatprep.mubr.f32.mxu0 %v557
      %1289 = vmatmul.mubr.f32.gmra.mxu0 %v541
      %v1290 = vpop.f32.mrf.mxu0
      %v1291 = vadd.f32 %v1146, %v1290
      %v1292 = vpop.f32.mrf.mxu0
      %1293 = vmatprep.mubr.f32.mxu0 %v558
      %1294 = vmatmul.mubr.f32.gmra.mxu0 %v542
      %v1295 = vpop.f32.mrf.mxu0
      %v1296 = vadd.f32 %v1151, %v1295
      %v1297 = vpop.f32.mrf.mxu0
      %1298 = vdwg.mxu0
      %1299 = vmatprep.subr.mxu0 0.0
      %1300 = vmatpush1.msra.mxu0 %v718
      %1301 = vmatprep.subr.mxu0 0.0
      %1302 = vmatpush1.msra.mxu0 %v717
      %1303 = vmatprep.subr.mxu0 0.0
      %1304 = vmatpush1.msra.mxu0 %v716
      %1305 = vmatprep.subr.mxu0 0.0
      %1306 = vmatpush1.msra.mxu0 %v715
      %1307 = vmatprep.subr.mxu0 0.0
      %1308 = vmatpush1.msra.mxu0 %v714
      %1309 = vmatprep.subr.mxu0 0.0
      %1310 = vmatpush1.msra.mxu0 %v713
      %1311 = vmatprep.subr.mxu0 0.0
      %1312 = vmatpush1.msra.mxu0 %v712
      %1313 = vmatprep.subr.mxu0 0.0
      %1314 = vmatpush1.msra.mxu0 %v711
      %1315 = vmatprep.subr.mxu0 0.0
      %1316 = vmatpush1.msra.mxu0 %v710
      %1317 = vmatprep.subr.mxu0 0.0
      %1318 = vmatpush1.msra.mxu0 %v709
      %1319 = vmatprep.subr.mxu0 0.0
      %1320 = vmatpush1.msra.mxu0 %v708
      %1321 = vmatprep.subr.mxu0 0.0
      %1322 = vmatpush1.msra.mxu0 %v707
      %1323 = vmatprep.subr.mxu0 0.0
      %1324 = vmatpush1.msra.mxu0 %v706
      %1325 = vmatprep.subr.mxu0 0.0
      %1326 = vmatpush1.msra.mxu0 %v705
      %1327 = vmatprep.subr.mxu0 0.0
      %1328 = vmatpush1.msra.mxu0 %v704
      %1329 = vmatprep.subr.mxu0 0.0
      %1330 = vmatpush1.msra.mxu0 %v703
      %1331 = vmatprep.subr.mxu0 0.0
      %1332 = vmatpush2.msra.mxu0 0.0
      %1333 = vmatprep.subr.mxu0 0.0
      %1334 = vmatpush2.msra.mxu0 0.0
      %1335 = vmatprep.subr.mxu0 0.0
      %1336 = vmatpush2.msra.mxu0 0.0
      %1337 = vmatprep.subr.mxu0 0.0
      %1338 = vmatpush2.msra.mxu0 0.0
      %1339 = vmatprep.subr.mxu0 0.0
      %1340 = vmatpush2.msra.mxu0 0.0
      %1341 = vmatprep.subr.mxu0 0.0
      %1342 = vmatpush2.msra.mxu0 0.0
      %1343 = vmatprep.subr.mxu0 0.0
      %1344 = vmatpush2.msra.mxu0 0.0
      %1345 = vmatprep.subr.mxu0 0.0
      %1346 = vmatpush2.msra.mxu0 0.0
      %1347 = vmatprep.subr.mxu0 0.0
      %1348 = vmatpush2.msra.mxu0 0.0
      %1349 = vmatprep.subr.mxu0 0.0
      %1350 = vmatpush2.msra.mxu0 0.0
      %1351 = vmatprep.subr.mxu0 0.0
      %1352 = vmatpush2.msra.mxu0 0.0
      %1353 = vmatprep.subr.mxu0 0.0
      %1354 = vmatpush2.msra.mxu0 0.0
      %1355 = vmatprep.subr.mxu0 0.0
      %1356 = vmatpush2.msra.mxu0 0.0
      %1357 = vmatprep.subr.mxu0 0.0
      %1358 = vmatpush2.msra.mxu0 0.0
      %1359 = vmatprep.subr.mxu0 0.0
      %1360 = vmatpush2.msra.mxu0 0.0
      %1361 = vmatprep.subr.mxu0 0.0
      %1362 = vmatpush2.msra.mxu0 0.0
      %1363 = vmatprep.mubr.f32.mxu0 0.0
      %1364 = vmatmul.mubr.f32.gmra.mxu0 %v559
      %v1365 = vpop.f32.mrf.mxu0
      %v1366 = vadd.f32 %v1221, %v1365
      %v1367 = vpop.f32.mrf.mxu0
      %1368 = vmatprep.mubr.f32.mxu0 0.0
      %1369 = vmatmul.mubr.f32.gmra.mxu0 %v560
      %v1370 = vpop.f32.mrf.mxu0
      %v1371 = vadd.f32 %v1226, %v1370
      %v1372 = vpop.f32.mrf.mxu0
      %1373 = vmatprep.mubr.f32.mxu0 0.0
      %1374 = vmatmul.mubr.f32.gmra.mxu0 %v561
      %v1375 = vpop.f32.mrf.mxu0
      %v1376 = vadd.f32 %v1231, %v1375
      %v1377 = vpop.f32.mrf.mxu0
      %1378 = vmatprep.mubr.f32.mxu0 0.0
      %1379 = vmatmul.mubr.f32.gmra.mxu0 %v562
      %v1380 = vpop.f32.mrf.mxu0
      %v1381 = vadd.f32 %v1236, %v1380
      %v1382 = vpop.f32.mrf.mxu0
      %1383 = vmatprep.mubr.f32.mxu0 0.0
      %1384 = vmatmul.mubr.f32.gmra.mxu0 %v563
      %v1385 = vpop.f32.mrf.mxu0
      %v1386 = vadd.f32 %v1241, %v1385
      %v1387 = vpop.f32.mrf.mxu0
      %1388 = vmatprep.mubr.f32.mxu0 0.0
      %1389 = vmatmul.mubr.f32.gmra.mxu0 %v564
      %v1390 = vpop.f32.mrf.mxu0
      %v1391 = vadd.f32 %v1246, %v1390
      %v1392 = vpop.f32.mrf.mxu0
      %1393 = vmatprep.mubr.f32.mxu0 0.0
      %1394 = vmatmul.mubr.f32.gmra.mxu0 %v565
      %v1395 = vpop.f32.mrf.mxu0
      %v1396 = vadd.f32 %v1251, %v1395
      %v1397 = vpop.f32.mrf.mxu0
      %1398 = vmatprep.mubr.f32.mxu0 0.0
      %1399 = vmatmul.mubr.f32.gmra.mxu0 %v566
      %v1400 = vpop.f32.mrf.mxu0
      %v1401 = vadd.f32 %v1256, %v1400
      %v1402 = vpop.f32.mrf.mxu0
      %1403 = vmatprep.mubr.f32.mxu0 0.0
      %1404 = vmatmul.mubr.f32.gmra.mxu0 %v567
      %v1405 = vpop.f32.mrf.mxu0
      %v1406 = vadd.f32 %v1261, %v1405
      %v1407 = vpop.f32.mrf.mxu0
      %1408 = vmatprep.mubr.f32.mxu0 0.0
      %1409 = vmatmul.mubr.f32.gmra.mxu0 %v568
      %v1410 = vpop.f32.mrf.mxu0
      %v1411 = vadd.f32 %v1266, %v1410
      %v1412 = vpop.f32.mrf.mxu0
      %1413 = vmatprep.mubr.f32.mxu0 0.0
      %1414 = vmatmul.mubr.f32.gmra.mxu0 %v569
      %v1415 = vpop.f32.mrf.mxu0
      %v1416 = vadd.f32 %v1271, %v1415
      %v1417 = vpop.f32.mrf.mxu0
      %1418 = vmatprep.mubr.f32.mxu0 0.0
      %1419 = vmatmul.mubr.f32.gmra.mxu0 %v570
      %v1420 = vpop.f32.mrf.mxu0
      %v1421 = vadd.f32 %v1276, %v1420
      %v1422 = vpop.f32.mrf.mxu0
      %1423 = vmatprep.mubr.f32.mxu0 0.0
      %1424 = vmatmul.mubr.f32.gmra.mxu0 %v571
      %v1425 = vpop.f32.mrf.mxu0
      %v1426 = vadd.f32 %v1281, %v1425
      %v1427 = vpop.f32.mrf.mxu0
      %1428 = vmatprep.mubr.f32.mxu0 0.0
      %1429 = vmatmul.mubr.f32.gmra.mxu0 %v572
      %v1430 = vpop.f32.mrf.mxu0
      %v1431 = vadd.f32 %v1286, %v1430
      %v1432 = vpop.f32.mrf.mxu0
      %1433 = vmatprep.mubr.f32.mxu0 0.0
      %1434 = vmatmul.mubr.f32.gmra.mxu0 %v573
      %v1435 = vpop.f32.mrf.mxu0
      %v1436 = vadd.f32 %v1291, %v1435
      %v1437 = vpop.f32.mrf.mxu0
      %1438 = vmatprep.mubr.f32.mxu0 0.0
      %1439 = vmatmul.mubr.f32.gmra.mxu0 %v574
      %v1440 = vpop.f32.mrf.mxu0
      %v1441 = vadd.f32 %v1296, %v1440
      %v1442 = vpop.f32.mrf.mxu0
      %1443 = vdwg.mxu0
      %s1444 = smul.u32 0, 16
      %s1445 = scalar_lea.vmem %s204, %s1444
      %1446 = vst [vmem:[%s1445] sm:$0xff] %v1366
      %1447 = vst [vmem:[%s1445 + $0x8] sm:$0xff] %v1371
      %1448 = vst [vmem:[%s1445 + $0x10] sm:$0xff] %v1376
      %1449 = vst [vmem:[%s1445 + $0x18] sm:$0xff] %v1381
      %1450 = vst [vmem:[%s1445 + $0x20] sm:$0xff] %v1386
      %1451 = vst [vmem:[%s1445 + $0x28] sm:$0xff] %v1391
      %1452 = vst [vmem:[%s1445 + $0x30] sm:$0xff] %v1396
      %1453 = vst [vmem:[%s1445 + $0x38] sm:$0xff] %v1401
      %1454 = vst [vmem:[%s1445 + $0x40] sm:$0xff] %v1406
      %1455 = vst [vmem:[%s1445 + $0x48] sm:$0xff] %v1411
      %1456 = vst [vmem:[%s1445 + $0x50] sm:$0xff] %v1416
      %1457 = vst [vmem:[%s1445 + $0x58] sm:$0xff] %v1421
      %1458 = vst [vmem:[%s1445 + $0x60] sm:$0xff] %v1426
      %1459 = vst [vmem:[%s1445 + $0x68] sm:$0xff] %v1431
      %1460 = vst [vmem:[%s1445 + $0x70] sm:$0xff] %v1436
      %1461 = vst [vmem:[%s1445 + $0x78] sm:$0xff] %v1441
      %v1462 = vadd.f32 %v1366, %v1371
      %v1463 = vadd.f32 %v1462, %v1376
      %v1464 = vadd.f32 %v1463, %v1381
      %v1465 = vadd.f32 %v1464, %v1386
      %v1466 = vadd.f32 %v1465, %v1391
      %v1467 = vadd.f32 %v1466, %v1396
      %v1468 = vadd.f32 %v1467, %v1401
      %v1469 = vadd.f32 %v1468, %v1406
      %v1470 = vadd.f32 %v1469, %v1411
      %v1471 = vadd.f32 %v1470, %v1416
      %v1472 = vadd.f32 %v1471, %v1421
      %v1473 = vadd.f32 %v1472, %v1426
      %v1474 = vadd.f32 %v1473, %v1431
      %v1475 = vadd.f32 %v1474, %v1436
      %v1476 = vadd.f32 %v1475, %v1441
      %v1477 = vrot.slane %v1476, 4
      %v1478 = vadd.f32 %v1476, %v1477
      %v1479 = vrot.slane %v1478, 2
      %v1480 = vadd.f32 %v1478, %v1479
      %v1481 = vrot.slane %v1480, 1
      %v1482 = vadd.f32 %v1480, %v1481
      %v1483 = vadd.f32 %v1482, 0.0
      %v1484 = vmul.f32 %v1366, %v1366
      %v1485 = vmul.f32 %v1371, %v1371
      %v1486 = vmul.f32 %v1376, %v1376
      %v1487 = vmul.f32 %v1381, %v1381
      %v1488 = vmul.f32 %v1386, %v1386
      %v1489 = vmul.f32 %v1391, %v1391
      %v1490 = vmul.f32 %v1396, %v1396
      %v1491 = vmul.f32 %v1401, %v1401
      %v1492 = vmul.f32 %v1406, %v1406
      %v1493 = vmul.f32 %v1411, %v1411
      %v1494 = vmul.f32 %v1416, %v1416
      %v1495 = vmul.f32 %v1421, %v1421
      %v1496 = vmul.f32 %v1426, %v1426
      %v1497 = vmul.f32 %v1431, %v1431
      %v1498 = vmul.f32 %v1436, %v1436
      %v1499 = vmul.f32 %v1441, %v1441
      %v1500 = vadd.f32 %v1484, %v1485
      %v1501 = vadd.f32 %v1500, %v1486
      %v1502 = vadd.f32 %v1501, %v1487
      %v1503 = vadd.f32 %v1502, %v1488
      %v1504 = vadd.f32 %v1503, %v1489
      %v1505 = vadd.f32 %v1504, %v1490
      %v1506 = vadd.f32 %v1505, %v1491
      %v1507 = vadd.f32 %v1506, %v1492
      %v1508 = vadd.f32 %v1507, %v1493
      %v1509 = vadd.f32 %v1508, %v1494
      %v1510 = vadd.f32 %v1509, %v1495
      %v1511 = vadd.f32 %v1510, %v1496
      %v1512 = vadd.f32 %v1511, %v1497
      %v1513 = vadd.f32 %v1512, %v1498
      %v1514 = vadd.f32 %v1513, %v1499
      %v1515 = vrot.slane %v1514, 4
      %v1516 = vadd.f32 %v1514, %v1515
      %v1517 = vrot.slane %v1516, 2
      %v1518 = vadd.f32 %v1516, %v1517
      %v1519 = vrot.slane %v1518, 1
      %v1520 = vadd.f32 %v1518, %v1519
      %v1521 = vadd.f32 %v1520, 0.0
      %s1522 = smul.u32 8, 24
      %s1523 = scalar_lea.vmem [#allocation2], %s1522
      %v1524 = vld [vmem:[%s1523] sm:$0xff]
      %v1525 = vld [vmem:[%s1523 + $0x8] sm:$0xff]
      %v1526 = vld [vmem:[%s1523 + $0x18] sm:$0xff]
      %v1527 = vld [vmem:[%s1523 + $0x20] sm:$0xff]
      %v1528 = vld [vmem:[%s1523 + $0x30] sm:$0xff]
      %v1529 = vld [vmem:[%s1523 + $0x38] sm:$0xff]
      %v1530 = vld [vmem:[%s1523 + $0x48] sm:$0xff]
      %v1531 = vld [vmem:[%s1523 + $0x50] sm:$0xff]
      %v1532 = vld [vmem:[%s1523 + $0x60] sm:$0xff]
      %v1533 = vld [vmem:[%s1523 + $0x68] sm:$0xff]
      %v1534 = vld [vmem:[%s1523 + $0x78] sm:$0xff]
      %v1535 = vld [vmem:[%s1523 + $0x80] sm:$0xff]
      %v1536 = vld [vmem:[%s1523 + $0x90] sm:$0xff]
      %v1537 = vld [vmem:[%s1523 + $0x98] sm:$0xff]
      %v1538 = vld [vmem:[%s1523 + $0xa8] sm:$0xff]
      %v1539 = vld [vmem:[%s1523 + $0xb0] sm:$0xff]
      %v1540 = vld [vmem:[%s1523 + $0x1] sm:$0xff]
      %v1541 = vld [vmem:[%s1523 + $0x9] sm:$0xff]
      %v1542 = vld [vmem:[%s1523 + $0x19] sm:$0xff]
      %v1543 = vld [vmem:[%s1523 + $0x21] sm:$0xff]
      %v1544 = vld [vmem:[%s1523 + $0x31] sm:$0xff]
      %v1545 = vld [vmem:[%s1523 + $0x39] sm:$0xff]
      %v1546 = vld [vmem:[%s1523 + $0x49] sm:$0xff]
      %v1547 = vld [vmem:[%s1523 + $0x51] sm:$0xff]
      %v1548 = vld [vmem:[%s1523 + $0x61] sm:$0xff]
      %v1549 = vld [vmem:[%s1523 + $0x69] sm:$0xff]
      %v1550 = vld [vmem:[%s1523 + $0x79] sm:$0xff]
      %v1551 = vld [vmem:[%s1523 + $0x81] sm:$0xff]
      %v1552 = vld [vmem:[%s1523 + $0x91] sm:$0xff]
      %v1553 = vld [vmem:[%s1523 + $0x99] sm:$0xff]
      %v1554 = vld [vmem:[%s1523 + $0xa9] sm:$0xff]
      %v1555 = vld [vmem:[%s1523 + $0xb1] sm:$0xff]
      %v1556 = vld [vmem:[%s1523 + $0x2] sm:$0xff]
      %v1557 = vld [vmem:[%s1523 + $0xa] sm:$0xff]
      %v1558 = vld [vmem:[%s1523 + $0x1a] sm:$0xff]
      %v1559 = vld [vmem:[%s1523 + $0x22] sm:$0xff]
      %v1560 = vld [vmem:[%s1523 + $0x32] sm:$0xff]
      %v1561 = vld [vmem:[%s1523 + $0x3a] sm:$0xff]
      %v1562 = vld [vmem:[%s1523 + $0x4a] sm:$0xff]
      %v1563 = vld [vmem:[%s1523 + $0x52] sm:$0xff]
      %v1564 = vld [vmem:[%s1523 + $0x62] sm:$0xff]
      %v1565 = vld [vmem:[%s1523 + $0x6a] sm:$0xff]
      %v1566 = vld [vmem:[%s1523 + $0x7a] sm:$0xff]
      %v1567 = vld [vmem:[%s1523 + $0x82] sm:$0xff]
      %v1568 = vld [vmem:[%s1523 + $0x92] sm:$0xff]
      %v1569 = vld [vmem:[%s1523 + $0x9a] sm:$0xff]
      %v1570 = vld [vmem:[%s1523 + $0xaa] sm:$0xff]
      %v1571 = vld [vmem:[%s1523 + $0xb2] sm:$0xff]
      %s1572 = sadd.s32 8, 1
      %s1573 = smul.u32 %s1572, 24
      %s1574 = scalar_lea.vmem [#allocation2], %s1573
      %v1575 = vld [vmem:[%s1574] sm:$0xff]
      %v1576 = vld [vmem:[%s1574 + $0x8] sm:$0xff]
      %v1577 = vld [vmem:[%s1574 + $0x18] sm:$0xff]
      %v1578 = vld [vmem:[%s1574 + $0x20] sm:$0xff]
      %v1579 = vld [vmem:[%s1574 + $0x30] sm:$0xff]
      %v1580 = vld [vmem:[%s1574 + $0x38] sm:$0xff]
      %v1581 = vld [vmem:[%s1574 + $0x48] sm:$0xff]
      %v1582 = vld [vmem:[%s1574 + $0x50] sm:$0xff]
      %v1583 = vld [vmem:[%s1574 + $0x60] sm:$0xff]
      %v1584 = vld [vmem:[%s1574 + $0x68] sm:$0xff]
      %v1585 = vld [vmem:[%s1574 + $0x78] sm:$0xff]
      %v1586 = vld [vmem:[%s1574 + $0x80] sm:$0xff]
      %v1587 = vld [vmem:[%s1574 + $0x90] sm:$0xff]
      %v1588 = vld [vmem:[%s1574 + $0x98] sm:$0xff]
      %v1589 = vld [vmem:[%s1574 + $0xa8] sm:$0xff]
      %v1590 = vld [vmem:[%s1574 + $0xb0] sm:$0xff]
      %v1591 = vld [vmem:[%s1574 + $0x1] sm:$0xff]
      %v1592 = vld [vmem:[%s1574 + $0x9] sm:$0xff]
      %v1593 = vld [vmem:[%s1574 + $0x19] sm:$0xff]
      %v1594 = vld [vmem:[%s1574 + $0x21] sm:$0xff]
      %v1595 = vld [vmem:[%s1574 + $0x31] sm:$0xff]
      %v1596 = vld [vmem:[%s1574 + $0x39] sm:$0xff]
      %v1597 = vld [vmem:[%s1574 + $0x49] sm:$0xff]
      %v1598 = vld [vmem:[%s1574 + $0x51] sm:$0xff]
      %v1599 = vld [vmem:[%s1574 + $0x61] sm:$0xff]
      %v1600 = vld [vmem:[%s1574 + $0x69] sm:$0xff]
      %v1601 = vld [vmem:[%s1574 + $0x79] sm:$0xff]
      %v1602 = vld [vmem:[%s1574 + $0x81] sm:$0xff]
      %v1603 = vld [vmem:[%s1574 + $0x91] sm:$0xff]
      %v1604 = vld [vmem:[%s1574 + $0x99] sm:$0xff]
      %v1605 = vld [vmem:[%s1574 + $0xa9] sm:$0xff]
      %v1606 = vld [vmem:[%s1574 + $0xb1] sm:$0xff]
      %v1607 = vld [vmem:[%s1574 + $0x2] sm:$0xff]
      %v1608 = vld [vmem:[%s1574 + $0xa] sm:$0xff]
      %v1609 = vld [vmem:[%s1574 + $0x1a] sm:$0xff]
      %v1610 = vld [vmem:[%s1574 + $0x22] sm:$0xff]
      %v1611 = vld [vmem:[%s1574 + $0x32] sm:$0xff]
      %v1612 = vld [vmem:[%s1574 + $0x3a] sm:$0xff]
      %v1613 = vld [vmem:[%s1574 + $0x4a] sm:$0xff]
      %v1614 = vld [vmem:[%s1574 + $0x52] sm:$0xff]
      %v1615 = vld [vmem:[%s1574 + $0x62] sm:$0xff]
      %v1616 = vld [vmem:[%s1574 + $0x6a] sm:$0xff]
      %v1617 = vld [vmem:[%s1574 + $0x7a] sm:$0xff]
      %v1618 = vld [vmem:[%s1574 + $0x82] sm:$0xff]
      %v1619 = vld [vmem:[%s1574 + $0x92] sm:$0xff]
      %v1620 = vld [vmem:[%s1574 + $0x9a] sm:$0xff]
      %v1621 = vld [vmem:[%s1574 + $0xaa] sm:$0xff]
      %v1622 = vld [vmem:[%s1574 + $0xb2] sm:$0xff]
      %s1623 = sadd.s32 8, 2
      %s1624 = smul.u32 %s1623, 24
      %s1625 = scalar_lea.vmem [#allocation2], %s1624
      %v1626 = vld [vmem:[%s1625] sm:$0xff]
      %v1627 = vld [vmem:[%s1625 + $0x8] sm:$0xff]
      %v1628 = vld [vmem:[%s1625 + $0x18] sm:$0xff]
      %v1629 = vld [vmem:[%s1625 + $0x20] sm:$0xff]
      %v1630 = vld [vmem:[%s1625 + $0x30] sm:$0xff]
      %v1631 = vld [vmem:[%s1625 + $0x38] sm:$0xff]
      %v1632 = vld [vmem:[%s1625 + $0x48] sm:$0xff]
      %v1633 = vld [vmem:[%s1625 + $0x50] sm:$0xff]
      %v1634 = vld [vmem:[%s1625 + $0x60] sm:$0xff]
      %v1635 = vld [vmem:[%s1625 + $0x68] sm:$0xff]
      %v1636 = vld [vmem:[%s1625 + $0x78] sm:$0xff]
      %v1637 = vld [vmem:[%s1625 + $0x80] sm:$0xff]
      %v1638 = vld [vmem:[%s1625 + $0x90] sm:$0xff]
      %v1639 = vld [vmem:[%s1625 + $0x98] sm:$0xff]
      %v1640 = vld [vmem:[%s1625 + $0xa8] sm:$0xff]
      %v1641 = vld [vmem:[%s1625 + $0xb0] sm:$0xff]
      %v1642 = vld [vmem:[%s1625 + $0x1] sm:$0xff]
      %v1643 = vld [vmem:[%s1625 + $0x9] sm:$0xff]
      %v1644 = vld [vmem:[%s1625 + $0x19] sm:$0xff]
      %v1645 = vld [vmem:[%s1625 + $0x21] sm:$0xff]
      %v1646 = vld [vmem:[%s1625 + $0x31] sm:$0xff]
      %v1647 = vld [vmem:[%s1625 + $0x39] sm:$0xff]
      %v1648 = vld [vmem:[%s1625 + $0x49] sm:$0xff]
      %v1649 = vld [vmem:[%s1625 + $0x51] sm:$0xff]
      %v1650 = vld [vmem:[%s1625 + $0x61] sm:$0xff]
      %v1651 = vld [vmem:[%s1625 + $0x69] sm:$0xff]
      %v1652 = vld [vmem:[%s1625 + $0x79] sm:$0xff]
      %v1653 = vld [vmem:[%s1625 + $0x81] sm:$0xff]
      %v1654 = vld [vmem:[%s1625 + $0x91] sm:$0xff]
      %v1655 = vld [vmem:[%s1625 + $0x99] sm:$0xff]
      %v1656 = vld [vmem:[%s1625 + $0xa9] sm:$0xff]
      %v1657 = vld [vmem:[%s1625 + $0xb1] sm:$0xff]
      %v1658 = vld [vmem:[%s1625 + $0x2] sm:$0xff]
      %v1659 = vld [vmem:[%s1625 + $0xa] sm:$0xff]
      %v1660 = vld [vmem:[%s1625 + $0x1a] sm:$0xff]
      %v1661 = vld [vmem:[%s1625 + $0x22] sm:$0xff]
      %v1662 = vld [vmem:[%s1625 + $0x32] sm:$0xff]
      %v1663 = vld [vmem:[%s1625 + $0x3a] sm:$0xff]
      %v1664 = vld [vmem:[%s1625 + $0x4a] sm:$0xff]
      %v1665 = vld [vmem:[%s1625 + $0x52] sm:$0xff]
      %v1666 = vld [vmem:[%s1625 + $0x62] sm:$0xff]
      %v1667 = vld [vmem:[%s1625 + $0x6a] sm:$0xff]
      %v1668 = vld [vmem:[%s1625 + $0x7a] sm:$0xff]
      %v1669 = vld [vmem:[%s1625 + $0x82] sm:$0xff]
      %v1670 = vld [vmem:[%s1625 + $0x92] sm:$0xff]
      %v1671 = vld [vmem:[%s1625 + $0x9a] sm:$0xff]
      %v1672 = vld [vmem:[%s1625 + $0xaa] sm:$0xff]
      %v1673 = vld [vmem:[%s1625 + $0xb2] sm:$0xff]
      %v1674 = vld [vmem:[%s2] sm:$0xff]
      %v1675 = vld [vmem:[%s2 + $0x8] sm:$0xff]
      %v1676 = vld [vmem:[%s2 + $0x10] sm:$0xff]
      %v1677 = vld [vmem:[%s2 + $0x18] sm:$0xff]
      %v1678 = vld [vmem:[%s2 + $0x20] sm:$0xff]
      %v1679 = vld [vmem:[%s2 + $0x28] sm:$0xff]
      %v1680 = vld [vmem:[%s2 + $0x30] sm:$0xff]
      %v1681 = vld [vmem:[%s2 + $0x38] sm:$0xff]
      %v1682 = vld [vmem:[%s2 + $0x40] sm:$0xff]
      %v1683 = vld [vmem:[%s2 + $0x48] sm:$0xff]
      %v1684 = vld [vmem:[%s2 + $0x50] sm:$0xff]
      %v1685 = vld [vmem:[%s2 + $0x58] sm:$0xff]
      %v1686 = vld [vmem:[%s2 + $0x60] sm:$0xff]
      %v1687 = vld [vmem:[%s2 + $0x68] sm:$0xff]
      %v1688 = vld [vmem:[%s2 + $0x70] sm:$0xff]
      %v1689 = vld [vmem:[%s2 + $0x78] sm:$0xff]
      %v1690 = vld [vmem:[%s2 + $0x80] sm:$0xff]
      %v1691 = vld [vmem:[%s2 + $0x88] sm:$0xff]
      %v1692 = vld [vmem:[%s2 + $0x90] sm:$0xff]
      %v1693 = vld [vmem:[%s2 + $0x98] sm:$0xff]
      %v1694 = vld [vmem:[%s2 + $0xa0] sm:$0xff]
      %v1695 = vld [vmem:[%s2 + $0xa8] sm:$0xff]
      %v1696 = vld [vmem:[%s2 + $0xb0] sm:$0xff]
      %v1697 = vld [vmem:[%s2 + $0xb8] sm:$0xff]
      %v1698 = vld [vmem:[%s2 + $0xc0] sm:$0xff]
      %v1699 = vld [vmem:[%s2 + $0xc8] sm:$0xff]
      %v1700 = vld [vmem:[%s2 + $0xd0] sm:$0xff]
      %v1701 = vld [vmem:[%s2 + $0xd8] sm:$0xff]
      %v1702 = vld [vmem:[%s2 + $0xe0] sm:$0xff]
      %v1703 = vld [vmem:[%s2 + $0xe8] sm:$0xff]
      %v1704 = vld [vmem:[%s2 + $0xf0] sm:$0xff]
      %v1705 = vld [vmem:[%s2 + $0xf8] sm:$0xff]
      %v1706 = vld [vmem:[%s2 + $0x100] sm:$0xff]
      %v1707 = vld [vmem:[%s2 + $0x108] sm:$0xff]
      %v1708 = vld [vmem:[%s2 + $0x110] sm:$0xff]
      %v1709 = vld [vmem:[%s2 + $0x118] sm:$0xff]
      %v1710 = vld [vmem:[%s2 + $0x120] sm:$0xff]
      %v1711 = vld [vmem:[%s2 + $0x128] sm:$0xff]
      %v1712 = vld [vmem:[%s2 + $0x130] sm:$0xff]
      %v1713 = vld [vmem:[%s2 + $0x138] sm:$0xff]
      %v1714 = vld [vmem:[%s2 + $0x140] sm:$0xff]
      %v1715 = vld [vmem:[%s2 + $0x148] sm:$0xff]
      %v1716 = vld [vmem:[%s2 + $0x150] sm:$0xff]
      %v1717 = vld [vmem:[%s2 + $0x158] sm:$0xff]
      %v1718 = vld [vmem:[%s2 + $0x160] sm:$0xff]
      %v1719 = vld [vmem:[%s2 + $0x168] sm:$0xff]
      %v1720 = vld [vmem:[%s2 + $0x170] sm:$0xff]
      %v1721 = vld [vmem:[%s2 + $0x178] sm:$0xff]
      %v1722 = vld [vmem:[%s2 + $0x180] sm:$0xff]
      %v1723 = vld [vmem:[%s2 + $0x188] sm:$0xff]
      %v1724 = vld [vmem:[%s2 + $0x190] sm:$0xff]
      %v1725 = vld [vmem:[%s2 + $0x198] sm:$0xff]
      %v1726 = vld [vmem:[%s2 + $0x1a0] sm:$0xff]
      %v1727 = vld [vmem:[%s2 + $0x1a8] sm:$0xff]
      %v1728 = vld [vmem:[%s2 + $0x1b0] sm:$0xff]
      %v1729 = vld [vmem:[%s2 + $0x1b8] sm:$0xff]
      %v1730 = vld [vmem:[%s2 + $0x1c0] sm:$0xff]
      %v1731 = vld [vmem:[%s2 + $0x1c8] sm:$0xff]
      %v1732 = vld [vmem:[%s2 + $0x1d0] sm:$0xff]
      %v1733 = vld [vmem:[%s2 + $0x1d8] sm:$0xff]
      %v1734 = vld [vmem:[%s2 + $0x1e0] sm:$0xff]
      %v1735 = vld [vmem:[%s2 + $0x1e8] sm:$0xff]
      %v1736 = vld [vmem:[%s2 + $0x1f0] sm:$0xff]
      %v1737 = vld [vmem:[%s2 + $0x1f8] sm:$0xff]
      %v1738 = vld [vmem:[%s2 + $0x200] sm:$0xff]
      %v1739 = vld [vmem:[%s2 + $0x208] sm:$0xff]
      %v1740 = vld [vmem:[%s2 + $0x210] sm:$0xff]
      %v1741 = vld [vmem:[%s2 + $0x218] sm:$0xff]
      %v1742 = vld [vmem:[%s2 + $0x220] sm:$0xff]
      %v1743 = vld [vmem:[%s2 + $0x228] sm:$0xff]
      %v1744 = vld [vmem:[%s2 + $0x230] sm:$0xff]
      %v1745 = vld [vmem:[%s2 + $0x238] sm:$0xff]
      %v1746 = vld [vmem:[%s2 + $0x240] sm:$0xff]
      %v1747 = vld [vmem:[%s2 + $0x248] sm:$0xff]
      %v1748 = vld [vmem:[%s2 + $0x250] sm:$0xff]
      %v1749 = vld [vmem:[%s2 + $0x258] sm:$0xff]
      %v1750 = vld [vmem:[%s2 + $0x260] sm:$0xff]
      %v1751 = vld [vmem:[%s2 + $0x268] sm:$0xff]
      %v1752 = vld [vmem:[%s2 + $0x270] sm:$0xff]
      %v1753 = vld [vmem:[%s2 + $0x278] sm:$0xff]
      %v1754 = vld [vmem:[%s2 + $0x280] sm:$0xff]
      %v1755 = vld [vmem:[%s2 + $0x288] sm:$0xff]
      %v1756 = vld [vmem:[%s2 + $0x290] sm:$0xff]
      %v1757 = vld [vmem:[%s2 + $0x298] sm:$0xff]
      %v1758 = vld [vmem:[%s2 + $0x2a0] sm:$0xff]
      %v1759 = vld [vmem:[%s2 + $0x2a8] sm:$0xff]
      %v1760 = vld [vmem:[%s2 + $0x2b0] sm:$0xff]
      %v1761 = vld [vmem:[%s2 + $0x2b8] sm:$0xff]
      %v1762 = vld [vmem:[%s2 + $0x2c0] sm:$0xff]
      %v1763 = vld [vmem:[%s2 + $0x2c8] sm:$0xff]
      %v1764 = vld [vmem:[%s2 + $0x2d0] sm:$0xff]
      %v1765 = vld [vmem:[%s2 + $0x2d8] sm:$0xff]
      %v1766 = vld [vmem:[%s2 + $0x2e0] sm:$0xff]
      %v1767 = vld [vmem:[%s2 + $0x2e8] sm:$0xff]
      %v1768 = vld [vmem:[%s2 + $0x2f0] sm:$0xff]
      %v1769 = vld [vmem:[%s2 + $0x2f8] sm:$0xff]
      %v1770 = vld [vmem:[%s2 + $0x300] sm:$0xff]
      %v1771 = vld [vmem:[%s2 + $0x308] sm:$0xff]
      %v1772 = vld [vmem:[%s2 + $0x310] sm:$0xff]
      %v1773 = vld [vmem:[%s2 + $0x318] sm:$0xff]
      %v1774 = vld [vmem:[%s2 + $0x320] sm:$0xff]
      %v1775 = vld [vmem:[%s2 + $0x328] sm:$0xff]
      %v1776 = vld [vmem:[%s2 + $0x330] sm:$0xff]
      %v1777 = vld [vmem:[%s2 + $0x338] sm:$0xff]
      %v1778 = vld [vmem:[%s2 + $0x340] sm:$0xff]
      %v1779 = vld [vmem:[%s2 + $0x348] sm:$0xff]
      %v1780 = vld [vmem:[%s2 + $0x350] sm:$0xff]
      %v1781 = vld [vmem:[%s2 + $0x358] sm:$0xff]
      %v1782 = vld [vmem:[%s2 + $0x360] sm:$0xff]
      %v1783 = vld [vmem:[%s2 + $0x368] sm:$0xff]
      %v1784 = vld [vmem:[%s2 + $0x370] sm:$0xff]
      %v1785 = vld [vmem:[%s2 + $0x378] sm:$0xff]
      %v1786 = vld [vmem:[%s2 + $0x380] sm:$0xff]
      %v1787 = vld [vmem:[%s2 + $0x388] sm:$0xff]
      %v1788 = vld [vmem:[%s2 + $0x390] sm:$0xff]
      %v1789 = vld [vmem:[%s2 + $0x398] sm:$0xff]
      %v1790 = vld [vmem:[%s2 + $0x3a0] sm:$0xff]
      %v1791 = vld [vmem:[%s2 + $0x3a8] sm:$0xff]
      %v1792 = vld [vmem:[%s2 + $0x3b0] sm:$0xff]
      %v1793 = vld [vmem:[%s2 + $0x3b8] sm:$0xff]
      %v1794 = vld [vmem:[%s2 + $0x3c0] sm:$0xff]
      %v1795 = vld [vmem:[%s2 + $0x3c8] sm:$0xff]
      %v1796 = vld [vmem:[%s2 + $0x3d0] sm:$0xff]
      %v1797 = vld [vmem:[%s2 + $0x3d8] sm:$0xff]
      %v1798 = vld [vmem:[%s2 + $0x3e0] sm:$0xff]
      %v1799 = vld [vmem:[%s2 + $0x3e8] sm:$0xff]
      %v1800 = vld [vmem:[%s2 + $0x3f0] sm:$0xff]
      %v1801 = vld [vmem:[%s2 + $0x3f8] sm:$0xff]
      %v1802 = vld [vmem:[%s2 + $0x400] sm:$0xff]
      %v1803 = vld [vmem:[%s2 + $0x408] sm:$0xff]
      %v1804 = vld [vmem:[%s2 + $0x410] sm:$0xff]
      %v1805 = vld [vmem:[%s2 + $0x418] sm:$0xff]
      %v1806 = vld [vmem:[%s2 + $0x420] sm:$0xff]
      %v1807 = vld [vmem:[%s2 + $0x428] sm:$0xff]
      %v1808 = vld [vmem:[%s2 + $0x430] sm:$0xff]
      %v1809 = vld [vmem:[%s2 + $0x438] sm:$0xff]
      %v1810 = vld [vmem:[%s2 + $0x440] sm:$0xff]
      %v1811 = vld [vmem:[%s2 + $0x448] sm:$0xff]
      %v1812 = vld [vmem:[%s2 + $0x450] sm:$0xff]
      %v1813 = vld [vmem:[%s2 + $0x458] sm:$0xff]
      %v1814 = vld [vmem:[%s2 + $0x460] sm:$0xff]
      %v1815 = vld [vmem:[%s2 + $0x468] sm:$0xff]
      %v1816 = vld [vmem:[%s2 + $0x470] sm:$0xff]
      %v1817 = vld [vmem:[%s2 + $0x478] sm:$0xff]
      %1818 = vmatprep.subr.mxu0 0.0
      %1819 = vmatpush1.msra.mxu0 %v1689
      %1820 = vmatprep.subr.mxu0 0.0
      %1821 = vmatpush1.msra.mxu0 %v1688
      %1822 = vmatprep.subr.mxu0 0.0
      %1823 = vmatpush1.msra.mxu0 %v1687
      %1824 = vmatprep.subr.mxu0 0.0
      %1825 = vmatpush1.msra.mxu0 %v1686
      %1826 = vmatprep.subr.mxu0 0.0
      %1827 = vmatpush1.msra.mxu0 %v1685
      %1828 = vmatprep.subr.mxu0 0.0
      %1829 = vmatpush1.msra.mxu0 %v1684
      %1830 = vmatprep.subr.mxu0 0.0
      %1831 = vmatpush1.msra.mxu0 %v1683
      %1832 = vmatprep.subr.mxu0 0.0
      %1833 = vmatpush1.msra.mxu0 %v1682
      %1834 = vmatprep.subr.mxu0 0.0
      %1835 = vmatpush1.msra.mxu0 %v1681
      %1836 = vmatprep.subr.mxu0 0.0
      %1837 = vmatpush1.msra.mxu0 %v1680
      %1838 = vmatprep.subr.mxu0 0.0
      %1839 = vmatpush1.msra.mxu0 %v1679
      %1840 = vmatprep.subr.mxu0 0.0
      %1841 = vmatpush1.msra.mxu0 %v1678
      %1842 = vmatprep.subr.mxu0 0.0
      %1843 = vmatpush1.msra.mxu0 %v1677
      %1844 = vmatprep.subr.mxu0 0.0
      %1845 = vmatpush1.msra.mxu0 %v1676
      %1846 = vmatprep.subr.mxu0 0.0
      %1847 = vmatpush1.msra.mxu0 %v1675
      %1848 = vmatprep.subr.mxu0 0.0
      %1849 = vmatpush1.msra.mxu0 %v1674
      %1850 = vmatprep.subr.mxu0 0.0
      %1851 = vmatpush2.msra.mxu0 %v1705
      %1852 = vmatprep.subr.mxu0 0.0
      %1853 = vmatpush2.msra.mxu0 %v1704
      %1854 = vmatprep.subr.mxu0 0.0
      %1855 = vmatpush2.msra.mxu0 %v1703
      %1856 = vmatprep.subr.mxu0 0.0
      %1857 = vmatpush2.msra.mxu0 %v1702
      %1858 = vmatprep.subr.mxu0 0.0
      %1859 = vmatpush2.msra.mxu0 %v1701
      %1860 = vmatprep.subr.mxu0 0.0
      %1861 = vmatpush2.msra.mxu0 %v1700
      %1862 = vmatprep.subr.mxu0 0.0
      %1863 = vmatpush2.msra.mxu0 %v1699
      %1864 = vmatprep.subr.mxu0 0.0
      %1865 = vmatpush2.msra.mxu0 %v1698
      %1866 = vmatprep.subr.mxu0 0.0
      %1867 = vmatpush2.msra.mxu0 %v1697
      %1868 = vmatprep.subr.mxu0 0.0
      %1869 = vmatpush2.msra.mxu0 %v1696
      %1870 = vmatprep.subr.mxu0 0.0
      %1871 = vmatpush2.msra.mxu0 %v1695
      %1872 = vmatprep.subr.mxu0 0.0
      %1873 = vmatpush2.msra.mxu0 %v1694
      %1874 = vmatprep.subr.mxu0 0.0
      %1875 = vmatpush2.msra.mxu0 %v1693
      %1876 = vmatprep.subr.mxu0 0.0
      %1877 = vmatpush2.msra.mxu0 %v1692
      %1878 = vmatprep.subr.mxu0 0.0
      %1879 = vmatpush2.msra.mxu0 %v1691
      %1880 = vmatprep.subr.mxu0 0.0
      %1881 = vmatpush2.msra.mxu0 %v1690
      %1882 = vmatprep.mubr.f32.mxu0 %v1540
      %1883 = vmatmul.mubr.f32.gmra.mxu0 %v1524
      %v1884 = vpop.f32.mrf.mxu0
      %v1885 = vadd.f32 0.0, %v1884
      %v1886 = vpop.f32.mrf.mxu0
      %1887 = vmatprep.mubr.f32.mxu0 %v1541
      %1888 = vmatmul.mubr.f32.gmra.mxu0 %v1525
      %v1889 = vpop.f32.mrf.mxu0
      %v1890 = vadd.f32 0.0, %v1889
      %v1891 = vpop.f32.mrf.mxu0
      %1892 = vmatprep.mubr.f32.mxu0 %v1542
      %1893 = vmatmul.mubr.f32.gmra.mxu0 %v1526
      %v1894 = vpop.f32.mrf.mxu0
      %v1895 = vadd.f32 0.0, %v1894
      %v1896 = vpop.f32.mrf.mxu0
      %1897 = vmatprep.mubr.f32.mxu0 %v1543
      %1898 = vmatmul.mubr.f32.gmra.mxu0 %v1527
      %v1899 = vpop.f32.mrf.mxu0
      %v1900 = vadd.f32 0.0, %v1899
      %v1901 = vpop.f32.mrf.mxu0
      %1902 = vmatprep.mubr.f32.mxu0 %v1544
      %1903 = vmatmul.mubr.f32.gmra.mxu0 %v1528
      %v1904 = vpop.f32.mrf.mxu0
      %v1905 = vadd.f32 0.0, %v1904
      %v1906 = vpop.f32.mrf.mxu0
      %1907 = vmatprep.mubr.f32.mxu0 %v1545
      %1908 = vmatmul.mubr.f32.gmra.mxu0 %v1529
      %v1909 = vpop.f32.mrf.mxu0
      %v1910 = vadd.f32 0.0, %v1909
      %v1911 = vpop.f32.mrf.mxu0
      %1912 = vmatprep.mubr.f32.mxu0 %v1546
      %1913 = vmatmul.mubr.f32.gmra.mxu0 %v1530
      %v1914 = vpop.f32.mrf.mxu0
      %v1915 = vadd.f32 0.0, %v1914
      %v1916 = vpop.f32.mrf.mxu0
      %1917 = vmatprep.mubr.f32.mxu0 %v1547
      %1918 = vmatmul.mubr.f32.gmra.mxu0 %v1531
      %v1919 = vpop.f32.mrf.mxu0
      %v1920 = vadd.f32 0.0, %v1919
      %v1921 = vpop.f32.mrf.mxu0
      %1922 = vmatprep.mubr.f32.mxu0 %v1548
      %1923 = vmatmul.mubr.f32.gmra.mxu0 %v1532
      %v1924 = vpop.f32.mrf.mxu0
      %v1925 = vadd.f32 0.0, %v1924
      %v1926 = vpop.f32.mrf.mxu0
      %1927 = vmatprep.mubr.f32.mxu0 %v1549
      %1928 = vmatmul.mubr.f32.gmra.mxu0 %v1533
      %v1929 = vpop.f32.mrf.mxu0
      %v1930 = vadd.f32 0.0, %v1929
      %v1931 = vpop.f32.mrf.mxu0
      %1932 = vmatprep.mubr.f32.mxu0 %v1550
      %1933 = vmatmul.mubr.f32.gmra.mxu0 %v1534
      %v1934 = vpop.f32.mrf.mxu0
      %v1935 = vadd.f32 0.0, %v1934
      %v1936 = vpop.f32.mrf.mxu0
      %1937 = vmatprep.mubr.f32.mxu0 %v1551
      %1938 = vmatmul.mubr.f32.gmra.mxu0 %v1535
      %v1939 = vpop.f32.mrf.mxu0
      %v1940 = vadd.f32 0.0, %v1939
      %v1941 = vpop.f32.mrf.mxu0
      %1942 = vmatprep.mubr.f32.mxu0 %v1552
      %1943 = vmatmul.mubr.f32.gmra.mxu0 %v1536
      %v1944 = vpop.f32.mrf.mxu0
      %v1945 = vadd.f32 0.0, %v1944
      %v1946 = vpop.f32.mrf.mxu0
      %1947 = vmatprep.mubr.f32.mxu0 %v1553
      %1948 = vmatmul.mubr.f32.gmra.mxu0 %v1537
      %v1949 = vpop.f32.mrf.mxu0
      %v1950 = vadd.f32 0.0, %v1949
      %v1951 = vpop.f32.mrf.mxu0
      %1952 = vmatprep.mubr.f32.mxu0 %v1554
      %1953 = vmatmul.mubr.f32.gmra.mxu0 %v1538
      %v1954 = vpop.f32.mrf.mxu0
      %v1955 = vadd.f32 0.0, %v1954
      %v1956 = vpop.f32.mrf.mxu0
      %1957 = vmatprep.mubr.f32.mxu0 %v1555
      %1958 = vmatmul.mubr.f32.gmra.mxu0 %v1539
      %v1959 = vpop.f32.mrf.mxu0
      %v1960 = vadd.f32 0.0, %v1959
      %v1961 = vpop.f32.mrf.mxu0
      %1962 = vdwg.mxu0
      %1963 = vmatprep.subr.mxu0 0.0
      %1964 = vmatpush1.msra.mxu0 %v1721
      %1965 = vmatprep.subr.mxu0 0.0
      %1966 = vmatpush1.msra.mxu0 %v1720
      %1967 = vmatprep.subr.mxu0 0.0
      %1968 = vmatpush1.msra.mxu0 %v1719
      %1969 = vmatprep.subr.mxu0 0.0
      %1970 = vmatpush1.msra.mxu0 %v1718
      %1971 = vmatprep.subr.mxu0 0.0
      %1972 = vmatpush1.msra.mxu0 %v1717
      %1973 = vmatprep.subr.mxu0 0.0
      %1974 = vmatpush1.msra.mxu0 %v1716
      %1975 = vmatprep.subr.mxu0 0.0
      %1976 = vmatpush1.msra.mxu0 %v1715
      %1977 = vmatprep.subr.mxu0 0.0
      %1978 = vmatpush1.msra.mxu0 %v1714
      %1979 = vmatprep.subr.mxu0 0.0
      %1980 = vmatpush1.msra.mxu0 %v1713
      %1981 = vmatprep.subr.mxu0 0.0
      %1982 = vmatpush1.msra.mxu0 %v1712
      %1983 = vmatprep.subr.mxu0 0.0
      %1984 = vmatpush1.msra.mxu0 %v1711
      %1985 = vmatprep.subr.mxu0 0.0
      %1986 = vmatpush1.msra.mxu0 %v1710
      %1987 = vmatprep.subr.mxu0 0.0
      %1988 = vmatpush1.msra.mxu0 %v1709
      %1989 = vmatprep.subr.mxu0 0.0
      %1990 = vmatpush1.msra.mxu0 %v1708
      %1991 = vmatprep.subr.mxu0 0.0
      %1992 = vmatpush1.msra.mxu0 %v1707
      %1993 = vmatprep.subr.mxu0 0.0
      %1994 = vmatpush1.msra.mxu0 %v1706
      %1995 = vmatprep.subr.mxu0 0.0
      %1996 = vmatpush2.msra.mxu0 %v1737
      %1997 = vmatprep.subr.mxu0 0.0
      %1998 = vmatpush2.msra.mxu0 %v1736
      %1999 = vmatprep.subr.mxu0 0.0
      %2000 = vmatpush2.msra.mxu0 %v1735
      %2001 = vmatprep.subr.mxu0 0.0
      %2002 = vmatpush2.msra.mxu0 %v1734
      %2003 = vmatprep.subr.mxu0 0.0
      %2004 = vmatpush2.msra.mxu0 %v1733
      %2005 = vmatprep.subr.mxu0 0.0
      %2006 = vmatpush2.msra.mxu0 %v1732
      %2007 = vmatprep.subr.mxu0 0.0
      %2008 = vmatpush2.msra.mxu0 %v1731
      %2009 = vmatprep.subr.mxu0 0.0
      %2010 = vmatpush2.msra.mxu0 %v1730
      %2011 = vmatprep.subr.mxu0 0.0
      %2012 = vmatpush2.msra.mxu0 %v1729
      %2013 = vmatprep.subr.mxu0 0.0
      %2014 = vmatpush2.msra.mxu0 %v1728
      %2015 = vmatprep.subr.mxu0 0.0
      %2016 = vmatpush2.msra.mxu0 %v1727
      %2017 = vmatprep.subr.mxu0 0.0
      %2018 = vmatpush2.msra.mxu0 %v1726
      %2019 = vmatprep.subr.mxu0 0.0
      %2020 = vmatpush2.msra.mxu0 %v1725
      %2021 = vmatprep.subr.mxu0 0.0
      %2022 = vmatpush2.msra.mxu0 %v1724
      %2023 = vmatprep.subr.mxu0 0.0
      %2024 = vmatpush2.msra.mxu0 %v1723
      %2025 = vmatprep.subr.mxu0 0.0
      %2026 = vmatpush2.msra.mxu0 %v1722
      %2027 = vmatprep.mubr.f32.mxu0 %v1575
      %2028 = vmatmul.mubr.f32.gmra.mxu0 %v1556
      %v2029 = vpop.f32.mrf.mxu0
      %v2030 = vadd.f32 %v1885, %v2029
      %v2031 = vpop.f32.mrf.mxu0
      %2032 = vmatprep.mubr.f32.mxu0 %v1576
      %2033 = vmatmul.mubr.f32.gmra.mxu0 %v1557
      %v2034 = vpop.f32.mrf.mxu0
      %v2035 = vadd.f32 %v1890, %v2034
      %v2036 = vpop.f32.mrf.mxu0
      %2037 = vmatprep.mubr.f32.mxu0 %v1577
      %2038 = vmatmul.mubr.f32.gmra.mxu0 %v1558
      %v2039 = vpop.f32.mrf.mxu0
      %v2040 = vadd.f32 %v1895, %v2039
      %v2041 = vpop.f32.mrf.mxu0
      %2042 = vmatprep.mubr.f32.mxu0 %v1578
      %2043 = vmatmul.mubr.f32.gmra.mxu0 %v1559
      %v2044 = vpop.f32.mrf.mxu0
      %v2045 = vadd.f32 %v1900, %v2044
      %v2046 = vpop.f32.mrf.mxu0
      %2047 = vmatprep.mubr.f32.mxu0 %v1579
      %2048 = vmatmul.mubr.f32.gmra.mxu0 %v1560
      %v2049 = vpop.f32.mrf.mxu0
      %v2050 = vadd.f32 %v1905, %v2049
      %v2051 = vpop.f32.mrf.mxu0
      %2052 = vmatprep.mubr.f32.mxu0 %v1580
      %2053 = vmatmul.mubr.f32.gmra.mxu0 %v1561
      %v2054 = vpop.f32.mrf.mxu0
      %v2055 = vadd.f32 %v1910, %v2054
      %v2056 = vpop.f32.mrf.mxu0
      %2057 = vmatprep.mubr.f32.mxu0 %v1581
      %2058 = vmatmul.mubr.f32.gmra.mxu0 %v1562
      %v2059 = vpop.f32.mrf.mxu0
      %v2060 = vadd.f32 %v1915, %v2059
      %v2061 = vpop.f32.mrf.mxu0
      %2062 = vmatprep.mubr.f32.mxu0 %v1582
      %2063 = vmatmul.mubr.f32.gmra.mxu0 %v1563
      %v2064 = vpop.f32.mrf.mxu0
      %v2065 = vadd.f32 %v1920, %v2064
      %v2066 = vpop.f32.mrf.mxu0
      %2067 = vmatprep.mubr.f32.mxu0 %v1583
      %2068 = vmatmul.mubr.f32.gmra.mxu0 %v1564
      %v2069 = vpop.f32.mrf.mxu0
      %v2070 = vadd.f32 %v1925, %v2069
      %v2071 = vpop.f32.mrf.mxu0
      %2072 = vmatprep.mubr.f32.mxu0 %v1584
      %2073 = vmatmul.mubr.f32.gmra.mxu0 %v1565
      %v2074 = vpop.f32.mrf.mxu0
      %v2075 = vadd.f32 %v1930, %v2074
      %v2076 = vpop.f32.mrf.mxu0
      %2077 = vmatprep.mubr.f32.mxu0 %v1585
      %2078 = vmatmul.mubr.f32.gmra.mxu0 %v1566
      %v2079 = vpop.f32.mrf.mxu0
      %v2080 = vadd.f32 %v1935, %v2079
      %v2081 = vpop.f32.mrf.mxu0
      %2082 = vmatprep.mubr.f32.mxu0 %v1586
      %2083 = vmatmul.mubr.f32.gmra.mxu0 %v1567
      %v2084 = vpop.f32.mrf.mxu0
      %v2085 = vadd.f32 %v1940, %v2084
      %v2086 = vpop.f32.mrf.mxu0
      %2087 = vmatprep.mubr.f32.mxu0 %v1587
      %2088 = vmatmul.mubr.f32.gmra.mxu0 %v1568
      %v2089 = vpop.f32.mrf.mxu0
      %v2090 = vadd.f32 %v1945, %v2089
      %v2091 = vpop.f32.mrf.mxu0
      %2092 = vmatprep.mubr.f32.mxu0 %v1588
      %2093 = vmatmul.mubr.f32.gmra.mxu0 %v1569
      %v2094 = vpop.f32.mrf.mxu0
      %v2095 = vadd.f32 %v1950, %v2094
      %v2096 = vpop.f32.mrf.mxu0
      %2097 = vmatprep.mubr.f32.mxu0 %v1589
      %2098 = vmatmul.mubr.f32.gmra.mxu0 %v1570
      %v2099 = vpop.f32.mrf.mxu0
      %v2100 = vadd.f32 %v1955, %v2099
      %v2101 = vpop.f32.mrf.mxu0
      %2102 = vmatprep.mubr.f32.mxu0 %v1590
      %2103 = vmatmul.mubr.f32.gmra.mxu0 %v1571
      %v2104 = vpop.f32.mrf.mxu0
      %v2105 = vadd.f32 %v1960, %v2104
      %v2106 = vpop.f32.mrf.mxu0
      %2107 = vdwg.mxu0
      %2108 = vmatprep.subr.mxu0 0.0
      %2109 = vmatpush1.msra.mxu0 %v1753
      %2110 = vmatprep.subr.mxu0 0.0
      %2111 = vmatpush1.msra.mxu0 %v1752
      %2112 = vmatprep.subr.mxu0 0.0
      %2113 = vmatpush1.msra.mxu0 %v1751
      %2114 = vmatprep.subr.mxu0 0.0
      %2115 = vmatpush1.msra.mxu0 %v1750
      %2116 = vmatprep.subr.mxu0 0.0
      %2117 = vmatpush1.msra.mxu0 %v1749
      %2118 = vmatprep.subr.mxu0 0.0
      %2119 = vmatpush1.msra.mxu0 %v1748
      %2120 = vmatprep.subr.mxu0 0.0
      %2121 = vmatpush1.msra.mxu0 %v1747
      %2122 = vmatprep.subr.mxu0 0.0
      %2123 = vmatpush1.msra.mxu0 %v1746
      %2124 = vmatprep.subr.mxu0 0.0
      %2125 = vmatpush1.msra.mxu0 %v1745
      %2126 = vmatprep.subr.mxu0 0.0
      %2127 = vmatpush1.msra.mxu0 %v1744
      %2128 = vmatprep.subr.mxu0 0.0
      %2129 = vmatpush1.msra.mxu0 %v1743
      %2130 = vmatprep.subr.mxu0 0.0
      %2131 = vmatpush1.msra.mxu0 %v1742
      %2132 = vmatprep.subr.mxu0 0.0
      %2133 = vmatpush1.msra.mxu0 %v1741
      %2134 = vmatprep.subr.mxu0 0.0
      %2135 = vmatpush1.msra.mxu0 %v1740
      %2136 = vmatprep.subr.mxu0 0.0
      %2137 = vmatpush1.msra.mxu0 %v1739
      %2138 = vmatprep.subr.mxu0 0.0
      %2139 = vmatpush1.msra.mxu0 %v1738
      %2140 = vmatprep.subr.mxu0 0.0
      %2141 = vmatpush2.msra.mxu0 %v1769
      %2142 = vmatprep.subr.mxu0 0.0
      %2143 = vmatpush2.msra.mxu0 %v1768
      %2144 = vmatprep.subr.mxu0 0.0
      %2145 = vmatpush2.msra.mxu0 %v1767
      %2146 = vmatprep.subr.mxu0 0.0
      %2147 = vmatpush2.msra.mxu0 %v1766
      %2148 = vmatprep.subr.mxu0 0.0
      %2149 = vmatpush2.msra.mxu0 %v1765
      %2150 = vmatprep.subr.mxu0 0.0
      %2151 = vmatpush2.msra.mxu0 %v1764
      %2152 = vmatprep.subr.mxu0 0.0
      %2153 = vmatpush2.msra.mxu0 %v1763
      %2154 = vmatprep.subr.mxu0 0.0
      %2155 = vmatpush2.msra.mxu0 %v1762
      %2156 = vmatprep.subr.mxu0 0.0
      %2157 = vmatpush2.msra.mxu0 %v1761
      %2158 = vmatprep.subr.mxu0 0.0
      %2159 = vmatpush2.msra.mxu0 %v1760
      %2160 = vmatprep.subr.mxu0 0.0
      %2161 = vmatpush2.msra.mxu0 %v1759
      %2162 = vmatprep.subr.mxu0 0.0
      %2163 = vmatpush2.msra.mxu0 %v1758
      %2164 = vmatprep.subr.mxu0 0.0
      %2165 = vmatpush2.msra.mxu0 %v1757
      %2166 = vmatprep.subr.mxu0 0.0
      %2167 = vmatpush2.msra.mxu0 %v1756
      %2168 = vmatprep.subr.mxu0 0.0
      %2169 = vmatpush2.msra.mxu0 %v1755
      %2170 = vmatprep.subr.mxu0 0.0
      %2171 = vmatpush2.msra.mxu0 %v1754
      %2172 = vmatprep.mubr.f32.mxu0 %v1607
      %2173 = vmatmul.mubr.f32.gmra.mxu0 %v1591
      %v2174 = vpop.f32.mrf.mxu0
      %v2175 = vadd.f32 %v2030, %v2174
      %v2176 = vpop.f32.mrf.mxu0
      %2177 = vmatprep.mubr.f32.mxu0 %v1608
      %2178 = vmatmul.mubr.f32.gmra.mxu0 %v1592
      %v2179 = vpop.f32.mrf.mxu0
      %v2180 = vadd.f32 %v2035, %v2179
      %v2181 = vpop.f32.mrf.mxu0
      %2182 = vmatprep.mubr.f32.mxu0 %v1609
      %2183 = vmatmul.mubr.f32.gmra.mxu0 %v1593
      %v2184 = vpop.f32.mrf.mxu0
      %v2185 = vadd.f32 %v2040, %v2184
      %v2186 = vpop.f32.mrf.mxu0
      %2187 = vmatprep.mubr.f32.mxu0 %v1610
      %2188 = vmatmul.mubr.f32.gmra.mxu0 %v1594
      %v2189 = vpop.f32.mrf.mxu0
      %v2190 = vadd.f32 %v2045, %v2189
      %v2191 = vpop.f32.mrf.mxu0
      %2192 = vmatprep.mubr.f32.mxu0 %v1611
      %2193 = vmatmul.mubr.f32.gmra.mxu0 %v1595
      %v2194 = vpop.f32.mrf.mxu0
      %v2195 = vadd.f32 %v2050, %v2194
      %v2196 = vpop.f32.mrf.mxu0
      %2197 = vmatprep.mubr.f32.mxu0 %v1612
      %2198 = vmatmul.mubr.f32.gmra.mxu0 %v1596
      %v2199 = vpop.f32.mrf.mxu0
      %v2200 = vadd.f32 %v2055, %v2199
      %v2201 = vpop.f32.mrf.mxu0
      %2202 = vmatprep.mubr.f32.mxu0 %v1613
      %2203 = vmatmul.mubr.f32.gmra.mxu0 %v1597
      %v2204 = vpop.f32.mrf.mxu0
      %v2205 = vadd.f32 %v2060, %v2204
      %v2206 = vpop.f32.mrf.mxu0
      %2207 = vmatprep.mubr.f32.mxu0 %v1614
      %2208 = vmatmul.mubr.f32.gmra.mxu0 %v1598
      %v2209 = vpop.f32.mrf.mxu0
      %v2210 = vadd.f32 %v2065, %v2209
      %v2211 = vpop.f32.mrf.mxu0
      %2212 = vmatprep.mubr.f32.mxu0 %v1615
      %2213 = vmatmul.mubr.f32.gmra.mxu0 %v1599
      %v2214 = vpop.f32.mrf.mxu0
      %v2215 = vadd.f32 %v2070, %v2214
      %v2216 = vpop.f32.mrf.mxu0
      %2217 = vmatprep.mubr.f32.mxu0 %v1616
      %2218 = vmatmul.mubr.f32.gmra.mxu0 %v1600
      %v2219 = vpop.f32.mrf.mxu0
      %v2220 = vadd.f32 %v2075, %v2219
      %v2221 = vpop.f32.mrf.mxu0
      %2222 = vmatprep.mubr.f32.mxu0 %v1617
      %2223 = vmatmul.mubr.f32.gmra.mxu0 %v1601
      %v2224 = vpop.f32.mrf.mxu0
      %v2225 = vadd.f32 %v2080, %v2224
      %v2226 = vpop.f32.mrf.mxu0
      %2227 = vmatprep.mubr.f32.mxu0 %v1618
      %2228 = vmatmul.mubr.f32.gmra.mxu0 %v1602
      %v2229 = vpop.f32.mrf.mxu0
      %v2230 = vadd.f32 %v2085, %v2229
      %v2231 = vpop.f32.mrf.mxu0
      %2232 = vmatprep.mubr.f32.mxu0 %v1619
      %2233 = vmatmul.mubr.f32.gmra.mxu0 %v1603
      %v2234 = vpop.f32.mrf.mxu0
      %v2235 = vadd.f32 %v2090, %v2234
      %v2236 = vpop.f32.mrf.mxu0
      %2237 = vmatprep.mubr.f32.mxu0 %v1620
      %2238 = vmatmul.mubr.f32.gmra.mxu0 %v1604
      %v2239 = vpop.f32.mrf.mxu0
      %v2240 = vadd.f32 %v2095, %v2239
      %v2241 = vpop.f32.mrf.mxu0
      %2242 = vmatprep.mubr.f32.mxu0 %v1621
      %2243 = vmatmul.mubr.f32.gmra.mxu0 %v1605
      %v2244 = vpop.f32.mrf.mxu0
      %v2245 = vadd.f32 %v2100, %v2244
      %v2246 = vpop.f32.mrf.mxu0
      %2247 = vmatprep.mubr.f32.mxu0 %v1622
      %2248 = vmatmul.mubr.f32.gmra.mxu0 %v1606
      %v2249 = vpop.f32.mrf.mxu0
      %v2250 = vadd.f32 %v2105, %v2249
      %v2251 = vpop.f32.mrf.mxu0
      %2252 = vdwg.mxu0
      %2253 = vmatprep.subr.mxu0 0.0
      %2254 = vmatpush1.msra.mxu0 %v1785
      %2255 = vmatprep.subr.mxu0 0.0
      %2256 = vmatpush1.msra.mxu0 %v1784
      %2257 = vmatprep.subr.mxu0 0.0
      %2258 = vmatpush1.msra.mxu0 %v1783
      %2259 = vmatprep.subr.mxu0 0.0
      %2260 = vmatpush1.msra.mxu0 %v1782
      %2261 = vmatprep.subr.mxu0 0.0
      %2262 = vmatpush1.msra.mxu0 %v1781
      %2263 = vmatprep.subr.mxu0 0.0
      %2264 = vmatpush1.msra.mxu0 %v1780
      %2265 = vmatprep.subr.mxu0 0.0
      %2266 = vmatpush1.msra.mxu0 %v1779
      %2267 = vmatprep.subr.mxu0 0.0
      %2268 = vmatpush1.msra.mxu0 %v1778
      %2269 = vmatprep.subr.mxu0 0.0
      %2270 = vmatpush1.msra.mxu0 %v1777
      %2271 = vmatprep.subr.mxu0 0.0
      %2272 = vmatpush1.msra.mxu0 %v1776
      %2273 = vmatprep.subr.mxu0 0.0
      %2274 = vmatpush1.msra.mxu0 %v1775
      %2275 = vmatprep.subr.mxu0 0.0
      %2276 = vmatpush1.msra.mxu0 %v1774
      %2277 = vmatprep.subr.mxu0 0.0
      %2278 = vmatpush1.msra.mxu0 %v1773
      %2279 = vmatprep.subr.mxu0 0.0
      %2280 = vmatpush1.msra.mxu0 %v1772
      %2281 = vmatprep.subr.mxu0 0.0
      %2282 = vmatpush1.msra.mxu0 %v1771
      %2283 = vmatprep.subr.mxu0 0.0
      %2284 = vmatpush1.msra.mxu0 %v1770
      %2285 = vmatprep.subr.mxu0 0.0
      %2286 = vmatpush2.msra.mxu0 %v1801
      %2287 = vmatprep.subr.mxu0 0.0
      %2288 = vmatpush2.msra.mxu0 %v1800
      %2289 = vmatprep.subr.mxu0 0.0
      %2290 = vmatpush2.msra.mxu0 %v1799
      %2291 = vmatprep.subr.mxu0 0.0
      %2292 = vmatpush2.msra.mxu0 %v1798
      %2293 = vmatprep.subr.mxu0 0.0
      %2294 = vmatpush2.msra.mxu0 %v1797
      %2295 = vmatprep.subr.mxu0 0.0
      %2296 = vmatpush2.msra.mxu0 %v1796
      %2297 = vmatprep.subr.mxu0 0.0
      %2298 = vmatpush2.msra.mxu0 %v1795
      %2299 = vmatprep.subr.mxu0 0.0
      %2300 = vmatpush2.msra.mxu0 %v1794
      %2301 = vmatprep.subr.mxu0 0.0
      %2302 = vmatpush2.msra.mxu0 %v1793
      %2303 = vmatprep.subr.mxu0 0.0
      %2304 = vmatpush2.msra.mxu0 %v1792
      %2305 = vmatprep.subr.mxu0 0.0
      %2306 = vmatpush2.msra.mxu0 %v1791
      %2307 = vmatprep.subr.mxu0 0.0
      %2308 = vmatpush2.msra.mxu0 %v1790
      %2309 = vmatprep.subr.mxu0 0.0
      %2310 = vmatpush2.msra.mxu0 %v1789
      %2311 = vmatprep.subr.mxu0 0.0
      %2312 = vmatpush2.msra.mxu0 %v1788
      %2313 = vmatprep.subr.mxu0 0.0
      %2314 = vmatpush2.msra.mxu0 %v1787
      %2315 = vmatprep.subr.mxu0 0.0
      %2316 = vmatpush2.msra.mxu0 %v1786
      %2317 = vmatprep.mubr.f32.mxu0 %v1642
      %2318 = vmatmul.mubr.f32.gmra.mxu0 %v1626
      %v2319 = vpop.f32.mrf.mxu0
      %v2320 = vadd.f32 %v2175, %v2319
      %v2321 = vpop.f32.mrf.mxu0
      %2322 = vmatprep.mubr.f32.mxu0 %v1643
      %2323 = vmatmul.mubr.f32.gmra.mxu0 %v1627
      %v2324 = vpop.f32.mrf.mxu0
      %v2325 = vadd.f32 %v2180, %v2324
      %v2326 = vpop.f32.mrf.mxu0
      %2327 = vmatprep.mubr.f32.mxu0 %v1644
      %2328 = vmatmul.mubr.f32.gmra.mxu0 %v1628
      %v2329 = vpop.f32.mrf.mxu0
      %v2330 = vadd.f32 %v2185, %v2329
      %v2331 = vpop.f32.mrf.mxu0
      %2332 = vmatprep.mubr.f32.mxu0 %v1645
      %2333 = vmatmul.mubr.f32.gmra.mxu0 %v1629
      %v2334 = vpop.f32.mrf.mxu0
      %v2335 = vadd.f32 %v2190, %v2334
      %v2336 = vpop.f32.mrf.mxu0
      %2337 = vmatprep.mubr.f32.mxu0 %v1646
      %2338 = vmatmul.mubr.f32.gmra.mxu0 %v1630
      %v2339 = vpop.f32.mrf.mxu0
      %v2340 = vadd.f32 %v2195, %v2339
      %v2341 = vpop.f32.mrf.mxu0
      %2342 = vmatprep.mubr.f32.mxu0 %v1647
      %2343 = vmatmul.mubr.f32.gmra.mxu0 %v1631
      %v2344 = vpop.f32.mrf.mxu0
      %v2345 = vadd.f32 %v2200, %v2344
      %v2346 = vpop.f32.mrf.mxu0
      %2347 = vmatprep.mubr.f32.mxu0 %v1648
      %2348 = vmatmul.mubr.f32.gmra.mxu0 %v1632
      %v2349 = vpop.f32.mrf.mxu0
      %v2350 = vadd.f32 %v2205, %v2349
      %v2351 = vpop.f32.mrf.mxu0
      %2352 = vmatprep.mubr.f32.mxu0 %v1649
      %2353 = vmatmul.mubr.f32.gmra.mxu0 %v1633
      %v2354 = vpop.f32.mrf.mxu0
      %v2355 = vadd.f32 %v2210, %v2354
      %v2356 = vpop.f32.mrf.mxu0
      %2357 = vmatprep.mubr.f32.mxu0 %v1650
      %2358 = vmatmul.mubr.f32.gmra.mxu0 %v1634
      %v2359 = vpop.f32.mrf.mxu0
      %v2360 = vadd.f32 %v2215, %v2359
      %v2361 = vpop.f32.mrf.mxu0
      %2362 = vmatprep.mubr.f32.mxu0 %v1651
      %2363 = vmatmul.mubr.f32.gmra.mxu0 %v1635
      %v2364 = vpop.f32.mrf.mxu0
      %v2365 = vadd.f32 %v2220, %v2364
      %v2366 = vpop.f32.mrf.mxu0
      %2367 = vmatprep.mubr.f32.mxu0 %v1652
      %2368 = vmatmul.mubr.f32.gmra.mxu0 %v1636
      %v2369 = vpop.f32.mrf.mxu0
      %v2370 = vadd.f32 %v2225, %v2369
      %v2371 = vpop.f32.mrf.mxu0
      %2372 = vmatprep.mubr.f32.mxu0 %v1653
      %2373 = vmatmul.mubr.f32.gmra.mxu0 %v1637
      %v2374 = vpop.f32.mrf.mxu0
      %v2375 = vadd.f32 %v2230, %v2374
      %v2376 = vpop.f32.mrf.mxu0
      %2377 = vmatprep.mubr.f32.mxu0 %v1654
      %2378 = vmatmul.mubr.f32.gmra.mxu0 %v1638
      %v2379 = vpop.f32.mrf.mxu0
      %v2380 = vadd.f32 %v2235, %v2379
      %v2381 = vpop.f32.mrf.mxu0
      %2382 = vmatprep.mubr.f32.mxu0 %v1655
      %2383 = vmatmul.mubr.f32.gmra.mxu0 %v1639
      %v2384 = vpop.f32.mrf.mxu0
      %v2385 = vadd.f32 %v2240, %v2384
      %v2386 = vpop.f32.mrf.mxu0
      %2387 = vmatprep.mubr.f32.mxu0 %v1656
      %2388 = vmatmul.mubr.f32.gmra.mxu0 %v1640
      %v2389 = vpop.f32.mrf.mxu0
      %v2390 = vadd.f32 %v2245, %v2389
      %v2391 = vpop.f32.mrf.mxu0
      %2392 = vmatprep.mubr.f32.mxu0 %v1657
      %2393 = vmatmul.mubr.f32.gmra.mxu0 %v1641
      %v2394 = vpop.f32.mrf.mxu0
      %v2395 = vadd.f32 %v2250, %v2394
      %v2396 = vpop.f32.mrf.mxu0
      %2397 = vdwg.mxu0
      %2398 = vmatprep.subr.mxu0 0.0
      %2399 = vmatpush1.msra.mxu0 %v1817
      %2400 = vmatprep.subr.mxu0 0.0
      %2401 = vmatpush1.msra.mxu0 %v1816
      %2402 = vmatprep.subr.mxu0 0.0
      %2403 = vmatpush1.msra.mxu0 %v1815
      %2404 = vmatprep.subr.mxu0 0.0
      %2405 = vmatpush1.msra.mxu0 %v1814
      %2406 = vmatprep.subr.mxu0 0.0
      %2407 = vmatpush1.msra.mxu0 %v1813
      %2408 = vmatprep.subr.mxu0 0.0
      %2409 = vmatpush1.msra.mxu0 %v1812
      %2410 = vmatprep.subr.mxu0 0.0
      %2411 = vmatpush1.msra.mxu0 %v1811
      %2412 = vmatprep.subr.mxu0 0.0
      %2413 = vmatpush1.msra.mxu0 %v1810
      %2414 = vmatprep.subr.mxu0 0.0
      %2415 = vmatpush1.msra.mxu0 %v1809
      %2416 = vmatprep.subr.mxu0 0.0
      %2417 = vmatpush1.msra.mxu0 %v1808
      %2418 = vmatprep.subr.mxu0 0.0
      %2419 = vmatpush1.msra.mxu0 %v1807
      %2420 = vmatprep.subr.mxu0 0.0
      %2421 = vmatpush1.msra.mxu0 %v1806
      %2422 = vmatprep.subr.mxu0 0.0
      %2423 = vmatpush1.msra.mxu0 %v1805
      %2424 = vmatprep.subr.mxu0 0.0
      %2425 = vmatpush1.msra.mxu0 %v1804
      %2426 = vmatprep.subr.mxu0 0.0
      %2427 = vmatpush1.msra.mxu0 %v1803
      %2428 = vmatprep.subr.mxu0 0.0
      %2429 = vmatpush1.msra.mxu0 %v1802
      %2430 = vmatprep.subr.mxu0 0.0
      %2431 = vmatpush2.msra.mxu0 0.0
      %2432 = vmatprep.subr.mxu0 0.0
      %2433 = vmatpush2.msra.mxu0 0.0
      %2434 = vmatprep.subr.mxu0 0.0
      %2435 = vmatpush2.msra.mxu0 0.0
      %2436 = vmatprep.subr.mxu0 0.0
      %2437 = vmatpush2.msra.mxu0 0.0
      %2438 = vmatprep.subr.mxu0 0.0
      %2439 = vmatpush2.msra.mxu0 0.0
      %2440 = vmatprep.subr.mxu0 0.0
      %2441 = vmatpush2.msra.mxu0 0.0
      %2442 = vmatprep.subr.mxu0 0.0
      %2443 = vmatpush2.msra.mxu0 0.0
      %2444 = vmatprep.subr.mxu0 0.0
      %2445 = vmatpush2.msra.mxu0 0.0
      %2446 = vmatprep.subr.mxu0 0.0
      %2447 = vmatpush2.msra.mxu0 0.0
      %2448 = vmatprep.subr.mxu0 0.0
      %2449 = vmatpush2.msra.mxu0 0.0
      %2450 = vmatprep.subr.mxu0 0.0
      %2451 = vmatpush2.msra.mxu0 0.0
      %2452 = vmatprep.subr.mxu0 0.0
      %2453 = vmatpush2.msra.mxu0 0.0
      %2454 = vmatprep.subr.mxu0 0.0
      %2455 = vmatpush2.msra.mxu0 0.0
      %2456 = vmatprep.subr.mxu0 0.0
      %2457 = vmatpush2.msra.mxu0 0.0
      %2458 = vmatprep.subr.mxu0 0.0
      %2459 = vmatpush2.msra.mxu0 0.0
      %2460 = vmatprep.subr.mxu0 0.0
      %2461 = vmatpush2.msra.mxu0 0.0
      %2462 = vmatprep.mubr.f32.mxu0 0.0
      %2463 = vmatmul.mubr.f32.gmra.mxu0 %v1658
      %v2464 = vpop.f32.mrf.mxu0
      %v2465 = vadd.f32 %v2320, %v2464
      %v2466 = vpop.f32.mrf.mxu0
      %2467 = vmatprep.mubr.f32.mxu0 0.0
      %2468 = vmatmul.mubr.f32.gmra.mxu0 %v1659
      %v2469 = vpop.f32.mrf.mxu0
      %v2470 = vadd.f32 %v2325, %v2469
      %v2471 = vpop.f32.mrf.mxu0
      %2472 = vmatprep.mubr.f32.mxu0 0.0
      %2473 = vmatmul.mubr.f32.gmra.mxu0 %v1660
      %v2474 = vpop.f32.mrf.mxu0
      %v2475 = vadd.f32 %v2330, %v2474
      %v2476 = vpop.f32.mrf.mxu0
      %2477 = vmatprep.mubr.f32.mxu0 0.0
      %2478 = vmatmul.mubr.f32.gmra.mxu0 %v1661
      %v2479 = vpop.f32.mrf.mxu0
      %v2480 = vadd.f32 %v2335, %v2479
      %v2481 = vpop.f32.mrf.mxu0
      %2482 = vmatprep.mubr.f32.mxu0 0.0
      %2483 = vmatmul.mubr.f32.gmra.mxu0 %v1662
      %v2484 = vpop.f32.mrf.mxu0
      %v2485 = vadd.f32 %v2340, %v2484
      %v2486 = vpop.f32.mrf.mxu0
      %2487 = vmatprep.mubr.f32.mxu0 0.0
      %2488 = vmatmul.mubr.f32.gmra.mxu0 %v1663
      %v2489 = vpop.f32.mrf.mxu0
      %v2490 = vadd.f32 %v2345, %v2489
      %v2491 = vpop.f32.mrf.mxu0
      %2492 = vmatprep.mubr.f32.mxu0 0.0
      %2493 = vmatmul.mubr.f32.gmra.mxu0 %v1664
      %v2494 = vpop.f32.mrf.mxu0
      %v2495 = vadd.f32 %v2350, %v2494
      %v2496 = vpop.f32.mrf.mxu0
      %2497 = vmatprep.mubr.f32.mxu0 0.0
      %2498 = vmatmul.mubr.f32.gmra.mxu0 %v1665
      %v2499 = vpop.f32.mrf.mxu0
      %v2500 = vadd.f32 %v2355, %v2499
      %v2501 = vpop.f32.mrf.mxu0
      %2502 = vmatprep.mubr.f32.mxu0 0.0
      %2503 = vmatmul.mubr.f32.gmra.mxu0 %v1666
      %v2504 = vpop.f32.mrf.mxu0
      %v2505 = vadd.f32 %v2360, %v2504
      %v2506 = vpop.f32.mrf.mxu0
      %2507 = vmatprep.mubr.f32.mxu0 0.0
      %2508 = vmatmul.mubr.f32.gmra.mxu0 %v1667
      %v2509 = vpop.f32.mrf.mxu0
      %v2510 = vadd.f32 %v2365, %v2509
      %v2511 = vpop.f32.mrf.mxu0
      %2512 = vmatprep.mubr.f32.mxu0 0.0
      %2513 = vmatmul.mubr.f32.gmra.mxu0 %v1668
      %v2514 = vpop.f32.mrf.mxu0
      %v2515 = vadd.f32 %v2370, %v2514
      %v2516 = vpop.f32.mrf.mxu0
      %2517 = vmatprep.mubr.f32.mxu0 0.0
      %2518 = vmatmul.mubr.f32.gmra.mxu0 %v1669
      %v2519 = vpop.f32.mrf.mxu0
      %v2520 = vadd.f32 %v2375, %v2519
      %v2521 = vpop.f32.mrf.mxu0
      %2522 = vmatprep.mubr.f32.mxu0 0.0
      %2523 = vmatmul.mubr.f32.gmra.mxu0 %v1670
      %v2524 = vpop.f32.mrf.mxu0
      %v2525 = vadd.f32 %v2380, %v2524
      %v2526 = vpop.f32.mrf.mxu0
      %2527 = vmatprep.mubr.f32.mxu0 0.0
      %2528 = vmatmul.mubr.f32.gmra.mxu0 %v1671
      %v2529 = vpop.f32.mrf.mxu0
      %v2530 = vadd.f32 %v2385, %v2529
      %v2531 = vpop.f32.mrf.mxu0
      %2532 = vmatprep.mubr.f32.mxu0 0.0
      %2533 = vmatmul.mubr.f32.gmra.mxu0 %v1672
      %v2534 = vpop.f32.mrf.mxu0
      %v2535 = vadd.f32 %v2390, %v2534
      %v2536 = vpop.f32.mrf.mxu0
      %2537 = vmatprep.mubr.f32.mxu0 0.0
      %2538 = vmatmul.mubr.f32.gmra.mxu0 %v1673
      %v2539 = vpop.f32.mrf.mxu0
      %v2540 = vadd.f32 %v2395, %v2539
      %v2541 = vpop.f32.mrf.mxu0
      %2542 = vdwg.mxu0
      %s2543 = smul.u32 8, 16
      %s2544 = scalar_lea.vmem %s204, %s2543
      %2545 = vst [vmem:[%s2544] sm:$0xff] %v2465
      %2546 = vst [vmem:[%s2544 + $0x8] sm:$0xff] %v2470
      %2547 = vst [vmem:[%s2544 + $0x10] sm:$0xff] %v2475
      %2548 = vst [vmem:[%s2544 + $0x18] sm:$0xff] %v2480
      %2549 = vst [vmem:[%s2544 + $0x20] sm:$0xff] %v2485
      %2550 = vst [vmem:[%s2544 + $0x28] sm:$0xff] %v2490
      %2551 = vst [vmem:[%s2544 + $0x30] sm:$0xff] %v2495
      %2552 = vst [vmem:[%s2544 + $0x38] sm:$0xff] %v2500
      %2553 = vst [vmem:[%s2544 + $0x40] sm:$0xff] %v2505
      %2554 = vst [vmem:[%s2544 + $0x48] sm:$0xff] %v2510
      %2555 = vst [vmem:[%s2544 + $0x50] sm:$0xff] %v2515
      %2556 = vst [vmem:[%s2544 + $0x58] sm:$0xff] %v2520
      %2557 = vst [vmem:[%s2544 + $0x60] sm:$0xff] %v2525
      %2558 = vst [vmem:[%s2544 + $0x68] sm:$0xff] %v2530
      %2559 = vst [vmem:[%s2544 + $0x70] sm:$0xff] %v2535
      %2560 = vst [vmem:[%s2544 + $0x78] sm:$0xff] %v2540
      %v2561 = vadd.f32 %v2465, %v2470
      %v2562 = vadd.f32 %v2561, %v2475
      %v2563 = vadd.f32 %v2562, %v2480
      %v2564 = vadd.f32 %v2563, %v2485
      %v2565 = vadd.f32 %v2564, %v2490
      %v2566 = vadd.f32 %v2565, %v2495
      %v2567 = vadd.f32 %v2566, %v2500
      %v2568 = vadd.f32 %v2567, %v2505
      %v2569 = vadd.f32 %v2568, %v2510
      %v2570 = vadd.f32 %v2569, %v2515
      %v2571 = vadd.f32 %v2570, %v2520
      %v2572 = vadd.f32 %v2571, %v2525
      %v2573 = vadd.f32 %v2572, %v2530
      %v2574 = vadd.f32 %v2573, %v2535
      %v2575 = vadd.f32 %v2574, %v2540
      %v2576 = vrot.slane %v2575, 4
      %v2577 = vadd.f32 %v2575, %v2576
      %v2578 = vrot.slane %v2577, 2
      %v2579 = vadd.f32 %v2577, %v2578
      %v2580 = vrot.slane %v2579, 1
      %v2581 = vadd.f32 %v2579, %v2580
      %v2582 = vadd.f32 %v1483, %v2581
      %v2583 = vmul.f32 %v2465, %v2465
      %v2584 = vmul.f32 %v2470, %v2470
      %v2585 = vmul.f32 %v2475, %v2475
      %v2586 = vmul.f32 %v2480, %v2480
      %v2587 = vmul.f32 %v2485, %v2485
      %v2588 = vmul.f32 %v2490, %v2490
      %v2589 = vmul.f32 %v2495, %v2495
      %v2590 = vmul.f32 %v2500, %v2500
      %v2591 = vmul.f32 %v2505, %v2505
      %v2592 = vmul.f32 %v2510, %v2510
      %v2593 = vmul.f32 %v2515, %v2515
      %v2594 = vmul.f32 %v2520, %v2520
      %v2595 = vmul.f32 %v2525, %v2525
      %v2596 = vmul.f32 %v2530, %v2530
      %v2597 = vmul.f32 %v2535, %v2535
      %v2598 = vmul.f32 %v2540, %v2540
      %v2599 = vadd.f32 %v2583, %v2584
      %v2600 = vadd.f32 %v2599, %v2585
      %v2601 = vadd.f32 %v2600, %v2586
      %v2602 = vadd.f32 %v2601, %v2587
      %v2603 = vadd.f32 %v2602, %v2588
      %v2604 = vadd.f32 %v2603, %v2589
      %v2605 = vadd.f32 %v2604, %v2590
      %v2606 = vadd.f32 %v2605, %v2591
      %v2607 = vadd.f32 %v2606, %v2592
      %v2608 = vadd.f32 %v2607, %v2593
      %v2609 = vadd.f32 %v2608, %v2594
      %v2610 = vadd.f32 %v2609, %v2595
      %v2611 = vadd.f32 %v2610, %v2596
      %v2612 = vadd.f32 %v2611, %v2597
      %v2613 = vadd.f32 %v2612, %v2598
      %v2614 = vrot.slane %v2613, 4
      %v2615 = vadd.f32 %v2613, %v2614
      %v2616 = vrot.slane %v2615, 2
      %v2617 = vadd.f32 %v2615, %v2616
      %v2618 = vrot.slane %v2617, 1
      %v2619 = vadd.f32 %v2617, %v2618
      %v2620 = vadd.f32 %v1521, %v2619
      %vm2621 = vcmask 1040384
      %v2622 = vsel %vm2621, %v2582, %v2620
      %2623 = vst [vmem:[%s208] sm:$0x3] %v2622
      %p2624 = scmp.lt.s32.totalorder %s16, 1
      %s2625 = scalar_select %p2624, %s16, 1
      %s2626 = smul.addr %s2625, 32
      %s2627 = smul.addr %s2626, 8
      %s2628 = scalar_lea.vmem %s3, %s2627
      %p2629 = scmp.lt.s32.totalorder %s16, 1
      %s2630 = scalar_select %p2629, %s16, 1
      %s2631 = smul.addr %s2630, 2
      %s2632 = scalar_lea.vmem %s4, %s2631
      // Predicated region
      $region33: #{res_basic_block_preact.2} parent=31 // pred_check
        %p2633 = pneg %p102
      $region34: #{res_basic_block_preact.2} parent=31 // pred_check_branch
        %2635 = sbr.rel (%p2633) target = $region36
      $region35: #{res_basic_block_preact.2} parent=31 // pred_region
        _
      $region36: #{res_basic_block_preact.2} parent=31 // pred_fallthru
        _
      // Predicated region
      $region37: #{res_basic_block_preact.2} parent=31 // pred_check
        %p2636 = pneg %p128
      $region38: #{res_basic_block_preact.2} parent=31 // pred_check_branch
        %2638 = sbr.rel (%p2636) target = $region40
      $region39: #{res_basic_block_preact.2} parent=31 // pred_region
        _
      $region40: #{res_basic_block_preact.2} parent=31 // pred_fallthru
        _
    $region32: #{res_basic_block_preact.2} parent=5 // pred_fallthru
      _
    %p2639 = scmp.le.s32.totalorder 2, %s11
    // Predicated region
    $region41: #{res_basic_block_preact.2} parent=5 // pred_check
      %p2640 = pneg %p2639
    $region42: #{res_basic_block_preact.2} parent=5 // pred_check_branch
      %2642 = sbr.rel (%p2640) target = $region44
    $region43: #{res_basic_block_preact.2} parent=5 // pred_region
      %s2643 = ssub.s32 %s11, 2
      // Predicated region
      $region45: #{res_basic_block_preact.2} parent=43 // pred_check
        %p2644 = pneg %p108
      $region46: #{res_basic_block_preact.2} parent=43 // pred_check_branch
        %2646 = sbr.rel (%p2644) target = $region48
      $region47: #{res_basic_block_preact.2} parent=43 // pred_region
        %p2647 = scmp.lt.s32.totalorder %s17, 1
        %s2648 = scalar_select %p2647, %s17, 1
        %s2649 = smul.addr %s2648, 32
        %s2650 = smul.addr %s2649, 8
        %s2651 = scalar_lea.vmem %s3, %s2650
      $region48: #{res_basic_block_preact.2} parent=43 // pred_fallthru
        _
      // Predicated region
      $region49: #{res_basic_block_preact.2} parent=43 // pred_check
        %p2652 = pneg %p134
      $region50: #{res_basic_block_preact.2} parent=43 // pred_check_branch
        %2654 = sbr.rel (%p2652) target = $region52
      $region51: #{res_basic_block_preact.2} parent=43 // pred_region
        %p2655 = scmp.lt.s32.totalorder %s17, 1
        %s2656 = scalar_select %p2655, %s17, 1
        %s2657 = smul.addr %s2656, 2
        %s2658 = scalar_lea.vmem %s4, %s2657
      $region52: #{res_basic_block_preact.2} parent=43 // pred_fallthru
        _
    $region44: #{res_basic_block_preact.2} parent=5 // pred_fallthru
      _
  $region6: #{res_basic_block_preact.2} parent=0 // loop_footer
    %s15 = sadd.s32 1, %s11
  $region7: #{res_basic_block_preact.2} parent=0 // loop_footer_branch
    %10 = sbr.rel target = $region3
  $region8: #{res_basic_block_preact.2} parent=0 // loop_exit
    _

// kernel: res_basic_block_preact.3
$region0: #{res_basic_block_preact.3}
  #allocation0 [shape = 'u32[]', space=smem, size = 0x4, offset = 0x4, fixed_abs, tag = 'smem constant byte address 0x4 - core index']
  #allocation1 [shape = 'u32[144,128]{1,0:T(1,128)}', space=vmem, size = 0x12000, scoped, tag = 'internal scratch']
  #allocation2 [shape = 'f32[1,18,18,128]{3,2,1,0:T(8,128)}', space=vmem, size = 0x36000, scoped, tag = 'scratch operand']
  %s0 = inlined_call_operand.vmem [shape: f32[2,16,16,128], index: 0, kind: input, shape index: {}]
  %s1 = inlined_call_operand.vmem [shape: f32[2,128], index: 1, kind: input, shape index: {}]
  %s2 = inlined_call_operand.vmem [shape: f32[1152,128], index: 2, kind: input, shape index: {}]
  %s3 = inlined_call_operand.vmem [shape: f32[2,16,16,128], index: 3, kind: input, shape index: {}]
  %s4 = inlined_call_operand.vmem [shape: f32[2,16,16,128], index: 4, kind: output, shape index: {}]
  %s5 = sld [smem:[#allocation0]]
  $region49: #{res_basic_block_preact.3} parent=0
    _
  %s7 = ssub.s32 1, %s5
  %s8 = scalar_select 0, %s7, %s5
  loop: start=0, step=1, limit=4
  $region2: #{res_basic_block_preact.3} parent=0 // loop_pre_header
    _
  $region3: #{res_basic_block_preact.3} parent=0 // loop_header
    %s10 = sphi 0, %s14
    %p11 = scmp.ge.s32.totalorder %s10, 4
    %s20 = sphi 0, %s22
    %s23 = sphi 0, %s20
    %s24 = sphi 0, %s23
    %s40 = sphi 0, %s24
    %s44 = sphi 0, %s44
    %s46 = sphi 0, %s44
    %s47 = sphi 0, %s46
    %s61 = sphi 0, %s47
    %s65 = sphi 0, %s65
    %s67 = sphi 0, %s65
    %s68 = sphi 0, %s67
    %s82 = sphi 0, %s68
    %s88 = sphi 0, %s90
    %s91 = sphi 0, %s88
    %s92 = sphi 0, %s91
    %s108 = sphi 0, %s92
    %s114 = sphi 0, %s116
    %s117 = sphi 0, %s114
    %s118 = sphi 0, %s117
    %s134 = sphi 0, %s118
  $region4: #{res_basic_block_preact.3} parent=0 // loop_header_branch
    %13 = sbr.rel (%p11) target = $region8
  $region5: #{res_basic_block_preact.3} parent=0 // loop_body
    %s15 = ssub.s32 %s10, 1
    %s16 = ssub.s32 %s10, 2
    %s17 = sadd.s32 %s10, 1
    %s18 = ssub.s32 %s10, %s17
    %p19 = scmp.eq.s32.totalorder %s18, 0
    %s21 = sadd.s32 %s20, 1
    %s22 = scalar_select %p19, %s20, %s21
    %p25 = pneg %p19
    %p26 = scmp.eq.s32.totalorder %s10, 1
    %p27 = por %p25, %p26
    %p28 = scmp.ne.s32.totalorder %s20, %s23
    %p29 = scmp.eq.s32.totalorder %s10, 0
    %p30 = por %p28, %p29
    %p31 = scmp.ne.s32.totalorder %s20, %s23
    %p32 = scmp.eq.s32.totalorder %s15, 1
    %p33 = por %p31, %p32
    %p34 = scmp.ne.s32.totalorder %s23, %s24
    %p35 = scmp.eq.s32.totalorder %s15, 0
    %p36 = por %p34, %p35
    %p37 = scmp.ne.s32.totalorder %s23, %s24
    %p38 = scmp.eq.s32.totalorder %s16, 1
    %p39 = por %p37, %p38
    %p41 = scmp.ne.s32.totalorder %s24, %s40
    %p42 = scmp.eq.s32.totalorder %s16, 0
    %p43 = por %p41, %p42
    %s45 = sadd.s32 %s44, 1
    %p48 = scmp.eq.s32.totalorder %s10, 1
    %p49 = scmp.ne.s32.totalorder %s44, %s46
    %p50 = scmp.eq.s32.totalorder %s10, 0
    %p51 = por %p49, %p50
    %p52 = scmp.ne.s32.totalorder %s44, %s46
    %p53 = scmp.eq.s32.totalorder %s15, 1
    %p54 = por %p52, %p53
    %p55 = scmp.ne.s32.totalorder %s46, %s47
    %p56 = scmp.eq.s32.totalorder %s15, 0
    %p57 = por %p55, %p56
    %p58 = scmp.ne.s32.totalorder %s46, %s47
    %p59 = scmp.eq.s32.totalorder %s16, 1
    %p60 = por %p58, %p59
    %p62 = scmp.ne.s32.totalorder %s47, %s61
    %p63 = scmp.eq.s32.totalorder %s16, 0
    %p64 = por %p62, %p63
    %s66 = sadd.s32 %s65, 1
    %p69 = scmp.eq.s32.totalorder %s10, 1
    %p70 = scmp.ne.s32.totalorder %s65, %s67
    %p71 = scmp.eq.s32.totalorder %s10, 0
    %p72 = por %p70, %p71
    %p73 = scmp.ne.s32.totalorder %s65, %s67
    %p74 = scmp.eq.s32.totalorder %s15, 1
    %p75 = por %p73, %p74
    %p76 = scmp.ne.s32.totalorder %s67, %s68
    %p77 = scmp.eq.s32.totalorder %s15, 0
    %p78 = por %p76, %p77
    %p79 = scmp.ne.s32.totalorder %s67, %s68
    %p80 = scmp.eq.s32.totalorder %s16, 1
    %p81 = por %p79, %p80
    %p83 = scmp.ne.s32.totalorder %s68, %s82
    %p84 = scmp.eq.s32.totalorder %s16, 0
    %p85 = por %p83, %p84
    %s86 = ssub.s32 %s10, %s17
    %p87 = scmp.eq.s32.totalorder %s86, 0
    %s89 = sadd.s32 %s88, 1
    %s90 = scalar_select %p87, %s88, %s89
    %p93 = pneg %p87
    %p94 = scmp.eq.s32.totalorder %s10, 1
    %p95 = por %p93, %p94
    %p96 = scmp.ne.s32.totalorder %s88, %s91
    %p97 = scmp.eq.s32.totalorder %s10, 0
    %p98 = por %p96, %p97
    %p99 = scmp.ne.s32.totalorder %s88, %s91
    %p100 = scmp.eq.s32.totalorder %s15, 1
    %p101 = por %p99, %p100
    %p102 = scmp.ne.s32.totalorder %s91, %s92
    %p103 = scmp.eq.s32.totalorder %s15, 0
    %p104 = por %p102, %p103
    %p105 = scmp.ne.s32.totalorder %s91, %s92
    %p106 = scmp.eq.s32.totalorder %s16, 1
    %p107 = por %p105, %p106
    %p109 = scmp.ne.s32.totalorder %s92, %s108
    %p110 = scmp.eq.s32.totalorder %s16, 0
    %p111 = por %p109, %p110
    %s112 = ssub.s32 %s10, %s17
    %p113 = scmp.eq.s32.totalorder %s112, 0
    %s115 = sadd.s32 %s114, 1
    %s116 = scalar_select %p113, %s114, %s115
    %p119 = pneg %p113
    %p120 = scmp.eq.s32.totalorder %s10, 1
    %p121 = por %p119, %p120
    %p122 = scmp.ne.s32.totalorder %s114, %s117
    %p123 = scmp.eq.s32.totalorder %s10, 0
    %p124 = por %p122, %p123
    %p125 = scmp.ne.s32.totalorder %s114, %s117
    %p126 = scmp.eq.s32.totalorder %s15, 1
    %p127 = por %p125, %p126
    %p128 = scmp.ne.s32.totalorder %s117, %s118
    %p129 = scmp.eq.s32.totalorder %s15, 0
    %p130 = por %p128, %p129
    %p131 = scmp.ne.s32.totalorder %s117, %s118
    %p132 = scmp.eq.s32.totalorder %s16, 1
    %p133 = por %p131, %p132
    %p135 = scmp.ne.s32.totalorder %s118, %s134
    %p136 = scmp.eq.s32.totalorder %s16, 0
    %p137 = por %p135, %p136
    %p138 = scmp.le.s32.totalorder 1, %s10
    %p139 = scmp.lt.s32.totalorder %s10, 3
    %p140 = pnand %p138, %p139
    %p141 = pneg %p140
    // Predicated region
    $region9: #{res_basic_block_preact.3} parent=5 // pred_check
      _
    $region10: #{res_basic_block_preact.3} parent=5 // pred_check_branch
      %143 = sbr.rel (%p140) target = $region12
    $region11: #{res_basic_block_preact.3} parent=5 // pred_region
      %s144 = ssub.s32 %s10, 1
      // Predicated region
      $region13: #{res_basic_block_preact.3} parent=11 // pred_check
        %p145 = pneg %p57
      $region14: #{res_basic_block_preact.3} parent=11 // pred_check_branch
        %147 = sbr.rel (%p145) target = $region16
      $region15: #{res_basic_block_preact.3} parent=11 // pred_region
        _
      $region16: #{res_basic_block_preact.3} parent=11 // pred_fallthru
        _
      // Predicated region
      $region17: #{res_basic_block_preact.3} parent=11 // pred_check
        %p148 = pneg %p78
      $region18: #{res_basic_block_preact.3} parent=11 // pred_check_branch
        %150 = sbr.rel (%p148) target = $region20
      $region19: #{res_basic_block_preact.3} parent=11 // pred_region
        _
      $region20: #{res_basic_block_preact.3} parent=11 // pred_fallthru
        _
    $region12: #{res_basic_block_preact.3} parent=5 // pred_fallthru
      _
    %p151 = scmp.lt.s32.totalorder %s10, 2
    // Predicated region
    $region21: #{res_basic_block_preact.3} parent=5 // pred_check
      %p152 = pneg %p151
    $region22: #{res_basic_block_preact.3} parent=5 // pred_check_branch
      %154 = sbr.rel (%p152) target = $region24
    $region23: #{res_basic_block_preact.3} parent=5 // pred_region
      // Predicated region
      $region25: #{res_basic_block_preact.3} parent=23 // pred_check
        %p155 = pneg %p30
      $region26: #{res_basic_block_preact.3} parent=23 // pred_check_branch
        %157 = sbr.rel (%p155) target = $region28
      $region27: #{res_basic_block_preact.3} parent=23 // pred_region
        %p158 = scmp.lt.s32.totalorder %s10, 1
        %s159 = scalar_select %p158, %s10, 1
        %s160 = smul.addr %s159, 32
        %s161 = smul.addr %s160, 8
        %s162 = scalar_lea.vmem %s0, %s161
      $region28: #{res_basic_block_preact.3} parent=23 // pred_fallthru
        _
      // Predicated region
      $region29: #{res_basic_block_preact.3} parent=23 // pred_check
        %p163 = pneg %p98
      $region30: #{res_basic_block_preact.3} parent=23 // pred_check_branch
        %165 = sbr.rel (%p163) target = $region32
      $region31: #{res_basic_block_preact.3} parent=23 // pred_region
        %p166 = scmp.lt.s32.totalorder %s10, 1
        %s167 = scalar_select %p166, %s10, 1
        %s168 = smul.addr %s167, 32
        %s169 = smul.addr %s168, 8
        %s170 = scalar_lea.vmem %s3, %s169
      $region32: #{res_basic_block_preact.3} parent=23 // pred_fallthru
        _
    $region24: #{res_basic_block_preact.3} parent=5 // pred_fallthru
      _
    %p171 = scmp.le.s32.totalorder 1, %s10
    %p172 = scmp.lt.s32.totalorder %s10, 3
    %p173 = pnand %p171, %p172
    %p174 = pneg %p173
    // Predicated region
    $region33: #{res_basic_block_preact.3} parent=5 // pred_check
      _
    $region34: #{res_basic_block_preact.3} parent=5 // pred_check_branch
      %176 = sbr.rel (%p173) target = $region36
    $region35: #{res_basic_block_preact.3} parent=5 // pred_region
      %s177 = ssub.s32 %s10, 1
      %p178 = scmp.lt.s32.totalorder %s15, 1
      %s179 = scalar_select %p178, %s15, 1
      %s180 = smul.addr %s179, 32
      %s181 = smul.addr %s180, 8
      %s182 = scalar_lea.vmem %s0, %s181
      %p183 = pneg %p36
      %p184 = pneg %p33
      %p185 = pneg %p57
      %p186 = pneg %p54
      %p187 = pneg %p78
      %p188 = pneg %p75
      %p189 = scmp.lt.s32.totalorder %s15, 1
      %s190 = scalar_select %p189, %s15, 1
      %s191 = smul.addr %s190, 32
      %s192 = smul.addr %s191, 8
      %s193 = scalar_lea.vmem %s3, %s192
      %p194 = pneg %p104
      %p195 = pneg %p101
      %p196 = pneg %p130
      %p197 = pneg %p127
      %p198 = scmp.lt.s32.totalorder %s15, 1
      %s199 = scalar_select %p198, %s15, 1
      %s200 = smul.addr %s199, 32
      %s201 = smul.addr %s200, 8
      %s202 = scalar_lea.vmem %s4, %s201
      %p203 = scmp.lt.s32.totalorder %s15, 1
      %s204 = scalar_select %p203, %s15, 1
      %s205 = smul.addr %s204, 32
      %s206 = smul.addr %s205, 8
      %s207 = scalar_lea.vmem %s0, %s206
      %p208 = scmp.lt.s32.totalorder %s15, 1
      %s209 = scalar_select %p208, %s15, 1
      %s210 = smul.addr %s209, 32
      %s211 = smul.addr %s210, 8
      %s212 = scalar_lea.vmem %s3, %s211
      %p213 = scmp.lt.s32.totalorder %s15, 1
      %s214 = scalar_select %p213, %s15, 1
      %s215 = smul.addr %s214, 32
      %s216 = smul.addr %s215, 8
      %s217 = scalar_lea.vmem %s4, %s216
      %v218 = vld [vmem:[%s1] sm:$0x1]
      %v219 = vld [vmem:[%s1 + $0x1] sm:$0x1]
      %v220 = vld [vmem:[%s207] sm:$0xff]
      %v221 = vld [vmem:[%s207 + $0x8] sm:$0xff]
      %v222 = vld [vmem:[%s207 + $0x10] sm:$0xff]
      %v223 = vld [vmem:[%s207 + $0x18] sm:$0xff]
      %v224 = vld [vmem:[%s207 + $0x20] sm:$0xff]
      %v225 = vld [vmem:[%s207 + $0x28] sm:$0xff]
      %v226 = vld [vmem:[%s207 + $0x30] sm:$0xff]
      %v227 = vld [vmem:[%s207 + $0x38] sm:$0xff]
      %v228 = vld [vmem:[%s207 + $0x40] sm:$0xff]
      %v229 = vld [vmem:[%s207 + $0x48] sm:$0xff]
      %v230 = vld [vmem:[%s207 + $0x50] sm:$0xff]
      %v231 = vld [vmem:[%s207 + $0x58] sm:$0xff]
      %v232 = vld [vmem:[%s207 + $0x60] sm:$0xff]
      %v233 = vld [vmem:[%s207 + $0x68] sm:$0xff]
      %v234 = vld [vmem:[%s207 + $0x70] sm:$0xff]
      %v235 = vld [vmem:[%s207 + $0x78] sm:$0xff]
      %v236 = vld [vmem:[%s207 + $0x80] sm:$0xff]
      %v237 = vld [vmem:[%s207 + $0x88] sm:$0xff]
      %v238 = vld [vmem:[%s207 + $0x90] sm:$0xff]
      %v239 = vld [vmem:[%s207 + $0x98] sm:$0xff]
      %v240 = vld [vmem:[%s207 + $0xa0] sm:$0xff]
      %v241 = vld [vmem:[%s207 + $0xa8] sm:$0xff]
      %v242 = vld [vmem:[%s207 + $0xb0] sm:$0xff]
      %v243 = vld [vmem:[%s207 + $0xb8] sm:$0xff]
      %v244 = vld [vmem:[%s207 + $0xc0] sm:$0xff]
      %v245 = vld [vmem:[%s207 + $0xc8] sm:$0xff]
      %v246 = vld [vmem:[%s207 + $0xd0] sm:$0xff]
      %v247 = vld [vmem:[%s207 + $0xd8] sm:$0xff]
      %v248 = vld [vmem:[%s207 + $0xe0] sm:$0xff]
      %v249 = vld [vmem:[%s207 + $0xe8] sm:$0xff]
      %v250 = vld [vmem:[%s207 + $0xf0] sm:$0xff]
      %v251 = vld [vmem:[%s207 + $0xf8] sm:$0xff]
      %v252 = vlaneseq
      %v253 = vshrl.u32 %v252, 7
      %v254 = vsub.s32 0, %v253
      %v255 = vrot.slane %v218, %v254
      %v256 = vsub.f32 %v220, %v255
      %v257 = vsub.f32 %v221, %v255
      %v258 = vsub.f32 %v222, %v255
      %v259 = vsub.f32 %v223, %v255
      %v260 = vsub.f32 %v224, %v255
      %v261 = vsub.f32 %v225, %v255
      %v262 = vsub.f32 %v226, %v255
      %v263 = vsub.f32 %v227, %v255
      %v264 = vsub.f32 %v228, %v255
      %v265 = vsub.f32 %v229, %v255
      %v266 = vsub.f32 %v230, %v255
      %v267 = vsub.f32 %v231, %v255
      %v268 = vsub.f32 %v232, %v255
      %v269 = vsub.f32 %v233, %v255
      %v270 = vsub.f32 %v234, %v255
      %v271 = vsub.f32 %v235, %v255
      %v272 = vsub.f32 %v236, %v255
      %v273 = vsub.f32 %v237, %v255
      %v274 = vsub.f32 %v238, %v255
      %v275 = vsub.f32 %v239, %v255
      %v276 = vsub.f32 %v240, %v255
      %v277 = vsub.f32 %v241, %v255
      %v278 = vsub.f32 %v242, %v255
      %v279 = vsub.f32 %v243, %v255
      %v280 = vsub.f32 %v244, %v255
      %v281 = vsub.f32 %v245, %v255
      %v282 = vsub.f32 %v246, %v255
      %v283 = vsub.f32 %v247, %v255
      %v284 = vsub.f32 %v248, %v255
      %v285 = vsub.f32 %v249, %v255
      %v286 = vsub.f32 %v250, %v255
      %v287 = vsub.f32 %v251, %v255
      %v288 = vlaneseq
      %v289 = vshrl.u32 %v288, 7
      %v290 = vsub.s32 0, %v289
      %v291 = vrot.slane %v219, %v290
      %v292 = vmul.f32 %v256, %v291
      %v293 = vmul.f32 %v257, %v291
      %v294 = vmul.f32 %v258, %v291
      %v295 = vmul.f32 %v259, %v291
      %v296 = vmul.f32 %v260, %v291
      %v297 = vmul.f32 %v261, %v291
      %v298 = vmul.f32 %v262, %v291
      %v299 = vmul.f32 %v263, %v291
      %v300 = vmul.f32 %v264, %v291
      %v301 = vmul.f32 %v265, %v291
      %v302 = vmul.f32 %v266, %v291
      %v303 = vmul.f32 %v267, %v291
      %v304 = vmul.f32 %v268, %v291
      %v305 = vmul.f32 %v269, %v291
      %v306 = vmul.f32 %v270, %v291
      %v307 = vmul.f32 %v271, %v291
      %v308 = vmul.f32 %v272, %v291
      %v309 = vmul.f32 %v273, %v291
      %v310 = vmul.f32 %v274, %v291
      %v311 = vmul.f32 %v275, %v291
      %v312 = vmul.f32 %v276, %v291
      %v313 = vmul.f32 %v277, %v291
      %v314 = vmul.f32 %v278, %v291
      %v315 = vmul.f32 %v279, %v291
      %v316 = vmul.f32 %v280, %v291
      %v317 = vmul.f32 %v281, %v291
      %v318 = vmul.f32 %v282, %v291
      %v319 = vmul.f32 %v283, %v291
      %v320 = vmul.f32 %v284, %v291
      %v321 = vmul.f32 %v285, %v291
      %v322 = vmul.f32 %v286, %v291
      %v323 = vmul.f32 %v287, %v291
      %v324 = vmax.f32 %v292, 0.0
      %v325 = vmax.f32 %v293, 0.0
      %v326 = vmax.f32 %v294, 0.0
      %v327 = vmax.f32 %v295, 0.0
      %v328 = vmax.f32 %v296, 0.0
      %v329 = vmax.f32 %v297, 0.0
      %v330 = vmax.f32 %v298, 0.0
      %v331 = vmax.f32 %v299, 0.0
      %v332 = vmax.f32 %v300, 0.0
      %v333 = vmax.f32 %v301, 0.0
      %v334 = vmax.f32 %v302, 0.0
      %v335 = vmax.f32 %v303, 0.0
      %v336 = vmax.f32 %v304, 0.0
      %v337 = vmax.f32 %v305, 0.0
      %v338 = vmax.f32 %v306, 0.0
      %v339 = vmax.f32 %v307, 0.0
      %v340 = vmax.f32 %v308, 0.0
      %v341 = vmax.f32 %v309, 0.0
      %v342 = vmax.f32 %v310, 0.0
      %v343 = vmax.f32 %v311, 0.0
      %v344 = vmax.f32 %v312, 0.0
      %v345 = vmax.f32 %v313, 0.0
      %v346 = vmax.f32 %v314, 0.0
      %v347 = vmax.f32 %v315, 0.0
      %v348 = vmax.f32 %v316, 0.0
      %v349 = vmax.f32 %v317, 0.0
      %v350 = vmax.f32 %v318, 0.0
      %v351 = vmax.f32 %v319, 0.0
      %v352 = vmax.f32 %v320, 0.0
      %v353 = vmax.f32 %v321, 0.0
      %v354 = vmax.f32 %v322, 0.0
      %v355 = vmax.f32 %v323, 0.0
      %356 = vst [vmem:[#allocation2] sm:$0xff] 0.0
      %357 = vst [vmem:[#allocation2 + $0x8] sm:$0xff] 0.0
      %358 = vst [vmem:[#allocation2 + $0x10] sm:$0x3] 0.0
      %s359 = scalar_lea.vmem [#allocation2], 408
      %360 = vst [vmem:[%s359] sm:$0xff] 0.0
      %361 = vst [vmem:[%s359 + $0x8] sm:$0xff] 0.0
      %362 = vst [vmem:[%s359 + $0x10] sm:$0x3] 0.0
      %363 = vst [vmem:[#allocation2] sm:$0x1] 0.0
      %364 = vst [vmem:[#allocation2 + $0x18] sm:$0x1] 0.0
      %365 = vst [vmem:[#allocation2 + $0x30] sm:$0x1] 0.0
      %366 = vst [vmem:[#allocation2 + $0x48] sm:$0x1] 0.0
      %367 = vst [vmem:[#allocation2 + $0x60] sm:$0x1] 0.0
      %368 = vst [vmem:[#allocation2 + $0x78] sm:$0x1] 0.0
      %369 = vst [vmem:[#allocation2 + $0x90] sm:$0x1] 0.0
      %370 = vst [vmem:[#allocation2 + $0xa8] sm:$0x1] 0.0
      %371 = vst [vmem:[#allocation2 + $0xc0] sm:$0x1] 0.0
      %372 = vst [vmem:[#allocation2 + $0xd8] sm:$0x1] 0.0
      %373 = vst [vmem:[#allocation2 + $0xf0] sm:$0x1] 0.0
      %374 = vst [vmem:[#allocation2 + $0x108] sm:$0x1] 0.0
      %375 = vst [vmem:[#allocation2 + $0x120] sm:$0x1] 0.0
      %376 = vst [vmem:[#allocation2 + $0x138] sm:$0x1] 0.0
      %377 = vst [vmem:[#allocation2 + $0x150] sm:$0x1] 0.0
      %378 = vst [vmem:[#allocation2 + $0x168] sm:$0x1] 0.0
      %379 = vst [vmem:[#allocation2 + $0x180] sm:$0x1] 0.0
      %380 = vst [vmem:[#allocation2 + $0x198] sm:$0x1] 0.0
      %381 = vst [vmem:[#allocation2 + $0x11] sm:$0x1] 0.0
      %382 = vst [vmem:[#allocation2 + $0x29] sm:$0x1] 0.0
      %383 = vst [vmem:[#allocation2 + $0x41] sm:$0x1] 0.0
      %384 = vst [vmem:[#allocation2 + $0x59] sm:$0x1] 0.0
      %385 = vst [vmem:[#allocation2 + $0x71] sm:$0x1] 0.0
      %386 = vst [vmem:[#allocation2 + $0x89] sm:$0x1] 0.0
      %387 = vst [vmem:[#allocation2 + $0xa1] sm:$0x1] 0.0
      %388 = vst [vmem:[#allocation2 + $0xb9] sm:$0x1] 0.0
      %389 = vst [vmem:[#allocation2 + $0xd1] sm:$0x1] 0.0
      %390 = vst [vmem:[#allocation2 + $0xe9] sm:$0x1] 0.0
      %391 = vst [vmem:[#allocation2 + $0x101] sm:$0x1] 0.0
      %392 = vst [vmem:[#allocation2 + $0x119] sm:$0x1] 0.0
      %393 = vst [vmem:[#allocation2 + $0x131] sm:$0x1] 0.0
      %394 = vst [vmem:[#allocation2 + $0x149] sm:$0x1] 0.0
      %395 = vst [vmem:[#allocation2 + $0x161] sm:$0x1] 0.0
      %396 = vst [vmem:[#allocation2 + $0x179] sm:$0x1] 0.0
      %397 = vst [vmem:[#allocation2 + $0x191] sm:$0x1] 0.0
      %398 = vst [vmem:[#allocation2 + $0x1a9] sm:$0x1] 0.0
      %s399 = scalar_lea.vmem [#allocation2], 24
      %400 = vst [vmem:[%s399 + $0x1] sm:$0xff] %v324
      %401 = vst [vmem:[%s399 + $0x9] sm:$0xff] %v325
      %402 = vst [vmem:[%s399 + $0x19] sm:$0xff] %v326
      %403 = vst [vmem:[%s399 + $0x21] sm:$0xff] %v327
      %404 = vst [vmem:[%s399 + $0x31] sm:$0xff] %v328
      %405 = vst [vmem:[%s399 + $0x39] sm:$0xff] %v329
      %406 = vst [vmem:[%s399 + $0x49] sm:$0xff] %v330
      %407 = vst [vmem:[%s399 + $0x51] sm:$0xff] %v331
      %408 = vst [vmem:[%s399 + $0x61] sm:$0xff] %v332
      %409 = vst [vmem:[%s399 + $0x69] sm:$0xff] %v333
      %410 = vst [vmem:[%s399 + $0x79] sm:$0xff] %v334
      %411 = vst [vmem:[%s399 + $0x81] sm:$0xff] %v335
      %412 = vst [vmem:[%s399 + $0x91] sm:$0xff] %v336
      %413 = vst [vmem:[%s399 + $0x99] sm:$0xff] %v337
      %414 = vst [vmem:[%s399 + $0xa9] sm:$0xff] %v338
      %415 = vst [vmem:[%s399 + $0xb1] sm:$0xff] %v339
      %416 = vst [vmem:[%s399 + $0xc1] sm:$0xff] %v340
      %417 = vst [vmem:[%s399 + $0xc9] sm:$0xff] %v341
      %418 = vst [vmem:[%s399 + $0xd9] sm:$0xff] %v342
      %419 = vst [vmem:[%s399 + $0xe1] sm:$0xff] %v343
      %420 = vst [vmem:[%s399 + $0xf1] sm:$0xff] %v344
      %421 = vst [vmem:[%s399 + $0xf9] sm:$0xff] %v345
      %422 = vst [vmem:[%s399 + $0x109] sm:$0xff] %v346
      %423 = vst [vmem:[%s399 + $0x111] sm:$0xff] %v347
      %424 = vst [vmem:[%s399 + $0x121] sm:$0xff] %v348
      %425 = vst [vmem:[%s399 + $0x129] sm:$0xff] %v349
      %426 = vst [vmem:[%s399 + $0x139] sm:$0xff] %v350
      %427 = vst [vmem:[%s399 + $0x141] sm:$0xff] %v351
      %428 = vst [vmem:[%s399 + $0x151] sm:$0xff] %v352
      %429 = vst [vmem:[%s399 + $0x159] sm:$0xff] %v353
      %430 = vst [vmem:[%s399 + $0x169] sm:$0xff] %v354
      %431 = vst [vmem:[%s399 + $0x171] sm:$0xff] %v355
      %s432 = smul.u32 0, 24
      %s433 = scalar_lea.vmem [#allocation2], %s432
      %v434 = vld [vmem:[%s433] sm:$0xff]
      %v435 = vld [vmem:[%s433 + $0x8] sm:$0xff]
      %v436 = vld [vmem:[%s433 + $0x18] sm:$0xff]
      %v437 = vld [vmem:[%s433 + $0x20] sm:$0xff]
      %v438 = vld [vmem:[%s433 + $0x30] sm:$0xff]
      %v439 = vld [vmem:[%s433 + $0x38] sm:$0xff]
      %v440 = vld [vmem:[%s433 + $0x48] sm:$0xff]
      %v441 = vld [vmem:[%s433 + $0x50] sm:$0xff]
      %v442 = vld [vmem:[%s433 + $0x60] sm:$0xff]
      %v443 = vld [vmem:[%s433 + $0x68] sm:$0xff]
      %v444 = vld [vmem:[%s433 + $0x78] sm:$0xff]
      %v445 = vld [vmem:[%s433 + $0x80] sm:$0xff]
      %v446 = vld [vmem:[%s433 + $0x90] sm:$0xff]
      %v447 = vld [vmem:[%s433 + $0x98] sm:$0xff]
      %v448 = vld [vmem:[%s433 + $0xa8] sm:$0xff]
      %v449 = vld [vmem:[%s433 + $0xb0] sm:$0xff]
      %v450 = vld [vmem:[%s433 + $0x1] sm:$0xff]
      %v451 = vld [vmem:[%s433 + $0x9] sm:$0xff]
      %v452 = vld [vmem:[%s433 + $0x19] sm:$0xff]
      %v453 = vld [vmem:[%s433 + $0x21] sm:$0xff]
      %v454 = vld [vmem:[%s433 + $0x31] sm:$0xff]
      %v455 = vld [vmem:[%s433 + $0x39] sm:$0xff]
      %v456 = vld [vmem:[%s433 + $0x49] sm:$0xff]
      %v457 = vld [vmem:[%s433 + $0x51] sm:$0xff]
      %v458 = vld [vmem:[%s433 + $0x61] sm:$0xff]
      %v459 = vld [vmem:[%s433 + $0x69] sm:$0xff]
      %v460 = vld [vmem:[%s433 + $0x79] sm:$0xff]
      %v461 = vld [vmem:[%s433 + $0x81] sm:$0xff]
      %v462 = vld [vmem:[%s433 + $0x91] sm:$0xff]
      %v463 = vld [vmem:[%s433 + $0x99] sm:$0xff]
      %v464 = vld [vmem:[%s433 + $0xa9] sm:$0xff]
      %v465 = vld [vmem:[%s433 + $0xb1] sm:$0xff]
      %v466 = vld [vmem:[%s433 + $0x2] sm:$0xff]
      %v467 = vld [vmem:[%s433 + $0xa] sm:$0xff]
      %v468 = vld [vmem:[%s433 + $0x1a] sm:$0xff]
      %v469 = vld [vmem:[%s433 + $0x22] sm:$0xff]
      %v470 = vld [vmem:[%s433 + $0x32] sm:$0xff]
      %v471 = vld [vmem:[%s433 + $0x3a] sm:$0xff]
      %v472 = vld [vmem:[%s433 + $0x4a] sm:$0xff]
      %v473 = vld [vmem:[%s433 + $0x52] sm:$0xff]
      %v474 = vld [vmem:[%s433 + $0x62] sm:$0xff]
      %v475 = vld [vmem:[%s433 + $0x6a] sm:$0xff]
      %v476 = vld [vmem:[%s433 + $0x7a] sm:$0xff]
      %v477 = vld [vmem:[%s433 + $0x82] sm:$0xff]
      %v478 = vld [vmem:[%s433 + $0x92] sm:$0xff]
      %v479 = vld [vmem:[%s433 + $0x9a] sm:$0xff]
      %v480 = vld [vmem:[%s433 + $0xaa] sm:$0xff]
      %v481 = vld [vmem:[%s433 + $0xb2] sm:$0xff]
      %s482 = sadd.s32 0, 1
      %s483 = smul.u32 %s482, 24
      %s484 = scalar_lea.vmem [#allocation2], %s483
      %v485 = vld [vmem:[%s484] sm:$0xff]
      %v486 = vld [vmem:[%s484 + $0x8] sm:$0xff]
      %v487 = vld [vmem:[%s484 + $0x18] sm:$0xff]
      %v488 = vld [vmem:[%s484 + $0x20] sm:$0xff]
      %v489 = vld [vmem:[%s484 + $0x30] sm:$0xff]
      %v490 = vld [vmem:[%s484 + $0x38] sm:$0xff]
      %v491 = vld [vmem:[%s484 + $0x48] sm:$0xff]
      %v492 = vld [vmem:[%s484 + $0x50] sm:$0xff]
      %v493 = vld [vmem:[%s484 + $0x60] sm:$0xff]
      %v494 = vld [vmem:[%s484 + $0x68] sm:$0xff]
      %v495 = vld [vmem:[%s484 + $0x78] sm:$0xff]
      %v496 = vld [vmem:[%s484 + $0x80] sm:$0xff]
      %v497 = vld [vmem:[%s484 + $0x90] sm:$0xff]
      %v498 = vld [vmem:[%s484 + $0x98] sm:$0xff]
      %v499 = vld [vmem:[%s484 + $0xa8] sm:$0xff]
      %v500 = vld [vmem:[%s484 + $0xb0] sm:$0xff]
      %v501 = vld [vmem:[%s484 + $0x1] sm:$0xff]
      %v502 = vld [vmem:[%s484 + $0x9] sm:$0xff]
      %v503 = vld [vmem:[%s484 + $0x19] sm:$0xff]
      %v504 = vld [vmem:[%s484 + $0x21] sm:$0xff]
      %v505 = vld [vmem:[%s484 + $0x31] sm:$0xff]
      %v506 = vld [vmem:[%s484 + $0x39] sm:$0xff]
      %v507 = vld [vmem:[%s484 + $0x49] sm:$0xff]
      %v508 = vld [vmem:[%s484 + $0x51] sm:$0xff]
      %v509 = vld [vmem:[%s484 + $0x61] sm:$0xff]
      %v510 = vld [vmem:[%s484 + $0x69] sm:$0xff]
      %v511 = vld [vmem:[%s484 + $0x79] sm:$0xff]
      %v512 = vld [vmem:[%s484 + $0x81] sm:$0xff]
      %v513 = vld [vmem:[%s484 + $0x91] sm:$0xff]
      %v514 = vld [vmem:[%s484 + $0x99] sm:$0xff]
      %v515 = vld [vmem:[%s484 + $0xa9] sm:$0xff]
      %v516 = vld [vmem:[%s484 + $0xb1] sm:$0xff]
      %v517 = vld [vmem:[%s484 + $0x2] sm:$0xff]
      %v518 = vld [vmem:[%s484 + $0xa] sm:$0xff]
      %v519 = vld [vmem:[%s484 + $0x1a] sm:$0xff]
      %v520 = vld [vmem:[%s484 + $0x22] sm:$0xff]
      %v521 = vld [vmem:[%s484 + $0x32] sm:$0xff]
      %v522 = vld [vmem:[%s484 + $0x3a] sm:$0xff]
      %v523 = vld [vmem:[%s484 + $0x4a] sm:$0xff]
      %v524 = vld [vmem:[%s484 + $0x52] sm:$0xff]
      %v525 = vld [vmem:[%s484 + $0x62] sm:$0xff]
      %v526 = vld [vmem:[%s484 + $0x6a] sm:$0xff]
      %v527 = vld [vmem:[%s484 + $0x7a] sm:$0xff]
      %v528 = vld [vmem:[%s484 + $0x82] sm:$0xff]
      %v529 = vld [vmem:[%s484 + $0x92] sm:$0xff]
      %v530 = vld [vmem:[%s484 + $0x9a] sm:$0xff]
      %v531 = vld [vmem:[%s484 + $0xaa] sm:$0xff]
      %v532 = vld [vmem:[%s484 + $0xb2] sm:$0xff]
      %s533 = sadd.s32 0, 2
      %s534 = smul.u32 %s533, 24
      %s535 = scalar_lea.vmem [#allocation2], %s534
      %v536 = vld [vmem:[%s535] sm:$0xff]
      %v537 = vld [vmem:[%s535 + $0x8] sm:$0xff]
      %v538 = vld [vmem:[%s535 + $0x18] sm:$0xff]
      %v539 = vld [vmem:[%s535 + $0x20] sm:$0xff]
      %v540 = vld [vmem:[%s535 + $0x30] sm:$0xff]
      %v541 = vld [vmem:[%s535 + $0x38] sm:$0xff]
      %v542 = vld [vmem:[%s535 + $0x48] sm:$0xff]
      %v543 = vld [vmem:[%s535 + $0x50] sm:$0xff]
      %v544 = vld [vmem:[%s535 + $0x60] sm:$0xff]
      %v545 = vld [vmem:[%s535 + $0x68] sm:$0xff]
      %v546 = vld [vmem:[%s535 + $0x78] sm:$0xff]
      %v547 = vld [vmem:[%s535 + $0x80] sm:$0xff]
      %v548 = vld [vmem:[%s535 + $0x90] sm:$0xff]
      %v549 = vld [vmem:[%s535 + $0x98] sm:$0xff]
      %v550 = vld [vmem:[%s535 + $0xa8] sm:$0xff]
      %v551 = vld [vmem:[%s535 + $0xb0] sm:$0xff]
      %v552 = vld [vmem:[%s535 + $0x1] sm:$0xff]
      %v553 = vld [vmem:[%s535 + $0x9] sm:$0xff]
      %v554 = vld [vmem:[%s535 + $0x19] sm:$0xff]
      %v555 = vld [vmem:[%s535 + $0x21] sm:$0xff]
      %v556 = vld [vmem:[%s535 + $0x31] sm:$0xff]
      %v557 = vld [vmem:[%s535 + $0x39] sm:$0xff]
      %v558 = vld [vmem:[%s535 + $0x49] sm:$0xff]
      %v559 = vld [vmem:[%s535 + $0x51] sm:$0xff]
      %v560 = vld [vmem:[%s535 + $0x61] sm:$0xff]
      %v561 = vld [vmem:[%s535 + $0x69] sm:$0xff]
      %v562 = vld [vmem:[%s535 + $0x79] sm:$0xff]
      %v563 = vld [vmem:[%s535 + $0x81] sm:$0xff]
      %v564 = vld [vmem:[%s535 + $0x91] sm:$0xff]
      %v565 = vld [vmem:[%s535 + $0x99] sm:$0xff]
      %v566 = vld [vmem:[%s535 + $0xa9] sm:$0xff]
      %v567 = vld [vmem:[%s535 + $0xb1] sm:$0xff]
      %v568 = vld [vmem:[%s535 + $0x2] sm:$0xff]
      %v569 = vld [vmem:[%s535 + $0xa] sm:$0xff]
      %v570 = vld [vmem:[%s535 + $0x1a] sm:$0xff]
      %v571 = vld [vmem:[%s535 + $0x22] sm:$0xff]
      %v572 = vld [vmem:[%s535 + $0x32] sm:$0xff]
      %v573 = vld [vmem:[%s535 + $0x3a] sm:$0xff]
      %v574 = vld [vmem:[%s535 + $0x4a] sm:$0xff]
      %v575 = vld [vmem:[%s535 + $0x52] sm:$0xff]
      %v576 = vld [vmem:[%s535 + $0x62] sm:$0xff]
      %v577 = vld [vmem:[%s535 + $0x6a] sm:$0xff]
      %v578 = vld [vmem:[%s535 + $0x7a] sm:$0xff]
      %v579 = vld [vmem:[%s535 + $0x82] sm:$0xff]
      %v580 = vld [vmem:[%s535 + $0x92] sm:$0xff]
      %v581 = vld [vmem:[%s535 + $0x9a] sm:$0xff]
      %v582 = vld [vmem:[%s535 + $0xaa] sm:$0xff]
      %v583 = vld [vmem:[%s535 + $0xb2] sm:$0xff]
      %v584 = vld [vmem:[%s2] sm:$0xff]
      %v585 = vld [vmem:[%s2 + $0x8] sm:$0xff]
      %v586 = vld [vmem:[%s2 + $0x10] sm:$0xff]
      %v587 = vld [vmem:[%s2 + $0x18] sm:$0xff]
      %v588 = vld [vmem:[%s2 + $0x20] sm:$0xff]
      %v589 = vld [vmem:[%s2 + $0x28] sm:$0xff]
      %v590 = vld [vmem:[%s2 + $0x30] sm:$0xff]
      %v591 = vld [vmem:[%s2 + $0x38] sm:$0xff]
      %v592 = vld [vmem:[%s2 + $0x40] sm:$0xff]
      %v593 = vld [vmem:[%s2 + $0x48] sm:$0xff]
      %v594 = vld [vmem:[%s2 + $0x50] sm:$0xff]
      %v595 = vld [vmem:[%s2 + $0x58] sm:$0xff]
      %v596 = vld [vmem:[%s2 + $0x60] sm:$0xff]
      %v597 = vld [vmem:[%s2 + $0x68] sm:$0xff]
      %v598 = vld [vmem:[%s2 + $0x70] sm:$0xff]
      %v599 = vld [vmem:[%s2 + $0x78] sm:$0xff]
      %v600 = vld [vmem:[%s2 + $0x80] sm:$0xff]
      %v601 = vld [vmem:[%s2 + $0x88] sm:$0xff]
      %v602 = vld [vmem:[%s2 + $0x90] sm:$0xff]
      %v603 = vld [vmem:[%s2 + $0x98] sm:$0xff]
      %v604 = vld [vmem:[%s2 + $0xa0] sm:$0xff]
      %v605 = vld [vmem:[%s2 + $0xa8] sm:$0xff]
      %v606 = vld [vmem:[%s2 + $0xb0] sm:$0xff]
      %v607 = vld [vmem:[%s2 + $0xb8] sm:$0xff]
      %v608 = vld [vmem:[%s2 + $0xc0] sm:$0xff]
      %v609 = vld [vmem:[%s2 + $0xc8] sm:$0xff]
      %v610 = vld [vmem:[%s2 + $0xd0] sm:$0xff]
      %v611 = vld [vmem:[%s2 + $0xd8] sm:$0xff]
      %v612 = vld [vmem:[%s2 + $0xe0] sm:$0xff]
      %v613 = vld [vmem:[%s2 + $0xe8] sm:$0xff]
      %v614 = vld [vmem:[%s2 + $0xf0] sm:$0xff]
      %v615 = vld [vmem:[%s2 + $0xf8] sm:$0xff]
      %v616 = vld [vmem:[%s2 + $0x100] sm:$0xff]
      %v617 = vld [vmem:[%s2 + $0x108] sm:$0xff]
      %v618 = vld [vmem:[%s2 + $0x110] sm:$0xff]
      %v619 = vld [vmem:[%s2 + $0x118] sm:$0xff]
      %v620 = vld [vmem:[%s2 + $0x120] sm:$0xff]
      %v621 = vld [vmem:[%s2 + $0x128] sm:$0xff]
      %v622 = vld [vmem:[%s2 + $0x130] sm:$0xff]
      %v623 = vld [vmem:[%s2 + $0x138] sm:$0xff]
      %v624 = vld [vmem:[%s2 + $0x140] sm:$0xff]
      %v625 = vld [vmem:[%s2 + $0x148] sm:$0xff]
      %v626 = vld [vmem:[%s2 + $0x150] sm:$0xff]
      %v627 = vld [vmem:[%s2 + $0x158] sm:$0xff]
      %v628 = vld [vmem:[%s2 + $0x160] sm:$0xff]
      %v629 = vld [vmem:[%s2 + $0x168] sm:$0xff]
      %v630 = vld [vmem:[%s2 + $0x170] sm:$0xff]
      %v631 = vld [vmem:[%s2 + $0x178] sm:$0xff]
      %v632 = vld [vmem:[%s2 + $0x180] sm:$0xff]
      %v633 = vld [vmem:[%s2 + $0x188] sm:$0xff]
      %v634 = vld [vmem:[%s2 + $0x190] sm:$0xff]
      %v635 = vld [vmem:[%s2 + $0x198] sm:$0xff]
      %v636 = vld [vmem:[%s2 + $0x1a0] sm:$0xff]
      %v637 = vld [vmem:[%s2 + $0x1a8] sm:$0xff]
      %v638 = vld [vmem:[%s2 + $0x1b0] sm:$0xff]
      %v639 = vld [vmem:[%s2 + $0x1b8] sm:$0xff]
      %v640 = vld [vmem:[%s2 + $0x1c0] sm:$0xff]
      %v641 = vld [vmem:[%s2 + $0x1c8] sm:$0xff]
      %v642 = vld [vmem:[%s2 + $0x1d0] sm:$0xff]
      %v643 = vld [vmem:[%s2 + $0x1d8] sm:$0xff]
      %v644 = vld [vmem:[%s2 + $0x1e0] sm:$0xff]
      %v645 = vld [vmem:[%s2 + $0x1e8] sm:$0xff]
      %v646 = vld [vmem:[%s2 + $0x1f0] sm:$0xff]
      %v647 = vld [vmem:[%s2 + $0x1f8] sm:$0xff]
      %v648 = vld [vmem:[%s2 + $0x200] sm:$0xff]
      %v649 = vld [vmem:[%s2 + $0x208] sm:$0xff]
      %v650 = vld [vmem:[%s2 + $0x210] sm:$0xff]
      %v651 = vld [vmem:[%s2 + $0x218] sm:$0xff]
      %v652 = vld [vmem:[%s2 + $0x220] sm:$0xff]
      %v653 = vld [vmem:[%s2 + $0x228] sm:$0xff]
      %v654 = vld [vmem:[%s2 + $0x230] sm:$0xff]
      %v655 = vld [vmem:[%s2 + $0x238] sm:$0xff]
      %v656 = vld [vmem:[%s2 + $0x240] sm:$0xff]
      %v657 = vld [vmem:[%s2 + $0x248] sm:$0xff]
      %v658 = vld [vmem:[%s2 + $0x250] sm:$0xff]
      %v659 = vld [vmem:[%s2 + $0x258] sm:$0xff]
      %v660 = vld [vmem:[%s2 + $0x260] sm:$0xff]
      %v661 = vld [vmem:[%s2 + $0x268] sm:$0xff]
      %v662 = vld [vmem:[%s2 + $0x270] sm:$0xff]
      %v663 = vld [vmem:[%s2 + $0x278] sm:$0xff]
      %v664 = vld [vmem:[%s2 + $0x280] sm:$0xff]
      %v665 = vld [vmem:[%s2 + $0x288] sm:$0xff]
      %v666 = vld [vmem:[%s2 + $0x290] sm:$0xff]
      %v667 = vld [vmem:[%s2 + $0x298] sm:$0xff]
      %v668 = vld [vmem:[%s2 + $0x2a0] sm:$0xff]
      %v669 = vld [vmem:[%s2 + $0x2a8] sm:$0xff]
      %v670 = vld [vmem:[%s2 + $0x2b0] sm:$0xff]
      %v671 = vld [vmem:[%s2 + $0x2b8] sm:$0xff]
      %v672 = vld [vmem:[%s2 + $0x2c0] sm:$0xff]
      %v673 = vld [vmem:[%s2 + $0x2c8] sm:$0xff]
      %v674 = vld [vmem:[%s2 + $0x2d0] sm:$0xff]
      %v675 = vld [vmem:[%s2 + $0x2d8] sm:$0xff]
      %v676 = vld [vmem:[%s2 + $0x2e0] sm:$0xff]
      %v677 = vld [vmem:[%s2 + $0x2e8] sm:$0xff]
      %v678 = vld [vmem:[%s2 + $0x2f0] sm:$0xff]
      %v679 = vld [vmem:[%s2 + $0x2f8] sm:$0xff]
      %v680 = vld [vmem:[%s2 + $0x300] sm:$0xff]
      %v681 = vld [vmem:[%s2 + $0x308] sm:$0xff]
      %v682 = vld [vmem:[%s2 + $0x310] sm:$0xff]
      %v683 = vld [vmem:[%s2 + $0x318] sm:$0xff]
      %v684 = vld [vmem:[%s2 + $0x320] sm:$0xff]
      %v685 = vld [vmem:[%s2 + $0x328] sm:$0xff]
      %v686 = vld [vmem:[%s2 + $0x330] sm:$0xff]
      %v687 = vld [vmem:[%s2 + $0x338] sm:$0xff]
      %v688 = vld [vmem:[%s2 + $0x340] sm:$0xff]
      %v689 = vld [vmem:[%s2 + $0x348] sm:$0xff]
      %v690 = vld [vmem:[%s2 + $0x350] sm:$0xff]
      %v691 = vld [vmem:[%s2 + $0x358] sm:$0xff]
      %v692 = vld [vmem:[%s2 + $0x360] sm:$0xff]
      %v693 = vld [vmem:[%s2 + $0x368] sm:$0xff]
      %v694 = vld [vmem:[%s2 + $0x370] sm:$0xff]
      %v695 = vld [vmem:[%s2 + $0x378] sm:$0xff]
      %v696 = vld [vmem:[%s2 + $0x380] sm:$0xff]
      %v697 = vld [vmem:[%s2 + $0x388] sm:$0xff]
      %v698 = vld [vmem:[%s2 + $0x390] sm:$0xff]
      %v699 = vld [vmem:[%s2 + $0x398] sm:$0xff]
      %v700 = vld [vmem:[%s2 + $0x3a0] sm:$0xff]
      %v701 = vld [vmem:[%s2 + $0x3a8] sm:$0xff]
      %v702 = vld [vmem:[%s2 + $0x3b0] sm:$0xff]
      %v703 = vld [vmem:[%s2 + $0x3b8] sm:$0xff]
      %v704 = vld [vmem:[%s2 + $0x3c0] sm:$0xff]
      %v705 = vld [vmem:[%s2 + $0x3c8] sm:$0xff]
      %v706 = vld [vmem:[%s2 + $0x3d0] sm:$0xff]
      %v707 = vld [vmem:[%s2 + $0x3d8] sm:$0xff]
      %v708 = vld [vmem:[%s2 + $0x3e0] sm:$0xff]
      %v709 = vld [vmem:[%s2 + $0x3e8] sm:$0xff]
      %v710 = vld [vmem:[%s2 + $0x3f0] sm:$0xff]
      %v711 = vld [vmem:[%s2 + $0x3f8] sm:$0xff]
      %v712 = vld [vmem:[%s2 + $0x400] sm:$0xff]
      %v713 = vld [vmem:[%s2 + $0x408] sm:$0xff]
      %v714 = vld [vmem:[%s2 + $0x410] sm:$0xff]
      %v715 = vld [vmem:[%s2 + $0x418] sm:$0xff]
      %v716 = vld [vmem:[%s2 + $0x420] sm:$0xff]
      %v717 = vld [vmem:[%s2 + $0x428] sm:$0xff]
      %v718 = vld [vmem:[%s2 + $0x430] sm:$0xff]
      %v719 = vld [vmem:[%s2 + $0x438] sm:$0xff]
      %v720 = vld [vmem:[%s2 + $0x440] sm:$0xff]
      %v721 = vld [vmem:[%s2 + $0x448] sm:$0xff]
      %v722 = vld [vmem:[%s2 + $0x450] sm:$0xff]
      %v723 = vld [vmem:[%s2 + $0x458] sm:$0xff]
      %v724 = vld [vmem:[%s2 + $0x460] sm:$0xff]
      %v725 = vld [vmem:[%s2 + $0x468] sm:$0xff]
      %v726 = vld [vmem:[%s2 + $0x470] sm:$0xff]
      %v727 = vld [vmem:[%s2 + $0x478] sm:$0xff]
      %728 = vmatprep.subr.mxu0 0.0
      %729 = vmatpush1.msra.mxu0 %v599
      %730 = vmatprep.subr.mxu0 0.0
      %731 = vmatpush1.msra.mxu0 %v598
      %732 = vmatprep.subr.mxu0 0.0
      %733 = vmatpush1.msra.mxu0 %v597
      %734 = vmatprep.subr.mxu0 0.0
      %735 = vmatpush1.msra.mxu0 %v596
      %736 = vmatprep.subr.mxu0 0.0
      %737 = vmatpush1.msra.mxu0 %v595
      %738 = vmatprep.subr.mxu0 0.0
      %739 = vmatpush1.msra.mxu0 %v594
      %740 = vmatprep.subr.mxu0 0.0
      %741 = vmatpush1.msra.mxu0 %v593
      %742 = vmatprep.subr.mxu0 0.0
      %743 = vmatpush1.msra.mxu0 %v592
      %744 = vmatprep.subr.mxu0 0.0
      %745 = vmatpush1.msra.mxu0 %v591
      %746 = vmatprep.subr.mxu0 0.0
      %747 = vmatpush1.msra.mxu0 %v590
      %748 = vmatprep.subr.mxu0 0.0
      %749 = vmatpush1.msra.mxu0 %v589
      %750 = vmatprep.subr.mxu0 0.0
      %751 = vmatpush1.msra.mxu0 %v588
      %752 = vmatprep.subr.mxu0 0.0
      %753 = vmatpush1.msra.mxu0 %v587
      %754 = vmatprep.subr.mxu0 0.0
      %755 = vmatpush1.msra.mxu0 %v586
      %756 = vmatprep.subr.mxu0 0.0
      %757 = vmatpush1.msra.mxu0 %v585
      %758 = vmatprep.subr.mxu0 0.0
      %759 = vmatpush1.msra.mxu0 %v584
      %760 = vmatprep.subr.mxu0 0.0
      %761 = vmatpush2.msra.mxu0 %v615
      %762 = vmatprep.subr.mxu0 0.0
      %763 = vmatpush2.msra.mxu0 %v614
      %764 = vmatprep.subr.mxu0 0.0
      %765 = vmatpush2.msra.mxu0 %v613
      %766 = vmatprep.subr.mxu0 0.0
      %767 = vmatpush2.msra.mxu0 %v612
      %768 = vmatprep.subr.mxu0 0.0
      %769 = vmatpush2.msra.mxu0 %v611
      %770 = vmatprep.subr.mxu0 0.0
      %771 = vmatpush2.msra.mxu0 %v610
      %772 = vmatprep.subr.mxu0 0.0
      %773 = vmatpush2.msra.mxu0 %v609
      %774 = vmatprep.subr.mxu0 0.0
      %775 = vmatpush2.msra.mxu0 %v608
      %776 = vmatprep.subr.mxu0 0.0
      %777 = vmatpush2.msra.mxu0 %v607
      %778 = vmatprep.subr.mxu0 0.0
      %779 = vmatpush2.msra.mxu0 %v606
      %780 = vmatprep.subr.mxu0 0.0
      %781 = vmatpush2.msra.mxu0 %v605
      %782 = vmatprep.subr.mxu0 0.0
      %783 = vmatpush2.msra.mxu0 %v604
      %784 = vmatprep.subr.mxu0 0.0
      %785 = vmatpush2.msra.mxu0 %v603
      %786 = vmatprep.subr.mxu0 0.0
      %787 = vmatpush2.msra.mxu0 %v602
      %788 = vmatprep.subr.mxu0 0.0
      %789 = vmatpush2.msra.mxu0 %v601
      %790 = vmatprep.subr.mxu0 0.0
      %791 = vmatpush2.msra.mxu0 %v600
      %792 = vmatprep.mubr.f32.mxu0 %v450
      %793 = vmatmul.mubr.f32.gmra.mxu0 %v434
      %v794 = vpop.f32.mrf.mxu0
      %v795 = vadd.f32 0.0, %v794
      %v796 = vpop.f32.mrf.mxu0
      %797 = vmatprep.mubr.f32.mxu0 %v451
      %798 = vmatmul.mubr.f32.gmra.mxu0 %v435
      %v799 = vpop.f32.mrf.mxu0
      %v800 = vadd.f32 0.0, %v799
      %v801 = vpop.f32.mrf.mxu0
      %802 = vmatprep.mubr.f32.mxu0 %v452
      %803 = vmatmul.mubr.f32.gmra.mxu0 %v436
      %v804 = vpop.f32.mrf.mxu0
      %v805 = vadd.f32 0.0, %v804
      %v806 = vpop.f32.mrf.mxu0
      %807 = vmatprep.mubr.f32.mxu0 %v453
      %808 = vmatmul.mubr.f32.gmra.mxu0 %v437
      %v809 = vpop.f32.mrf.mxu0
      %v810 = vadd.f32 0.0, %v809
      %v811 = vpop.f32.mrf.mxu0
      %812 = vmatprep.mubr.f32.mxu0 %v454
      %813 = vmatmul.mubr.f32.gmra.mxu0 %v438
      %v814 = vpop.f32.mrf.mxu0
      %v815 = vadd.f32 0.0, %v814
      %v816 = vpop.f32.mrf.mxu0
      %817 = vmatprep.mubr.f32.mxu0 %v455
      %818 = vmatmul.mubr.f32.gmra.mxu0 %v439
      %v819 = vpop.f32.mrf.mxu0
      %v820 = vadd.f32 0.0, %v819
      %v821 = vpop.f32.mrf.mxu0
      %822 = vmatprep.mubr.f32.mxu0 %v456
      %823 = vmatmul.mubr.f32.gmra.mxu0 %v440
      %v824 = vpop.f32.mrf.mxu0
      %v825 = vadd.f32 0.0, %v824
      %v826 = vpop.f32.mrf.mxu0
      %827 = vmatprep.mubr.f32.mxu0 %v457
      %828 = vmatmul.mubr.f32.gmra.mxu0 %v441
      %v829 = vpop.f32.mrf.mxu0
      %v830 = vadd.f32 0.0, %v829
      %v831 = vpop.f32.mrf.mxu0
      %832 = vmatprep.mubr.f32.mxu0 %v458
      %833 = vmatmul.mubr.f32.gmra.mxu0 %v442
      %v834 = vpop.f32.mrf.mxu0
      %v835 = vadd.f32 0.0, %v834
      %v836 = vpop.f32.mrf.mxu0
      %837 = vmatprep.mubr.f32.mxu0 %v459
      %838 = vmatmul.mubr.f32.gmra.mxu0 %v443
      %v839 = vpop.f32.mrf.mxu0
      %v840 = vadd.f32 0.0, %v839
      %v841 = vpop.f32.mrf.mxu0
      %842 = vmatprep.mubr.f32.mxu0 %v460
      %843 = vmatmul.mubr.f32.gmra.mxu0 %v444
      %v844 = vpop.f32.mrf.mxu0
      %v845 = vadd.f32 0.0, %v844
      %v846 = vpop.f32.mrf.mxu0
      %847 = vmatprep.mubr.f32.mxu0 %v461
      %848 = vmatmul.mubr.f32.gmra.mxu0 %v445
      %v849 = vpop.f32.mrf.mxu0
      %v850 = vadd.f32 0.0, %v849
      %v851 = vpop.f32.mrf.mxu0
      %852 = vmatprep.mubr.f32.mxu0 %v462
      %853 = vmatmul.mubr.f32.gmra.mxu0 %v446
      %v854 = vpop.f32.mrf.mxu0
      %v855 = vadd.f32 0.0, %v854
      %v856 = vpop.f32.mrf.mxu0
      %857 = vmatprep.mubr.f32.mxu0 %v463
      %858 = vmatmul.mubr.f32.gmra.mxu0 %v447
      %v859 = vpop.f32.mrf.mxu0
      %v860 = vadd.f32 0.0, %v859
      %v861 = vpop.f32.mrf.mxu0
      %862 = vmatprep.mubr.f32.mxu0 %v464
      %863 = vmatmul.mubr.f32.gmra.mxu0 %v448
      %v864 = vpop.f32.mrf.mxu0
      %v865 = vadd.f32 0.0, %v864
      %v866 = vpop.f32.mrf.mxu0
      %867 = vmatprep.mubr.f32.mxu0 %v465
      %868 = vmatmul.mubr.f32.gmra.mxu0 %v449
      %v869 = vpop.f32.mrf.mxu0
      %v870 = vadd.f32 0.0, %v869
      %v871 = vpop.f32.mrf.mxu0
      %872 = vdwg.mxu0
      %873 = vmatprep.subr.mxu0 0.0
      %874 = vmatpush1.msra.mxu0 %v631
      %875 = vmatprep.subr.mxu0 0.0
      %876 = vmatpush1.msra.mxu0 %v630
      %877 = vmatprep.subr.mxu0 0.0
      %878 = vmatpush1.msra.mxu0 %v629
      %879 = vmatprep.subr.mxu0 0.0
      %880 = vmatpush1.msra.mxu0 %v628
      %881 = vmatprep.subr.mxu0 0.0
      %882 = vmatpush1.msra.mxu0 %v627
      %883 = vmatprep.subr.mxu0 0.0
      %884 = vmatpush1.msra.mxu0 %v626
      %885 = vmatprep.subr.mxu0 0.0
      %886 = vmatpush1.msra.mxu0 %v625
      %887 = vmatprep.subr.mxu0 0.0
      %888 = vmatpush1.msra.mxu0 %v624
      %889 = vmatprep.subr.mxu0 0.0
      %890 = vmatpush1.msra.mxu0 %v623
      %891 = vmatprep.subr.mxu0 0.0
      %892 = vmatpush1.msra.mxu0 %v622
      %893 = vmatprep.subr.mxu0 0.0
      %894 = vmatpush1.msra.mxu0 %v621
      %895 = vmatprep.subr.mxu0 0.0
      %896 = vmatpush1.msra.mxu0 %v620
      %897 = vmatprep.subr.mxu0 0.0
      %898 = vmatpush1.msra.mxu0 %v619
      %899 = vmatprep.subr.mxu0 0.0
      %900 = vmatpush1.msra.mxu0 %v618
      %901 = vmatprep.subr.mxu0 0.0
      %902 = vmatpush1.msra.mxu0 %v617
      %903 = vmatprep.subr.mxu0 0.0
      %904 = vmatpush1.msra.mxu0 %v616
      %905 = vmatprep.subr.mxu0 0.0
      %906 = vmatpush2.msra.mxu0 %v647
      %907 = vmatprep.subr.mxu0 0.0
      %908 = vmatpush2.msra.mxu0 %v646
      %909 = vmatprep.subr.mxu0 0.0
      %910 = vmatpush2.msra.mxu0 %v645
      %911 = vmatprep.subr.mxu0 0.0
      %912 = vmatpush2.msra.mxu0 %v644
      %913 = vmatprep.subr.mxu0 0.0
      %914 = vmatpush2.msra.mxu0 %v643
      %915 = vmatprep.subr.mxu0 0.0
      %916 = vmatpush2.msra.mxu0 %v642
      %917 = vmatprep.subr.mxu0 0.0
      %918 = vmatpush2.msra.mxu0 %v641
      %919 = vmatprep.subr.mxu0 0.0
      %920 = vmatpush2.msra.mxu0 %v640
      %921 = vmatprep.subr.mxu0 0.0
      %922 = vmatpush2.msra.mxu0 %v639
      %923 = vmatprep.subr.mxu0 0.0
      %924 = vmatpush2.msra.mxu0 %v638
      %925 = vmatprep.subr.mxu0 0.0
      %926 = vmatpush2.msra.mxu0 %v637
      %927 = vmatprep.subr.mxu0 0.0
      %928 = vmatpush2.msra.mxu0 %v636
      %929 = vmatprep.subr.mxu0 0.0
      %930 = vmatpush2.msra.mxu0 %v635
      %931 = vmatprep.subr.mxu0 0.0
      %932 = vmatpush2.msra.mxu0 %v634
      %933 = vmatprep.subr.mxu0 0.0
      %934 = vmatpush2.msra.mxu0 %v633
      %935 = vmatprep.subr.mxu0 0.0
      %936 = vmatpush2.msra.mxu0 %v632
      %937 = vmatprep.mubr.f32.mxu0 %v485
      %938 = vmatmul.mubr.f32.gmra.mxu0 %v466
      %v939 = vpop.f32.mrf.mxu0
      %v940 = vadd.f32 %v795, %v939
      %v941 = vpop.f32.mrf.mxu0
      %942 = vmatprep.mubr.f32.mxu0 %v486
      %943 = vmatmul.mubr.f32.gmra.mxu0 %v467
      %v944 = vpop.f32.mrf.mxu0
      %v945 = vadd.f32 %v800, %v944
      %v946 = vpop.f32.mrf.mxu0
      %947 = vmatprep.mubr.f32.mxu0 %v487
      %948 = vmatmul.mubr.f32.gmra.mxu0 %v468
      %v949 = vpop.f32.mrf.mxu0
      %v950 = vadd.f32 %v805, %v949
      %v951 = vpop.f32.mrf.mxu0
      %952 = vmatprep.mubr.f32.mxu0 %v488
      %953 = vmatmul.mubr.f32.gmra.mxu0 %v469
      %v954 = vpop.f32.mrf.mxu0
      %v955 = vadd.f32 %v810, %v954
      %v956 = vpop.f32.mrf.mxu0
      %957 = vmatprep.mubr.f32.mxu0 %v489
      %958 = vmatmul.mubr.f32.gmra.mxu0 %v470
      %v959 = vpop.f32.mrf.mxu0
      %v960 = vadd.f32 %v815, %v959
      %v961 = vpop.f32.mrf.mxu0
      %962 = vmatprep.mubr.f32.mxu0 %v490
      %963 = vmatmul.mubr.f32.gmra.mxu0 %v471
      %v964 = vpop.f32.mrf.mxu0
      %v965 = vadd.f32 %v820, %v964
      %v966 = vpop.f32.mrf.mxu0
      %967 = vmatprep.mubr.f32.mxu0 %v491
      %968 = vmatmul.mubr.f32.gmra.mxu0 %v472
      %v969 = vpop.f32.mrf.mxu0
      %v970 = vadd.f32 %v825, %v969
      %v971 = vpop.f32.mrf.mxu0
      %972 = vmatprep.mubr.f32.mxu0 %v492
      %973 = vmatmul.mubr.f32.gmra.mxu0 %v473
      %v974 = vpop.f32.mrf.mxu0
      %v975 = vadd.f32 %v830, %v974
      %v976 = vpop.f32.mrf.mxu0
      %977 = vmatprep.mubr.f32.mxu0 %v493
      %978 = vmatmul.mubr.f32.gmra.mxu0 %v474
      %v979 = vpop.f32.mrf.mxu0
      %v980 = vadd.f32 %v835, %v979
      %v981 = vpop.f32.mrf.mxu0
      %982 = vmatprep.mubr.f32.mxu0 %v494
      %983 = vmatmul.mubr.f32.gmra.mxu0 %v475
      %v984 = vpop.f32.mrf.mxu0
      %v985 = vadd.f32 %v840, %v984
      %v986 = vpop.f32.mrf.mxu0
      %987 = vmatprep.mubr.f32.mxu0 %v495
      %988 = vmatmul.mubr.f32.gmra.mxu0 %v476
      %v989 = vpop.f32.mrf.mxu0
      %v990 = vadd.f32 %v845, %v989
      %v991 = vpop.f32.mrf.mxu0
      %992 = vmatprep.mubr.f32.mxu0 %v496
      %993 = vmatmul.mubr.f32.gmra.mxu0 %v477
      %v994 = vpop.f32.mrf.mxu0
      %v995 = vadd.f32 %v850, %v994
      %v996 = vpop.f32.mrf.mxu0
      %997 = vmatprep.mubr.f32.mxu0 %v497
      %998 = vmatmul.mubr.f32.gmra.mxu0 %v478
      %v999 = vpop.f32.mrf.mxu0
      %v1000 = vadd.f32 %v855, %v999
      %v1001 = vpop.f32.mrf.mxu0
      %1002 = vmatprep.mubr.f32.mxu0 %v498
      %1003 = vmatmul.mubr.f32.gmra.mxu0 %v479
      %v1004 = vpop.f32.mrf.mxu0
      %v1005 = vadd.f32 %v860, %v1004
      %v1006 = vpop.f32.mrf.mxu0
      %1007 = vmatprep.mubr.f32.mxu0 %v499
      %1008 = vmatmul.mubr.f32.gmra.mxu0 %v480
      %v1009 = vpop.f32.mrf.mxu0
      %v1010 = vadd.f32 %v865, %v1009
      %v1011 = vpop.f32.mrf.mxu0
      %1012 = vmatprep.mubr.f32.mxu0 %v500
      %1013 = vmatmul.mubr.f32.gmra.mxu0 %v481
      %v1014 = vpop.f32.mrf.mxu0
      %v1015 = vadd.f32 %v870, %v1014
      %v1016 = vpop.f32.mrf.mxu0
      %1017 = vdwg.mxu0
      %1018 = vmatprep.subr.mxu0 0.0
      %1019 = vmatpush1.msra.mxu0 %v663
      %1020 = vmatprep.subr.mxu0 0.0
      %1021 = vmatpush1.msra.mxu0 %v662
      %1022 = vmatprep.subr.mxu0 0.0
      %1023 = vmatpush1.msra.mxu0 %v661
      %1024 = vmatprep.subr.mxu0 0.0
      %1025 = vmatpush1.msra.mxu0 %v660
      %1026 = vmatprep.subr.mxu0 0.0
      %1027 = vmatpush1.msra.mxu0 %v659
      %1028 = vmatprep.subr.mxu0 0.0
      %1029 = vmatpush1.msra.mxu0 %v658
      %1030 = vmatprep.subr.mxu0 0.0
      %1031 = vmatpush1.msra.mxu0 %v657
      %1032 = vmatprep.subr.mxu0 0.0
      %1033 = vmatpush1.msra.mxu0 %v656
      %1034 = vmatprep.subr.mxu0 0.0
      %1035 = vmatpush1.msra.mxu0 %v655
      %1036 = vmatprep.subr.mxu0 0.0
      %1037 = vmatpush1.msra.mxu0 %v654
      %1038 = vmatprep.subr.mxu0 0.0
      %1039 = vmatpush1.msra.mxu0 %v653
      %1040 = vmatprep.subr.mxu0 0.0
      %1041 = vmatpush1.msra.mxu0 %v652
      %1042 = vmatprep.subr.mxu0 0.0
      %1043 = vmatpush1.msra.mxu0 %v651
      %1044 = vmatprep.subr.mxu0 0.0
      %1045 = vmatpush1.msra.mxu0 %v650
      %1046 = vmatprep.subr.mxu0 0.0
      %1047 = vmatpush1.msra.mxu0 %v649
      %1048 = vmatprep.subr.mxu0 0.0
      %1049 = vmatpush1.msra.mxu0 %v648
      %1050 = vmatprep.subr.mxu0 0.0
      %1051 = vmatpush2.msra.mxu0 %v679
      %1052 = vmatprep.subr.mxu0 0.0
      %1053 = vmatpush2.msra.mxu0 %v678
      %1054 = vmatprep.subr.mxu0 0.0
      %1055 = vmatpush2.msra.mxu0 %v677
      %1056 = vmatprep.subr.mxu0 0.0
      %1057 = vmatpush2.msra.mxu0 %v676
      %1058 = vmatprep.subr.mxu0 0.0
      %1059 = vmatpush2.msra.mxu0 %v675
      %1060 = vmatprep.subr.mxu0 0.0
      %1061 = vmatpush2.msra.mxu0 %v674
      %1062 = vmatprep.subr.mxu0 0.0
      %1063 = vmatpush2.msra.mxu0 %v673
      %1064 = vmatprep.subr.mxu0 0.0
      %1065 = vmatpush2.msra.mxu0 %v672
      %1066 = vmatprep.subr.mxu0 0.0
      %1067 = vmatpush2.msra.mxu0 %v671
      %1068 = vmatprep.subr.mxu0 0.0
      %1069 = vmatpush2.msra.mxu0 %v670
      %1070 = vmatprep.subr.mxu0 0.0
      %1071 = vmatpush2.msra.mxu0 %v669
      %1072 = vmatprep.subr.mxu0 0.0
      %1073 = vmatpush2.msra.mxu0 %v668
      %1074 = vmatprep.subr.mxu0 0.0
      %1075 = vmatpush2.msra.mxu0 %v667
      %1076 = vmatprep.subr.mxu0 0.0
      %1077 = vmatpush2.msra.mxu0 %v666
      %1078 = vmatprep.subr.mxu0 0.0
      %1079 = vmatpush2.msra.mxu0 %v665
      %1080 = vmatprep.subr.mxu0 0.0
      %1081 = vmatpush2.msra.mxu0 %v664
      %1082 = vmatprep.mubr.f32.mxu0 %v517
      %1083 = vmatmul.mubr.f32.gmra.mxu0 %v501
      %v1084 = vpop.f32.mrf.mxu0
      %v1085 = vadd.f32 %v940, %v1084
      %v1086 = vpop.f32.mrf.mxu0
      %1087 = vmatprep.mubr.f32.mxu0 %v518
      %1088 = vmatmul.mubr.f32.gmra.mxu0 %v502
      %v1089 = vpop.f32.mrf.mxu0
      %v1090 = vadd.f32 %v945, %v1089
      %v1091 = vpop.f32.mrf.mxu0
      %1092 = vmatprep.mubr.f32.mxu0 %v519
      %1093 = vmatmul.mubr.f32.gmra.mxu0 %v503
      %v1094 = vpop.f32.mrf.mxu0
      %v1095 = vadd.f32 %v950, %v1094
      %v1096 = vpop.f32.mrf.mxu0
      %1097 = vmatprep.mubr.f32.mxu0 %v520
      %1098 = vmatmul.mubr.f32.gmra.mxu0 %v504
      %v1099 = vpop.f32.mrf.mxu0
      %v1100 = vadd.f32 %v955, %v1099
      %v1101 = vpop.f32.mrf.mxu0
      %1102 = vmatprep.mubr.f32.mxu0 %v521
      %1103 = vmatmul.mubr.f32.gmra.mxu0 %v505
      %v1104 = vpop.f32.mrf.mxu0
      %v1105 = vadd.f32 %v960, %v1104
      %v1106 = vpop.f32.mrf.mxu0
      %1107 = vmatprep.mubr.f32.mxu0 %v522
      %1108 = vmatmul.mubr.f32.gmra.mxu0 %v506
      %v1109 = vpop.f32.mrf.mxu0
      %v1110 = vadd.f32 %v965, %v1109
      %v1111 = vpop.f32.mrf.mxu0
      %1112 = vmatprep.mubr.f32.mxu0 %v523
      %1113 = vmatmul.mubr.f32.gmra.mxu0 %v507
      %v1114 = vpop.f32.mrf.mxu0
      %v1115 = vadd.f32 %v970, %v1114
      %v1116 = vpop.f32.mrf.mxu0
      %1117 = vmatprep.mubr.f32.mxu0 %v524
      %1118 = vmatmul.mubr.f32.gmra.mxu0 %v508
      %v1119 = vpop.f32.mrf.mxu0
      %v1120 = vadd.f32 %v975, %v1119
      %v1121 = vpop.f32.mrf.mxu0
      %1122 = vmatprep.mubr.f32.mxu0 %v525
      %1123 = vmatmul.mubr.f32.gmra.mxu0 %v509
      %v1124 = vpop.f32.mrf.mxu0
      %v1125 = vadd.f32 %v980, %v1124
      %v1126 = vpop.f32.mrf.mxu0
      %1127 = vmatprep.mubr.f32.mxu0 %v526
      %1128 = vmatmul.mubr.f32.gmra.mxu0 %v510
      %v1129 = vpop.f32.mrf.mxu0
      %v1130 = vadd.f32 %v985, %v1129
      %v1131 = vpop.f32.mrf.mxu0
      %1132 = vmatprep.mubr.f32.mxu0 %v527
      %1133 = vmatmul.mubr.f32.gmra.mxu0 %v511
      %v1134 = vpop.f32.mrf.mxu0
      %v1135 = vadd.f32 %v990, %v1134
      %v1136 = vpop.f32.mrf.mxu0
      %1137 = vmatprep.mubr.f32.mxu0 %v528
      %1138 = vmatmul.mubr.f32.gmra.mxu0 %v512
      %v1139 = vpop.f32.mrf.mxu0
      %v1140 = vadd.f32 %v995, %v1139
      %v1141 = vpop.f32.mrf.mxu0
      %1142 = vmatprep.mubr.f32.mxu0 %v529
      %1143 = vmatmul.mubr.f32.gmra.mxu0 %v513
      %v1144 = vpop.f32.mrf.mxu0
      %v1145 = vadd.f32 %v1000, %v1144
      %v1146 = vpop.f32.mrf.mxu0
      %1147 = vmatprep.mubr.f32.mxu0 %v530
      %1148 = vmatmul.mubr.f32.gmra.mxu0 %v514
      %v1149 = vpop.f32.mrf.mxu0
      %v1150 = vadd.f32 %v1005, %v1149
      %v1151 = vpop.f32.mrf.mxu0
      %1152 = vmatprep.mubr.f32.mxu0 %v531
      %1153 = vmatmul.mubr.f32.gmra.mxu0 %v515
      %v1154 = vpop.f32.mrf.mxu0
      %v1155 = vadd.f32 %v1010, %v1154
      %v1156 = vpop.f32.mrf.mxu0
      %1157 = vmatprep.mubr.f32.mxu0 %v532
      %1158 = vmatmul.mubr.f32.gmra.mxu0 %v516
      %v1159 = vpop.f32.mrf.mxu0
      %v1160 = vadd.f32 %v1015, %v1159
      %v1161 = vpop.f32.mrf.mxu0
      %1162 = vdwg.mxu0
      %1163 = vmatprep.subr.mxu0 0.0
      %1164 = vmatpush1.msra.mxu0 %v695
      %1165 = vmatprep.subr.mxu0 0.0
      %1166 = vmatpush1.msra.mxu0 %v694
      %1167 = vmatprep.subr.mxu0 0.0
      %1168 = vmatpush1.msra.mxu0 %v693
      %1169 = vmatprep.subr.mxu0 0.0
      %1170 = vmatpush1.msra.mxu0 %v692
      %1171 = vmatprep.subr.mxu0 0.0
      %1172 = vmatpush1.msra.mxu0 %v691
      %1173 = vmatprep.subr.mxu0 0.0
      %1174 = vmatpush1.msra.mxu0 %v690
      %1175 = vmatprep.subr.mxu0 0.0
      %1176 = vmatpush1.msra.mxu0 %v689
      %1177 = vmatprep.subr.mxu0 0.0
      %1178 = vmatpush1.msra.mxu0 %v688
      %1179 = vmatprep.subr.mxu0 0.0
      %1180 = vmatpush1.msra.mxu0 %v687
      %1181 = vmatprep.subr.mxu0 0.0
      %1182 = vmatpush1.msra.mxu0 %v686
      %1183 = vmatprep.subr.mxu0 0.0
      %1184 = vmatpush1.msra.mxu0 %v685
      %1185 = vmatprep.subr.mxu0 0.0
      %1186 = vmatpush1.msra.mxu0 %v684
      %1187 = vmatprep.subr.mxu0 0.0
      %1188 = vmatpush1.msra.mxu0 %v683
      %1189 = vmatprep.subr.mxu0 0.0
      %1190 = vmatpush1.msra.mxu0 %v682
      %1191 = vmatprep.subr.mxu0 0.0
      %1192 = vmatpush1.msra.mxu0 %v681
      %1193 = vmatprep.subr.mxu0 0.0
      %1194 = vmatpush1.msra.mxu0 %v680
      %1195 = vmatprep.subr.mxu0 0.0
      %1196 = vmatpush2.msra.mxu0 %v711
      %1197 = vmatprep.subr.mxu0 0.0
      %1198 = vmatpush2.msra.mxu0 %v710
      %1199 = vmatprep.subr.mxu0 0.0
      %1200 = vmatpush2.msra.mxu0 %v709
      %1201 = vmatprep.subr.mxu0 0.0
      %1202 = vmatpush2.msra.mxu0 %v708
      %1203 = vmatprep.subr.mxu0 0.0
      %1204 = vmatpush2.msra.mxu0 %v707
      %1205 = vmatprep.subr.mxu0 0.0
      %1206 = vmatpush2.msra.mxu0 %v706
      %1207 = vmatprep.subr.mxu0 0.0
      %1208 = vmatpush2.msra.mxu0 %v705
      %1209 = vmatprep.subr.mxu0 0.0
      %1210 = vmatpush2.msra.mxu0 %v704
      %1211 = vmatprep.subr.mxu0 0.0
      %1212 = vmatpush2.msra.mxu0 %v703
      %1213 = vmatprep.subr.mxu0 0.0
      %1214 = vmatpush2.msra.mxu0 %v702
      %1215 = vmatprep.subr.mxu0 0.0
      %1216 = vmatpush2.msra.mxu0 %v701
      %1217 = vmatprep.subr.mxu0 0.0
      %1218 = vmatpush2.msra.mxu0 %v700
      %1219 = vmatprep.subr.mxu0 0.0
      %1220 = vmatpush2.msra.mxu0 %v699
      %1221 = vmatprep.subr.mxu0 0.0
      %1222 = vmatpush2.msra.mxu0 %v698
      %1223 = vmatprep.subr.mxu0 0.0
      %1224 = vmatpush2.msra.mxu0 %v697
      %1225 = vmatprep.subr.mxu0 0.0
      %1226 = vmatpush2.msra.mxu0 %v696
      %1227 = vmatprep.mubr.f32.mxu0 %v552
      %1228 = vmatmul.mubr.f32.gmra.mxu0 %v536
      %v1229 = vpop.f32.mrf.mxu0
      %v1230 = vadd.f32 %v1085, %v1229
      %v1231 = vpop.f32.mrf.mxu0
      %1232 = vmatprep.mubr.f32.mxu0 %v553
      %1233 = vmatmul.mubr.f32.gmra.mxu0 %v537
      %v1234 = vpop.f32.mrf.mxu0
      %v1235 = vadd.f32 %v1090, %v1234
      %v1236 = vpop.f32.mrf.mxu0
      %1237 = vmatprep.mubr.f32.mxu0 %v554
      %1238 = vmatmul.mubr.f32.gmra.mxu0 %v538
      %v1239 = vpop.f32.mrf.mxu0
      %v1240 = vadd.f32 %v1095, %v1239
      %v1241 = vpop.f32.mrf.mxu0
      %1242 = vmatprep.mubr.f32.mxu0 %v555
      %1243 = vmatmul.mubr.f32.gmra.mxu0 %v539
      %v1244 = vpop.f32.mrf.mxu0
      %v1245 = vadd.f32 %v1100, %v1244
      %v1246 = vpop.f32.mrf.mxu0
      %1247 = vmatprep.mubr.f32.mxu0 %v556
      %1248 = vmatmul.mubr.f32.gmra.mxu0 %v540
      %v1249 = vpop.f32.mrf.mxu0
      %v1250 = vadd.f32 %v1105, %v1249
      %v1251 = vpop.f32.mrf.mxu0
      %1252 = vmatprep.mubr.f32.mxu0 %v557
      %1253 = vmatmul.mubr.f32.gmra.mxu0 %v541
      %v1254 = vpop.f32.mrf.mxu0
      %v1255 = vadd.f32 %v1110, %v1254
      %v1256 = vpop.f32.mrf.mxu0
      %1257 = vmatprep.mubr.f32.mxu0 %v558
      %1258 = vmatmul.mubr.f32.gmra.mxu0 %v542
      %v1259 = vpop.f32.mrf.mxu0
      %v1260 = vadd.f32 %v1115, %v1259
      %v1261 = vpop.f32.mrf.mxu0
      %1262 = vmatprep.mubr.f32.mxu0 %v559
      %1263 = vmatmul.mubr.f32.gmra.mxu0 %v543
      %v1264 = vpop.f32.mrf.mxu0
      %v1265 = vadd.f32 %v1120, %v1264
      %v1266 = vpop.f32.mrf.mxu0
      %1267 = vmatprep.mubr.f32.mxu0 %v560
      %1268 = vmatmul.mubr.f32.gmra.mxu0 %v544
      %v1269 = vpop.f32.mrf.mxu0
      %v1270 = vadd.f32 %v1125, %v1269
      %v1271 = vpop.f32.mrf.mxu0
      %1272 = vmatprep.mubr.f32.mxu0 %v561
      %1273 = vmatmul.mubr.f32.gmra.mxu0 %v545
      %v1274 = vpop.f32.mrf.mxu0
      %v1275 = vadd.f32 %v1130, %v1274
      %v1276 = vpop.f32.mrf.mxu0
      %1277 = vmatprep.mubr.f32.mxu0 %v562
      %1278 = vmatmul.mubr.f32.gmra.mxu0 %v546
      %v1279 = vpop.f32.mrf.mxu0
      %v1280 = vadd.f32 %v1135, %v1279
      %v1281 = vpop.f32.mrf.mxu0
      %1282 = vmatprep.mubr.f32.mxu0 %v563
      %1283 = vmatmul.mubr.f32.gmra.mxu0 %v547
      %v1284 = vpop.f32.mrf.mxu0
      %v1285 = vadd.f32 %v1140, %v1284
      %v1286 = vpop.f32.mrf.mxu0
      %1287 = vmatprep.mubr.f32.mxu0 %v564
      %1288 = vmatmul.mubr.f32.gmra.mxu0 %v548
      %v1289 = vpop.f32.mrf.mxu0
      %v1290 = vadd.f32 %v1145, %v1289
      %v1291 = vpop.f32.mrf.mxu0
      %1292 = vmatprep.mubr.f32.mxu0 %v565
      %1293 = vmatmul.mubr.f32.gmra.mxu0 %v549
      %v1294 = vpop.f32.mrf.mxu0
      %v1295 = vadd.f32 %v1150, %v1294
      %v1296 = vpop.f32.mrf.mxu0
      %1297 = vmatprep.mubr.f32.mxu0 %v566
      %1298 = vmatmul.mubr.f32.gmra.mxu0 %v550
      %v1299 = vpop.f32.mrf.mxu0
      %v1300 = vadd.f32 %v1155, %v1299
      %v1301 = vpop.f32.mrf.mxu0
      %1302 = vmatprep.mubr.f32.mxu0 %v567
      %1303 = vmatmul.mubr.f32.gmra.mxu0 %v551
      %v1304 = vpop.f32.mrf.mxu0
      %v1305 = vadd.f32 %v1160, %v1304
      %v1306 = vpop.f32.mrf.mxu0
      %1307 = vdwg.mxu0
      %1308 = vmatprep.subr.mxu0 0.0
      %1309 = vmatpush1.msra.mxu0 %v727
      %1310 = vmatprep.subr.mxu0 0.0
      %1311 = vmatpush1.msra.mxu0 %v726
      %1312 = vmatprep.subr.mxu0 0.0
      %1313 = vmatpush1.msra.mxu0 %v725
      %1314 = vmatprep.subr.mxu0 0.0
      %1315 = vmatpush1.msra.mxu0 %v724
      %1316 = vmatprep.subr.mxu0 0.0
      %1317 = vmatpush1.msra.mxu0 %v723
      %1318 = vmatprep.subr.mxu0 0.0
      %1319 = vmatpush1.msra.mxu0 %v722
      %1320 = vmatprep.subr.mxu0 0.0
      %1321 = vmatpush1.msra.mxu0 %v721
      %1322 = vmatprep.subr.mxu0 0.0
      %1323 = vmatpush1.msra.mxu0 %v720
      %1324 = vmatprep.subr.mxu0 0.0
      %1325 = vmatpush1.msra.mxu0 %v719
      %1326 = vmatprep.subr.mxu0 0.0
      %1327 = vmatpush1.msra.mxu0 %v718
      %1328 = vmatprep.subr.mxu0 0.0
      %1329 = vmatpush1.msra.mxu0 %v717
      %1330 = vmatprep.subr.mxu0 0.0
      %1331 = vmatpush1.msra.mxu0 %v716
      %1332 = vmatprep.subr.mxu0 0.0
      %1333 = vmatpush1.msra.mxu0 %v715
      %1334 = vmatprep.subr.mxu0 0.0
      %1335 = vmatpush1.msra.mxu0 %v714
      %1336 = vmatprep.subr.mxu0 0.0
      %1337 = vmatpush1.msra.mxu0 %v713
      %1338 = vmatprep.subr.mxu0 0.0
      %1339 = vmatpush1.msra.mxu0 %v712
      %1340 = vmatprep.subr.mxu0 0.0
      %1341 = vmatpush2.msra.mxu0 0.0
      %1342 = vmatprep.subr.mxu0 0.0
      %1343 = vmatpush2.msra.mxu0 0.0
      %1344 = vmatprep.subr.mxu0 0.0
      %1345 = vmatpush2.msra.mxu0 0.0
      %1346 = vmatprep.subr.mxu0 0.0
      %1347 = vmatpush2.msra.mxu0 0.0
      %1348 = vmatprep.subr.mxu0 0.0
      %1349 = vmatpush2.msra.mxu0 0.0
      %1350 = vmatprep.subr.mxu0 0.0
      %1351 = vmatpush2.msra.mxu0 0.0
      %1352 = vmatprep.subr.mxu0 0.0
      %1353 = vmatpush2.msra.mxu0 0.0
      %1354 = vmatprep.subr.mxu0 0.0
      %1355 = vmatpush2.msra.mxu0 0.0
      %1356 = vmatprep.subr.mxu0 0.0
      %1357 = vmatpush2.msra.mxu0 0.0
      %1358 = vmatprep.subr.mxu0 0.0
      %1359 = vmatpush2.msra.mxu0 0.0
      %1360 = vmatprep.subr.mxu0 0.0
      %1361 = vmatpush2.msra.mxu0 0.0
      %1362 = vmatprep.subr.mxu0 0.0
      %1363 = vmatpush2.msra.mxu0 0.0
      %1364 = vmatprep.subr.mxu0 0.0
      %1365 = vmatpush2.msra.mxu0 0.0
      %1366 = vmatprep.subr.mxu0 0.0
      %1367 = vmatpush2.msra.mxu0 0.0
      %1368 = vmatprep.subr.mxu0 0.0
      %1369 = vmatpush2.msra.mxu0 0.0
      %1370 = vmatprep.subr.mxu0 0.0
      %1371 = vmatpush2.msra.mxu0 0.0
      %1372 = vmatprep.mubr.f32.mxu0 0.0
      %1373 = vmatmul.mubr.f32.gmra.mxu0 %v568
      %v1374 = vpop.f32.mrf.mxu0
      %v1375 = vadd.f32 %v1230, %v1374
      %v1376 = vpop.f32.mrf.mxu0
      %1377 = vmatprep.mubr.f32.mxu0 0.0
      %1378 = vmatmul.mubr.f32.gmra.mxu0 %v569
      %v1379 = vpop.f32.mrf.mxu0
      %v1380 = vadd.f32 %v1235, %v1379
      %v1381 = vpop.f32.mrf.mxu0
      %1382 = vmatprep.mubr.f32.mxu0 0.0
      %1383 = vmatmul.mubr.f32.gmra.mxu0 %v570
      %v1384 = vpop.f32.mrf.mxu0
      %v1385 = vadd.f32 %v1240, %v1384
      %v1386 = vpop.f32.mrf.mxu0
      %1387 = vmatprep.mubr.f32.mxu0 0.0
      %1388 = vmatmul.mubr.f32.gmra.mxu0 %v571
      %v1389 = vpop.f32.mrf.mxu0
      %v1390 = vadd.f32 %v1245, %v1389
      %v1391 = vpop.f32.mrf.mxu0
      %1392 = vmatprep.mubr.f32.mxu0 0.0
      %1393 = vmatmul.mubr.f32.gmra.mxu0 %v572
      %v1394 = vpop.f32.mrf.mxu0
      %v1395 = vadd.f32 %v1250, %v1394
      %v1396 = vpop.f32.mrf.mxu0
      %1397 = vmatprep.mubr.f32.mxu0 0.0
      %1398 = vmatmul.mubr.f32.gmra.mxu0 %v573
      %v1399 = vpop.f32.mrf.mxu0
      %v1400 = vadd.f32 %v1255, %v1399
      %v1401 = vpop.f32.mrf.mxu0
      %1402 = vmatprep.mubr.f32.mxu0 0.0
      %1403 = vmatmul.mubr.f32.gmra.mxu0 %v574
      %v1404 = vpop.f32.mrf.mxu0
      %v1405 = vadd.f32 %v1260, %v1404
      %v1406 = vpop.f32.mrf.mxu0
      %1407 = vmatprep.mubr.f32.mxu0 0.0
      %1408 = vmatmul.mubr.f32.gmra.mxu0 %v575
      %v1409 = vpop.f32.mrf.mxu0
      %v1410 = vadd.f32 %v1265, %v1409
      %v1411 = vpop.f32.mrf.mxu0
      %1412 = vmatprep.mubr.f32.mxu0 0.0
      %1413 = vmatmul.mubr.f32.gmra.mxu0 %v576
      %v1414 = vpop.f32.mrf.mxu0
      %v1415 = vadd.f32 %v1270, %v1414
      %v1416 = vpop.f32.mrf.mxu0
      %1417 = vmatprep.mubr.f32.mxu0 0.0
      %1418 = vmatmul.mubr.f32.gmra.mxu0 %v577
      %v1419 = vpop.f32.mrf.mxu0
      %v1420 = vadd.f32 %v1275, %v1419
      %v1421 = vpop.f32.mrf.mxu0
      %1422 = vmatprep.mubr.f32.mxu0 0.0
      %1423 = vmatmul.mubr.f32.gmra.mxu0 %v578
      %v1424 = vpop.f32.mrf.mxu0
      %v1425 = vadd.f32 %v1280, %v1424
      %v1426 = vpop.f32.mrf.mxu0
      %1427 = vmatprep.mubr.f32.mxu0 0.0
      %1428 = vmatmul.mubr.f32.gmra.mxu0 %v579
      %v1429 = vpop.f32.mrf.mxu0
      %v1430 = vadd.f32 %v1285, %v1429
      %v1431 = vpop.f32.mrf.mxu0
      %1432 = vmatprep.mubr.f32.mxu0 0.0
      %1433 = vmatmul.mubr.f32.gmra.mxu0 %v580
      %v1434 = vpop.f32.mrf.mxu0
      %v1435 = vadd.f32 %v1290, %v1434
      %v1436 = vpop.f32.mrf.mxu0
      %1437 = vmatprep.mubr.f32.mxu0 0.0
      %1438 = vmatmul.mubr.f32.gmra.mxu0 %v581
      %v1439 = vpop.f32.mrf.mxu0
      %v1440 = vadd.f32 %v1295, %v1439
      %v1441 = vpop.f32.mrf.mxu0
      %1442 = vmatprep.mubr.f32.mxu0 0.0
      %1443 = vmatmul.mubr.f32.gmra.mxu0 %v582
      %v1444 = vpop.f32.mrf.mxu0
      %v1445 = vadd.f32 %v1300, %v1444
      %v1446 = vpop.f32.mrf.mxu0
      %1447 = vmatprep.mubr.f32.mxu0 0.0
      %1448 = vmatmul.mubr.f32.gmra.mxu0 %v583
      %v1449 = vpop.f32.mrf.mxu0
      %v1450 = vadd.f32 %v1305, %v1449
      %v1451 = vpop.f32.mrf.mxu0
      %1452 = vdwg.mxu0
      %s1453 = smul.u32 0, 16
      %s1454 = scalar_lea.vmem %s212, %s1453
      %v1455 = vld [vmem:[%s1454] sm:$0xff]
      %v1456 = vld [vmem:[%s1454 + $0x8] sm:$0xff]
      %v1457 = vld [vmem:[%s1454 + $0x10] sm:$0xff]
      %v1458 = vld [vmem:[%s1454 + $0x18] sm:$0xff]
      %v1459 = vld [vmem:[%s1454 + $0x20] sm:$0xff]
      %v1460 = vld [vmem:[%s1454 + $0x28] sm:$0xff]
      %v1461 = vld [vmem:[%s1454 + $0x30] sm:$0xff]
      %v1462 = vld [vmem:[%s1454 + $0x38] sm:$0xff]
      %v1463 = vld [vmem:[%s1454 + $0x40] sm:$0xff]
      %v1464 = vld [vmem:[%s1454 + $0x48] sm:$0xff]
      %v1465 = vld [vmem:[%s1454 + $0x50] sm:$0xff]
      %v1466 = vld [vmem:[%s1454 + $0x58] sm:$0xff]
      %v1467 = vld [vmem:[%s1454 + $0x60] sm:$0xff]
      %v1468 = vld [vmem:[%s1454 + $0x68] sm:$0xff]
      %v1469 = vld [vmem:[%s1454 + $0x70] sm:$0xff]
      %v1470 = vld [vmem:[%s1454 + $0x78] sm:$0xff]
      %v1471 = vadd.f32 %v1375, %v1455
      %v1472 = vadd.f32 %v1380, %v1456
      %v1473 = vadd.f32 %v1385, %v1457
      %v1474 = vadd.f32 %v1390, %v1458
      %v1475 = vadd.f32 %v1395, %v1459
      %v1476 = vadd.f32 %v1400, %v1460
      %v1477 = vadd.f32 %v1405, %v1461
      %v1478 = vadd.f32 %v1410, %v1462
      %v1479 = vadd.f32 %v1415, %v1463
      %v1480 = vadd.f32 %v1420, %v1464
      %v1481 = vadd.f32 %v1425, %v1465
      %v1482 = vadd.f32 %v1430, %v1466
      %v1483 = vadd.f32 %v1435, %v1467
      %v1484 = vadd.f32 %v1440, %v1468
      %v1485 = vadd.f32 %v1445, %v1469
      %v1486 = vadd.f32 %v1450, %v1470
      %s1487 = scalar_lea.vmem %s217, %s1453
      %1488 = vst [vmem:[%s1487] sm:$0xff] %v1471
      %1489 = vst [vmem:[%s1487 + $0x8] sm:$0xff] %v1472
      %1490 = vst [vmem:[%s1487 + $0x10] sm:$0xff] %v1473
      %1491 = vst [vmem:[%s1487 + $0x18] sm:$0xff] %v1474
      %1492 = vst [vmem:[%s1487 + $0x20] sm:$0xff] %v1475
      %1493 = vst [vmem:[%s1487 + $0x28] sm:$0xff] %v1476
      %1494 = vst [vmem:[%s1487 + $0x30] sm:$0xff] %v1477
      %1495 = vst [vmem:[%s1487 + $0x38] sm:$0xff] %v1478
      %1496 = vst [vmem:[%s1487 + $0x40] sm:$0xff] %v1479
      %1497 = vst [vmem:[%s1487 + $0x48] sm:$0xff] %v1480
      %1498 = vst [vmem:[%s1487 + $0x50] sm:$0xff] %v1481
      %1499 = vst [vmem:[%s1487 + $0x58] sm:$0xff] %v1482
      %1500 = vst [vmem:[%s1487 + $0x60] sm:$0xff] %v1483
      %1501 = vst [vmem:[%s1487 + $0x68] sm:$0xff] %v1484
      %1502 = vst [vmem:[%s1487 + $0x70] sm:$0xff] %v1485
      %1503 = vst [vmem:[%s1487 + $0x78] sm:$0xff] %v1486
      %s1504 = smul.u32 8, 24
      %s1505 = scalar_lea.vmem [#allocation2], %s1504
      %v1506 = vld [vmem:[%s1505] sm:$0xff]
      %v1507 = vld [vmem:[%s1505 + $0x8] sm:$0xff]
      %v1508 = vld [vmem:[%s1505 + $0x18] sm:$0xff]
      %v1509 = vld [vmem:[%s1505 + $0x20] sm:$0xff]
      %v1510 = vld [vmem:[%s1505 + $0x30] sm:$0xff]
      %v1511 = vld [vmem:[%s1505 + $0x38] sm:$0xff]
      %v1512 = vld [vmem:[%s1505 + $0x48] sm:$0xff]
      %v1513 = vld [vmem:[%s1505 + $0x50] sm:$0xff]
      %v1514 = vld [vmem:[%s1505 + $0x60] sm:$0xff]
      %v1515 = vld [vmem:[%s1505 + $0x68] sm:$0xff]
      %v1516 = vld [vmem:[%s1505 + $0x78] sm:$0xff]
      %v1517 = vld [vmem:[%s1505 + $0x80] sm:$0xff]
      %v1518 = vld [vmem:[%s1505 + $0x90] sm:$0xff]
      %v1519 = vld [vmem:[%s1505 + $0x98] sm:$0xff]
      %v1520 = vld [vmem:[%s1505 + $0xa8] sm:$0xff]
      %v1521 = vld [vmem:[%s1505 + $0xb0] sm:$0xff]
      %v1522 = vld [vmem:[%s1505 + $0x1] sm:$0xff]
      %v1523 = vld [vmem:[%s1505 + $0x9] sm:$0xff]
      %v1524 = vld [vmem:[%s1505 + $0x19] sm:$0xff]
      %v1525 = vld [vmem:[%s1505 + $0x21] sm:$0xff]
      %v1526 = vld [vmem:[%s1505 + $0x31] sm:$0xff]
      %v1527 = vld [vmem:[%s1505 + $0x39] sm:$0xff]
      %v1528 = vld [vmem:[%s1505 + $0x49] sm:$0xff]
      %v1529 = vld [vmem:[%s1505 + $0x51] sm:$0xff]
      %v1530 = vld [vmem:[%s1505 + $0x61] sm:$0xff]
      %v1531 = vld [vmem:[%s1505 + $0x69] sm:$0xff]
      %v1532 = vld [vmem:[%s1505 + $0x79] sm:$0xff]
      %v1533 = vld [vmem:[%s1505 + $0x81] sm:$0xff]
      %v1534 = vld [vmem:[%s1505 + $0x91] sm:$0xff]
      %v1535 = vld [vmem:[%s1505 + $0x99] sm:$0xff]
      %v1536 = vld [vmem:[%s1505 + $0xa9] sm:$0xff]
      %v1537 = vld [vmem:[%s1505 + $0xb1] sm:$0xff]
      %v1538 = vld [vmem:[%s1505 + $0x2] sm:$0xff]
      %v1539 = vld [vmem:[%s1505 + $0xa] sm:$0xff]
      %v1540 = vld [vmem:[%s1505 + $0x1a] sm:$0xff]
      %v1541 = vld [vmem:[%s1505 + $0x22] sm:$0xff]
      %v1542 = vld [vmem:[%s1505 + $0x32] sm:$0xff]
      %v1543 = vld [vmem:[%s1505 + $0x3a] sm:$0xff]
      %v1544 = vld [vmem:[%s1505 + $0x4a] sm:$0xff]
      %v1545 = vld [vmem:[%s1505 + $0x52] sm:$0xff]
      %v1546 = vld [vmem:[%s1505 + $0x62] sm:$0xff]
      %v1547 = vld [vmem:[%s1505 + $0x6a] sm:$0xff]
      %v1548 = vld [vmem:[%s1505 + $0x7a] sm:$0xff]
      %v1549 = vld [vmem:[%s1505 + $0x82] sm:$0xff]
      %v1550 = vld [vmem:[%s1505 + $0x92] sm:$0xff]
      %v1551 = vld [vmem:[%s1505 + $0x9a] sm:$0xff]
      %v1552 = vld [vmem:[%s1505 + $0xaa] sm:$0xff]
      %v1553 = vld [vmem:[%s1505 + $0xb2] sm:$0xff]
      %s1554 = sadd.s32 8, 1
      %s1555 = smul.u32 %s1554, 24
      %s1556 = scalar_lea.vmem [#allocation2], %s1555
      %v1557 = vld [vmem:[%s1556] sm:$0xff]
      %v1558 = vld [vmem:[%s1556 + $0x8] sm:$0xff]
      %v1559 = vld [vmem:[%s1556 + $0x18] sm:$0xff]
      %v1560 = vld [vmem:[%s1556 + $0x20] sm:$0xff]
      %v1561 = vld [vmem:[%s1556 + $0x30] sm:$0xff]
      %v1562 = vld [vmem:[%s1556 + $0x38] sm:$0xff]
      %v1563 = vld [vmem:[%s1556 + $0x48] sm:$0xff]
      %v1564 = vld [vmem:[%s1556 + $0x50] sm:$0xff]
      %v1565 = vld [vmem:[%s1556 + $0x60] sm:$0xff]
      %v1566 = vld [vmem:[%s1556 + $0x68] sm:$0xff]
      %v1567 = vld [vmem:[%s1556 + $0x78] sm:$0xff]
      %v1568 = vld [vmem:[%s1556 + $0x80] sm:$0xff]
      %v1569 = vld [vmem:[%s1556 + $0x90] sm:$0xff]
      %v1570 = vld [vmem:[%s1556 + $0x98] sm:$0xff]
      %v1571 = vld [vmem:[%s1556 + $0xa8] sm:$0xff]
      %v1572 = vld [vmem:[%s1556 + $0xb0] sm:$0xff]
      %v1573 = vld [vmem:[%s1556 + $0x1] sm:$0xff]
      %v1574 = vld [vmem:[%s1556 + $0x9] sm:$0xff]
      %v1575 = vld [vmem:[%s1556 + $0x19] sm:$0xff]
      %v1576 = vld [vmem:[%s1556 + $0x21] sm:$0xff]
      %v1577 = vld [vmem:[%s1556 + $0x31] sm:$0xff]
      %v1578 = vld [vmem:[%s1556 + $0x39] sm:$0xff]
      %v1579 = vld [vmem:[%s1556 + $0x49] sm:$0xff]
      %v1580 = vld [vmem:[%s1556 + $0x51] sm:$0xff]
      %v1581 = vld [vmem:[%s1556 + $0x61] sm:$0xff]
      %v1582 = vld [vmem:[%s1556 + $0x69] sm:$0xff]
      %v1583 = vld [vmem:[%s1556 + $0x79] sm:$0xff]
      %v1584 = vld [vmem:[%s1556 + $0x81] sm:$0xff]
      %v1585 = vld [vmem:[%s1556 + $0x91] sm:$0xff]
      %v1586 = vld [vmem:[%s1556 + $0x99] sm:$0xff]
      %v1587 = vld [vmem:[%s1556 + $0xa9] sm:$0xff]
      %v1588 = vld [vmem:[%s1556 + $0xb1] sm:$0xff]
      %v1589 = vld [vmem:[%s1556 + $0x2] sm:$0xff]
      %v1590 = vld [vmem:[%s1556 + $0xa] sm:$0xff]
      %v1591 = vld [vmem:[%s1556 + $0x1a] sm:$0xff]
      %v1592 = vld [vmem:[%s1556 + $0x22] sm:$0xff]
      %v1593 = vld [vmem:[%s1556 + $0x32] sm:$0xff]
      %v1594 = vld [vmem:[%s1556 + $0x3a] sm:$0xff]
      %v1595 = vld [vmem:[%s1556 + $0x4a] sm:$0xff]
      %v1596 = vld [vmem:[%s1556 + $0x52] sm:$0xff]
      %v1597 = vld [vmem:[%s1556 + $0x62] sm:$0xff]
      %v1598 = vld [vmem:[%s1556 + $0x6a] sm:$0xff]
      %v1599 = vld [vmem:[%s1556 + $0x7a] sm:$0xff]
      %v1600 = vld [vmem:[%s1556 + $0x82] sm:$0xff]
      %v1601 = vld [vmem:[%s1556 + $0x92] sm:$0xff]
      %v1602 = vld [vmem:[%s1556 + $0x9a] sm:$0xff]
      %v1603 = vld [vmem:[%s1556 + $0xaa] sm:$0xff]
      %v1604 = vld [vmem:[%s1556 + $0xb2] sm:$0xff]
      %s1605 = sadd.s32 8, 2
      %s1606 = smul.u32 %s1605, 24
      %s1607 = scalar_lea.vmem [#allocation2], %s1606
      %v1608 = vld [vmem:[%s1607] sm:$0xff]
      %v1609 = vld [vmem:[%s1607 + $0x8] sm:$0xff]
      %v1610 = vld [vmem:[%s1607 + $0x18] sm:$0xff]
      %v1611 = vld [vmem:[%s1607 + $0x20] sm:$0xff]
      %v1612 = vld [vmem:[%s1607 + $0x30] sm:$0xff]
      %v1613 = vld [vmem:[%s1607 + $0x38] sm:$0xff]
      %v1614 = vld [vmem:[%s1607 + $0x48] sm:$0xff]
      %v1615 = vld [vmem:[%s1607 + $0x50] sm:$0xff]
      %v1616 = vld [vmem:[%s1607 + $0x60] sm:$0xff]
      %v1617 = vld [vmem:[%s1607 + $0x68] sm:$0xff]
      %v1618 = vld [vmem:[%s1607 + $0x78] sm:$0xff]
      %v1619 = vld [vmem:[%s1607 + $0x80] sm:$0xff]
      %v1620 = vld [vmem:[%s1607 + $0x90] sm:$0xff]
      %v1621 = vld [vmem:[%s1607 + $0x98] sm:$0xff]
      %v1622 = vld [vmem:[%s1607 + $0xa8] sm:$0xff]
      %v1623 = vld [vmem:[%s1607 + $0xb0] sm:$0xff]
      %v1624 = vld [vmem:[%s1607 + $0x1] sm:$0xff]
      %v1625 = vld [vmem:[%s1607 + $0x9] sm:$0xff]
      %v1626 = vld [vmem:[%s1607 + $0x19] sm:$0xff]
      %v1627 = vld [vmem:[%s1607 + $0x21] sm:$0xff]
      %v1628 = vld [vmem:[%s1607 + $0x31] sm:$0xff]
      %v1629 = vld [vmem:[%s1607 + $0x39] sm:$0xff]
      %v1630 = vld [vmem:[%s1607 + $0x49] sm:$0xff]
      %v1631 = vld [vmem:[%s1607 + $0x51] sm:$0xff]
      %v1632 = vld [vmem:[%s1607 + $0x61] sm:$0xff]
      %v1633 = vld [vmem:[%s1607 + $0x69] sm:$0xff]
      %v1634 = vld [vmem:[%s1607 + $0x79] sm:$0xff]
      %v1635 = vld [vmem:[%s1607 + $0x81] sm:$0xff]
      %v1636 = vld [vmem:[%s1607 + $0x91] sm:$0xff]
      %v1637 = vld [vmem:[%s1607 + $0x99] sm:$0xff]
      %v1638 = vld [vmem:[%s1607 + $0xa9] sm:$0xff]
      %v1639 = vld [vmem:[%s1607 + $0xb1] sm:$0xff]
      %v1640 = vld [vmem:[%s1607 + $0x2] sm:$0xff]
      %v1641 = vld [vmem:[%s1607 + $0xa] sm:$0xff]
      %v1642 = vld [vmem:[%s1607 + $0x1a] sm:$0xff]
      %v1643 = vld [vmem:[%s1607 + $0x22] sm:$0xff]
      %v1644 = vld [vmem:[%s1607 + $0x32] sm:$0xff]
      %v1645 = vld [vmem:[%s1607 + $0x3a] sm:$0xff]
      %v1646 = vld [vmem:[%s1607 + $0x4a] sm:$0xff]
      %v1647 = vld [vmem:[%s1607 + $0x52] sm:$0xff]
      %v1648 = vld [vmem:[%s1607 + $0x62] sm:$0xff]
      %v1649 = vld [vmem:[%s1607 + $0x6a] sm:$0xff]
      %v1650 = vld [vmem:[%s1607 + $0x7a] sm:$0xff]
      %v1651 = vld [vmem:[%s1607 + $0x82] sm:$0xff]
      %v1652 = vld [vmem:[%s1607 + $0x92] sm:$0xff]
      %v1653 = vld [vmem:[%s1607 + $0x9a] sm:$0xff]
      %v1654 = vld [vmem:[%s1607 + $0xaa] sm:$0xff]
      %v1655 = vld [vmem:[%s1607 + $0xb2] sm:$0xff]
      %v1656 = vld [vmem:[%s2] sm:$0xff]
      %v1657 = vld [vmem:[%s2 + $0x8] sm:$0xff]
      %v1658 = vld [vmem:[%s2 + $0x10] sm:$0xff]
      %v1659 = vld [vmem:[%s2 + $0x18] sm:$0xff]
      %v1660 = vld [vmem:[%s2 + $0x20] sm:$0xff]
      %v1661 = vld [vmem:[%s2 + $0x28] sm:$0xff]
      %v1662 = vld [vmem:[%s2 + $0x30] sm:$0xff]
      %v1663 = vld [vmem:[%s2 + $0x38] sm:$0xff]
      %v1664 = vld [vmem:[%s2 + $0x40] sm:$0xff]
      %v1665 = vld [vmem:[%s2 + $0x48] sm:$0xff]
      %v1666 = vld [vmem:[%s2 + $0x50] sm:$0xff]
      %v1667 = vld [vmem:[%s2 + $0x58] sm:$0xff]
      %v1668 = vld [vmem:[%s2 + $0x60] sm:$0xff]
      %v1669 = vld [vmem:[%s2 + $0x68] sm:$0xff]
      %v1670 = vld [vmem:[%s2 + $0x70] sm:$0xff]
      %v1671 = vld [vmem:[%s2 + $0x78] sm:$0xff]
      %v1672 = vld [vmem:[%s2 + $0x80] sm:$0xff]
      %v1673 = vld [vmem:[%s2 + $0x88] sm:$0xff]
      %v1674 = vld [vmem:[%s2 + $0x90] sm:$0xff]
      %v1675 = vld [vmem:[%s2 + $0x98] sm:$0xff]
      %v1676 = vld [vmem:[%s2 + $0xa0] sm:$0xff]
      %v1677 = vld [vmem:[%s2 + $0xa8] sm:$0xff]
      %v1678 = vld [vmem:[%s2 + $0xb0] sm:$0xff]
      %v1679 = vld [vmem:[%s2 + $0xb8] sm:$0xff]
      %v1680 = vld [vmem:[%s2 + $0xc0] sm:$0xff]
      %v1681 = vld [vmem:[%s2 + $0xc8] sm:$0xff]
      %v1682 = vld [vmem:[%s2 + $0xd0] sm:$0xff]
      %v1683 = vld [vmem:[%s2 + $0xd8] sm:$0xff]
      %v1684 = vld [vmem:[%s2 + $0xe0] sm:$0xff]
      %v1685 = vld [vmem:[%s2 + $0xe8] sm:$0xff]
      %v1686 = vld [vmem:[%s2 + $0xf0] sm:$0xff]
      %v1687 = vld [vmem:[%s2 + $0xf8] sm:$0xff]
      %v1688 = vld [vmem:[%s2 + $0x100] sm:$0xff]
      %v1689 = vld [vmem:[%s2 + $0x108] sm:$0xff]
      %v1690 = vld [vmem:[%s2 + $0x110] sm:$0xff]
      %v1691 = vld [vmem:[%s2 + $0x118] sm:$0xff]
      %v1692 = vld [vmem:[%s2 + $0x120] sm:$0xff]
      %v1693 = vld [vmem:[%s2 + $0x128] sm:$0xff]
      %v1694 = vld [vmem:[%s2 + $0x130] sm:$0xff]
      %v1695 = vld [vmem:[%s2 + $0x138] sm:$0xff]
      %v1696 = vld [vmem:[%s2 + $0x140] sm:$0xff]
      %v1697 = vld [vmem:[%s2 + $0x148] sm:$0xff]
      %v1698 = vld [vmem:[%s2 + $0x150] sm:$0xff]
      %v1699 = vld [vmem:[%s2 + $0x158] sm:$0xff]
      %v1700 = vld [vmem:[%s2 + $0x160] sm:$0xff]
      %v1701 = vld [vmem:[%s2 + $0x168] sm:$0xff]
      %v1702 = vld [vmem:[%s2 + $0x170] sm:$0xff]
      %v1703 = vld [vmem:[%s2 + $0x178] sm:$0xff]
      %v1704 = vld [vmem:[%s2 + $0x180] sm:$0xff]
      %v1705 = vld [vmem:[%s2 + $0x188] sm:$0xff]
      %v1706 = vld [vmem:[%s2 + $0x190] sm:$0xff]
      %v1707 = vld [vmem:[%s2 + $0x198] sm:$0xff]
      %v1708 = vld [vmem:[%s2 + $0x1a0] sm:$0xff]
      %v1709 = vld [vmem:[%s2 + $0x1a8] sm:$0xff]
      %v1710 = vld [vmem:[%s2 + $0x1b0] sm:$0xff]
      %v1711 = vld [vmem:[%s2 + $0x1b8] sm:$0xff]
      %v1712 = vld [vmem:[%s2 + $0x1c0] sm:$0xff]
      %v1713 = vld [vmem:[%s2 + $0x1c8] sm:$0xff]
      %v1714 = vld [vmem:[%s2 + $0x1d0] sm:$0xff]
      %v1715 = vld [vmem:[%s2 + $0x1d8] sm:$0xff]
      %v1716 = vld [vmem:[%s2 + $0x1e0] sm:$0xff]
      %v1717 = vld [vmem:[%s2 + $0x1e8] sm:$0xff]
      %v1718 = vld [vmem:[%s2 + $0x1f0] sm:$0xff]
      %v1719 = vld [vmem:[%s2 + $0x1f8] sm:$0xff]
      %v1720 = vld [vmem:[%s2 + $0x200] sm:$0xff]
      %v1721 = vld [vmem:[%s2 + $0x208] sm:$0xff]
      %v1722 = vld [vmem:[%s2 + $0x210] sm:$0xff]
      %v1723 = vld [vmem:[%s2 + $0x218] sm:$0xff]
      %v1724 = vld [vmem:[%s2 + $0x220] sm:$0xff]
      %v1725 = vld [vmem:[%s2 + $0x228] sm:$0xff]
      %v1726 = vld [vmem:[%s2 + $0x230] sm:$0xff]
      %v1727 = vld [vmem:[%s2 + $0x238] sm:$0xff]
      %v1728 = vld [vmem:[%s2 + $0x240] sm:$0xff]
      %v1729 = vld [vmem:[%s2 + $0x248] sm:$0xff]
      %v1730 = vld [vmem:[%s2 + $0x250] sm:$0xff]
      %v1731 = vld [vmem:[%s2 + $0x258] sm:$0xff]
      %v1732 = vld [vmem:[%s2 + $0x260] sm:$0xff]
      %v1733 = vld [vmem:[%s2 + $0x268] sm:$0xff]
      %v1734 = vld [vmem:[%s2 + $0x270] sm:$0xff]
      %v1735 = vld [vmem:[%s2 + $0x278] sm:$0xff]
      %v1736 = vld [vmem:[%s2 + $0x280] sm:$0xff]
      %v1737 = vld [vmem:[%s2 + $0x288] sm:$0xff]
      %v1738 = vld [vmem:[%s2 + $0x290] sm:$0xff]
      %v1739 = vld [vmem:[%s2 + $0x298] sm:$0xff]
      %v1740 = vld [vmem:[%s2 + $0x2a0] sm:$0xff]
      %v1741 = vld [vmem:[%s2 + $0x2a8] sm:$0xff]
      %v1742 = vld [vmem:[%s2 + $0x2b0] sm:$0xff]
      %v1743 = vld [vmem:[%s2 + $0x2b8] sm:$0xff]
      %v1744 = vld [vmem:[%s2 + $0x2c0] sm:$0xff]
      %v1745 = vld [vmem:[%s2 + $0x2c8] sm:$0xff]
      %v1746 = vld [vmem:[%s2 + $0x2d0] sm:$0xff]
      %v1747 = vld [vmem:[%s2 + $0x2d8] sm:$0xff]
      %v1748 = vld [vmem:[%s2 + $0x2e0] sm:$0xff]
      %v1749 = vld [vmem:[%s2 + $0x2e8] sm:$0xff]
      %v1750 = vld [vmem:[%s2 + $0x2f0] sm:$0xff]
      %v1751 = vld [vmem:[%s2 + $0x2f8] sm:$0xff]
      %v1752 = vld [vmem:[%s2 + $0x300] sm:$0xff]
      %v1753 = vld [vmem:[%s2 + $0x308] sm:$0xff]
      %v1754 = vld [vmem:[%s2 + $0x310] sm:$0xff]
      %v1755 = vld [vmem:[%s2 + $0x318] sm:$0xff]
      %v1756 = vld [vmem:[%s2 + $0x320] sm:$0xff]
      %v1757 = vld [vmem:[%s2 + $0x328] sm:$0xff]
      %v1758 = vld [vmem:[%s2 + $0x330] sm:$0xff]
      %v1759 = vld [vmem:[%s2 + $0x338] sm:$0xff]
      %v1760 = vld [vmem:[%s2 + $0x340] sm:$0xff]
      %v1761 = vld [vmem:[%s2 + $0x348] sm:$0xff]
      %v1762 = vld [vmem:[%s2 + $0x350] sm:$0xff]
      %v1763 = vld [vmem:[%s2 + $0x358] sm:$0xff]
      %v1764 = vld [vmem:[%s2 + $0x360] sm:$0xff]
      %v1765 = vld [vmem:[%s2 + $0x368] sm:$0xff]
      %v1766 = vld [vmem:[%s2 + $0x370] sm:$0xff]
      %v1767 = vld [vmem:[%s2 + $0x378] sm:$0xff]
      %v1768 = vld [vmem:[%s2 + $0x380] sm:$0xff]
      %v1769 = vld [vmem:[%s2 + $0x388] sm:$0xff]
      %v1770 = vld [vmem:[%s2 + $0x390] sm:$0xff]
      %v1771 = vld [vmem:[%s2 + $0x398] sm:$0xff]
      %v1772 = vld [vmem:[%s2 + $0x3a0] sm:$0xff]
      %v1773 = vld [vmem:[%s2 + $0x3a8] sm:$0xff]
      %v1774 = vld [vmem:[%s2 + $0x3b0] sm:$0xff]
      %v1775 = vld [vmem:[%s2 + $0x3b8] sm:$0xff]
      %v1776 = vld [vmem:[%s2 + $0x3c0] sm:$0xff]
      %v1777 = vld [vmem:[%s2 + $0x3c8] sm:$0xff]
      %v1778 = vld [vmem:[%s2 + $0x3d0] sm:$0xff]
      %v1779 = vld [vmem:[%s2 + $0x3d8] sm:$0xff]
      %v1780 = vld [vmem:[%s2 + $0x3e0] sm:$0xff]
      %v1781 = vld [vmem:[%s2 + $0x3e8] sm:$0xff]
      %v1782 = vld [vmem:[%s2 + $0x3f0] sm:$0xff]
      %v1783 = vld [vmem:[%s2 + $0x3f8] sm:$0xff]
      %v1784 = vld [vmem:[%s2 + $0x400] sm:$0xff]
      %v1785 = vld [vmem:[%s2 + $0x408] sm:$0xff]
      %v1786 = vld [vmem:[%s2 + $0x410] sm:$0xff]
      %v1787 = vld [vmem:[%s2 + $0x418] sm:$0xff]
      %v1788 = vld [vmem:[%s2 + $0x420] sm:$0xff]
      %v1789 = vld [vmem:[%s2 + $0x428] sm:$0xff]
      %v1790 = vld [vmem:[%s2 + $0x430] sm:$0xff]
      %v1791 = vld [vmem:[%s2 + $0x438] sm:$0xff]
      %v1792 = vld [vmem:[%s2 + $0x440] sm:$0xff]
      %v1793 = vld [vmem:[%s2 + $0x448] sm:$0xff]
      %v1794 = vld [vmem:[%s2 + $0x450] sm:$0xff]
      %v1795 = vld [vmem:[%s2 + $0x458] sm:$0xff]
      %v1796 = vld [vmem:[%s2 + $0x460] sm:$0xff]
      %v1797 = vld [vmem:[%s2 + $0x468] sm:$0xff]
      %v1798 = vld [vmem:[%s2 + $0x470] sm:$0xff]
      %v1799 = vld [vmem:[%s2 + $0x478] sm:$0xff]
      %1800 = vmatprep.subr.mxu0 0.0
      %1801 = vmatpush1.msra.mxu0 %v1671
      %1802 = vmatprep.subr.mxu0 0.0
      %1803 = vmatpush1.msra.mxu0 %v1670
      %1804 = vmatprep.subr.mxu0 0.0
      %1805 = vmatpush1.msra.mxu0 %v1669
      %1806 = vmatprep.subr.mxu0 0.0
      %1807 = vmatpush1.msra.mxu0 %v1668
      %1808 = vmatprep.subr.mxu0 0.0
      %1809 = vmatpush1.msra.mxu0 %v1667
      %1810 = vmatprep.subr.mxu0 0.0
      %1811 = vmatpush1.msra.mxu0 %v1666
      %1812 = vmatprep.subr.mxu0 0.0
      %1813 = vmatpush1.msra.mxu0 %v1665
      %1814 = vmatprep.subr.mxu0 0.0
      %1815 = vmatpush1.msra.mxu0 %v1664
      %1816 = vmatprep.subr.mxu0 0.0
      %1817 = vmatpush1.msra.mxu0 %v1663
      %1818 = vmatprep.subr.mxu0 0.0
      %1819 = vmatpush1.msra.mxu0 %v1662
      %1820 = vmatprep.subr.mxu0 0.0
      %1821 = vmatpush1.msra.mxu0 %v1661
      %1822 = vmatprep.subr.mxu0 0.0
      %1823 = vmatpush1.msra.mxu0 %v1660
      %1824 = vmatprep.subr.mxu0 0.0
      %1825 = vmatpush1.msra.mxu0 %v1659
      %1826 = vmatprep.subr.mxu0 0.0
      %1827 = vmatpush1.msra.mxu0 %v1658
      %1828 = vmatprep.subr.mxu0 0.0
      %1829 = vmatpush1.msra.mxu0 %v1657
      %1830 = vmatprep.subr.mxu0 0.0
      %1831 = vmatpush1.msra.mxu0 %v1656
      %1832 = vmatprep.subr.mxu0 0.0
      %1833 = vmatpush2.msra.mxu0 %v1687
      %1834 = vmatprep.subr.mxu0 0.0
      %1835 = vmatpush2.msra.mxu0 %v1686
      %1836 = vmatprep.subr.mxu0 0.0
      %1837 = vmatpush2.msra.mxu0 %v1685
      %1838 = vmatprep.subr.mxu0 0.0
      %1839 = vmatpush2.msra.mxu0 %v1684
      %1840 = vmatprep.subr.mxu0 0.0
      %1841 = vmatpush2.msra.mxu0 %v1683
      %1842 = vmatprep.subr.mxu0 0.0
      %1843 = vmatpush2.msra.mxu0 %v1682
      %1844 = vmatprep.subr.mxu0 0.0
      %1845 = vmatpush2.msra.mxu0 %v1681
      %1846 = vmatprep.subr.mxu0 0.0
      %1847 = vmatpush2.msra.mxu0 %v1680
      %1848 = vmatprep.subr.mxu0 0.0
      %1849 = vmatpush2.msra.mxu0 %v1679
      %1850 = vmatprep.subr.mxu0 0.0
      %1851 = vmatpush2.msra.mxu0 %v1678
      %1852 = vmatprep.subr.mxu0 0.0
      %1853 = vmatpush2.msra.mxu0 %v1677
      %1854 = vmatprep.subr.mxu0 0.0
      %1855 = vmatpush2.msra.mxu0 %v1676
      %1856 = vmatprep.subr.mxu0 0.0
      %1857 = vmatpush2.msra.mxu0 %v1675
      %1858 = vmatprep.subr.mxu0 0.0
      %1859 = vmatpush2.msra.mxu0 %v1674
      %1860 = vmatprep.subr.mxu0 0.0
      %1861 = vmatpush2.msra.mxu0 %v1673
      %1862 = vmatprep.subr.mxu0 0.0
      %1863 = vmatpush2.msra.mxu0 %v1672
      %1864 = vmatprep.mubr.f32.mxu0 %v1522
      %1865 = vmatmul.mubr.f32.gmra.mxu0 %v1506
      %v1866 = vpop.f32.mrf.mxu0
      %v1867 = vadd.f32 0.0, %v1866
      %v1868 = vpop.f32.mrf.mxu0
      %1869 = vmatprep.mubr.f32.mxu0 %v1523
      %1870 = vmatmul.mubr.f32.gmra.mxu0 %v1507
      %v1871 = vpop.f32.mrf.mxu0
      %v1872 = vadd.f32 0.0, %v1871
      %v1873 = vpop.f32.mrf.mxu0
      %1874 = vmatprep.mubr.f32.mxu0 %v1524
      %1875 = vmatmul.mubr.f32.gmra.mxu0 %v1508
      %v1876 = vpop.f32.mrf.mxu0
      %v1877 = vadd.f32 0.0, %v1876
      %v1878 = vpop.f32.mrf.mxu0
      %1879 = vmatprep.mubr.f32.mxu0 %v1525
      %1880 = vmatmul.mubr.f32.gmra.mxu0 %v1509
      %v1881 = vpop.f32.mrf.mxu0
      %v1882 = vadd.f32 0.0, %v1881
      %v1883 = vpop.f32.mrf.mxu0
      %1884 = vmatprep.mubr.f32.mxu0 %v1526
      %1885 = vmatmul.mubr.f32.gmra.mxu0 %v1510
      %v1886 = vpop.f32.mrf.mxu0
      %v1887 = vadd.f32 0.0, %v1886
      %v1888 = vpop.f32.mrf.mxu0
      %1889 = vmatprep.mubr.f32.mxu0 %v1527
      %1890 = vmatmul.mubr.f32.gmra.mxu0 %v1511
      %v1891 = vpop.f32.mrf.mxu0
      %v1892 = vadd.f32 0.0, %v1891
      %v1893 = vpop.f32.mrf.mxu0
      %1894 = vmatprep.mubr.f32.mxu0 %v1528
      %1895 = vmatmul.mubr.f32.gmra.mxu0 %v1512
      %v1896 = vpop.f32.mrf.mxu0
      %v1897 = vadd.f32 0.0, %v1896
      %v1898 = vpop.f32.mrf.mxu0
      %1899 = vmatprep.mubr.f32.mxu0 %v1529
      %1900 = vmatmul.mubr.f32.gmra.mxu0 %v1513
      %v1901 = vpop.f32.mrf.mxu0
      %v1902 = vadd.f32 0.0, %v1901
      %v1903 = vpop.f32.mrf.mxu0
      %1904 = vmatprep.mubr.f32.mxu0 %v1530
      %1905 = vmatmul.mubr.f32.gmra.mxu0 %v1514
      %v1906 = vpop.f32.mrf.mxu0
      %v1907 = vadd.f32 0.0, %v1906
      %v1908 = vpop.f32.mrf.mxu0
      %1909 = vmatprep.mubr.f32.mxu0 %v1531
      %1910 = vmatmul.mubr.f32.gmra.mxu0 %v1515
      %v1911 = vpop.f32.mrf.mxu0
      %v1912 = vadd.f32 0.0, %v1911
      %v1913 = vpop.f32.mrf.mxu0
      %1914 = vmatprep.mubr.f32.mxu0 %v1532
      %1915 = vmatmul.mubr.f32.gmra.mxu0 %v1516
      %v1916 = vpop.f32.mrf.mxu0
      %v1917 = vadd.f32 0.0, %v1916
      %v1918 = vpop.f32.mrf.mxu0
      %1919 = vmatprep.mubr.f32.mxu0 %v1533
      %1920 = vmatmul.mubr.f32.gmra.mxu0 %v1517
      %v1921 = vpop.f32.mrf.mxu0
      %v1922 = vadd.f32 0.0, %v1921
      %v1923 = vpop.f32.mrf.mxu0
      %1924 = vmatprep.mubr.f32.mxu0 %v1534
      %1925 = vmatmul.mubr.f32.gmra.mxu0 %v1518
      %v1926 = vpop.f32.mrf.mxu0
      %v1927 = vadd.f32 0.0, %v1926
      %v1928 = vpop.f32.mrf.mxu0
      %1929 = vmatprep.mubr.f32.mxu0 %v1535
      %1930 = vmatmul.mubr.f32.gmra.mxu0 %v1519
      %v1931 = vpop.f32.mrf.mxu0
      %v1932 = vadd.f32 0.0, %v1931
      %v1933 = vpop.f32.mrf.mxu0
      %1934 = vmatprep.mubr.f32.mxu0 %v1536
      %1935 = vmatmul.mubr.f32.gmra.mxu0 %v1520
      %v1936 = vpop.f32.mrf.mxu0
      %v1937 = vadd.f32 0.0, %v1936
      %v1938 = vpop.f32.mrf.mxu0
      %1939 = vmatprep.mubr.f32.mxu0 %v1537
      %1940 = vmatmul.mubr.f32.gmra.mxu0 %v1521
      %v1941 = vpop.f32.mrf.mxu0
      %v1942 = vadd.f32 0.0, %v1941
      %v1943 = vpop.f32.mrf.mxu0
      %1944 = vdwg.mxu0
      %1945 = vmatprep.subr.mxu0 0.0
      %1946 = vmatpush1.msra.mxu0 %v1703
      %1947 = vmatprep.subr.mxu0 0.0
      %1948 = vmatpush1.msra.mxu0 %v1702
      %1949 = vmatprep.subr.mxu0 0.0
      %1950 = vmatpush1.msra.mxu0 %v1701
      %1951 = vmatprep.subr.mxu0 0.0
      %1952 = vmatpush1.msra.mxu0 %v1700
      %1953 = vmatprep.subr.mxu0 0.0
      %1954 = vmatpush1.msra.mxu0 %v1699
      %1955 = vmatprep.subr.mxu0 0.0
      %1956 = vmatpush1.msra.mxu0 %v1698
      %1957 = vmatprep.subr.mxu0 0.0
      %1958 = vmatpush1.msra.mxu0 %v1697
      %1959 = vmatprep.subr.mxu0 0.0
      %1960 = vmatpush1.msra.mxu0 %v1696
      %1961 = vmatprep.subr.mxu0 0.0
      %1962 = vmatpush1.msra.mxu0 %v1695
      %1963 = vmatprep.subr.mxu0 0.0
      %1964 = vmatpush1.msra.mxu0 %v1694
      %1965 = vmatprep.subr.mxu0 0.0
      %1966 = vmatpush1.msra.mxu0 %v1693
      %1967 = vmatprep.subr.mxu0 0.0
      %1968 = vmatpush1.msra.mxu0 %v1692
      %1969 = vmatprep.subr.mxu0 0.0
      %1970 = vmatpush1.msra.mxu0 %v1691
      %1971 = vmatprep.subr.mxu0 0.0
      %1972 = vmatpush1.msra.mxu0 %v1690
      %1973 = vmatprep.subr.mxu0 0.0
      %1974 = vmatpush1.msra.mxu0 %v1689
      %1975 = vmatprep.subr.mxu0 0.0
      %1976 = vmatpush1.msra.mxu0 %v1688
      %1977 = vmatprep.subr.mxu0 0.0
      %1978 = vmatpush2.msra.mxu0 %v1719
      %1979 = vmatprep.subr.mxu0 0.0
      %1980 = vmatpush2.msra.mxu0 %v1718
      %1981 = vmatprep.subr.mxu0 0.0
      %1982 = vmatpush2.msra.mxu0 %v1717
      %1983 = vmatprep.subr.mxu0 0.0
      %1984 = vmatpush2.msra.mxu0 %v1716
      %1985 = vmatprep.subr.mxu0 0.0
      %1986 = vmatpush2.msra.mxu0 %v1715
      %1987 = vmatprep.subr.mxu0 0.0
      %1988 = vmatpush2.msra.mxu0 %v1714
      %1989 = vmatprep.subr.mxu0 0.0
      %1990 = vmatpush2.msra.mxu0 %v1713
      %1991 = vmatprep.subr.mxu0 0.0
      %1992 = vmatpush2.msra.mxu0 %v1712
      %1993 = vmatprep.subr.mxu0 0.0
      %1994 = vmatpush2.msra.mxu0 %v1711
      %1995 = vmatprep.subr.mxu0 0.0
      %1996 = vmatpush2.msra.mxu0 %v1710
      %1997 = vmatprep.subr.mxu0 0.0
      %1998 = vmatpush2.msra.mxu0 %v1709
      %1999 = vmatprep.subr.mxu0 0.0
      %2000 = vmatpush2.msra.mxu0 %v1708
      %2001 = vmatprep.subr.mxu0 0.0
      %2002 = vmatpush2.msra.mxu0 %v1707
      %2003 = vmatprep.subr.mxu0 0.0
      %2004 = vmatpush2.msra.mxu0 %v1706
      %2005 = vmatprep.subr.mxu0 0.0
      %2006 = vmatpush2.msra.mxu0 %v1705
      %2007 = vmatprep.subr.mxu0 0.0
      %2008 = vmatpush2.msra.mxu0 %v1704
      %2009 = vmatprep.mubr.f32.mxu0 %v1557
      %2010 = vmatmul.mubr.f32.gmra.mxu0 %v1538
      %v2011 = vpop.f32.mrf.mxu0
      %v2012 = vadd.f32 %v1867, %v2011
      %v2013 = vpop.f32.mrf.mxu0
      %2014 = vmatprep.mubr.f32.mxu0 %v1558
      %2015 = vmatmul.mubr.f32.gmra.mxu0 %v1539
      %v2016 = vpop.f32.mrf.mxu0
      %v2017 = vadd.f32 %v1872, %v2016
      %v2018 = vpop.f32.mrf.mxu0
      %2019 = vmatprep.mubr.f32.mxu0 %v1559
      %2020 = vmatmul.mubr.f32.gmra.mxu0 %v1540
      %v2021 = vpop.f32.mrf.mxu0
      %v2022 = vadd.f32 %v1877, %v2021
      %v2023 = vpop.f32.mrf.mxu0
      %2024 = vmatprep.mubr.f32.mxu0 %v1560
      %2025 = vmatmul.mubr.f32.gmra.mxu0 %v1541
      %v2026 = vpop.f32.mrf.mxu0
      %v2027 = vadd.f32 %v1882, %v2026
      %v2028 = vpop.f32.mrf.mxu0
      %2029 = vmatprep.mubr.f32.mxu0 %v1561
      %2030 = vmatmul.mubr.f32.gmra.mxu0 %v1542
      %v2031 = vpop.f32.mrf.mxu0
      %v2032 = vadd.f32 %v1887, %v2031
      %v2033 = vpop.f32.mrf.mxu0
      %2034 = vmatprep.mubr.f32.mxu0 %v1562
      %2035 = vmatmul.mubr.f32.gmra.mxu0 %v1543
      %v2036 = vpop.f32.mrf.mxu0
      %v2037 = vadd.f32 %v1892, %v2036
      %v2038 = vpop.f32.mrf.mxu0
      %2039 = vmatprep.mubr.f32.mxu0 %v1563
      %2040 = vmatmul.mubr.f32.gmra.mxu0 %v1544
      %v2041 = vpop.f32.mrf.mxu0
      %v2042 = vadd.f32 %v1897, %v2041
      %v2043 = vpop.f32.mrf.mxu0
      %2044 = vmatprep.mubr.f32.mxu0 %v1564
      %2045 = vmatmul.mubr.f32.gmra.mxu0 %v1545
      %v2046 = vpop.f32.mrf.mxu0
      %v2047 = vadd.f32 %v1902, %v2046
      %v2048 = vpop.f32.mrf.mxu0
      %2049 = vmatprep.mubr.f32.mxu0 %v1565
      %2050 = vmatmul.mubr.f32.gmra.mxu0 %v1546
      %v2051 = vpop.f32.mrf.mxu0
      %v2052 = vadd.f32 %v1907, %v2051
      %v2053 = vpop.f32.mrf.mxu0
      %2054 = vmatprep.mubr.f32.mxu0 %v1566
      %2055 = vmatmul.mubr.f32.gmra.mxu0 %v1547
      %v2056 = vpop.f32.mrf.mxu0
      %v2057 = vadd.f32 %v1912, %v2056
      %v2058 = vpop.f32.mrf.mxu0
      %2059 = vmatprep.mubr.f32.mxu0 %v1567
      %2060 = vmatmul.mubr.f32.gmra.mxu0 %v1548
      %v2061 = vpop.f32.mrf.mxu0
      %v2062 = vadd.f32 %v1917, %v2061
      %v2063 = vpop.f32.mrf.mxu0
      %2064 = vmatprep.mubr.f32.mxu0 %v1568
      %2065 = vmatmul.mubr.f32.gmra.mxu0 %v1549
      %v2066 = vpop.f32.mrf.mxu0
      %v2067 = vadd.f32 %v1922, %v2066
      %v2068 = vpop.f32.mrf.mxu0
      %2069 = vmatprep.mubr.f32.mxu0 %v1569
      %2070 = vmatmul.mubr.f32.gmra.mxu0 %v1550
      %v2071 = vpop.f32.mrf.mxu0
      %v2072 = vadd.f32 %v1927, %v2071
      %v2073 = vpop.f32.mrf.mxu0
      %2074 = vmatprep.mubr.f32.mxu0 %v1570
      %2075 = vmatmul.mubr.f32.gmra.mxu0 %v1551
      %v2076 = vpop.f32.mrf.mxu0
      %v2077 = vadd.f32 %v1932, %v2076
      %v2078 = vpop.f32.mrf.mxu0
      %2079 = vmatprep.mubr.f32.mxu0 %v1571
      %2080 = vmatmul.mubr.f32.gmra.mxu0 %v1552
      %v2081 = vpop.f32.mrf.mxu0
      %v2082 = vadd.f32 %v1937, %v2081
      %v2083 = vpop.f32.mrf.mxu0
      %2084 = vmatprep.mubr.f32.mxu0 %v1572
      %2085 = vmatmul.mubr.f32.gmra.mxu0 %v1553
      %v2086 = vpop.f32.mrf.mxu0
      %v2087 = vadd.f32 %v1942, %v2086
      %v2088 = vpop.f32.mrf.mxu0
      %2089 = vdwg.mxu0
      %2090 = vmatprep.subr.mxu0 0.0
      %2091 = vmatpush1.msra.mxu0 %v1735
      %2092 = vmatprep.subr.mxu0 0.0
      %2093 = vmatpush1.msra.mxu0 %v1734
      %2094 = vmatprep.subr.mxu0 0.0
      %2095 = vmatpush1.msra.mxu0 %v1733
      %2096 = vmatprep.subr.mxu0 0.0
      %2097 = vmatpush1.msra.mxu0 %v1732
      %2098 = vmatprep.subr.mxu0 0.0
      %2099 = vmatpush1.msra.mxu0 %v1731
      %2100 = vmatprep.subr.mxu0 0.0
      %2101 = vmatpush1.msra.mxu0 %v1730
      %2102 = vmatprep.subr.mxu0 0.0
      %2103 = vmatpush1.msra.mxu0 %v1729
      %2104 = vmatprep.subr.mxu0 0.0
      %2105 = vmatpush1.msra.mxu0 %v1728
      %2106 = vmatprep.subr.mxu0 0.0
      %2107 = vmatpush1.msra.mxu0 %v1727
      %2108 = vmatprep.subr.mxu0 0.0
      %2109 = vmatpush1.msra.mxu0 %v1726
      %2110 = vmatprep.subr.mxu0 0.0
      %2111 = vmatpush1.msra.mxu0 %v1725
      %2112 = vmatprep.subr.mxu0 0.0
      %2113 = vmatpush1.msra.mxu0 %v1724
      %2114 = vmatprep.subr.mxu0 0.0
      %2115 = vmatpush1.msra.mxu0 %v1723
      %2116 = vmatprep.subr.mxu0 0.0
      %2117 = vmatpush1.msra.mxu0 %v1722
      %2118 = vmatprep.subr.mxu0 0.0
      %2119 = vmatpush1.msra.mxu0 %v1721
      %2120 = vmatprep.subr.mxu0 0.0
      %2121 = vmatpush1.msra.mxu0 %v1720
      %2122 = vmatprep.subr.mxu0 0.0
      %2123 = vmatpush2.msra.mxu0 %v1751
      %2124 = vmatprep.subr.mxu0 0.0
      %2125 = vmatpush2.msra.mxu0 %v1750
      %2126 = vmatprep.subr.mxu0 0.0
      %2127 = vmatpush2.msra.mxu0 %v1749
      %2128 = vmatprep.subr.mxu0 0.0
      %2129 = vmatpush2.msra.mxu0 %v1748
      %2130 = vmatprep.subr.mxu0 0.0
      %2131 = vmatpush2.msra.mxu0 %v1747
      %2132 = vmatprep.subr.mxu0 0.0
      %2133 = vmatpush2.msra.mxu0 %v1746
      %2134 = vmatprep.subr.mxu0 0.0
      %2135 = vmatpush2.msra.mxu0 %v1745
      %2136 = vmatprep.subr.mxu0 0.0
      %2137 = vmatpush2.msra.mxu0 %v1744
      %2138 = vmatprep.subr.mxu0 0.0
      %2139 = vmatpush2.msra.mxu0 %v1743
      %2140 = vmatprep.subr.mxu0 0.0
      %2141 = vmatpush2.msra.mxu0 %v1742
      %2142 = vmatprep.subr.mxu0 0.0
      %2143 = vmatpush2.msra.mxu0 %v1741
      %2144 = vmatprep.subr.mxu0 0.0
      %2145 = vmatpush2.msra.mxu0 %v1740
      %2146 = vmatprep.subr.mxu0 0.0
      %2147 = vmatpush2.msra.mxu0 %v1739
      %2148 = vmatprep.subr.mxu0 0.0
      %2149 = vmatpush2.msra.mxu0 %v1738
      %2150 = vmatprep.subr.mxu0 0.0
      %2151 = vmatpush2.msra.mxu0 %v1737
      %2152 = vmatprep.subr.mxu0 0.0
      %2153 = vmatpush2.msra.mxu0 %v1736
      %2154 = vmatprep.mubr.f32.mxu0 %v1589
      %2155 = vmatmul.mubr.f32.gmra.mxu0 %v1573
      %v2156 = vpop.f32.mrf.mxu0
      %v2157 = vadd.f32 %v2012, %v2156
      %v2158 = vpop.f32.mrf.mxu0
      %2159 = vmatprep.mubr.f32.mxu0 %v1590
      %2160 = vmatmul.mubr.f32.gmra.mxu0 %v1574
      %v2161 = vpop.f32.mrf.mxu0
      %v2162 = vadd.f32 %v2017, %v2161
      %v2163 = vpop.f32.mrf.mxu0
      %2164 = vmatprep.mubr.f32.mxu0 %v1591
      %2165 = vmatmul.mubr.f32.gmra.mxu0 %v1575
      %v2166 = vpop.f32.mrf.mxu0
      %v2167 = vadd.f32 %v2022, %v2166
      %v2168 = vpop.f32.mrf.mxu0
      %2169 = vmatprep.mubr.f32.mxu0 %v1592
      %2170 = vmatmul.mubr.f32.gmra.mxu0 %v1576
      %v2171 = vpop.f32.mrf.mxu0
      %v2172 = vadd.f32 %v2027, %v2171
      %v2173 = vpop.f32.mrf.mxu0
      %2174 = vmatprep.mubr.f32.mxu0 %v1593
      %2175 = vmatmul.mubr.f32.gmra.mxu0 %v1577
      %v2176 = vpop.f32.mrf.mxu0
      %v2177 = vadd.f32 %v2032, %v2176
      %v2178 = vpop.f32.mrf.mxu0
      %2179 = vmatprep.mubr.f32.mxu0 %v1594
      %2180 = vmatmul.mubr.f32.gmra.mxu0 %v1578
      %v2181 = vpop.f32.mrf.mxu0
      %v2182 = vadd.f32 %v2037, %v2181
      %v2183 = vpop.f32.mrf.mxu0
      %2184 = vmatprep.mubr.f32.mxu0 %v1595
      %2185 = vmatmul.mubr.f32.gmra.mxu0 %v1579
      %v2186 = vpop.f32.mrf.mxu0
      %v2187 = vadd.f32 %v2042, %v2186
      %v2188 = vpop.f32.mrf.mxu0
      %2189 = vmatprep.mubr.f32.mxu0 %v1596
      %2190 = vmatmul.mubr.f32.gmra.mxu0 %v1580
      %v2191 = vpop.f32.mrf.mxu0
      %v2192 = vadd.f32 %v2047, %v2191
      %v2193 = vpop.f32.mrf.mxu0
      %2194 = vmatprep.mubr.f32.mxu0 %v1597
      %2195 = vmatmul.mubr.f32.gmra.mxu0 %v1581
      %v2196 = vpop.f32.mrf.mxu0
      %v2197 = vadd.f32 %v2052, %v2196
      %v2198 = vpop.f32.mrf.mxu0
      %2199 = vmatprep.mubr.f32.mxu0 %v1598
      %2200 = vmatmul.mubr.f32.gmra.mxu0 %v1582
      %v2201 = vpop.f32.mrf.mxu0
      %v2202 = vadd.f32 %v2057, %v2201
      %v2203 = vpop.f32.mrf.mxu0
      %2204 = vmatprep.mubr.f32.mxu0 %v1599
      %2205 = vmatmul.mubr.f32.gmra.mxu0 %v1583
      %v2206 = vpop.f32.mrf.mxu0
      %v2207 = vadd.f32 %v2062, %v2206
      %v2208 = vpop.f32.mrf.mxu0
      %2209 = vmatprep.mubr.f32.mxu0 %v1600
      %2210 = vmatmul.mubr.f32.gmra.mxu0 %v1584
      %v2211 = vpop.f32.mrf.mxu0
      %v2212 = vadd.f32 %v2067, %v2211
      %v2213 = vpop.f32.mrf.mxu0
      %2214 = vmatprep.mubr.f32.mxu0 %v1601
      %2215 = vmatmul.mubr.f32.gmra.mxu0 %v1585
      %v2216 = vpop.f32.mrf.mxu0
      %v2217 = vadd.f32 %v2072, %v2216
      %v2218 = vpop.f32.mrf.mxu0
      %2219 = vmatprep.mubr.f32.mxu0 %v1602
      %2220 = vmatmul.mubr.f32.gmra.mxu0 %v1586
      %v2221 = vpop.f32.mrf.mxu0
      %v2222 = vadd.f32 %v2077, %v2221
      %v2223 = vpop.f32.mrf.mxu0
      %2224 = vmatprep.mubr.f32.mxu0 %v1603
      %2225 = vmatmul.mubr.f32.gmra.mxu0 %v1587
      %v2226 = vpop.f32.mrf.mxu0
      %v2227 = vadd.f32 %v2082, %v2226
      %v2228 = vpop.f32.mrf.mxu0
      %2229 = vmatprep.mubr.f32.mxu0 %v1604
      %2230 = vmatmul.mubr.f32.gmra.mxu0 %v1588
      %v2231 = vpop.f32.mrf.mxu0
      %v2232 = vadd.f32 %v2087, %v2231
      %v2233 = vpop.f32.mrf.mxu0
      %2234 = vdwg.mxu0
      %2235 = vmatprep.subr.mxu0 0.0
      %2236 = vmatpush1.msra.mxu0 %v1767
      %2237 = vmatprep.subr.mxu0 0.0
      %2238 = vmatpush1.msra.mxu0 %v1766
      %2239 = vmatprep.subr.mxu0 0.0
      %2240 = vmatpush1.msra.mxu0 %v1765
      %2241 = vmatprep.subr.mxu0 0.0
      %2242 = vmatpush1.msra.mxu0 %v1764
      %2243 = vmatprep.subr.mxu0 0.0
      %2244 = vmatpush1.msra.mxu0 %v1763
      %2245 = vmatprep.subr.mxu0 0.0
      %2246 = vmatpush1.msra.mxu0 %v1762
      %2247 = vmatprep.subr.mxu0 0.0
      %2248 = vmatpush1.msra.mxu0 %v1761
      %2249 = vmatprep.subr.mxu0 0.0
      %2250 = vmatpush1.msra.mxu0 %v1760
      %2251 = vmatprep.subr.mxu0 0.0
      %2252 = vmatpush1.msra.mxu0 %v1759
      %2253 = vmatprep.subr.mxu0 0.0
      %2254 = vmatpush1.msra.mxu0 %v1758
      %2255 = vmatprep.subr.mxu0 0.0
      %2256 = vmatpush1.msra.mxu0 %v1757
      %2257 = vmatprep.subr.mxu0 0.0
      %2258 = vmatpush1.msra.mxu0 %v1756
      %2259 = vmatprep.subr.mxu0 0.0
      %2260 = vmatpush1.msra.mxu0 %v1755
      %2261 = vmatprep.subr.mxu0 0.0
      %2262 = vmatpush1.msra.mxu0 %v1754
      %2263 = vmatprep.subr.mxu0 0.0
      %2264 = vmatpush1.msra.mxu0 %v1753
      %2265 = vmatprep.subr.mxu0 0.0
      %2266 = vmatpush1.msra.mxu0 %v1752
      %2267 = vmatprep.subr.mxu0 0.0
      %2268 = vmatpush2.msra.mxu0 %v1783
      %2269 = vmatprep.subr.mxu0 0.0
      %2270 = vmatpush2.msra.mxu0 %v1782
      %2271 = vmatprep.subr.mxu0 0.0
      %2272 = vmatpush2.msra.mxu0 %v1781
      %2273 = vmatprep.subr.mxu0 0.0
      %2274 = vmatpush2.msra.mxu0 %v1780
      %2275 = vmatprep.subr.mxu0 0.0
      %2276 = vmatpush2.msra.mxu0 %v1779
      %2277 = vmatprep.subr.mxu0 0.0
      %2278 = vmatpush2.msra.mxu0 %v1778
      %2279 = vmatprep.subr.mxu0 0.0
      %2280 = vmatpush2.msra.mxu0 %v1777
      %2281 = vmatprep.subr.mxu0 0.0
      %2282 = vmatpush2.msra.mxu0 %v1776
      %2283 = vmatprep.subr.mxu0 0.0
      %2284 = vmatpush2.msra.mxu0 %v1775
      %2285 = vmatprep.subr.mxu0 0.0
      %2286 = vmatpush2.msra.mxu0 %v1774
      %2287 = vmatprep.subr.mxu0 0.0
      %2288 = vmatpush2.msra.mxu0 %v1773
      %2289 = vmatprep.subr.mxu0 0.0
      %2290 = vmatpush2.msra.mxu0 %v1772
      %2291 = vmatprep.subr.mxu0 0.0
      %2292 = vmatpush2.msra.mxu0 %v1771
      %2293 = vmatprep.subr.mxu0 0.0
      %2294 = vmatpush2.msra.mxu0 %v1770
      %2295 = vmatprep.subr.mxu0 0.0
      %2296 = vmatpush2.msra.mxu0 %v1769
      %2297 = vmatprep.subr.mxu0 0.0
      %2298 = vmatpush2.msra.mxu0 %v1768
      %2299 = vmatprep.mubr.f32.mxu0 %v1624
      %2300 = vmatmul.mubr.f32.gmra.mxu0 %v1608
      %v2301 = vpop.f32.mrf.mxu0
      %v2302 = vadd.f32 %v2157, %v2301
      %v2303 = vpop.f32.mrf.mxu0
      %2304 = vmatprep.mubr.f32.mxu0 %v1625
      %2305 = vmatmul.mubr.f32.gmra.mxu0 %v1609
      %v2306 = vpop.f32.mrf.mxu0
      %v2307 = vadd.f32 %v2162, %v2306
      %v2308 = vpop.f32.mrf.mxu0
      %2309 = vmatprep.mubr.f32.mxu0 %v1626
      %2310 = vmatmul.mubr.f32.gmra.mxu0 %v1610
      %v2311 = vpop.f32.mrf.mxu0
      %v2312 = vadd.f32 %v2167, %v2311
      %v2313 = vpop.f32.mrf.mxu0
      %2314 = vmatprep.mubr.f32.mxu0 %v1627
      %2315 = vmatmul.mubr.f32.gmra.mxu0 %v1611
      %v2316 = vpop.f32.mrf.mxu0
      %v2317 = vadd.f32 %v2172, %v2316
      %v2318 = vpop.f32.mrf.mxu0
      %2319 = vmatprep.mubr.f32.mxu0 %v1628
      %2320 = vmatmul.mubr.f32.gmra.mxu0 %v1612
      %v2321 = vpop.f32.mrf.mxu0
      %v2322 = vadd.f32 %v2177, %v2321
      %v2323 = vpop.f32.mrf.mxu0
      %2324 = vmatprep.mubr.f32.mxu0 %v1629
      %2325 = vmatmul.mubr.f32.gmra.mxu0 %v1613
      %v2326 = vpop.f32.mrf.mxu0
      %v2327 = vadd.f32 %v2182, %v2326
      %v2328 = vpop.f32.mrf.mxu0
      %2329 = vmatprep.mubr.f32.mxu0 %v1630
      %2330 = vmatmul.mubr.f32.gmra.mxu0 %v1614
      %v2331 = vpop.f32.mrf.mxu0
      %v2332 = vadd.f32 %v2187, %v2331
      %v2333 = vpop.f32.mrf.mxu0
      %2334 = vmatprep.mubr.f32.mxu0 %v1631
      %2335 = vmatmul.mubr.f32.gmra.mxu0 %v1615
      %v2336 = vpop.f32.mrf.mxu0
      %v2337 = vadd.f32 %v2192, %v2336
      %v2338 = vpop.f32.mrf.mxu0
      %2339 = vmatprep.mubr.f32.mxu0 %v1632
      %2340 = vmatmul.mubr.f32.gmra.mxu0 %v1616
      %v2341 = vpop.f32.mrf.mxu0
      %v2342 = vadd.f32 %v2197, %v2341
      %v2343 = vpop.f32.mrf.mxu0
      %2344 = vmatprep.mubr.f32.mxu0 %v1633
      %2345 = vmatmul.mubr.f32.gmra.mxu0 %v1617
      %v2346 = vpop.f32.mrf.mxu0
      %v2347 = vadd.f32 %v2202, %v2346
      %v2348 = vpop.f32.mrf.mxu0
      %2349 = vmatprep.mubr.f32.mxu0 %v1634
      %2350 = vmatmul.mubr.f32.gmra.mxu0 %v1618
      %v2351 = vpop.f32.mrf.mxu0
      %v2352 = vadd.f32 %v2207, %v2351
      %v2353 = vpop.f32.mrf.mxu0
      %2354 = vmatprep.mubr.f32.mxu0 %v1635
      %2355 = vmatmul.mubr.f32.gmra.mxu0 %v1619
      %v2356 = vpop.f32.mrf.mxu0
      %v2357 = vadd.f32 %v2212, %v2356
      %v2358 = vpop.f32.mrf.mxu0
      %2359 = vmatprep.mubr.f32.mxu0 %v1636
      %2360 = vmatmul.mubr.f32.gmra.mxu0 %v1620
      %v2361 = vpop.f32.mrf.mxu0
      %v2362 = vadd.f32 %v2217, %v2361
      %v2363 = vpop.f32.mrf.mxu0
      %2364 = vmatprep.mubr.f32.mxu0 %v1637
      %2365 = vmatmul.mubr.f32.gmra.mxu0 %v1621
      %v2366 = vpop.f32.mrf.mxu0
      %v2367 = vadd.f32 %v2222, %v2366
      %v2368 = vpop.f32.mrf.mxu0
      %2369 = vmatprep.mubr.f32.mxu0 %v1638
      %2370 = vmatmul.mubr.f32.gmra.mxu0 %v1622
      %v2371 = vpop.f32.mrf.mxu0
      %v2372 = vadd.f32 %v2227, %v2371
      %v2373 = vpop.f32.mrf.mxu0
      %2374 = vmatprep.mubr.f32.mxu0 %v1639
      %2375 = vmatmul.mubr.f32.gmra.mxu0 %v1623
      %v2376 = vpop.f32.mrf.mxu0
      %v2377 = vadd.f32 %v2232, %v2376
      %v2378 = vpop.f32.mrf.mxu0
      %2379 = vdwg.mxu0
      %2380 = vmatprep.subr.mxu0 0.0
      %2381 = vmatpush1.msra.mxu0 %v1799
      %2382 = vmatprep.subr.mxu0 0.0
      %2383 = vmatpush1.msra.mxu0 %v1798
      %2384 = vmatprep.subr.mxu0 0.0
      %2385 = vmatpush1.msra.mxu0 %v1797
      %2386 = vmatprep.subr.mxu0 0.0
      %2387 = vmatpush1.msra.mxu0 %v1796
      %2388 = vmatprep.subr.mxu0 0.0
      %2389 = vmatpush1.msra.mxu0 %v1795
      %2390 = vmatprep.subr.mxu0 0.0
      %2391 = vmatpush1.msra.mxu0 %v1794
      %2392 = vmatprep.subr.mxu0 0.0
      %2393 = vmatpush1.msra.mxu0 %v1793
      %2394 = vmatprep.subr.mxu0 0.0
      %2395 = vmatpush1.msra.mxu0 %v1792
      %2396 = vmatprep.subr.mxu0 0.0
      %2397 = vmatpush1.msra.mxu0 %v1791
      %2398 = vmatprep.subr.mxu0 0.0
      %2399 = vmatpush1.msra.mxu0 %v1790
      %2400 = vmatprep.subr.mxu0 0.0
      %2401 = vmatpush1.msra.mxu0 %v1789
      %2402 = vmatprep.subr.mxu0 0.0
      %2403 = vmatpush1.msra.mxu0 %v1788
      %2404 = vmatprep.subr.mxu0 0.0
      %2405 = vmatpush1.msra.mxu0 %v1787
      %2406 = vmatprep.subr.mxu0 0.0
      %2407 = vmatpush1.msra.mxu0 %v1786
      %2408 = vmatprep.subr.mxu0 0.0
      %2409 = vmatpush1.msra.mxu0 %v1785
      %2410 = vmatprep.subr.mxu0 0.0
      %2411 = vmatpush1.msra.mxu0 %v1784
      %2412 = vmatprep.subr.mxu0 0.0
      %2413 = vmatpush2.msra.mxu0 0.0
      %2414 = vmatprep.subr.mxu0 0.0
      %2415 = vmatpush2.msra.mxu0 0.0
      %2416 = vmatprep.subr.mxu0 0.0
      %2417 = vmatpush2.msra.mxu0 0.0
      %2418 = vmatprep.subr.mxu0 0.0
      %2419 = vmatpush2.msra.mxu0 0.0
      %2420 = vmatprep.subr.mxu0 0.0
      %2421 = vmatpush2.msra.mxu0 0.0
      %2422 = vmatprep.subr.mxu0 0.0
      %2423 = vmatpush2.msra.mxu0 0.0
      %2424 = vmatprep.subr.mxu0 0.0
      %2425 = vmatpush2.msra.mxu0 0.0
      %2426 = vmatprep.subr.mxu0 0.0
      %2427 = vmatpush2.msra.mxu0 0.0
      %2428 = vmatprep.subr.mxu0 0.0
      %2429 = vmatpush2.msra.mxu0 0.0
      %2430 = vmatprep.subr.mxu0 0.0
      %2431 = vmatpush2.msra.mxu0 0.0
      %2432 = vmatprep.subr.mxu0 0.0
      %2433 = vmatpush2.msra.mxu0 0.0
      %2434 = vmatprep.subr.mxu0 0.0
      %2435 = vmatpush2.msra.mxu0 0.0
      %2436 = vmatprep.subr.mxu0 0.0
      %2437 = vmatpush2.msra.mxu0 0.0
      %2438 = vmatprep.subr.mxu0 0.0
      %2439 = vmatpush2.msra.mxu0 0.0
      %2440 = vmatprep.subr.mxu0 0.0
      %2441 = vmatpush2.msra.mxu0 0.0
      %2442 = vmatprep.subr.mxu0 0.0
      %2443 = vmatpush2.msra.mxu0 0.0
      %2444 = vmatprep.mubr.f32.mxu0 0.0
      %2445 = vmatmul.mubr.f32.gmra.mxu0 %v1640
      %v2446 = vpop.f32.mrf.mxu0
      %v2447 = vadd.f32 %v2302, %v2446
      %v2448 = vpop.f32.mrf.mxu0
      %2449 = vmatprep.mubr.f32.mxu0 0.0
      %2450 = vmatmul.mubr.f32.gmra.mxu0 %v1641
      %v2451 = vpop.f32.mrf.mxu0
      %v2452 = vadd.f32 %v2307, %v2451
      %v2453 = vpop.f32.mrf.mxu0
      %2454 = vmatprep.mubr.f32.mxu0 0.0
      %2455 = vmatmul.mubr.f32.gmra.mxu0 %v1642
      %v2456 = vpop.f32.mrf.mxu0
      %v2457 = vadd.f32 %v2312, %v2456
      %v2458 = vpop.f32.mrf.mxu0
      %2459 = vmatprep.mubr.f32.mxu0 0.0
      %2460 = vmatmul.mubr.f32.gmra.mxu0 %v1643
      %v2461 = vpop.f32.mrf.mxu0
      %v2462 = vadd.f32 %v2317, %v2461
      %v2463 = vpop.f32.mrf.mxu0
      %2464 = vmatprep.mubr.f32.mxu0 0.0
      %2465 = vmatmul.mubr.f32.gmra.mxu0 %v1644
      %v2466 = vpop.f32.mrf.mxu0
      %v2467 = vadd.f32 %v2322, %v2466
      %v2468 = vpop.f32.mrf.mxu0
      %2469 = vmatprep.mubr.f32.mxu0 0.0
      %2470 = vmatmul.mubr.f32.gmra.mxu0 %v1645
      %v2471 = vpop.f32.mrf.mxu0
      %v2472 = vadd.f32 %v2327, %v2471
      %v2473 = vpop.f32.mrf.mxu0
      %2474 = vmatprep.mubr.f32.mxu0 0.0
      %2475 = vmatmul.mubr.f32.gmra.mxu0 %v1646
      %v2476 = vpop.f32.mrf.mxu0
      %v2477 = vadd.f32 %v2332, %v2476
      %v2478 = vpop.f32.mrf.mxu0
      %2479 = vmatprep.mubr.f32.mxu0 0.0
      %2480 = vmatmul.mubr.f32.gmra.mxu0 %v1647
      %v2481 = vpop.f32.mrf.mxu0
      %v2482 = vadd.f32 %v2337, %v2481
      %v2483 = vpop.f32.mrf.mxu0
      %2484 = vmatprep.mubr.f32.mxu0 0.0
      %2485 = vmatmul.mubr.f32.gmra.mxu0 %v1648
      %v2486 = vpop.f32.mrf.mxu0
      %v2487 = vadd.f32 %v2342, %v2486
      %v2488 = vpop.f32.mrf.mxu0
      %2489 = vmatprep.mubr.f32.mxu0 0.0
      %2490 = vmatmul.mubr.f32.gmra.mxu0 %v1649
      %v2491 = vpop.f32.mrf.mxu0
      %v2492 = vadd.f32 %v2347, %v2491
      %v2493 = vpop.f32.mrf.mxu0
      %2494 = vmatprep.mubr.f32.mxu0 0.0
      %2495 = vmatmul.mubr.f32.gmra.mxu0 %v1650
      %v2496 = vpop.f32.mrf.mxu0
      %v2497 = vadd.f32 %v2352, %v2496
      %v2498 = vpop.f32.mrf.mxu0
      %2499 = vmatprep.mubr.f32.mxu0 0.0
      %2500 = vmatmul.mubr.f32.gmra.mxu0 %v1651
      %v2501 = vpop.f32.mrf.mxu0
      %v2502 = vadd.f32 %v2357, %v2501
      %v2503 = vpop.f32.mrf.mxu0
      %2504 = vmatprep.mubr.f32.mxu0 0.0
      %2505 = vmatmul.mubr.f32.gmra.mxu0 %v1652
      %v2506 = vpop.f32.mrf.mxu0
      %v2507 = vadd.f32 %v2362, %v2506
      %v2508 = vpop.f32.mrf.mxu0
      %2509 = vmatprep.mubr.f32.mxu0 0.0
      %2510 = vmatmul.mubr.f32.gmra.mxu0 %v1653
      %v2511 = vpop.f32.mrf.mxu0
      %v2512 = vadd.f32 %v2367, %v2511
      %v2513 = vpop.f32.mrf.mxu0
      %2514 = vmatprep.mubr.f32.mxu0 0.0
      %2515 = vmatmul.mubr.f32.gmra.mxu0 %v1654
      %v2516 = vpop.f32.mrf.mxu0
      %v2517 = vadd.f32 %v2372, %v2516
      %v2518 = vpop.f32.mrf.mxu0
      %2519 = vmatprep.mubr.f32.mxu0 0.0
      %2520 = vmatmul.mubr.f32.gmra.mxu0 %v1655
      %v2521 = vpop.f32.mrf.mxu0
      %v2522 = vadd.f32 %v2377, %v2521
      %v2523 = vpop.f32.mrf.mxu0
      %2524 = vdwg.mxu0
      %s2525 = smul.u32 8, 16
      %s2526 = scalar_lea.vmem %s212, %s2525
      %v2527 = vld [vmem:[%s2526] sm:$0xff]
      %v2528 = vld [vmem:[%s2526 + $0x8] sm:$0xff]
      %v2529 = vld [vmem:[%s2526 + $0x10] sm:$0xff]
      %v2530 = vld [vmem:[%s2526 + $0x18] sm:$0xff]
      %v2531 = vld [vmem:[%s2526 + $0x20] sm:$0xff]
      %v2532 = vld [vmem:[%s2526 + $0x28] sm:$0xff]
      %v2533 = vld [vmem:[%s2526 + $0x30] sm:$0xff]
      %v2534 = vld [vmem:[%s2526 + $0x38] sm:$0xff]
      %v2535 = vld [vmem:[%s2526 + $0x40] sm:$0xff]
      %v2536 = vld [vmem:[%s2526 + $0x48] sm:$0xff]
      %v2537 = vld [vmem:[%s2526 + $0x50] sm:$0xff]
      %v2538 = vld [vmem:[%s2526 + $0x58] sm:$0xff]
      %v2539 = vld [vmem:[%s2526 + $0x60] sm:$0xff]
      %v2540 = vld [vmem:[%s2526 + $0x68] sm:$0xff]
      %v2541 = vld [vmem:[%s2526 + $0x70] sm:$0xff]
      %v2542 = vld [vmem:[%s2526 + $0x78] sm:$0xff]
      %v2543 = vadd.f32 %v2447, %v2527
      %v2544 = vadd.f32 %v2452, %v2528
      %v2545 = vadd.f32 %v2457, %v2529
      %v2546 = vadd.f32 %v2462, %v2530
      %v2547 = vadd.f32 %v2467, %v2531
      %v2548 = vadd.f32 %v2472, %v2532
      %v2549 = vadd.f32 %v2477, %v2533
      %v2550 = vadd.f32 %v2482, %v2534
      %v2551 = vadd.f32 %v2487, %v2535
      %v2552 = vadd.f32 %v2492, %v2536
      %v2553 = vadd.f32 %v2497, %v2537
      %v2554 = vadd.f32 %v2502, %v2538
      %v2555 = vadd.f32 %v2507, %v2539
      %v2556 = vadd.f32 %v2512, %v2540
      %v2557 = vadd.f32 %v2517, %v2541
      %v2558 = vadd.f32 %v2522, %v2542
      %s2559 = scalar_lea.vmem %s217, %s2525
      %2560 = vst [vmem:[%s2559] sm:$0xff] %v2543
      %2561 = vst [vmem:[%s2559 + $0x8] sm:$0xff] %v2544
      %2562 = vst [vmem:[%s2559 + $0x10] sm:$0xff] %v2545
      %2563 = vst [vmem:[%s2559 + $0x18] sm:$0xff] %v2546
      %2564 = vst [vmem:[%s2559 + $0x20] sm:$0xff] %v2547
      %2565 = vst [vmem:[%s2559 + $0x28] sm:$0xff] %v2548
      %2566 = vst [vmem:[%s2559 + $0x30] sm:$0xff] %v2549
      %2567 = vst [vmem:[%s2559 + $0x38] sm:$0xff] %v2550
      %2568 = vst [vmem:[%s2559 + $0x40] sm:$0xff] %v2551
      %2569 = vst [vmem:[%s2559 + $0x48] sm:$0xff] %v2552
      %2570 = vst [vmem:[%s2559 + $0x50] sm:$0xff] %v2553
      %2571 = vst [vmem:[%s2559 + $0x58] sm:$0xff] %v2554
      %2572 = vst [vmem:[%s2559 + $0x60] sm:$0xff] %v2555
      %2573 = vst [vmem:[%s2559 + $0x68] sm:$0xff] %v2556
      %2574 = vst [vmem:[%s2559 + $0x70] sm:$0xff] %v2557
      %2575 = vst [vmem:[%s2559 + $0x78] sm:$0xff] %v2558
      %p2576 = scmp.lt.s32.totalorder %s15, 1
      %s2577 = scalar_select %p2576, %s15, 1
      %s2578 = smul.addr %s2577, 32
      %s2579 = smul.addr %s2578, 8
      %s2580 = scalar_lea.vmem %s4, %s2579
      // Predicated region
      $region37: #{res_basic_block_preact.3} parent=35 // pred_check
        %p2581 = pneg %p127
      $region38: #{res_basic_block_preact.3} parent=35 // pred_check_branch
        %2583 = sbr.rel (%p2581) target = $region40
      $region39: #{res_basic_block_preact.3} parent=35 // pred_region
        _
      $region40: #{res_basic_block_preact.3} parent=35 // pred_fallthru
        _
    $region36: #{res_basic_block_preact.3} parent=5 // pred_fallthru
      _
    %p2584 = scmp.le.s32.totalorder 2, %s10
    // Predicated region
    $region41: #{res_basic_block_preact.3} parent=5 // pred_check
      %p2585 = pneg %p2584
    $region42: #{res_basic_block_preact.3} parent=5 // pred_check_branch
      %2587 = sbr.rel (%p2585) target = $region44
    $region43: #{res_basic_block_preact.3} parent=5 // pred_region
      %s2588 = ssub.s32 %s10, 2
      // Predicated region
      $region45: #{res_basic_block_preact.3} parent=43 // pred_check
        %p2589 = pneg %p133
      $region46: #{res_basic_block_preact.3} parent=43 // pred_check_branch
        %2591 = sbr.rel (%p2589) target = $region48
      $region47: #{res_basic_block_preact.3} parent=43 // pred_region
        %p2592 = scmp.lt.s32.totalorder %s16, 1
        %s2593 = scalar_select %p2592, %s16, 1
        %s2594 = smul.addr %s2593, 32
        %s2595 = smul.addr %s2594, 8
        %s2596 = scalar_lea.vmem %s4, %s2595
      $region48: #{res_basic_block_preact.3} parent=43 // pred_fallthru
        _
    $region44: #{res_basic_block_preact.3} parent=5 // pred_fallthru
      _
  $region6: #{res_basic_block_preact.3} parent=0 // loop_footer
    %s14 = sadd.s32 1, %s10
  $region7: #{res_basic_block_preact.3} parent=0 // loop_footer_branch
    %9 = sbr.rel target = $region3
  $region8: #{res_basic_block_preact.3} parent=0 // loop_exit
    _

</llo_original>
